<compile_context>
chip_gen: v7x
topology: tpu7x:2x2x1
jax: 0.10.0
libtpu: 0.0.40
codegen_flags: <defaults>
</compile_context>

<pallas_src>
import functools

import jax
import jax.numpy as jnp
from jax.experimental import pallas as pl
from jax.experimental.pallas import tpu as pltpu

LSE_R = 0.5          # r passed to pool.lse in the PyTorch forward
L = 32               # feature length per instance
H1, H2, H3 = 256, 128, 64
N_INST = 8           # instances per bag
BAG_TILE = 512       # bags per grid step -> 4096 instances on the lane axis


def mi_net_kernel(x_ref, w1_ref, w2_ref, w3_ref, w4_ref, o_ref):
    bag_tile = o_ref.shape[-1]
    n_inst = x_ref.shape[-1] // bag_tile

    # x_ref: (L, m) bf16 — m instances on the lane axis, instance-major columns
    # within the tile (col = inst * bag_tile + bag).
    x = x_ref[...]

    # Hidden layers: bf16 MXU matmuls with f32 accumulation, weights resident.
    # ReLU after the bf16 downcast (fewer vmax vregs on v6e/v7x; same values).
    h = jnp.dot(w1_ref[...], x, preferred_element_type=jnp.float32)        # (H1, m)
    h = jnp.maximum(h.astype(jnp.bfloat16), 0)
    h = jnp.dot(w2_ref[...], h, preferred_element_type=jnp.float32)        # (H2, m)
    h = jnp.maximum(h.astype(jnp.bfloat16), 0)
    h = jnp.dot(w3_ref[...], h, preferred_element_type=jnp.float32)        # (H3, m)
    h = jnp.maximum(h.astype(jnp.bfloat16), 0)

    # Output layer (H3 -> 1): 1-row bf16 MXU matmul (MXU has slack; frees VPU/XLU).
    logits = jnp.dot(w4_ref[...], h, preferred_element_type=jnp.float32)   # (1, m)
    s = jax.nn.sigmoid(logits)
    e = jnp.exp(LSE_R * s)                                                  # (1, m)

    # LSE (log-mean-exp) pooling over instances: columns are instance-major
    # within the tile, so the per-bag sum is n_inst static lane-aligned slices
    # added on the VPU — no pooling matrix, no extra matmul.
    acc = e[:, 0:bag_tile]
    for j in range(1, n_inst):
        acc = acc + e[:, j * bag_tile:(j + 1) * bag_tile]
    o_ref[...] = (1.0 / LSE_R) * jnp.log(acc * (1.0 / n_inst))             # (1, bag_tile)


@functools.partial(jax.jit, static_argnames=("bag_tile",))
def mi_net_forward(x_bags, w1, w2, w3, w4, *, bag_tile=BAG_TILE):
    """x_bags: (num_bags, n_inst, L) f32.
    w1: (256, L), w2: (128, 256), w3: (64, 128) bf16 (PyTorch (out, in) layout),
    w4: (1, 64) bf16 row (PyTorch linear4.weight layout).
    Returns (num_bags,) f32 LSE-pooled bag scores."""
    num_bags, n_inst, length = x_bags.shape
    assert num_bags % bag_tile == 0, "num_bags must be a multiple of bag_tile"
    assert bag_tile % 128 == 0, "bag_tile must be a multiple of 128"
    n_tiles = num_bags // bag_tile
    m = bag_tile * n_inst
    total = num_bags * n_inst

    # Single fused layout pass (under jit): feature-major with instance-major
    # columns within each bag tile:
    #   x_t[f, t*m + i*bag_tile + b] = x_bags[t*bag_tile + b, i, f]
    x4 = x_bags.reshape(n_tiles, bag_tile, n_inst, length).astype(jnp.bfloat16)
    x_t = jnp.transpose(x4, (3, 0, 2, 1)).reshape(length, total)

    h1, h2, h3 = w1.shape[0], w2.shape[0], w3.shape[0]
    flops = 2 * total * (length * h1 + h1 * h2 + h2 * h3 + h3) + total
    bytes_accessed = (x_t.size * 2
                      + (w1.size + w2.size + w3.size + w4.size) * 2
                      + num_bags * 4)

    out = pl.pallas_call(
        mi_net_kernel,
        out_shape=jax.ShapeDtypeStruct((1, num_bags), jnp.float32),
        grid=(n_tiles,),
        in_specs=[
            pl.BlockSpec((length, m), lambda i: (0, i)),     # x tiles stream
            pl.BlockSpec((h1, length), lambda i: (0, 0)),    # weights stay resident
            pl.BlockSpec((h2, h1), lambda i: (0, 0)),
            pl.BlockSpec((h3, h2), lambda i: (0, 0)),
            pl.BlockSpec((1, h3), lambda i: (0, 0)),
        ],
        out_specs=pl.BlockSpec((1, bag_tile), lambda i: (0, i)),  # lane-dense scores
        compiler_params=pltpu.CompilerParams(
            dimension_semantics=("parallel",),               # v7x: shard across 2 TCs
            vmem_limit_bytes=48 * 1024 * 1024),
        cost_estimate=pl.CostEstimate(
            flops=flops,
            transcendentals=2 * total + num_bags,
            bytes_accessed=bytes_accessed),
    )(x_t, w1, w2, w3, w4)
    return out[0]


def init_linear_weight(key, fan_out, fan_in, dtype=jnp.float32):
    """torch.nn.Linear default init U(-1/sqrt(fan_in), 1/sqrt(fan_in)),
    stored in PyTorch (out, in) layout."""
    bound = 1.0 / (fan_in ** 0.5)
    w = jax.random.uniform(key, (fan_out, fan_in), dtype=jnp.float32,
                           minval=-bound, maxval=bound)
    return w.astype(dtype)


if __name__ == "__main__":
    NUM_BAGS = 1024   # 1024 bags of 8 instances -> grid of 2 bag tiles (>=2 for v7x)

    key = jax.random.PRNGKey(0)
    kx, k1, k2, k3, k4 = jax.random.split(key, 5)

    x_bags = jax.random.normal(kx, (NUM_BAGS, N_INST, L), dtype=jnp.float32)
    w1 = init_linear_weight(k1, H1, L, jnp.bfloat16)
    w2 = init_linear_weight(k2, H2, H1, jnp.bfloat16)
    w3 = init_linear_weight(k3, H3, H2, jnp.bfloat16)
    w4 = init_linear_weight(k4, 1, H3, jnp.bfloat16)     # (1, 64) bf16 row

    y = mi_net_forward(x_bags, w1, w2, w3, w4)
    jax.block_until_ready(y)

    # Pure-JAX reference with the same mixed precision (bf16 matmuls, f32 accum).
    def ref(x_bags, w1, w2, w3, w4):
        x = x_bags.reshape(-1, L).astype(jnp.bfloat16)
        h = jnp.maximum(jnp.dot(x, w1.T, preferred_element_type=jnp.float32), 0.0)
        h = jnp.maximum(jnp.dot(h.astype(jnp.bfloat16), w2.T,
                                preferred_element_type=jnp.float32), 0.0)
        h = jnp.maximum(jnp.dot(h.astype(jnp.bfloat16), w3.T,
                                preferred_element_type=jnp.float32), 0.0)
        logits = jnp.dot(h.astype(jnp.bfloat16), w4.T,
                         preferred_element_type=jnp.float32)               # (total, 1)
        s = jax.nn.sigmoid(logits)
        e = jnp.exp(LSE_R * s)
        means = jnp.mean(e.reshape(NUM_BAGS, N_INST), axis=-1)
        return (1.0 / LSE_R) * jnp.log(means)

    y_ref = ref(x_bags, w1, w2, w3, w4)
    assert y.shape == (NUM_BAGS,)
    assert jnp.allclose(y, y_ref, rtol=2e-3, atol=2e-3), (y[:4], y_ref[:4])

    print("KERNEL_OK")
</pallas_src>

<mosaic_0001>
module attributes {stable_mosaic.version = 11 : i64} {
  func.func @mi_net_kernel(%arg0: i32, %arg1: memref<32x4096xbf16, #tpu.memory_space<vmem>>, %arg2: memref<256x32xbf16, #tpu.memory_space<vmem>>, %arg3: memref<128x256xbf16, #tpu.memory_space<vmem>>, %arg4: memref<64x128xbf16, #tpu.memory_space<vmem>>, %arg5: memref<1x64xbf16, #tpu.memory_space<vmem>>, %arg6: memref<1x512xf32, #tpu.memory_space<vmem>>) attributes {dimension_semantics = [#tpu.dimension_semantics<parallel>], iteration_bounds = array<i64: 2>, scalar_prefetch = 0 : i64, scratch_operands = 0 : i64, tpu.core_type = #tpu.core_type<tc>, window_params = [{transform_indices = @transform_0, window_bounds = array<i64: 32, 4096>}, {pipeline_mode = #tpu.pipeline_mode<synchronous>, transform_indices = @transform_1, window_bounds = array<i64: 256, 32>}, {pipeline_mode = #tpu.pipeline_mode<synchronous>, transform_indices = @transform_2, window_bounds = array<i64: 128, 256>}, {pipeline_mode = #tpu.pipeline_mode<synchronous>, transform_indices = @transform_3, window_bounds = array<i64: 64, 128>}, {pipeline_mode = #tpu.pipeline_mode<synchronous>, transform_indices = @transform_4, window_bounds = array<i64: 1, 64>}, {transform_indices = @transform_5, window_bounds = array<i64: 1, 512>}]} {
    %c0 = arith.constant 0 : index
    %c0_0 = arith.constant 0 : index
    %0 = vector.load %arg1[%c0, %c0_0] : memref<32x4096xbf16, #tpu.memory_space<vmem>>, vector<32x4096xbf16>
    %c0_1 = arith.constant 0 : index
    %c0_2 = arith.constant 0 : index
    %1 = vector.load %arg2[%c0_1, %c0_2] : memref<256x32xbf16, #tpu.memory_space<vmem>>, vector<256x32xbf16>
    %cst = arith.constant dense<0.000000e+00> : vector<256x4096xf32>
    %2 = tpu.matmul %1, %0, %cst {dimension_numbers = #tpu.dot_dimension_numbers<[1], [0], [0], [1], [0, 0, 1, 1], [], []>} : vector<256x32xbf16>, vector<32x4096xbf16>, vector<256x4096xf32> -> vector<256x4096xf32>
    %3 = arith.truncf %2 : vector<256x4096xf32> to vector<256x4096xbf16>
    %cst_3 = arith.constant 0.000000e+00 : bf16
    %4 = vector.broadcast %cst_3 : bf16 to vector<256x4096xbf16>
    %5 = arith.maximumf %3, %4 : vector<256x4096xbf16>
    %c0_4 = arith.constant 0 : index
    %c0_5 = arith.constant 0 : index
    %6 = vector.load %arg3[%c0_4, %c0_5] : memref<128x256xbf16, #tpu.memory_space<vmem>>, vector<128x256xbf16>
    %cst_6 = arith.constant dense<0.000000e+00> : vector<128x4096xf32>
    %7 = tpu.matmul %6, %5, %cst_6 {dimension_numbers = #tpu.dot_dimension_numbers<[1], [0], [0], [1], [0, 0, 1, 1], [], []>} : vector<128x256xbf16>, vector<256x4096xbf16>, vector<128x4096xf32> -> vector<128x4096xf32>
    %8 = arith.truncf %7 : vector<128x4096xf32> to vector<128x4096xbf16>
    %cst_7 = arith.constant 0.000000e+00 : bf16
    %9 = vector.broadcast %cst_7 : bf16 to vector<128x4096xbf16>
    %10 = arith.maximumf %8, %9 : vector<128x4096xbf16>
    %c0_8 = arith.constant 0 : index
    %c0_9 = arith.constant 0 : index
    %11 = vector.load %arg4[%c0_8, %c0_9] : memref<64x128xbf16, #tpu.memory_space<vmem>>, vector<64x128xbf16>
    %cst_10 = arith.constant dense<0.000000e+00> : vector<64x4096xf32>
    %12 = tpu.matmul %11, %10, %cst_10 {dimension_numbers = #tpu.dot_dimension_numbers<[1], [0], [0], [1], [0, 0, 1, 1], [], []>} : vector<64x128xbf16>, vector<128x4096xbf16>, vector<64x4096xf32> -> vector<64x4096xf32>
    %13 = arith.truncf %12 : vector<64x4096xf32> to vector<64x4096xbf16>
    %cst_11 = arith.constant 0.000000e+00 : bf16
    %14 = vector.broadcast %cst_11 : bf16 to vector<64x4096xbf16>
    %15 = arith.maximumf %13, %14 : vector<64x4096xbf16>
    %c0_12 = arith.constant 0 : index
    %c0_13 = arith.constant 0 : index
    %16 = vector.load %arg5[%c0_12, %c0_13] : memref<1x64xbf16, #tpu.memory_space<vmem>>, vector<1x64xbf16>
    %cst_14 = arith.constant dense<0.000000e+00> : vector<1x4096xf32>
    %17 = tpu.matmul %16, %15, %cst_14 {dimension_numbers = #tpu.dot_dimension_numbers<[1], [0], [0], [1], [0, 0, 1, 1], [], []>} : vector<1x64xbf16>, vector<64x4096xbf16>, vector<1x4096xf32> -> vector<1x4096xf32>
    %18 = arith.negf %17 : vector<1x4096xf32>
    %19 = math.exp %18 : vector<1x4096xf32>
    %cst_15 = arith.constant 1.000000e+00 : f32
    %20 = vector.broadcast %cst_15 : f32 to vector<1x4096xf32>
    %21 = arith.addf %20, %19 : vector<1x4096xf32>
    %22 = arith.divf %20, %21 : vector<1x4096xf32>
    %cst_16 = arith.constant 5.000000e-01 : f32
    %23 = vector.broadcast %cst_16 : f32 to vector<1x4096xf32>
    %24 = arith.mulf %23, %22 : vector<1x4096xf32>
    %25 = math.exp %24 : vector<1x4096xf32>
    %26 = vector.extract_strided_slice %25 {offsets = [0, 0], sizes = [1, 512], strides = [1, 1]} : vector<1x4096xf32> to vector<1x512xf32>
    %27 = vector.extract_strided_slice %25 {offsets = [0, 512], sizes = [1, 512], strides = [1, 1]} : vector<1x4096xf32> to vector<1x512xf32>
    %28 = arith.addf %26, %27 : vector<1x512xf32>
    %29 = vector.extract_strided_slice %25 {offsets = [0, 1024], sizes = [1, 512], strides = [1, 1]} : vector<1x4096xf32> to vector<1x512xf32>
    %30 = arith.addf %28, %29 : vector<1x512xf32>
    %31 = vector.extract_strided_slice %25 {offsets = [0, 1536], sizes = [1, 512], strides = [1, 1]} : vector<1x4096xf32> to vector<1x512xf32>
    %32 = arith.addf %30, %31 : vector<1x512xf32>
    %33 = vector.extract_strided_slice %25 {offsets = [0, 2048], sizes = [1, 512], strides = [1, 1]} : vector<1x4096xf32> to vector<1x512xf32>
    %34 = arith.addf %32, %33 : vector<1x512xf32>
    %35 = vector.extract_strided_slice %25 {offsets = [0, 2560], sizes = [1, 512], strides = [1, 1]} : vector<1x4096xf32> to vector<1x512xf32>
    %36 = arith.addf %34, %35 : vector<1x512xf32>
    %37 = vector.extract_strided_slice %25 {offsets = [0, 3072], sizes = [1, 512], strides = [1, 1]} : vector<1x4096xf32> to vector<1x512xf32>
    %38 = arith.addf %36, %37 : vector<1x512xf32>
    %39 = vector.extract_strided_slice %25 {offsets = [0, 3584], sizes = [1, 512], strides = [1, 1]} : vector<1x4096xf32> to vector<1x512xf32>
    %40 = arith.addf %38, %39 : vector<1x512xf32>
    %cst_17 = arith.constant 1.250000e-01 : f32
    %41 = vector.broadcast %cst_17 : f32 to vector<1x512xf32>
    %42 = arith.mulf %40, %41 : vector<1x512xf32>
    %43 = math.log %42 : vector<1x512xf32>
    %cst_18 = arith.constant 2.000000e+00 : f32
    %44 = vector.broadcast %cst_18 : f32 to vector<1x512xf32>
    %45 = arith.mulf %44, %43 : vector<1x512xf32>
    %c0_19 = arith.constant 0 : index
    %c0_20 = arith.constant 0 : index
    %46 = vector.load %arg6[%c0_19, %c0_20] : memref<1x512xf32, #tpu.memory_space<vmem>>, vector<1x512xf32>
    tpu.vector_store %arg6[%c0_19, %c0_20], %45 {strides = array<i32>} : memref<1x512xf32, #tpu.memory_space<vmem>>, vector<1x512xf32>,
    return
  }
  func.func @transform_0(%arg0: i32) -> (i32, i32) {
    %c0_i32 = arith.constant 0 : i32
    %c0_i32_0 = arith.constant 0 : i32
    return %c0_i32, %arg0 : i32, i32
  }
  func.func @transform_1(%arg0: i32) -> (i32, i32) {
    %c0_i32 = arith.constant 0 : i32
    %c0_i32_0 = arith.constant 0 : i32
    %c0_i32_1 = arith.constant 0 : i32
    return %c0_i32, %c0_i32_0 : i32, i32
  }
  func.func @transform_2(%arg0: i32) -> (i32, i32) {
    %c0_i32 = arith.constant 0 : i32
    %c0_i32_0 = arith.constant 0 : i32
    %c0_i32_1 = arith.constant 0 : i32
    return %c0_i32, %c0_i32_0 : i32, i32
  }
  func.func @transform_3(%arg0: i32) -> (i32, i32) {
    %c0_i32 = arith.constant 0 : i32
    %c0_i32_0 = arith.constant 0 : i32
    %c0_i32_1 = arith.constant 0 : i32
    return %c0_i32, %c0_i32_0 : i32, i32
  }
  func.func @transform_4(%arg0: i32) -> (i32, i32) {
    %c0_i32 = arith.constant 0 : i32
    %c0_i32_0 = arith.constant 0 : i32
    %c0_i32_1 = arith.constant 0 : i32
    return %c0_i32, %c0_i32_0 : i32, i32
  }
  func.func @transform_5(%arg0: i32) -> (i32, i32) {
    %c0_i32 = arith.constant 0 : i32
    %c0_i32_0 = arith.constant 0 : i32
    return %c0_i32, %arg0 : i32, i32
  }
}

</mosaic_0001>

<llo_original>
// kernel: mi_net_forward.1
$region0: #{mi_net_forward.1}
  #allocation0 [shape = 'u32[]', space=smem, size = 0x4, offset = 0x4, fixed_abs, tag = 'smem constant byte address 0x4 - core index']
  #allocation1 [shape = 'u32[144,128]{1,0:T(1,128)}', space=vmem, size = 0x12000, scoped, tag = 'internal scratch']
  %s0 = inlined_call_operand.vmem [shape: bf16[32,8192], index: 0, kind: input, shape index: {}]
  %s1 = inlined_call_operand.vmem [shape: bf16[256,32], index: 1, kind: input, shape index: {}]
  %s2 = inlined_call_operand.vmem [shape: bf16[128,256], index: 2, kind: input, shape index: {}]
  %s3 = inlined_call_operand.vmem [shape: bf16[64,128], index: 3, kind: input, shape index: {}]
  %s4 = inlined_call_operand.vmem [shape: bf16[1,64], index: 4, kind: input, shape index: {}]
  %s5 = inlined_call_operand.hbm [shape: f32[1,1024], index: 5, kind: output, shape index: {}]
  %s6 = sld [smem:[#allocation0]]
  $region76: #{mi_net_forward.1} parent=0
    _
  %s8 = ssub.s32 1, %s6
  %s9 = scalar_select 0, %s8, %s6
  $region1: #{mi_net_forward.1} parent=0
    #allocation2 [shape = 'u8[524288]{0}', space=vmem, size = 0x80000, scoped, tag = 'input window, operand 0']
    #allocation3 [shape = 'u8[4096]{0}', space=vmem, size = 0x1000, scoped, tag = 'output window, operand 0']
    #allocation4 [shape = 's32[2]{0}', space=sflag, size = 0x8, scoped, tag = 'scoped memory for mi_net_forward.1']
    %10 = vsyncpa [#allocation4], 0
    %s11 = scalar_lea.sflag [#allocation4], 1
    %12 = vsyncpa %s11, 0
    loop: start=0, step=1, limit=4
    $region2: #{mi_net_forward.1} parent=1 // loop_pre_header
      _
    $region3: #{mi_net_forward.1} parent=1 // loop_header
      %s14 = sphi 0, %s18
      %p15 = scmp.ge.s32.totalorder %s14, 4
      %s24 = sphi 0, %s26
      %s27 = sphi 0, %s24
      %s28 = sphi 0, %s27
      %s44 = sphi 0, %s28
      %s48 = sphi 0, %s48
      %s50 = sphi 0, %s48
      %s51 = sphi 0, %s50
      %s65 = sphi 0, %s51
      %s69 = sphi 0, %s69
      %s71 = sphi 0, %s69
      %s72 = sphi 0, %s71
      %s86 = sphi 0, %s72
      %s90 = sphi 0, %s90
      %s92 = sphi 0, %s90
      %s93 = sphi 0, %s92
      %s107 = sphi 0, %s93
      %s111 = sphi 0, %s111
      %s113 = sphi 0, %s111
      %s114 = sphi 0, %s113
      %s128 = sphi 0, %s114
      %s134 = sphi 0, %s136
      %s137 = sphi 0, %s134
      %s138 = sphi 0, %s137
      %s154 = sphi 0, %s138
    $region4: #{mi_net_forward.1} parent=1 // loop_header_branch
      %17 = sbr.rel (%p15) target = $region8
    $region5: #{mi_net_forward.1} parent=1 // loop_body
      %s19 = ssub.s32 %s14, 1
      %s20 = ssub.s32 %s14, 2
      %s21 = sadd.s32 %s14, 1
      %s22 = ssub.s32 %s14, %s21
      %p23 = scmp.eq.s32.totalorder %s22, 0
      %s25 = sadd.s32 %s24, 1
      %s26 = scalar_select %p23, %s24, %s25
      %p29 = pneg %p23
      %p30 = scmp.eq.s32.totalorder %s14, 1
      %p31 = por %p29, %p30
      %p32 = scmp.ne.s32.totalorder %s24, %s27
      %p33 = scmp.eq.s32.totalorder %s14, 0
      %p34 = por %p32, %p33
      %p35 = scmp.ne.s32.totalorder %s24, %s27
      %p36 = scmp.eq.s32.totalorder %s19, 1
      %p37 = por %p35, %p36
      %p38 = scmp.ne.s32.totalorder %s27, %s28
      %p39 = scmp.eq.s32.totalorder %s19, 0
      %p40 = por %p38, %p39
      %p41 = scmp.ne.s32.totalorder %s27, %s28
      %p42 = scmp.eq.s32.totalorder %s20, 1
      %p43 = por %p41, %p42
      %p45 = scmp.ne.s32.totalorder %s28, %s44
      %p46 = scmp.eq.s32.totalorder %s20, 0
      %p47 = por %p45, %p46
      %s49 = sadd.s32 %s48, 1
      %p52 = scmp.eq.s32.totalorder %s14, 1
      %p53 = scmp.ne.s32.totalorder %s48, %s50
      %p54 = scmp.eq.s32.totalorder %s14, 0
      %p55 = por %p53, %p54
      %p56 = scmp.ne.s32.totalorder %s48, %s50
      %p57 = scmp.eq.s32.totalorder %s19, 1
      %p58 = por %p56, %p57
      %p59 = scmp.ne.s32.totalorder %s50, %s51
      %p60 = scmp.eq.s32.totalorder %s19, 0
      %p61 = por %p59, %p60
      %p62 = scmp.ne.s32.totalorder %s50, %s51
      %p63 = scmp.eq.s32.totalorder %s20, 1
      %p64 = por %p62, %p63
      %p66 = scmp.ne.s32.totalorder %s51, %s65
      %p67 = scmp.eq.s32.totalorder %s20, 0
      %p68 = por %p66, %p67
      %s70 = sadd.s32 %s69, 1
      %p73 = scmp.eq.s32.totalorder %s14, 1
      %p74 = scmp.ne.s32.totalorder %s69, %s71
      %p75 = scmp.eq.s32.totalorder %s14, 0
      %p76 = por %p74, %p75
      %p77 = scmp.ne.s32.totalorder %s69, %s71
      %p78 = scmp.eq.s32.totalorder %s19, 1
      %p79 = por %p77, %p78
      %p80 = scmp.ne.s32.totalorder %s71, %s72
      %p81 = scmp.eq.s32.totalorder %s19, 0
      %p82 = por %p80, %p81
      %p83 = scmp.ne.s32.totalorder %s71, %s72
      %p84 = scmp.eq.s32.totalorder %s20, 1
      %p85 = por %p83, %p84
      %p87 = scmp.ne.s32.totalorder %s72, %s86
      %p88 = scmp.eq.s32.totalorder %s20, 0
      %p89 = por %p87, %p88
      %s91 = sadd.s32 %s90, 1
      %p94 = scmp.eq.s32.totalorder %s14, 1
      %p95 = scmp.ne.s32.totalorder %s90, %s92
      %p96 = scmp.eq.s32.totalorder %s14, 0
      %p97 = por %p95, %p96
      %p98 = scmp.ne.s32.totalorder %s90, %s92
      %p99 = scmp.eq.s32.totalorder %s19, 1
      %p100 = por %p98, %p99
      %p101 = scmp.ne.s32.totalorder %s92, %s93
      %p102 = scmp.eq.s32.totalorder %s19, 0
      %p103 = por %p101, %p102
      %p104 = scmp.ne.s32.totalorder %s92, %s93
      %p105 = scmp.eq.s32.totalorder %s20, 1
      %p106 = por %p104, %p105
      %p108 = scmp.ne.s32.totalorder %s93, %s107
      %p109 = scmp.eq.s32.totalorder %s20, 0
      %p110 = por %p108, %p109
      %s112 = sadd.s32 %s111, 1
      %p115 = scmp.eq.s32.totalorder %s14, 1
      %p116 = scmp.ne.s32.totalorder %s111, %s113
      %p117 = scmp.eq.s32.totalorder %s14, 0
      %p118 = por %p116, %p117
      %p119 = scmp.ne.s32.totalorder %s111, %s113
      %p120 = scmp.eq.s32.totalorder %s19, 1
      %p121 = por %p119, %p120
      %p122 = scmp.ne.s32.totalorder %s113, %s114
      %p123 = scmp.eq.s32.totalorder %s19, 0
      %p124 = por %p122, %p123
      %p125 = scmp.ne.s32.totalorder %s113, %s114
      %p126 = scmp.eq.s32.totalorder %s20, 1
      %p127 = por %p125, %p126
      %p129 = scmp.ne.s32.totalorder %s114, %s128
      %p130 = scmp.eq.s32.totalorder %s20, 0
      %p131 = por %p129, %p130
      %s132 = ssub.s32 %s14, %s21
      %p133 = scmp.eq.s32.totalorder %s132, 0
      %s135 = sadd.s32 %s134, 1
      %s136 = scalar_select %p133, %s134, %s135
      %p139 = pneg %p133
      %p140 = scmp.eq.s32.totalorder %s14, 1
      %p141 = por %p139, %p140
      %p142 = scmp.ne.s32.totalorder %s134, %s137
      %p143 = scmp.eq.s32.totalorder %s14, 0
      %p144 = por %p142, %p143
      %p145 = scmp.ne.s32.totalorder %s134, %s137
      %p146 = scmp.eq.s32.totalorder %s19, 1
      %p147 = por %p145, %p146
      %p148 = scmp.ne.s32.totalorder %s137, %s138
      %p149 = scmp.eq.s32.totalorder %s19, 0
      %p150 = por %p148, %p149
      %p151 = scmp.ne.s32.totalorder %s137, %s138
      %p152 = scmp.eq.s32.totalorder %s20, 1
      %p153 = por %p151, %p152
      %p155 = scmp.ne.s32.totalorder %s138, %s154
      %p156 = scmp.eq.s32.totalorder %s20, 0
      %p157 = por %p155, %p156
      %p158 = scmp.le.s32.totalorder 1, %s14
      %p159 = scmp.lt.s32.totalorder %s14, 3
      %p160 = pnand %p158, %p159
      %p161 = pneg %p160
      // Predicated region
      $region9: #{mi_net_forward.1} parent=5 // pred_check
        _
      $region10: #{mi_net_forward.1} parent=5 // pred_check_branch
        %163 = sbr.rel (%p160) target = $region12
      $region11: #{mi_net_forward.1} parent=5 // pred_region
        %s164 = ssub.s32 %s14, 1
        // Predicated region
        $region13: #{mi_net_forward.1} parent=11 // pred_check
          %p165 = pneg %p61
        $region14: #{mi_net_forward.1} parent=11 // pred_check_branch
          %167 = sbr.rel (%p165) target = $region16
        $region15: #{mi_net_forward.1} parent=11 // pred_region
          _
        $region16: #{mi_net_forward.1} parent=11 // pred_fallthru
          _
        // Predicated region
        $region17: #{mi_net_forward.1} parent=11 // pred_check
          %p168 = pneg %p82
        $region18: #{mi_net_forward.1} parent=11 // pred_check_branch
          %170 = sbr.rel (%p168) target = $region20
        $region19: #{mi_net_forward.1} parent=11 // pred_region
          _
        $region20: #{mi_net_forward.1} parent=11 // pred_fallthru
          _
        // Predicated region
        $region21: #{mi_net_forward.1} parent=11 // pred_check
          %p171 = pneg %p103
        $region22: #{mi_net_forward.1} parent=11 // pred_check_branch
          %173 = sbr.rel (%p171) target = $region24
        $region23: #{mi_net_forward.1} parent=11 // pred_region
          _
        $region24: #{mi_net_forward.1} parent=11 // pred_fallthru
          _
        // Predicated region
        $region25: #{mi_net_forward.1} parent=11 // pred_check
          %p174 = pneg %p124
        $region26: #{mi_net_forward.1} parent=11 // pred_check_branch
          %176 = sbr.rel (%p174) target = $region28
        $region27: #{mi_net_forward.1} parent=11 // pred_region
          _
        $region28: #{mi_net_forward.1} parent=11 // pred_fallthru
          _
      $region12: #{mi_net_forward.1} parent=5 // pred_fallthru
        _
      %p177 = scmp.lt.s32.totalorder %s14, 2
      // Predicated region
      $region29: #{mi_net_forward.1} parent=5 // pred_check
        %p178 = pneg %p177
      $region30: #{mi_net_forward.1} parent=5 // pred_check_branch
        %180 = sbr.rel (%p178) target = $region32
      $region31: #{mi_net_forward.1} parent=5 // pred_region
        // Predicated region
        $region33: #{mi_net_forward.1} parent=31 // pred_check
          %p181 = pneg %p34
        $region34: #{mi_net_forward.1} parent=31 // pred_check_branch
          %183 = sbr.rel (%p181) target = $region36
        $region35: #{mi_net_forward.1} parent=31 // pred_region
          %s184 = sand.u32 %s24, 1
          %s185 = sand.u32 %s24, 1
          %s186 = smul.addr %s185, 512
          %s187 = scalar_lea.vmem [#allocation2], %s186
          %s188 = smul.u32 32, %s14
          %s189 = smul.addr %s188, 4
          %s190 = scalar_lea.vmem %s0, %s189
          // Predicated region
          $region37: #{mi_net_forward.1} parent=35 // pred_check
            _
          $region38: #{mi_net_forward.1} parent=35 // pred_check_branch
            %192 = sbr.rel (0) target = $region40
          $region39: #{mi_net_forward.1} parent=35 // pred_region
            // Predicated region
            $region41: #{mi_net_forward.1} parent=39 // pred_check
              _
            $region42: #{mi_net_forward.1} parent=39 // pred_check_branch
              %194 = sbr.rel (0) target = $region44
            $region43: #{mi_net_forward.1} parent=39 // pred_region
              loop: start=0, step=1, limit=1
              $region45: #{mi_net_forward.1} parent=43 // loop_pre_header
                _
              $region46: #{mi_net_forward.1} parent=43 // loop_header
                %s196 = sphi 0, %s200
                %p197 = scmp.ge.s32.totalorder %s196, 1
                %s201 = sphi %s190, %s190
                %s202 = sphi %s187, %s187
              $region47: #{mi_net_forward.1} parent=43 // loop_header_branch
                %199 = sbr.rel (%p197) target = $region51
              $region48: #{mi_net_forward.1} parent=43 // loop_body
                %v203 = vld [vmem:[%s201] sm:$0xff]
                %204 = vst [vmem:[%s202] sm:$0xff] %v203
                %v205 = vld [vmem:[%s201 + $0x8] sm:$0xff]
                %206 = vst [vmem:[%s202 + $0x8] sm:$0xff] %v205
                %v207 = vld [vmem:[%s201 + $0x10] sm:$0xff]
                %208 = vst [vmem:[%s202 + $0x10] sm:$0xff] %v207
                %v209 = vld [vmem:[%s201 + $0x18] sm:$0xff]
                %210 = vst [vmem:[%s202 + $0x18] sm:$0xff] %v209
                %v211 = vld [vmem:[%s201 + $0x20] sm:$0xff]
                %212 = vst [vmem:[%s202 + $0x20] sm:$0xff] %v211
                %v213 = vld [vmem:[%s201 + $0x28] sm:$0xff]
                %214 = vst [vmem:[%s202 + $0x28] sm:$0xff] %v213
                %v215 = vld [vmem:[%s201 + $0x30] sm:$0xff]
                %216 = vst [vmem:[%s202 + $0x30] sm:$0xff] %v215
                %v217 = vld [vmem:[%s201 + $0x38] sm:$0xff]
                %218 = vst [vmem:[%s202 + $0x38] sm:$0xff] %v217
                %v219 = vld [vmem:[%s201 + $0x40] sm:$0xff]
                %220 = vst [vmem:[%s202 + $0x40] sm:$0xff] %v219
                %v221 = vld [vmem:[%s201 + $0x48] sm:$0xff]
                %222 = vst [vmem:[%s202 + $0x48] sm:$0xff] %v221
                %v223 = vld [vmem:[%s201 + $0x50] sm:$0xff]
                %224 = vst [vmem:[%s202 + $0x50] sm:$0xff] %v223
                %v225 = vld [vmem:[%s201 + $0x58] sm:$0xff]
                %226 = vst [vmem:[%s202 + $0x58] sm:$0xff] %v225
                %v227 = vld [vmem:[%s201 + $0x60] sm:$0xff]
                %228 = vst [vmem:[%s202 + $0x60] sm:$0xff] %v227
                %v229 = vld [vmem:[%s201 + $0x68] sm:$0xff]
                %230 = vst [vmem:[%s202 + $0x68] sm:$0xff] %v229
                %v231 = vld [vmem:[%s201 + $0x70] sm:$0xff]
                %232 = vst [vmem:[%s202 + $0x70] sm:$0xff] %v231
                %v233 = vld [vmem:[%s201 + $0x78] sm:$0xff]
                %234 = vst [vmem:[%s202 + $0x78] sm:$0xff] %v233
                %v235 = vld [vmem:[%s201 + $0x100] sm:$0xff]
                %236 = vst [vmem:[%s202 + $0x80] sm:$0xff] %v235
                %v237 = vld [vmem:[%s201 + $0x108] sm:$0xff]
                %238 = vst [vmem:[%s202 + $0x88] sm:$0xff] %v237
                %v239 = vld [vmem:[%s201 + $0x110] sm:$0xff]
                %240 = vst [vmem:[%s202 + $0x90] sm:$0xff] %v239
                %v241 = vld [vmem:[%s201 + $0x118] sm:$0xff]
                %242 = vst [vmem:[%s202 + $0x98] sm:$0xff] %v241
                %v243 = vld [vmem:[%s201 + $0x120] sm:$0xff]
                %244 = vst [vmem:[%s202 + $0xa0] sm:$0xff] %v243
                %v245 = vld [vmem:[%s201 + $0x128] sm:$0xff]
                %246 = vst [vmem:[%s202 + $0xa8] sm:$0xff] %v245
                %v247 = vld [vmem:[%s201 + $0x130] sm:$0xff]
                %248 = vst [vmem:[%s202 + $0xb0] sm:$0xff] %v247
                %v249 = vld [vmem:[%s201 + $0x138] sm:$0xff]
                %250 = vst [vmem:[%s202 + $0xb8] sm:$0xff] %v249
                %v251 = vld [vmem:[%s201 + $0x140] sm:$0xff]
                %252 = vst [vmem:[%s202 + $0xc0] sm:$0xff] %v251
                %v253 = vld [vmem:[%s201 + $0x148] sm:$0xff]
                %254 = vst [vmem:[%s202 + $0xc8] sm:$0xff] %v253
                %v255 = vld [vmem:[%s201 + $0x150] sm:$0xff]
                %256 = vst [vmem:[%s202 + $0xd0] sm:$0xff] %v255
                %v257 = vld [vmem:[%s201 + $0x158] sm:$0xff]
                %258 = vst [vmem:[%s202 + $0xd8] sm:$0xff] %v257
                %v259 = vld [vmem:[%s201 + $0x160] sm:$0xff]
                %260 = vst [vmem:[%s202 + $0xe0] sm:$0xff] %v259
                %v261 = vld [vmem:[%s201 + $0x168] sm:$0xff]
                %262 = vst [vmem:[%s202 + $0xe8] sm:$0xff] %v261
                %v263 = vld [vmem:[%s201 + $0x170] sm:$0xff]
                %264 = vst [vmem:[%s202 + $0xf0] sm:$0xff] %v263
                %v265 = vld [vmem:[%s201 + $0x178] sm:$0xff]
                %266 = vst [vmem:[%s202 + $0xf8] sm:$0xff] %v265
                %v267 = vld [vmem:[%s201 + $0x200] sm:$0xff]
                %268 = vst [vmem:[%s202 + $0x100] sm:$0xff] %v267
                %v269 = vld [vmem:[%s201 + $0x208] sm:$0xff]
                %270 = vst [vmem:[%s202 + $0x108] sm:$0xff] %v269
                %v271 = vld [vmem:[%s201 + $0x210] sm:$0xff]
                %272 = vst [vmem:[%s202 + $0x110] sm:$0xff] %v271
                %v273 = vld [vmem:[%s201 + $0x218] sm:$0xff]
                %274 = vst [vmem:[%s202 + $0x118] sm:$0xff] %v273
                %v275 = vld [vmem:[%s201 + $0x220] sm:$0xff]
                %276 = vst [vmem:[%s202 + $0x120] sm:$0xff] %v275
                %v277 = vld [vmem:[%s201 + $0x228] sm:$0xff]
                %278 = vst [vmem:[%s202 + $0x128] sm:$0xff] %v277
                %v279 = vld [vmem:[%s201 + $0x230] sm:$0xff]
                %280 = vst [vmem:[%s202 + $0x130] sm:$0xff] %v279
                %v281 = vld [vmem:[%s201 + $0x238] sm:$0xff]
                %282 = vst [vmem:[%s202 + $0x138] sm:$0xff] %v281
                %v283 = vld [vmem:[%s201 + $0x240] sm:$0xff]
                %284 = vst [vmem:[%s202 + $0x140] sm:$0xff] %v283
                %v285 = vld [vmem:[%s201 + $0x248] sm:$0xff]
                %286 = vst [vmem:[%s202 + $0x148] sm:$0xff] %v285
                %v287 = vld [vmem:[%s201 + $0x250] sm:$0xff]
                %288 = vst [vmem:[%s202 + $0x150] sm:$0xff] %v287
                %v289 = vld [vmem:[%s201 + $0x258] sm:$0xff]
                %290 = vst [vmem:[%s202 + $0x158] sm:$0xff] %v289
                %v291 = vld [vmem:[%s201 + $0x260] sm:$0xff]
                %292 = vst [vmem:[%s202 + $0x160] sm:$0xff] %v291
                %v293 = vld [vmem:[%s201 + $0x268] sm:$0xff]
                %294 = vst [vmem:[%s202 + $0x168] sm:$0xff] %v293
                %v295 = vld [vmem:[%s201 + $0x270] sm:$0xff]
                %296 = vst [vmem:[%s202 + $0x170] sm:$0xff] %v295
                %v297 = vld [vmem:[%s201 + $0x278] sm:$0xff]
                %298 = vst [vmem:[%s202 + $0x178] sm:$0xff] %v297
                %v299 = vld [vmem:[%s201 + $0x300] sm:$0xff]
                %300 = vst [vmem:[%s202 + $0x180] sm:$0xff] %v299
                %v301 = vld [vmem:[%s201 + $0x308] sm:$0xff]
                %302 = vst [vmem:[%s202 + $0x188] sm:$0xff] %v301
                %v303 = vld [vmem:[%s201 + $0x310] sm:$0xff]
                %304 = vst [vmem:[%s202 + $0x190] sm:$0xff] %v303
                %v305 = vld [vmem:[%s201 + $0x318] sm:$0xff]
                %306 = vst [vmem:[%s202 + $0x198] sm:$0xff] %v305
                %v307 = vld [vmem:[%s201 + $0x320] sm:$0xff]
                %308 = vst [vmem:[%s202 + $0x1a0] sm:$0xff] %v307
                %v309 = vld [vmem:[%s201 + $0x328] sm:$0xff]
                %310 = vst [vmem:[%s202 + $0x1a8] sm:$0xff] %v309
                %v311 = vld [vmem:[%s201 + $0x330] sm:$0xff]
                %312 = vst [vmem:[%s202 + $0x1b0] sm:$0xff] %v311
                %v313 = vld [vmem:[%s201 + $0x338] sm:$0xff]
                %314 = vst [vmem:[%s202 + $0x1b8] sm:$0xff] %v313
                %v315 = vld [vmem:[%s201 + $0x340] sm:$0xff]
                %316 = vst [vmem:[%s202 + $0x1c0] sm:$0xff] %v315
                %v317 = vld [vmem:[%s201 + $0x348] sm:$0xff]
                %318 = vst [vmem:[%s202 + $0x1c8] sm:$0xff] %v317
                %v319 = vld [vmem:[%s201 + $0x350] sm:$0xff]
                %320 = vst [vmem:[%s202 + $0x1d0] sm:$0xff] %v319
                %v321 = vld [vmem:[%s201 + $0x358] sm:$0xff]
                %322 = vst [vmem:[%s202 + $0x1d8] sm:$0xff] %v321
                %v323 = vld [vmem:[%s201 + $0x360] sm:$0xff]
                %324 = vst [vmem:[%s202 + $0x1e0] sm:$0xff] %v323
                %v325 = vld [vmem:[%s201 + $0x368] sm:$0xff]
                %326 = vst [vmem:[%s202 + $0x1e8] sm:$0xff] %v325
                %v327 = vld [vmem:[%s201 + $0x370] sm:$0xff]
                %328 = vst [vmem:[%s202 + $0x1f0] sm:$0xff] %v327
                %v329 = vld [vmem:[%s201 + $0x378] sm:$0xff]
                %330 = vst [vmem:[%s202 + $0x1f8] sm:$0xff] %v329
              $region49: #{mi_net_forward.1} parent=43 // loop_footer
                %s200 = sadd.s32 1, %s196
              $region50: #{mi_net_forward.1} parent=43 // loop_footer_branch
                %195 = sbr.rel target = $region46
              $region51: #{mi_net_forward.1} parent=43 // loop_exit
                _
            $region44: #{mi_net_forward.1} parent=39 // pred_fallthru
              _
            // Predicated region
            $region52: #{mi_net_forward.1} parent=39 // pred_check
              _
            $region53: #{mi_net_forward.1} parent=39 // pred_check_branch
              %332 = sbr.rel target = $region55
            $region54: #{mi_net_forward.1} parent=39 // pred_region
              _
            $region55: #{mi_net_forward.1} parent=39 // pred_fallthru
              _
          $region40: #{mi_net_forward.1} parent=35 // pred_fallthru
            _
          %333 = vnop
        $region36: #{mi_net_forward.1} parent=31 // pred_fallthru
          _
      $region32: #{mi_net_forward.1} parent=5 // pred_fallthru
        _
      %p334 = scmp.le.s32.totalorder 1, %s14
      %p335 = scmp.lt.s32.totalorder %s14, 3
      %p336 = pnand %p334, %p335
      %p337 = pneg %p336
      // Predicated region
      $region56: #{mi_net_forward.1} parent=5 // pred_check
        _
      $region57: #{mi_net_forward.1} parent=5 // pred_check_branch
        %339 = sbr.rel (%p336) target = $region59
      $region58: #{mi_net_forward.1} parent=5 // pred_region
        %s340 = ssub.s32 %s14, 1
        %s341 = sand.u32 %s27, 1
        %s342 = sand.u32 %s27, 1
        %s343 = smul.addr %s342, 512
        %s344 = scalar_lea.vmem [#allocation2], %s343
        // Predicated region
        $region60: #{mi_net_forward.1} parent=58 // pred_check
          %p345 = pneg %p40
        $region61: #{mi_net_forward.1} parent=58 // pred_check_branch
          %347 = sbr.rel (%p345) target = $region63
        $region62: #{mi_net_forward.1} parent=58 // pred_region
          _
        $region63: #{mi_net_forward.1} parent=58 // pred_fallthru
          _
        %s348 = sand.u32 %s27, 1
        %s349 = sand.u32 %s27, 1
        %s350 = smul.addr %s349, 512
        %s351 = scalar_lea.vmem [#allocation2], %s350
        %p352 = pneg %p40
        %p353 = pneg %p37
        %p354 = pneg %p61
        %p355 = pneg %p58
        %p356 = pneg %p82
        %p357 = pneg %p79
        %p358 = pneg %p103
        %p359 = pneg %p100
        %p360 = pneg %p124
        %p361 = pneg %p121
        %p362 = pneg %p150
        %p363 = pneg %p147
        %s364 = sand.u32 %s137, 1
        %s365 = scalar_lea.sflag [#allocation4], %s364
        %s366 = sand.u32 %s137, 1
        %s367 = smul.addr %s366, 4
        %s368 = scalar_lea.vmem [#allocation3], %s367
        %s369 = smul.u32 32, %s19
        %s370 = smul.u32 4, %s19
        %v372 = vld [vmem:[%s344] sm:$0xff]
        %v373 = vld [vmem:[%s344 + $0x8] sm:$0xff]
        %v374 = vld [vmem:[%s344 + $0x10] sm:$0xff]
        %v375 = vld [vmem:[%s344 + $0x18] sm:$0xff]
        %v376 = vld [vmem:[%s344 + $0x20] sm:$0xff]
        %v377 = vld [vmem:[%s344 + $0x28] sm:$0xff]
        %v378 = vld [vmem:[%s344 + $0x30] sm:$0xff]
        %v379 = vld [vmem:[%s344 + $0x38] sm:$0xff]
        %v380 = vld [vmem:[%s344 + $0x40] sm:$0xff]
        %v381 = vld [vmem:[%s344 + $0x48] sm:$0xff]
        %v382 = vld [vmem:[%s344 + $0x50] sm:$0xff]
        %v383 = vld [vmem:[%s344 + $0x58] sm:$0xff]
        %v384 = vld [vmem:[%s344 + $0x60] sm:$0xff]
        %v385 = vld [vmem:[%s344 + $0x68] sm:$0xff]
        %v386 = vld [vmem:[%s344 + $0x70] sm:$0xff]
        %v387 = vld [vmem:[%s344 + $0x78] sm:$0xff]
        %v388 = vld [vmem:[%s344 + $0x80] sm:$0xff]
        %v389 = vld [vmem:[%s344 + $0x88] sm:$0xff]
        %v390 = vld [vmem:[%s344 + $0x90] sm:$0xff]
        %v391 = vld [vmem:[%s344 + $0x98] sm:$0xff]
        %v392 = vld [vmem:[%s344 + $0xa0] sm:$0xff]
        %v393 = vld [vmem:[%s344 + $0xa8] sm:$0xff]
        %v394 = vld [vmem:[%s344 + $0xb0] sm:$0xff]
        %v395 = vld [vmem:[%s344 + $0xb8] sm:$0xff]
        %v396 = vld [vmem:[%s344 + $0xc0] sm:$0xff]
        %v397 = vld [vmem:[%s344 + $0xc8] sm:$0xff]
        %v398 = vld [vmem:[%s344 + $0xd0] sm:$0xff]
        %v399 = vld [vmem:[%s344 + $0xd8] sm:$0xff]
        %v400 = vld [vmem:[%s344 + $0xe0] sm:$0xff]
        %v401 = vld [vmem:[%s344 + $0xe8] sm:$0xff]
        %v402 = vld [vmem:[%s344 + $0xf0] sm:$0xff]
        %v403 = vld [vmem:[%s344 + $0xf8] sm:$0xff]
        %v404 = vld [vmem:[%s344 + $0x100] sm:$0xff]
        %v405 = vld [vmem:[%s344 + $0x108] sm:$0xff]
        %v406 = vld [vmem:[%s344 + $0x110] sm:$0xff]
        %v407 = vld [vmem:[%s344 + $0x118] sm:$0xff]
        %v408 = vld [vmem:[%s344 + $0x120] sm:$0xff]
        %v409 = vld [vmem:[%s344 + $0x128] sm:$0xff]
        %v410 = vld [vmem:[%s344 + $0x130] sm:$0xff]
        %v411 = vld [vmem:[%s344 + $0x138] sm:$0xff]
        %v412 = vld [vmem:[%s344 + $0x140] sm:$0xff]
        %v413 = vld [vmem:[%s344 + $0x148] sm:$0xff]
        %v414 = vld [vmem:[%s344 + $0x150] sm:$0xff]
        %v415 = vld [vmem:[%s344 + $0x158] sm:$0xff]
        %v416 = vld [vmem:[%s344 + $0x160] sm:$0xff]
        %v417 = vld [vmem:[%s344 + $0x168] sm:$0xff]
        %v418 = vld [vmem:[%s344 + $0x170] sm:$0xff]
        %v419 = vld [vmem:[%s344 + $0x178] sm:$0xff]
        %v420 = vld [vmem:[%s344 + $0x180] sm:$0xff]
        %v421 = vld [vmem:[%s344 + $0x188] sm:$0xff]
        %v422 = vld [vmem:[%s344 + $0x190] sm:$0xff]
        %v423 = vld [vmem:[%s344 + $0x198] sm:$0xff]
        %v424 = vld [vmem:[%s344 + $0x1a0] sm:$0xff]
        %v425 = vld [vmem:[%s344 + $0x1a8] sm:$0xff]
        %v426 = vld [vmem:[%s344 + $0x1b0] sm:$0xff]
        %v427 = vld [vmem:[%s344 + $0x1b8] sm:$0xff]
        %v428 = vld [vmem:[%s344 + $0x1c0] sm:$0xff]
        %v429 = vld [vmem:[%s344 + $0x1c8] sm:$0xff]
        %v430 = vld [vmem:[%s344 + $0x1d0] sm:$0xff]
        %v431 = vld [vmem:[%s344 + $0x1d8] sm:$0xff]
        %v432 = vld [vmem:[%s344 + $0x1e0] sm:$0xff]
        %v433 = vld [vmem:[%s344 + $0x1e8] sm:$0xff]
        %v434 = vld [vmem:[%s344 + $0x1f0] sm:$0xff]
        %v435 = vld [vmem:[%s344 + $0x1f8] sm:$0xff]
        %v436 = vld [vmem:[%s1] sm:$0xf]
        %v437 = vld [vmem:[%s1 + $0x4] sm:$0xf]
        %v438 = vld [vmem:[%s1 + $0x8] sm:$0xf]
        %v439 = vld [vmem:[%s1 + $0xc] sm:$0xf]
        %v440 = vld [vmem:[%s1 + $0x10] sm:$0xf]
        %v441 = vld [vmem:[%s1 + $0x14] sm:$0xf]
        %v442 = vld [vmem:[%s1 + $0x18] sm:$0xf]
        %v443 = vld [vmem:[%s1 + $0x1c] sm:$0xf]
        %v444 = vld [vmem:[%s1 + $0x20] sm:$0xf]
        %v445 = vld [vmem:[%s1 + $0x24] sm:$0xf]
        %v446 = vld [vmem:[%s1 + $0x28] sm:$0xf]
        %v447 = vld [vmem:[%s1 + $0x2c] sm:$0xf]
        %v448 = vld [vmem:[%s1 + $0x30] sm:$0xf]
        %v449 = vld [vmem:[%s1 + $0x34] sm:$0xf]
        %v450 = vld [vmem:[%s1 + $0x38] sm:$0xf]
        %v451 = vld [vmem:[%s1 + $0x3c] sm:$0xf]
        %v452 = vld [vmem:[%s1 + $0x40] sm:$0xf]
        %v453 = vld [vmem:[%s1 + $0x44] sm:$0xf]
        %v454 = vld [vmem:[%s1 + $0x48] sm:$0xf]
        %v455 = vld [vmem:[%s1 + $0x4c] sm:$0xf]
        %v456 = vld [vmem:[%s1 + $0x50] sm:$0xf]
        %v457 = vld [vmem:[%s1 + $0x54] sm:$0xf]
        %v458 = vld [vmem:[%s1 + $0x58] sm:$0xf]
        %v459 = vld [vmem:[%s1 + $0x5c] sm:$0xf]
        %v460 = vld [vmem:[%s1 + $0x60] sm:$0xf]
        %v461 = vld [vmem:[%s1 + $0x64] sm:$0xf]
        %v462 = vld [vmem:[%s1 + $0x68] sm:$0xf]
        %v463 = vld [vmem:[%s1 + $0x6c] sm:$0xf]
        %v464 = vld [vmem:[%s1 + $0x70] sm:$0xf]
        %v465 = vld [vmem:[%s1 + $0x74] sm:$0xf]
        %v466 = vld [vmem:[%s1 + $0x78] sm:$0xf]
        %v467 = vld [vmem:[%s1 + $0x7c] sm:$0xf]
        %v500 = vunpack.c.l.b16 %v436
        %v501 = vunpack.c.l.b16 %v437
        %v502 = vunpack.c.l.b16 %v438
        %v503 = vunpack.c.l.b16 %v439
        %v504 = vunpack.c.l.b16 %v440
        %v505 = vunpack.c.l.b16 %v441
        %v506 = vunpack.c.l.b16 %v442
        %v507 = vunpack.c.l.b16 %v443
        %v508 = vunpack.c.l.b16 %v444
        %v509 = vunpack.c.l.b16 %v445
        %v510 = vunpack.c.l.b16 %v446
        %v511 = vunpack.c.l.b16 %v447
        %v512 = vunpack.c.l.b16 %v448
        %v513 = vunpack.c.l.b16 %v449
        %v514 = vunpack.c.l.b16 %v450
        %v515 = vunpack.c.l.b16 %v451
        %v516 = vunpack.c.l.b16 %v452
        %v517 = vunpack.c.l.b16 %v453
        %v518 = vunpack.c.l.b16 %v454
        %v519 = vunpack.c.l.b16 %v455
        %v520 = vunpack.c.l.b16 %v456
        %v521 = vunpack.c.l.b16 %v457
        %v522 = vunpack.c.l.b16 %v458
        %v523 = vunpack.c.l.b16 %v459
        %v524 = vunpack.c.l.b16 %v460
        %v525 = vunpack.c.l.b16 %v461
        %v526 = vunpack.c.l.b16 %v462
        %v527 = vunpack.c.l.b16 %v463
        %v528 = vunpack.c.l.b16 %v464
        %v529 = vunpack.c.l.b16 %v465
        %v530 = vunpack.c.l.b16 %v466
        %v531 = vunpack.c.l.b16 %v467
        %v532 = vpack.c.b16 %v501, %v500
        %v533 = vpack.c.b16 %v503, %v502
        %v534 = vpack.c.b16 %v505, %v504
        %v535 = vpack.c.b16 %v507, %v506
        %v536 = vpack.c.b16 %v509, %v508
        %v537 = vpack.c.b16 %v511, %v510
        %v538 = vpack.c.b16 %v513, %v512
        %v539 = vpack.c.b16 %v515, %v514
        %v540 = vpack.c.b16 %v517, %v516
        %v541 = vpack.c.b16 %v519, %v518
        %v542 = vpack.c.b16 %v521, %v520
        %v543 = vpack.c.b16 %v523, %v522
        %v544 = vpack.c.b16 %v525, %v524
        %v545 = vpack.c.b16 %v527, %v526
        %v546 = vpack.c.b16 %v529, %v528
        %v547 = vpack.c.b16 %v531, %v530
        %v612 = vunpack.c.l.b16 %v372
        %v613 = vunpack.c.h.b16 %v372
        %v614 = vunpack.c.l.b16 %v373
        %v615 = vunpack.c.h.b16 %v373
        %v616 = vunpack.c.l.b16 %v374
        %v617 = vunpack.c.h.b16 %v374
        %v618 = vunpack.c.l.b16 %v375
        %v619 = vunpack.c.h.b16 %v375
        %v620 = vunpack.c.l.b16 %v376
        %v621 = vunpack.c.h.b16 %v376
        %v622 = vunpack.c.l.b16 %v377
        %v623 = vunpack.c.h.b16 %v377
        %v624 = vunpack.c.l.b16 %v378
        %v625 = vunpack.c.h.b16 %v378
        %v626 = vunpack.c.l.b16 %v379
        %v627 = vunpack.c.h.b16 %v379
        %v628 = vunpack.c.l.b16 %v380
        %v629 = vunpack.c.h.b16 %v380
        %v630 = vunpack.c.l.b16 %v381
        %v631 = vunpack.c.h.b16 %v381
        %v632 = vunpack.c.l.b16 %v382
        %v633 = vunpack.c.h.b16 %v382
        %v634 = vunpack.c.l.b16 %v383
        %v635 = vunpack.c.h.b16 %v383
        %v636 = vunpack.c.l.b16 %v384
        %v637 = vunpack.c.h.b16 %v384
        %v638 = vunpack.c.l.b16 %v385
        %v639 = vunpack.c.h.b16 %v385
        %v640 = vunpack.c.l.b16 %v386
        %v641 = vunpack.c.h.b16 %v386
        %v642 = vunpack.c.l.b16 %v387
        %v643 = vunpack.c.h.b16 %v387
        %v644 = vunpack.c.l.b16 %v388
        %v645 = vunpack.c.h.b16 %v388
        %v646 = vunpack.c.l.b16 %v389
        %v647 = vunpack.c.h.b16 %v389
        %v648 = vunpack.c.l.b16 %v390
        %v649 = vunpack.c.h.b16 %v390
        %v650 = vunpack.c.l.b16 %v391
        %v651 = vunpack.c.h.b16 %v391
        %v652 = vunpack.c.l.b16 %v392
        %v653 = vunpack.c.h.b16 %v392
        %v654 = vunpack.c.l.b16 %v393
        %v655 = vunpack.c.h.b16 %v393
        %v656 = vunpack.c.l.b16 %v394
        %v657 = vunpack.c.h.b16 %v394
        %v658 = vunpack.c.l.b16 %v395
        %v659 = vunpack.c.h.b16 %v395
        %v660 = vunpack.c.l.b16 %v396
        %v661 = vunpack.c.h.b16 %v396
        %v662 = vunpack.c.l.b16 %v397
        %v663 = vunpack.c.h.b16 %v397
        %v664 = vunpack.c.l.b16 %v398
        %v665 = vunpack.c.h.b16 %v398
        %v666 = vunpack.c.l.b16 %v399
        %v667 = vunpack.c.h.b16 %v399
        %v668 = vunpack.c.l.b16 %v400
        %v669 = vunpack.c.h.b16 %v400
        %v670 = vunpack.c.l.b16 %v401
        %v671 = vunpack.c.h.b16 %v401
        %v672 = vunpack.c.l.b16 %v402
        %v673 = vunpack.c.h.b16 %v402
        %v674 = vunpack.c.l.b16 %v403
        %v675 = vunpack.c.h.b16 %v403
        %v676 = vunpack.c.l.b16 %v404
        %v677 = vunpack.c.h.b16 %v404
        %v678 = vunpack.c.l.b16 %v405
        %v679 = vunpack.c.h.b16 %v405
        %v680 = vunpack.c.l.b16 %v406
        %v681 = vunpack.c.h.b16 %v406
        %v682 = vunpack.c.l.b16 %v407
        %v683 = vunpack.c.h.b16 %v407
        %v684 = vunpack.c.l.b16 %v408
        %v685 = vunpack.c.h.b16 %v408
        %v686 = vunpack.c.l.b16 %v409
        %v687 = vunpack.c.h.b16 %v409
        %v688 = vunpack.c.l.b16 %v410
        %v689 = vunpack.c.h.b16 %v410
        %v690 = vunpack.c.l.b16 %v411
        %v691 = vunpack.c.h.b16 %v411
        %v692 = vunpack.c.l.b16 %v412
        %v693 = vunpack.c.h.b16 %v412
        %v694 = vunpack.c.l.b16 %v413
        %v695 = vunpack.c.h.b16 %v413
        %v696 = vunpack.c.l.b16 %v414
        %v697 = vunpack.c.h.b16 %v414
        %v698 = vunpack.c.l.b16 %v415
        %v699 = vunpack.c.h.b16 %v415
        %v700 = vunpack.c.l.b16 %v416
        %v701 = vunpack.c.h.b16 %v416
        %v702 = vunpack.c.l.b16 %v417
        %v703 = vunpack.c.h.b16 %v417
        %v704 = vunpack.c.l.b16 %v418
        %v705 = vunpack.c.h.b16 %v418
        %v706 = vunpack.c.l.b16 %v419
        %v707 = vunpack.c.h.b16 %v419
        %v708 = vunpack.c.l.b16 %v420
        %v709 = vunpack.c.h.b16 %v420
        %v710 = vunpack.c.l.b16 %v421
        %v711 = vunpack.c.h.b16 %v421
        %v712 = vunpack.c.l.b16 %v422
        %v713 = vunpack.c.h.b16 %v422
        %v714 = vunpack.c.l.b16 %v423
        %v715 = vunpack.c.h.b16 %v423
        %v716 = vunpack.c.l.b16 %v424
        %v717 = vunpack.c.h.b16 %v424
        %v718 = vunpack.c.l.b16 %v425
        %v719 = vunpack.c.h.b16 %v425
        %v720 = vunpack.c.l.b16 %v426
        %v721 = vunpack.c.h.b16 %v426
        %v722 = vunpack.c.l.b16 %v427
        %v723 = vunpack.c.h.b16 %v427
        %v724 = vunpack.c.l.b16 %v428
        %v725 = vunpack.c.h.b16 %v428
        %v726 = vunpack.c.l.b16 %v429
        %v727 = vunpack.c.h.b16 %v429
        %v728 = vunpack.c.l.b16 %v430
        %v729 = vunpack.c.h.b16 %v430
        %v730 = vunpack.c.l.b16 %v431
        %v731 = vunpack.c.h.b16 %v431
        %v732 = vunpack.c.l.b16 %v432
        %v733 = vunpack.c.h.b16 %v432
        %v734 = vunpack.c.l.b16 %v433
        %v735 = vunpack.c.h.b16 %v433
        %v736 = vunpack.c.l.b16 %v434
        %v737 = vunpack.c.h.b16 %v434
        %v738 = vunpack.c.l.b16 %v435
        %v739 = vunpack.c.h.b16 %v435
        %v740 = vpack.c.b16 %v644, %v612
        %v741 = vpack.c.b16 %v645, %v613
        %v742 = vpack.c.b16 %v646, %v614
        %v743 = vpack.c.b16 %v647, %v615
        %v744 = vpack.c.b16 %v648, %v616
        %v745 = vpack.c.b16 %v649, %v617
        %v746 = vpack.c.b16 %v650, %v618
        %v747 = vpack.c.b16 %v651, %v619
        %v748 = vpack.c.b16 %v652, %v620
        %v749 = vpack.c.b16 %v653, %v621
        %v750 = vpack.c.b16 %v654, %v622
        %v751 = vpack.c.b16 %v655, %v623
        %v752 = vpack.c.b16 %v656, %v624
        %v753 = vpack.c.b16 %v657, %v625
        %v754 = vpack.c.b16 %v658, %v626
        %v755 = vpack.c.b16 %v659, %v627
        %v756 = vpack.c.b16 %v660, %v628
        %v757 = vpack.c.b16 %v661, %v629
        %v758 = vpack.c.b16 %v662, %v630
        %v759 = vpack.c.b16 %v663, %v631
        %v760 = vpack.c.b16 %v664, %v632
        %v761 = vpack.c.b16 %v665, %v633
        %v762 = vpack.c.b16 %v666, %v634
        %v763 = vpack.c.b16 %v667, %v635
        %v764 = vpack.c.b16 %v668, %v636
        %v765 = vpack.c.b16 %v669, %v637
        %v766 = vpack.c.b16 %v670, %v638
        %v767 = vpack.c.b16 %v671, %v639
        %v768 = vpack.c.b16 %v672, %v640
        %v769 = vpack.c.b16 %v673, %v641
        %v770 = vpack.c.b16 %v674, %v642
        %v771 = vpack.c.b16 %v675, %v643
        %v772 = vpack.c.b16 %v708, %v676
        %v773 = vpack.c.b16 %v709, %v677
        %v774 = vpack.c.b16 %v710, %v678
        %v775 = vpack.c.b16 %v711, %v679
        %v776 = vpack.c.b16 %v712, %v680
        %v777 = vpack.c.b16 %v713, %v681
        %v778 = vpack.c.b16 %v714, %v682
        %v779 = vpack.c.b16 %v715, %v683
        %v780 = vpack.c.b16 %v716, %v684
        %v781 = vpack.c.b16 %v717, %v685
        %v782 = vpack.c.b16 %v718, %v686
        %v783 = vpack.c.b16 %v719, %v687
        %v784 = vpack.c.b16 %v720, %v688
        %v785 = vpack.c.b16 %v721, %v689
        %v786 = vpack.c.b16 %v722, %v690
        %v787 = vpack.c.b16 %v723, %v691
        %v788 = vpack.c.b16 %v724, %v692
        %v789 = vpack.c.b16 %v725, %v693
        %v790 = vpack.c.b16 %v726, %v694
        %v791 = vpack.c.b16 %v727, %v695
        %v792 = vpack.c.b16 %v728, %v696
        %v793 = vpack.c.b16 %v729, %v697
        %v794 = vpack.c.b16 %v730, %v698
        %v795 = vpack.c.b16 %v731, %v699
        %v796 = vpack.c.b16 %v732, %v700
        %v797 = vpack.c.b16 %v733, %v701
        %v798 = vpack.c.b16 %v734, %v702
        %v799 = vpack.c.b16 %v735, %v703
        %v800 = vpack.c.b16 %v736, %v704
        %v801 = vpack.c.b16 %v737, %v705
        %v802 = vpack.c.b16 %v738, %v706
        %v803 = vpack.c.b16 %v739, %v707
        %vm868 = vcmask 261120
        %v870 = vsel %vm868, %v532, 0
        %v873 = vsel %vm868, %v533, 0
        %v876 = vsel %vm868, %v534, 0
        %v879 = vsel %vm868, %v535, 0
        %v882 = vsel %vm868, %v536, 0
        %v885 = vsel %vm868, %v537, 0
        %v888 = vsel %vm868, %v538, 0
        %v891 = vsel %vm868, %v539, 0
        %v894 = vsel %vm868, %v540, 0
        %v897 = vsel %vm868, %v541, 0
        %v900 = vsel %vm868, %v542, 0
        %v903 = vsel %vm868, %v543, 0
        %v906 = vsel %vm868, %v544, 0
        %v909 = vsel %vm868, %v545, 0
        %v912 = vsel %vm868, %v546, 0
        %v915 = vsel %vm868, %v547, 0
        %917 = vmatprep.subr.bf16.mxu0 %v741
        %918 = vmatpush1.bf16.msra.mxu0 %v740
        %919 = vmatprep.subr.bf16.mxu0 %v773
        %920 = vmatpush1.bf16.msra.mxu0 %v772
        %921 = vmatprep.subr.bf16.mxu0 0
        %922 = vmatpush1.bf16.msra.mxu0 0
        %923 = vmatprep.subr.bf16.mxu0 0
        %924 = vmatpush1.bf16.msra.mxu0 0
        %925 = vmatprep.subr.bf16.mxu0 0
        %926 = vmatpush1.bf16.msra.mxu0 0
        %927 = vmatprep.subr.bf16.mxu0 0
        %928 = vmatpush1.bf16.msra.mxu0 0
        %929 = vmatprep.subr.bf16.mxu0 0
        %930 = vmatpush1.bf16.msra.mxu0 0
        %931 = vmatprep.subr.bf16.mxu0 0
        %932 = vmatpush1.bf16.msra.mxu0 0
        %933 = vmatprep.subr.bf16.mxu0 0
        %934 = vmatpush1.bf16.msra.mxu0 0
        %935 = vmatprep.subr.bf16.mxu0 0
        %936 = vmatpush1.bf16.msra.mxu0 0
        %937 = vmatprep.subr.bf16.mxu0 0
        %938 = vmatpush1.bf16.msra.mxu0 0
        %939 = vmatprep.subr.bf16.mxu0 0
        %940 = vmatpush1.bf16.msra.mxu0 0
        %941 = vmatprep.subr.bf16.mxu0 0
        %942 = vmatpush1.bf16.msra.mxu0 0
        %943 = vmatprep.subr.bf16.mxu0 0
        %944 = vmatpush1.bf16.msra.mxu0 0
        %945 = vmatprep.subr.bf16.mxu0 0
        %946 = vmatpush1.bf16.msra.mxu0 0
        %947 = vmatprep.subr.bf16.mxu0 0
        %948 = vmatpush1.bf16.msra.mxu0 0
        %949 = vmatprep.mubr.bf16.mxu0 0
        %950 = vmatmul.mubr.bf16.gmra.mrb[0].mxu0 %v870
        %v951 = vpop.f32.mrb[0].mxu0
        %v952 = vadd.f32 0.0, %v951
        %v953 = vpop.f32.mrb[0].mxu0
        %v954 = vadd.f32 0.0, %v953
        %v955 = vpop.f32.mrb[0].mxu0
        %v956 = vadd.f32 0.0, %v955
        %v957 = vpop.f32.mrb[0].mxu0
        %v958 = vadd.f32 0.0, %v957
        %959 = vmatprep.mubr.bf16.mxu0 0
        %960 = vmatmul.mubr.bf16.gmra.mrb[0].mxu0 %v873
        %v961 = vpop.f32.mrb[0].mxu0
        %v962 = vadd.f32 0.0, %v961
        %v963 = vpop.f32.mrb[0].mxu0
        %v964 = vadd.f32 0.0, %v963
        %v965 = vpop.f32.mrb[0].mxu0
        %v966 = vadd.f32 0.0, %v965
        %v967 = vpop.f32.mrb[0].mxu0
        %v968 = vadd.f32 0.0, %v967
        %969 = vmatprep.mubr.bf16.mxu0 0
        %970 = vmatmul.mubr.bf16.gmra.mrb[0].mxu0 %v876
        %v971 = vpop.f32.mrb[0].mxu0
        %v972 = vadd.f32 0.0, %v971
        %v973 = vpop.f32.mrb[0].mxu0
        %v974 = vadd.f32 0.0, %v973
        %v975 = vpop.f32.mrb[0].mxu0
        %v976 = vadd.f32 0.0, %v975
        %v977 = vpop.f32.mrb[0].mxu0
        %v978 = vadd.f32 0.0, %v977
        %979 = vmatprep.mubr.bf16.mxu0 0
        %980 = vmatmul.mubr.bf16.gmra.mrb[0].mxu0 %v879
        %v981 = vpop.f32.mrb[0].mxu0
        %v982 = vadd.f32 0.0, %v981
        %v983 = vpop.f32.mrb[0].mxu0
        %v984 = vadd.f32 0.0, %v983
        %v985 = vpop.f32.mrb[0].mxu0
        %v986 = vadd.f32 0.0, %v985
        %v987 = vpop.f32.mrb[0].mxu0
        %v988 = vadd.f32 0.0, %v987
        %989 = vmatprep.mubr.bf16.mxu0 0
        %990 = vmatmul.mubr.bf16.gmra.mrb[0].mxu0 %v882
        %v991 = vpop.f32.mrb[0].mxu0
        %v992 = vadd.f32 0.0, %v991
        %v993 = vpop.f32.mrb[0].mxu0
        %v994 = vadd.f32 0.0, %v993
        %v995 = vpop.f32.mrb[0].mxu0
        %v996 = vadd.f32 0.0, %v995
        %v997 = vpop.f32.mrb[0].mxu0
        %v998 = vadd.f32 0.0, %v997
        %999 = vmatprep.mubr.bf16.mxu0 0
        %1000 = vmatmul.mubr.bf16.gmra.mrb[0].mxu0 %v885
        %v1001 = vpop.f32.mrb[0].mxu0
        %v1002 = vadd.f32 0.0, %v1001
        %v1003 = vpop.f32.mrb[0].mxu0
        %v1004 = vadd.f32 0.0, %v1003
        %v1005 = vpop.f32.mrb[0].mxu0
        %v1006 = vadd.f32 0.0, %v1005
        %v1007 = vpop.f32.mrb[0].mxu0
        %v1008 = vadd.f32 0.0, %v1007
        %1009 = vmatprep.mubr.bf16.mxu0 0
        %1010 = vmatmul.mubr.bf16.gmra.mrb[0].mxu0 %v888
        %v1011 = vpop.f32.mrb[0].mxu0
        %v1012 = vadd.f32 0.0, %v1011
        %v1013 = vpop.f32.mrb[0].mxu0
        %v1014 = vadd.f32 0.0, %v1013
        %v1015 = vpop.f32.mrb[0].mxu0
        %v1016 = vadd.f32 0.0, %v1015
        %v1017 = vpop.f32.mrb[0].mxu0
        %v1018 = vadd.f32 0.0, %v1017
        %1019 = vmatprep.mubr.bf16.mxu0 0
        %1020 = vmatmul.mubr.bf16.gmra.mrb[0].mxu0 %v891
        %v1021 = vpop.f32.mrb[0].mxu0
        %v1022 = vadd.f32 0.0, %v1021
        %v1023 = vpop.f32.mrb[0].mxu0
        %v1024 = vadd.f32 0.0, %v1023
        %v1025 = vpop.f32.mrb[0].mxu0
        %v1026 = vadd.f32 0.0, %v1025
        %v1027 = vpop.f32.mrb[0].mxu0
        %v1028 = vadd.f32 0.0, %v1027
        %1029 = vmatprep.mubr.bf16.mxu0 0
        %1030 = vmatmul.mubr.bf16.gmra.mrb[0].mxu0 %v894
        %v1031 = vpop.f32.mrb[0].mxu0
        %v1032 = vadd.f32 0.0, %v1031
        %v1033 = vpop.f32.mrb[0].mxu0
        %v1034 = vadd.f32 0.0, %v1033
        %v1035 = vpop.f32.mrb[0].mxu0
        %v1036 = vadd.f32 0.0, %v1035
        %v1037 = vpop.f32.mrb[0].mxu0
        %v1038 = vadd.f32 0.0, %v1037
        %1039 = vmatprep.mubr.bf16.mxu0 0
        %1040 = vmatmul.mubr.bf16.gmra.mrb[0].mxu0 %v897
        %v1041 = vpop.f32.mrb[0].mxu0
        %v1042 = vadd.f32 0.0, %v1041
        %v1043 = vpop.f32.mrb[0].mxu0
        %v1044 = vadd.f32 0.0, %v1043
        %v1045 = vpop.f32.mrb[0].mxu0
        %v1046 = vadd.f32 0.0, %v1045
        %v1047 = vpop.f32.mrb[0].mxu0
        %v1048 = vadd.f32 0.0, %v1047
        %1049 = vmatprep.mubr.bf16.mxu0 0
        %1050 = vmatmul.mubr.bf16.gmra.mrb[0].mxu0 %v900
        %v1051 = vpop.f32.mrb[0].mxu0
        %v1052 = vadd.f32 0.0, %v1051
        %v1053 = vpop.f32.mrb[0].mxu0
        %v1054 = vadd.f32 0.0, %v1053
        %v1055 = vpop.f32.mrb[0].mxu0
        %v1056 = vadd.f32 0.0, %v1055
        %v1057 = vpop.f32.mrb[0].mxu0
        %v1058 = vadd.f32 0.0, %v1057
        %1059 = vmatprep.mubr.bf16.mxu0 0
        %1060 = vmatmul.mubr.bf16.gmra.mrb[0].mxu0 %v903
        %v1061 = vpop.f32.mrb[0].mxu0
        %v1062 = vadd.f32 0.0, %v1061
        %v1063 = vpop.f32.mrb[0].mxu0
        %v1064 = vadd.f32 0.0, %v1063
        %v1065 = vpop.f32.mrb[0].mxu0
        %v1066 = vadd.f32 0.0, %v1065
        %v1067 = vpop.f32.mrb[0].mxu0
        %v1068 = vadd.f32 0.0, %v1067
        %1069 = vmatprep.mubr.bf16.mxu0 0
        %1070 = vmatmul.mubr.bf16.gmra.mrb[0].mxu0 %v906
        %v1071 = vpop.f32.mrb[0].mxu0
        %v1072 = vadd.f32 0.0, %v1071
        %v1073 = vpop.f32.mrb[0].mxu0
        %v1074 = vadd.f32 0.0, %v1073
        %v1075 = vpop.f32.mrb[0].mxu0
        %v1076 = vadd.f32 0.0, %v1075
        %v1077 = vpop.f32.mrb[0].mxu0
        %v1078 = vadd.f32 0.0, %v1077
        %1079 = vmatprep.mubr.bf16.mxu0 0
        %1080 = vmatmul.mubr.bf16.gmra.mrb[0].mxu0 %v909
        %v1081 = vpop.f32.mrb[0].mxu0
        %v1082 = vadd.f32 0.0, %v1081
        %v1083 = vpop.f32.mrb[0].mxu0
        %v1084 = vadd.f32 0.0, %v1083
        %v1085 = vpop.f32.mrb[0].mxu0
        %v1086 = vadd.f32 0.0, %v1085
        %v1087 = vpop.f32.mrb[0].mxu0
        %v1088 = vadd.f32 0.0, %v1087
        %1089 = vmatprep.mubr.bf16.mxu0 0
        %1090 = vmatmul.mubr.bf16.gmra.mrb[0].mxu0 %v912
        %v1091 = vpop.f32.mrb[0].mxu0
        %v1092 = vadd.f32 0.0, %v1091
        %v1093 = vpop.f32.mrb[0].mxu0
        %v1094 = vadd.f32 0.0, %v1093
        %v1095 = vpop.f32.mrb[0].mxu0
        %v1096 = vadd.f32 0.0, %v1095
        %v1097 = vpop.f32.mrb[0].mxu0
        %v1098 = vadd.f32 0.0, %v1097
        %1099 = vmatprep.mubr.bf16.mxu0 0
        %1100 = vmatmul.mubr.bf16.gmra.mrb[0].mxu0 %v915
        %v1101 = vpop.f32.mrb[0].mxu0
        %v1102 = vadd.f32 0.0, %v1101
        %v1103 = vpop.f32.mrb[0].mxu0
        %v1104 = vadd.f32 0.0, %v1103
        %v1105 = vpop.f32.mrb[0].mxu0
        %v1106 = vadd.f32 0.0, %v1105
        %v1107 = vpop.f32.mrb[0].mxu0
        %v1108 = vadd.f32 0.0, %v1107
        %1109 = vdwg.mxu0
        %1110 = vmatprep.subr.bf16.mxu0 %v743
        %1111 = vmatpush1.bf16.msra.mxu0 %v742
        %1112 = vmatprep.subr.bf16.mxu0 %v775
        %1113 = vmatpush1.bf16.msra.mxu0 %v774
        %1114 = vmatprep.subr.bf16.mxu0 0
        %1115 = vmatpush1.bf16.msra.mxu0 0
        %1116 = vmatprep.subr.bf16.mxu0 0
        %1117 = vmatpush1.bf16.msra.mxu0 0
        %1118 = vmatprep.subr.bf16.mxu0 0
        %1119 = vmatpush1.bf16.msra.mxu0 0
        %1120 = vmatprep.subr.bf16.mxu0 0
        %1121 = vmatpush1.bf16.msra.mxu0 0
        %1122 = vmatprep.subr.bf16.mxu0 0
        %1123 = vmatpush1.bf16.msra.mxu0 0
        %1124 = vmatprep.subr.bf16.mxu0 0
        %1125 = vmatpush1.bf16.msra.mxu0 0
        %1126 = vmatprep.subr.bf16.mxu0 0
        %1127 = vmatpush1.bf16.msra.mxu0 0
        %1128 = vmatprep.subr.bf16.mxu0 0
        %1129 = vmatpush1.bf16.msra.mxu0 0
        %1130 = vmatprep.subr.bf16.mxu0 0
        %1131 = vmatpush1.bf16.msra.mxu0 0
        %1132 = vmatprep.subr.bf16.mxu0 0
        %1133 = vmatpush1.bf16.msra.mxu0 0
        %1134 = vmatprep.subr.bf16.mxu0 0
        %1135 = vmatpush1.bf16.msra.mxu0 0
        %1136 = vmatprep.subr.bf16.mxu0 0
        %1137 = vmatpush1.bf16.msra.mxu0 0
        %1138 = vmatprep.subr.bf16.mxu0 0
        %1139 = vmatpush1.bf16.msra.mxu0 0
        %1140 = vmatprep.subr.bf16.mxu0 0
        %1141 = vmatpush1.bf16.msra.mxu0 0
        %1142 = vmatprep.mubr.bf16.mxu0 0
        %1143 = vmatmul.mubr.bf16.gmra.mrb[0].mxu0 %v870
        %v1144 = vpop.f32.mrb[0].mxu0
        %v1145 = vadd.f32 0.0, %v1144
        %v1146 = vpop.f32.mrb[0].mxu0
        %v1147 = vadd.f32 0.0, %v1146
        %v1148 = vpop.f32.mrb[0].mxu0
        %v1149 = vadd.f32 0.0, %v1148
        %v1150 = vpop.f32.mrb[0].mxu0
        %v1151 = vadd.f32 0.0, %v1150
        %1152 = vmatprep.mubr.bf16.mxu0 0
        %1153 = vmatmul.mubr.bf16.gmra.mrb[0].mxu0 %v873
        %v1154 = vpop.f32.mrb[0].mxu0
        %v1155 = vadd.f32 0.0, %v1154
        %v1156 = vpop.f32.mrb[0].mxu0
        %v1157 = vadd.f32 0.0, %v1156
        %v1158 = vpop.f32.mrb[0].mxu0
        %v1159 = vadd.f32 0.0, %v1158
        %v1160 = vpop.f32.mrb[0].mxu0
        %v1161 = vadd.f32 0.0, %v1160
        %1162 = vmatprep.mubr.bf16.mxu0 0
        %1163 = vmatmul.mubr.bf16.gmra.mrb[0].mxu0 %v876
        %v1164 = vpop.f32.mrb[0].mxu0
        %v1165 = vadd.f32 0.0, %v1164
        %v1166 = vpop.f32.mrb[0].mxu0
        %v1167 = vadd.f32 0.0, %v1166
        %v1168 = vpop.f32.mrb[0].mxu0
        %v1169 = vadd.f32 0.0, %v1168
        %v1170 = vpop.f32.mrb[0].mxu0
        %v1171 = vadd.f32 0.0, %v1170
        %1172 = vmatprep.mubr.bf16.mxu0 0
        %1173 = vmatmul.mubr.bf16.gmra.mrb[0].mxu0 %v879
        %v1174 = vpop.f32.mrb[0].mxu0
        %v1175 = vadd.f32 0.0, %v1174
        %v1176 = vpop.f32.mrb[0].mxu0
        %v1177 = vadd.f32 0.0, %v1176
        %v1178 = vpop.f32.mrb[0].mxu0
        %v1179 = vadd.f32 0.0, %v1178
        %v1180 = vpop.f32.mrb[0].mxu0
        %v1181 = vadd.f32 0.0, %v1180
        %1182 = vmatprep.mubr.bf16.mxu0 0
        %1183 = vmatmul.mubr.bf16.gmra.mrb[0].mxu0 %v882
        %v1184 = vpop.f32.mrb[0].mxu0
        %v1185 = vadd.f32 0.0, %v1184
        %v1186 = vpop.f32.mrb[0].mxu0
        %v1187 = vadd.f32 0.0, %v1186
        %v1188 = vpop.f32.mrb[0].mxu0
        %v1189 = vadd.f32 0.0, %v1188
        %v1190 = vpop.f32.mrb[0].mxu0
        %v1191 = vadd.f32 0.0, %v1190
        %1192 = vmatprep.mubr.bf16.mxu0 0
        %1193 = vmatmul.mubr.bf16.gmra.mrb[0].mxu0 %v885
        %v1194 = vpop.f32.mrb[0].mxu0
        %v1195 = vadd.f32 0.0, %v1194
        %v1196 = vpop.f32.mrb[0].mxu0
        %v1197 = vadd.f32 0.0, %v1196
        %v1198 = vpop.f32.mrb[0].mxu0
        %v1199 = vadd.f32 0.0, %v1198
        %v1200 = vpop.f32.mrb[0].mxu0
        %v1201 = vadd.f32 0.0, %v1200
        %1202 = vmatprep.mubr.bf16.mxu0 0
        %1203 = vmatmul.mubr.bf16.gmra.mrb[0].mxu0 %v888
        %v1204 = vpop.f32.mrb[0].mxu0
        %v1205 = vadd.f32 0.0, %v1204
        %v1206 = vpop.f32.mrb[0].mxu0
        %v1207 = vadd.f32 0.0, %v1206
        %v1208 = vpop.f32.mrb[0].mxu0
        %v1209 = vadd.f32 0.0, %v1208
        %v1210 = vpop.f32.mrb[0].mxu0
        %v1211 = vadd.f32 0.0, %v1210
        %1212 = vmatprep.mubr.bf16.mxu0 0
        %1213 = vmatmul.mubr.bf16.gmra.mrb[0].mxu0 %v891
        %v1214 = vpop.f32.mrb[0].mxu0
        %v1215 = vadd.f32 0.0, %v1214
        %v1216 = vpop.f32.mrb[0].mxu0
        %v1217 = vadd.f32 0.0, %v1216
        %v1218 = vpop.f32.mrb[0].mxu0
        %v1219 = vadd.f32 0.0, %v1218
        %v1220 = vpop.f32.mrb[0].mxu0
        %v1221 = vadd.f32 0.0, %v1220
        %1222 = vmatprep.mubr.bf16.mxu0 0
        %1223 = vmatmul.mubr.bf16.gmra.mrb[0].mxu0 %v894
        %v1224 = vpop.f32.mrb[0].mxu0
        %v1225 = vadd.f32 0.0, %v1224
        %v1226 = vpop.f32.mrb[0].mxu0
        %v1227 = vadd.f32 0.0, %v1226
        %v1228 = vpop.f32.mrb[0].mxu0
        %v1229 = vadd.f32 0.0, %v1228
        %v1230 = vpop.f32.mrb[0].mxu0
        %v1231 = vadd.f32 0.0, %v1230
        %1232 = vmatprep.mubr.bf16.mxu0 0
        %1233 = vmatmul.mubr.bf16.gmra.mrb[0].mxu0 %v897
        %v1234 = vpop.f32.mrb[0].mxu0
        %v1235 = vadd.f32 0.0, %v1234
        %v1236 = vpop.f32.mrb[0].mxu0
        %v1237 = vadd.f32 0.0, %v1236
        %v1238 = vpop.f32.mrb[0].mxu0
        %v1239 = vadd.f32 0.0, %v1238
        %v1240 = vpop.f32.mrb[0].mxu0
        %v1241 = vadd.f32 0.0, %v1240
        %1242 = vmatprep.mubr.bf16.mxu0 0
        %1243 = vmatmul.mubr.bf16.gmra.mrb[0].mxu0 %v900
        %v1244 = vpop.f32.mrb[0].mxu0
        %v1245 = vadd.f32 0.0, %v1244
        %v1246 = vpop.f32.mrb[0].mxu0
        %v1247 = vadd.f32 0.0, %v1246
        %v1248 = vpop.f32.mrb[0].mxu0
        %v1249 = vadd.f32 0.0, %v1248
        %v1250 = vpop.f32.mrb[0].mxu0
        %v1251 = vadd.f32 0.0, %v1250
        %1252 = vmatprep.mubr.bf16.mxu0 0
        %1253 = vmatmul.mubr.bf16.gmra.mrb[0].mxu0 %v903
        %v1254 = vpop.f32.mrb[0].mxu0
        %v1255 = vadd.f32 0.0, %v1254
        %v1256 = vpop.f32.mrb[0].mxu0
        %v1257 = vadd.f32 0.0, %v1256
        %v1258 = vpop.f32.mrb[0].mxu0
        %v1259 = vadd.f32 0.0, %v1258
        %v1260 = vpop.f32.mrb[0].mxu0
        %v1261 = vadd.f32 0.0, %v1260
        %1262 = vmatprep.mubr.bf16.mxu0 0
        %1263 = vmatmul.mubr.bf16.gmra.mrb[0].mxu0 %v906
        %v1264 = vpop.f32.mrb[0].mxu0
        %v1265 = vadd.f32 0.0, %v1264
        %v1266 = vpop.f32.mrb[0].mxu0
        %v1267 = vadd.f32 0.0, %v1266
        %v1268 = vpop.f32.mrb[0].mxu0
        %v1269 = vadd.f32 0.0, %v1268
        %v1270 = vpop.f32.mrb[0].mxu0
        %v1271 = vadd.f32 0.0, %v1270
        %1272 = vmatprep.mubr.bf16.mxu0 0
        %1273 = vmatmul.mubr.bf16.gmra.mrb[0].mxu0 %v909
        %v1274 = vpop.f32.mrb[0].mxu0
        %v1275 = vadd.f32 0.0, %v1274
        %v1276 = vpop.f32.mrb[0].mxu0
        %v1277 = vadd.f32 0.0, %v1276
        %v1278 = vpop.f32.mrb[0].mxu0
        %v1279 = vadd.f32 0.0, %v1278
        %v1280 = vpop.f32.mrb[0].mxu0
        %v1281 = vadd.f32 0.0, %v1280
        %1282 = vmatprep.mubr.bf16.mxu0 0
        %1283 = vmatmul.mubr.bf16.gmra.mrb[0].mxu0 %v912
        %v1284 = vpop.f32.mrb[0].mxu0
        %v1285 = vadd.f32 0.0, %v1284
        %v1286 = vpop.f32.mrb[0].mxu0
        %v1287 = vadd.f32 0.0, %v1286
        %v1288 = vpop.f32.mrb[0].mxu0
        %v1289 = vadd.f32 0.0, %v1288
        %v1290 = vpop.f32.mrb[0].mxu0
        %v1291 = vadd.f32 0.0, %v1290
        %1292 = vmatprep.mubr.bf16.mxu0 0
        %1293 = vmatmul.mubr.bf16.gmra.mrb[0].mxu0 %v915
        %v1294 = vpop.f32.mrb[0].mxu0
        %v1295 = vadd.f32 0.0, %v1294
        %v1296 = vpop.f32.mrb[0].mxu0
        %v1297 = vadd.f32 0.0, %v1296
        %v1298 = vpop.f32.mrb[0].mxu0
        %v1299 = vadd.f32 0.0, %v1298
        %v1300 = vpop.f32.mrb[0].mxu0
        %v1301 = vadd.f32 0.0, %v1300
        %1302 = vdwg.mxu0
        %1303 = vmatprep.subr.bf16.mxu0 %v745
        %1304 = vmatpush1.bf16.msra.mxu0 %v744
        %1305 = vmatprep.subr.bf16.mxu0 %v777
        %1306 = vmatpush1.bf16.msra.mxu0 %v776
        %1307 = vmatprep.subr.bf16.mxu0 0
        %1308 = vmatpush1.bf16.msra.mxu0 0
        %1309 = vmatprep.subr.bf16.mxu0 0
        %1310 = vmatpush1.bf16.msra.mxu0 0
        %1311 = vmatprep.subr.bf16.mxu0 0
        %1312 = vmatpush1.bf16.msra.mxu0 0
        %1313 = vmatprep.subr.bf16.mxu0 0
        %1314 = vmatpush1.bf16.msra.mxu0 0
        %1315 = vmatprep.subr.bf16.mxu0 0
        %1316 = vmatpush1.bf16.msra.mxu0 0
        %1317 = vmatprep.subr.bf16.mxu0 0
        %1318 = vmatpush1.bf16.msra.mxu0 0
        %1319 = vmatprep.subr.bf16.mxu0 0
        %1320 = vmatpush1.bf16.msra.mxu0 0
        %1321 = vmatprep.subr.bf16.mxu0 0
        %1322 = vmatpush1.bf16.msra.mxu0 0
        %1323 = vmatprep.subr.bf16.mxu0 0
        %1324 = vmatpush1.bf16.msra.mxu0 0
        %1325 = vmatprep.subr.bf16.mxu0 0
        %1326 = vmatpush1.bf16.msra.mxu0 0
        %1327 = vmatprep.subr.bf16.mxu0 0
        %1328 = vmatpush1.bf16.msra.mxu0 0
        %1329 = vmatprep.subr.bf16.mxu0 0
        %1330 = vmatpush1.bf16.msra.mxu0 0
        %1331 = vmatprep.subr.bf16.mxu0 0
        %1332 = vmatpush1.bf16.msra.mxu0 0
        %1333 = vmatprep.subr.bf16.mxu0 0
        %1334 = vmatpush1.bf16.msra.mxu0 0
        %1335 = vmatprep.mubr.bf16.mxu0 0
        %1336 = vmatmul.mubr.bf16.gmra.mrb[0].mxu0 %v870
        %v1337 = vpop.f32.mrb[0].mxu0
        %v1338 = vadd.f32 0.0, %v1337
        %v1339 = vpop.f32.mrb[0].mxu0
        %v1340 = vadd.f32 0.0, %v1339
        %v1341 = vpop.f32.mrb[0].mxu0
        %v1342 = vadd.f32 0.0, %v1341
        %v1343 = vpop.f32.mrb[0].mxu0
        %v1344 = vadd.f32 0.0, %v1343
        %1345 = vmatprep.mubr.bf16.mxu0 0
        %1346 = vmatmul.mubr.bf16.gmra.mrb[0].mxu0 %v873
        %v1347 = vpop.f32.mrb[0].mxu0
        %v1348 = vadd.f32 0.0, %v1347
        %v1349 = vpop.f32.mrb[0].mxu0
        %v1350 = vadd.f32 0.0, %v1349
        %v1351 = vpop.f32.mrb[0].mxu0
        %v1352 = vadd.f32 0.0, %v1351
        %v1353 = vpop.f32.mrb[0].mxu0
        %v1354 = vadd.f32 0.0, %v1353
        %1355 = vmatprep.mubr.bf16.mxu0 0
        %1356 = vmatmul.mubr.bf16.gmra.mrb[0].mxu0 %v876
        %v1357 = vpop.f32.mrb[0].mxu0
        %v1358 = vadd.f32 0.0, %v1357
        %v1359 = vpop.f32.mrb[0].mxu0
        %v1360 = vadd.f32 0.0, %v1359
        %v1361 = vpop.f32.mrb[0].mxu0
        %v1362 = vadd.f32 0.0, %v1361
        %v1363 = vpop.f32.mrb[0].mxu0
        %v1364 = vadd.f32 0.0, %v1363
        %1365 = vmatprep.mubr.bf16.mxu0 0
        %1366 = vmatmul.mubr.bf16.gmra.mrb[0].mxu0 %v879
        %v1367 = vpop.f32.mrb[0].mxu0
        %v1368 = vadd.f32 0.0, %v1367
        %v1369 = vpop.f32.mrb[0].mxu0
        %v1370 = vadd.f32 0.0, %v1369
        %v1371 = vpop.f32.mrb[0].mxu0
        %v1372 = vadd.f32 0.0, %v1371
        %v1373 = vpop.f32.mrb[0].mxu0
        %v1374 = vadd.f32 0.0, %v1373
        %1375 = vmatprep.mubr.bf16.mxu0 0
        %1376 = vmatmul.mubr.bf16.gmra.mrb[0].mxu0 %v882
        %v1377 = vpop.f32.mrb[0].mxu0
        %v1378 = vadd.f32 0.0, %v1377
        %v1379 = vpop.f32.mrb[0].mxu0
        %v1380 = vadd.f32 0.0, %v1379
        %v1381 = vpop.f32.mrb[0].mxu0
        %v1382 = vadd.f32 0.0, %v1381
        %v1383 = vpop.f32.mrb[0].mxu0
        %v1384 = vadd.f32 0.0, %v1383
        %1385 = vmatprep.mubr.bf16.mxu0 0
        %1386 = vmatmul.mubr.bf16.gmra.mrb[0].mxu0 %v885
        %v1387 = vpop.f32.mrb[0].mxu0
        %v1388 = vadd.f32 0.0, %v1387
        %v1389 = vpop.f32.mrb[0].mxu0
        %v1390 = vadd.f32 0.0, %v1389
        %v1391 = vpop.f32.mrb[0].mxu0
        %v1392 = vadd.f32 0.0, %v1391
        %v1393 = vpop.f32.mrb[0].mxu0
        %v1394 = vadd.f32 0.0, %v1393
        %1395 = vmatprep.mubr.bf16.mxu0 0
        %1396 = vmatmul.mubr.bf16.gmra.mrb[0].mxu0 %v888
        %v1397 = vpop.f32.mrb[0].mxu0
        %v1398 = vadd.f32 0.0, %v1397
        %v1399 = vpop.f32.mrb[0].mxu0
        %v1400 = vadd.f32 0.0, %v1399
        %v1401 = vpop.f32.mrb[0].mxu0
        %v1402 = vadd.f32 0.0, %v1401
        %v1403 = vpop.f32.mrb[0].mxu0
        %v1404 = vadd.f32 0.0, %v1403
        %1405 = vmatprep.mubr.bf16.mxu0 0
        %1406 = vmatmul.mubr.bf16.gmra.mrb[0].mxu0 %v891
        %v1407 = vpop.f32.mrb[0].mxu0
        %v1408 = vadd.f32 0.0, %v1407
        %v1409 = vpop.f32.mrb[0].mxu0
        %v1410 = vadd.f32 0.0, %v1409
        %v1411 = vpop.f32.mrb[0].mxu0
        %v1412 = vadd.f32 0.0, %v1411
        %v1413 = vpop.f32.mrb[0].mxu0
        %v1414 = vadd.f32 0.0, %v1413
        %1415 = vmatprep.mubr.bf16.mxu0 0
        %1416 = vmatmul.mubr.bf16.gmra.mrb[0].mxu0 %v894
        %v1417 = vpop.f32.mrb[0].mxu0
        %v1418 = vadd.f32 0.0, %v1417
        %v1419 = vpop.f32.mrb[0].mxu0
        %v1420 = vadd.f32 0.0, %v1419
        %v1421 = vpop.f32.mrb[0].mxu0
        %v1422 = vadd.f32 0.0, %v1421
        %v1423 = vpop.f32.mrb[0].mxu0
        %v1424 = vadd.f32 0.0, %v1423
        %1425 = vmatprep.mubr.bf16.mxu0 0
        %1426 = vmatmul.mubr.bf16.gmra.mrb[0].mxu0 %v897
        %v1427 = vpop.f32.mrb[0].mxu0
        %v1428 = vadd.f32 0.0, %v1427
        %v1429 = vpop.f32.mrb[0].mxu0
        %v1430 = vadd.f32 0.0, %v1429
        %v1431 = vpop.f32.mrb[0].mxu0
        %v1432 = vadd.f32 0.0, %v1431
        %v1433 = vpop.f32.mrb[0].mxu0
        %v1434 = vadd.f32 0.0, %v1433
        %1435 = vmatprep.mubr.bf16.mxu0 0
        %1436 = vmatmul.mubr.bf16.gmra.mrb[0].mxu0 %v900
        %v1437 = vpop.f32.mrb[0].mxu0
        %v1438 = vadd.f32 0.0, %v1437
        %v1439 = vpop.f32.mrb[0].mxu0
        %v1440 = vadd.f32 0.0, %v1439
        %v1441 = vpop.f32.mrb[0].mxu0
        %v1442 = vadd.f32 0.0, %v1441
        %v1443 = vpop.f32.mrb[0].mxu0
        %v1444 = vadd.f32 0.0, %v1443
        %1445 = vmatprep.mubr.bf16.mxu0 0
        %1446 = vmatmul.mubr.bf16.gmra.mrb[0].mxu0 %v903
        %v1447 = vpop.f32.mrb[0].mxu0
        %v1448 = vadd.f32 0.0, %v1447
        %v1449 = vpop.f32.mrb[0].mxu0
        %v1450 = vadd.f32 0.0, %v1449
        %v1451 = vpop.f32.mrb[0].mxu0
        %v1452 = vadd.f32 0.0, %v1451
        %v1453 = vpop.f32.mrb[0].mxu0
        %v1454 = vadd.f32 0.0, %v1453
        %1455 = vmatprep.mubr.bf16.mxu0 0
        %1456 = vmatmul.mubr.bf16.gmra.mrb[0].mxu0 %v906
        %v1457 = vpop.f32.mrb[0].mxu0
        %v1458 = vadd.f32 0.0, %v1457
        %v1459 = vpop.f32.mrb[0].mxu0
        %v1460 = vadd.f32 0.0, %v1459
        %v1461 = vpop.f32.mrb[0].mxu0
        %v1462 = vadd.f32 0.0, %v1461
        %v1463 = vpop.f32.mrb[0].mxu0
        %v1464 = vadd.f32 0.0, %v1463
        %1465 = vmatprep.mubr.bf16.mxu0 0
        %1466 = vmatmul.mubr.bf16.gmra.mrb[0].mxu0 %v909
        %v1467 = vpop.f32.mrb[0].mxu0
        %v1468 = vadd.f32 0.0, %v1467
        %v1469 = vpop.f32.mrb[0].mxu0
        %v1470 = vadd.f32 0.0, %v1469
        %v1471 = vpop.f32.mrb[0].mxu0
        %v1472 = vadd.f32 0.0, %v1471
        %v1473 = vpop.f32.mrb[0].mxu0
        %v1474 = vadd.f32 0.0, %v1473
        %1475 = vmatprep.mubr.bf16.mxu0 0
        %1476 = vmatmul.mubr.bf16.gmra.mrb[0].mxu0 %v912
        %v1477 = vpop.f32.mrb[0].mxu0
        %v1478 = vadd.f32 0.0, %v1477
        %v1479 = vpop.f32.mrb[0].mxu0
        %v1480 = vadd.f32 0.0, %v1479
        %v1481 = vpop.f32.mrb[0].mxu0
        %v1482 = vadd.f32 0.0, %v1481
        %v1483 = vpop.f32.mrb[0].mxu0
        %v1484 = vadd.f32 0.0, %v1483
        %1485 = vmatprep.mubr.bf16.mxu0 0
        %1486 = vmatmul.mubr.bf16.gmra.mrb[0].mxu0 %v915
        %v1487 = vpop.f32.mrb[0].mxu0
        %v1488 = vadd.f32 0.0, %v1487
        %v1489 = vpop.f32.mrb[0].mxu0
        %v1490 = vadd.f32 0.0, %v1489
        %v1491 = vpop.f32.mrb[0].mxu0
        %v1492 = vadd.f32 0.0, %v1491
        %v1493 = vpop.f32.mrb[0].mxu0
        %v1494 = vadd.f32 0.0, %v1493
        %1495 = vdwg.mxu0
        %1496 = vmatprep.subr.bf16.mxu0 %v747
        %1497 = vmatpush1.bf16.msra.mxu0 %v746
        %1498 = vmatprep.subr.bf16.mxu0 %v779
        %1499 = vmatpush1.bf16.msra.mxu0 %v778
        %1500 = vmatprep.subr.bf16.mxu0 0
        %1501 = vmatpush1.bf16.msra.mxu0 0
        %1502 = vmatprep.subr.bf16.mxu0 0
        %1503 = vmatpush1.bf16.msra.mxu0 0
        %1504 = vmatprep.subr.bf16.mxu0 0
        %1505 = vmatpush1.bf16.msra.mxu0 0
        %1506 = vmatprep.subr.bf16.mxu0 0
        %1507 = vmatpush1.bf16.msra.mxu0 0
        %1508 = vmatprep.subr.bf16.mxu0 0
        %1509 = vmatpush1.bf16.msra.mxu0 0
        %1510 = vmatprep.subr.bf16.mxu0 0
        %1511 = vmatpush1.bf16.msra.mxu0 0
        %1512 = vmatprep.subr.bf16.mxu0 0
        %1513 = vmatpush1.bf16.msra.mxu0 0
        %1514 = vmatprep.subr.bf16.mxu0 0
        %1515 = vmatpush1.bf16.msra.mxu0 0
        %1516 = vmatprep.subr.bf16.mxu0 0
        %1517 = vmatpush1.bf16.msra.mxu0 0
        %1518 = vmatprep.subr.bf16.mxu0 0
        %1519 = vmatpush1.bf16.msra.mxu0 0
        %1520 = vmatprep.subr.bf16.mxu0 0
        %1521 = vmatpush1.bf16.msra.mxu0 0
        %1522 = vmatprep.subr.bf16.mxu0 0
        %1523 = vmatpush1.bf16.msra.mxu0 0
        %1524 = vmatprep.subr.bf16.mxu0 0
        %1525 = vmatpush1.bf16.msra.mxu0 0
        %1526 = vmatprep.subr.bf16.mxu0 0
        %1527 = vmatpush1.bf16.msra.mxu0 0
        %1528 = vmatprep.mubr.bf16.mxu0 0
        %1529 = vmatmul.mubr.bf16.gmra.mrb[0].mxu0 %v870
        %v1530 = vpop.f32.mrb[0].mxu0
        %v1531 = vadd.f32 0.0, %v1530
        %v1532 = vpop.f32.mrb[0].mxu0
        %v1533 = vadd.f32 0.0, %v1532
        %v1534 = vpop.f32.mrb[0].mxu0
        %v1535 = vadd.f32 0.0, %v1534
        %v1536 = vpop.f32.mrb[0].mxu0
        %v1537 = vadd.f32 0.0, %v1536
        %1538 = vmatprep.mubr.bf16.mxu0 0
        %1539 = vmatmul.mubr.bf16.gmra.mrb[0].mxu0 %v873
        %v1540 = vpop.f32.mrb[0].mxu0
        %v1541 = vadd.f32 0.0, %v1540
        %v1542 = vpop.f32.mrb[0].mxu0
        %v1543 = vadd.f32 0.0, %v1542
        %v1544 = vpop.f32.mrb[0].mxu0
        %v1545 = vadd.f32 0.0, %v1544
        %v1546 = vpop.f32.mrb[0].mxu0
        %v1547 = vadd.f32 0.0, %v1546
        %1548 = vmatprep.mubr.bf16.mxu0 0
        %1549 = vmatmul.mubr.bf16.gmra.mrb[0].mxu0 %v876
        %v1550 = vpop.f32.mrb[0].mxu0
        %v1551 = vadd.f32 0.0, %v1550
        %v1552 = vpop.f32.mrb[0].mxu0
        %v1553 = vadd.f32 0.0, %v1552
        %v1554 = vpop.f32.mrb[0].mxu0
        %v1555 = vadd.f32 0.0, %v1554
        %v1556 = vpop.f32.mrb[0].mxu0
        %v1557 = vadd.f32 0.0, %v1556
        %1558 = vmatprep.mubr.bf16.mxu0 0
        %1559 = vmatmul.mubr.bf16.gmra.mrb[0].mxu0 %v879
        %v1560 = vpop.f32.mrb[0].mxu0
        %v1561 = vadd.f32 0.0, %v1560
        %v1562 = vpop.f32.mrb[0].mxu0
        %v1563 = vadd.f32 0.0, %v1562
        %v1564 = vpop.f32.mrb[0].mxu0
        %v1565 = vadd.f32 0.0, %v1564
        %v1566 = vpop.f32.mrb[0].mxu0
        %v1567 = vadd.f32 0.0, %v1566
        %1568 = vmatprep.mubr.bf16.mxu0 0
        %1569 = vmatmul.mubr.bf16.gmra.mrb[0].mxu0 %v882
        %v1570 = vpop.f32.mrb[0].mxu0
        %v1571 = vadd.f32 0.0, %v1570
        %v1572 = vpop.f32.mrb[0].mxu0
        %v1573 = vadd.f32 0.0, %v1572
        %v1574 = vpop.f32.mrb[0].mxu0
        %v1575 = vadd.f32 0.0, %v1574
        %v1576 = vpop.f32.mrb[0].mxu0
        %v1577 = vadd.f32 0.0, %v1576
        %1578 = vmatprep.mubr.bf16.mxu0 0
        %1579 = vmatmul.mubr.bf16.gmra.mrb[0].mxu0 %v885
        %v1580 = vpop.f32.mrb[0].mxu0
        %v1581 = vadd.f32 0.0, %v1580
        %v1582 = vpop.f32.mrb[0].mxu0
        %v1583 = vadd.f32 0.0, %v1582
        %v1584 = vpop.f32.mrb[0].mxu0
        %v1585 = vadd.f32 0.0, %v1584
        %v1586 = vpop.f32.mrb[0].mxu0
        %v1587 = vadd.f32 0.0, %v1586
        %1588 = vmatprep.mubr.bf16.mxu0 0
        %1589 = vmatmul.mubr.bf16.gmra.mrb[0].mxu0 %v888
        %v1590 = vpop.f32.mrb[0].mxu0
        %v1591 = vadd.f32 0.0, %v1590
        %v1592 = vpop.f32.mrb[0].mxu0
        %v1593 = vadd.f32 0.0, %v1592
        %v1594 = vpop.f32.mrb[0].mxu0
        %v1595 = vadd.f32 0.0, %v1594
        %v1596 = vpop.f32.mrb[0].mxu0
        %v1597 = vadd.f32 0.0, %v1596
        %1598 = vmatprep.mubr.bf16.mxu0 0
        %1599 = vmatmul.mubr.bf16.gmra.mrb[0].mxu0 %v891
        %v1600 = vpop.f32.mrb[0].mxu0
        %v1601 = vadd.f32 0.0, %v1600
        %v1602 = vpop.f32.mrb[0].mxu0
        %v1603 = vadd.f32 0.0, %v1602
        %v1604 = vpop.f32.mrb[0].mxu0
        %v1605 = vadd.f32 0.0, %v1604
        %v1606 = vpop.f32.mrb[0].mxu0
        %v1607 = vadd.f32 0.0, %v1606
        %1608 = vmatprep.mubr.bf16.mxu0 0
        %1609 = vmatmul.mubr.bf16.gmra.mrb[0].mxu0 %v894
        %v1610 = vpop.f32.mrb[0].mxu0
        %v1611 = vadd.f32 0.0, %v1610
        %v1612 = vpop.f32.mrb[0].mxu0
        %v1613 = vadd.f32 0.0, %v1612
        %v1614 = vpop.f32.mrb[0].mxu0
        %v1615 = vadd.f32 0.0, %v1614
        %v1616 = vpop.f32.mrb[0].mxu0
        %v1617 = vadd.f32 0.0, %v1616
        %1618 = vmatprep.mubr.bf16.mxu0 0
        %1619 = vmatmul.mubr.bf16.gmra.mrb[0].mxu0 %v897
        %v1620 = vpop.f32.mrb[0].mxu0
        %v1621 = vadd.f32 0.0, %v1620
        %v1622 = vpop.f32.mrb[0].mxu0
        %v1623 = vadd.f32 0.0, %v1622
        %v1624 = vpop.f32.mrb[0].mxu0
        %v1625 = vadd.f32 0.0, %v1624
        %v1626 = vpop.f32.mrb[0].mxu0
        %v1627 = vadd.f32 0.0, %v1626
        %1628 = vmatprep.mubr.bf16.mxu0 0
        %1629 = vmatmul.mubr.bf16.gmra.mrb[0].mxu0 %v900
        %v1630 = vpop.f32.mrb[0].mxu0
        %v1631 = vadd.f32 0.0, %v1630
        %v1632 = vpop.f32.mrb[0].mxu0
        %v1633 = vadd.f32 0.0, %v1632
        %v1634 = vpop.f32.mrb[0].mxu0
        %v1635 = vadd.f32 0.0, %v1634
        %v1636 = vpop.f32.mrb[0].mxu0
        %v1637 = vadd.f32 0.0, %v1636
        %1638 = vmatprep.mubr.bf16.mxu0 0
        %1639 = vmatmul.mubr.bf16.gmra.mrb[0].mxu0 %v903
        %v1640 = vpop.f32.mrb[0].mxu0
        %v1641 = vadd.f32 0.0, %v1640
        %v1642 = vpop.f32.mrb[0].mxu0
        %v1643 = vadd.f32 0.0, %v1642
        %v1644 = vpop.f32.mrb[0].mxu0
        %v1645 = vadd.f32 0.0, %v1644
        %v1646 = vpop.f32.mrb[0].mxu0
        %v1647 = vadd.f32 0.0, %v1646
        %1648 = vmatprep.mubr.bf16.mxu0 0
        %1649 = vmatmul.mubr.bf16.gmra.mrb[0].mxu0 %v906
        %v1650 = vpop.f32.mrb[0].mxu0
        %v1651 = vadd.f32 0.0, %v1650
        %v1652 = vpop.f32.mrb[0].mxu0
        %v1653 = vadd.f32 0.0, %v1652
        %v1654 = vpop.f32.mrb[0].mxu0
        %v1655 = vadd.f32 0.0, %v1654
        %v1656 = vpop.f32.mrb[0].mxu0
        %v1657 = vadd.f32 0.0, %v1656
        %1658 = vmatprep.mubr.bf16.mxu0 0
        %1659 = vmatmul.mubr.bf16.gmra.mrb[0].mxu0 %v909
        %v1660 = vpop.f32.mrb[0].mxu0
        %v1661 = vadd.f32 0.0, %v1660
        %v1662 = vpop.f32.mrb[0].mxu0
        %v1663 = vadd.f32 0.0, %v1662
        %v1664 = vpop.f32.mrb[0].mxu0
        %v1665 = vadd.f32 0.0, %v1664
        %v1666 = vpop.f32.mrb[0].mxu0
        %v1667 = vadd.f32 0.0, %v1666
        %1668 = vmatprep.mubr.bf16.mxu0 0
        %1669 = vmatmul.mubr.bf16.gmra.mrb[0].mxu0 %v912
        %v1670 = vpop.f32.mrb[0].mxu0
        %v1671 = vadd.f32 0.0, %v1670
        %v1672 = vpop.f32.mrb[0].mxu0
        %v1673 = vadd.f32 0.0, %v1672
        %v1674 = vpop.f32.mrb[0].mxu0
        %v1675 = vadd.f32 0.0, %v1674
        %v1676 = vpop.f32.mrb[0].mxu0
        %v1677 = vadd.f32 0.0, %v1676
        %1678 = vmatprep.mubr.bf16.mxu0 0
        %1679 = vmatmul.mubr.bf16.gmra.mrb[0].mxu0 %v915
        %v1680 = vpop.f32.mrb[0].mxu0
        %v1681 = vadd.f32 0.0, %v1680
        %v1682 = vpop.f32.mrb[0].mxu0
        %v1683 = vadd.f32 0.0, %v1682
        %v1684 = vpop.f32.mrb[0].mxu0
        %v1685 = vadd.f32 0.0, %v1684
        %v1686 = vpop.f32.mrb[0].mxu0
        %v1687 = vadd.f32 0.0, %v1686
        %1688 = vdwg.mxu0
        %1689 = vmatprep.subr.bf16.mxu0 %v749
        %1690 = vmatpush1.bf16.msra.mxu0 %v748
        %1691 = vmatprep.subr.bf16.mxu0 %v781
        %1692 = vmatpush1.bf16.msra.mxu0 %v780
        %1693 = vmatprep.subr.bf16.mxu0 0
        %1694 = vmatpush1.bf16.msra.mxu0 0
        %1695 = vmatprep.subr.bf16.mxu0 0
        %1696 = vmatpush1.bf16.msra.mxu0 0
        %1697 = vmatprep.subr.bf16.mxu0 0
        %1698 = vmatpush1.bf16.msra.mxu0 0
        %1699 = vmatprep.subr.bf16.mxu0 0
        %1700 = vmatpush1.bf16.msra.mxu0 0
        %1701 = vmatprep.subr.bf16.mxu0 0
        %1702 = vmatpush1.bf16.msra.mxu0 0
        %1703 = vmatprep.subr.bf16.mxu0 0
        %1704 = vmatpush1.bf16.msra.mxu0 0
        %1705 = vmatprep.subr.bf16.mxu0 0
        %1706 = vmatpush1.bf16.msra.mxu0 0
        %1707 = vmatprep.subr.bf16.mxu0 0
        %1708 = vmatpush1.bf16.msra.mxu0 0
        %1709 = vmatprep.subr.bf16.mxu0 0
        %1710 = vmatpush1.bf16.msra.mxu0 0
        %1711 = vmatprep.subr.bf16.mxu0 0
        %1712 = vmatpush1.bf16.msra.mxu0 0
        %1713 = vmatprep.subr.bf16.mxu0 0
        %1714 = vmatpush1.bf16.msra.mxu0 0
        %1715 = vmatprep.subr.bf16.mxu0 0
        %1716 = vmatpush1.bf16.msra.mxu0 0
        %1717 = vmatprep.subr.bf16.mxu0 0
        %1718 = vmatpush1.bf16.msra.mxu0 0
        %1719 = vmatprep.subr.bf16.mxu0 0
        %1720 = vmatpush1.bf16.msra.mxu0 0
        %1721 = vmatprep.mubr.bf16.mxu0 0
        %1722 = vmatmul.mubr.bf16.gmra.mrb[0].mxu0 %v870
        %v1723 = vpop.f32.mrb[0].mxu0
        %v1724 = vadd.f32 0.0, %v1723
        %v1725 = vpop.f32.mrb[0].mxu0
        %v1726 = vadd.f32 0.0, %v1725
        %v1727 = vpop.f32.mrb[0].mxu0
        %v1728 = vadd.f32 0.0, %v1727
        %v1729 = vpop.f32.mrb[0].mxu0
        %v1730 = vadd.f32 0.0, %v1729
        %1731 = vmatprep.mubr.bf16.mxu0 0
        %1732 = vmatmul.mubr.bf16.gmra.mrb[0].mxu0 %v873
        %v1733 = vpop.f32.mrb[0].mxu0
        %v1734 = vadd.f32 0.0, %v1733
        %v1735 = vpop.f32.mrb[0].mxu0
        %v1736 = vadd.f32 0.0, %v1735
        %v1737 = vpop.f32.mrb[0].mxu0
        %v1738 = vadd.f32 0.0, %v1737
        %v1739 = vpop.f32.mrb[0].mxu0
        %v1740 = vadd.f32 0.0, %v1739
        %1741 = vmatprep.mubr.bf16.mxu0 0
        %1742 = vmatmul.mubr.bf16.gmra.mrb[0].mxu0 %v876
        %v1743 = vpop.f32.mrb[0].mxu0
        %v1744 = vadd.f32 0.0, %v1743
        %v1745 = vpop.f32.mrb[0].mxu0
        %v1746 = vadd.f32 0.0, %v1745
        %v1747 = vpop.f32.mrb[0].mxu0
        %v1748 = vadd.f32 0.0, %v1747
        %v1749 = vpop.f32.mrb[0].mxu0
        %v1750 = vadd.f32 0.0, %v1749
        %1751 = vmatprep.mubr.bf16.mxu0 0
        %1752 = vmatmul.mubr.bf16.gmra.mrb[0].mxu0 %v879
        %v1753 = vpop.f32.mrb[0].mxu0
        %v1754 = vadd.f32 0.0, %v1753
        %v1755 = vpop.f32.mrb[0].mxu0
        %v1756 = vadd.f32 0.0, %v1755
        %v1757 = vpop.f32.mrb[0].mxu0
        %v1758 = vadd.f32 0.0, %v1757
        %v1759 = vpop.f32.mrb[0].mxu0
        %v1760 = vadd.f32 0.0, %v1759
        %1761 = vmatprep.mubr.bf16.mxu0 0
        %1762 = vmatmul.mubr.bf16.gmra.mrb[0].mxu0 %v882
        %v1763 = vpop.f32.mrb[0].mxu0
        %v1764 = vadd.f32 0.0, %v1763
        %v1765 = vpop.f32.mrb[0].mxu0
        %v1766 = vadd.f32 0.0, %v1765
        %v1767 = vpop.f32.mrb[0].mxu0
        %v1768 = vadd.f32 0.0, %v1767
        %v1769 = vpop.f32.mrb[0].mxu0
        %v1770 = vadd.f32 0.0, %v1769
        %1771 = vmatprep.mubr.bf16.mxu0 0
        %1772 = vmatmul.mubr.bf16.gmra.mrb[0].mxu0 %v885
        %v1773 = vpop.f32.mrb[0].mxu0
        %v1774 = vadd.f32 0.0, %v1773
        %v1775 = vpop.f32.mrb[0].mxu0
        %v1776 = vadd.f32 0.0, %v1775
        %v1777 = vpop.f32.mrb[0].mxu0
        %v1778 = vadd.f32 0.0, %v1777
        %v1779 = vpop.f32.mrb[0].mxu0
        %v1780 = vadd.f32 0.0, %v1779
        %1781 = vmatprep.mubr.bf16.mxu0 0
        %1782 = vmatmul.mubr.bf16.gmra.mrb[0].mxu0 %v888
        %v1783 = vpop.f32.mrb[0].mxu0
        %v1784 = vadd.f32 0.0, %v1783
        %v1785 = vpop.f32.mrb[0].mxu0
        %v1786 = vadd.f32 0.0, %v1785
        %v1787 = vpop.f32.mrb[0].mxu0
        %v1788 = vadd.f32 0.0, %v1787
        %v1789 = vpop.f32.mrb[0].mxu0
        %v1790 = vadd.f32 0.0, %v1789
        %1791 = vmatprep.mubr.bf16.mxu0 0
        %1792 = vmatmul.mubr.bf16.gmra.mrb[0].mxu0 %v891
        %v1793 = vpop.f32.mrb[0].mxu0
        %v1794 = vadd.f32 0.0, %v1793
        %v1795 = vpop.f32.mrb[0].mxu0
        %v1796 = vadd.f32 0.0, %v1795
        %v1797 = vpop.f32.mrb[0].mxu0
        %v1798 = vadd.f32 0.0, %v1797
        %v1799 = vpop.f32.mrb[0].mxu0
        %v1800 = vadd.f32 0.0, %v1799
        %1801 = vmatprep.mubr.bf16.mxu0 0
        %1802 = vmatmul.mubr.bf16.gmra.mrb[0].mxu0 %v894
        %v1803 = vpop.f32.mrb[0].mxu0
        %v1804 = vadd.f32 0.0, %v1803
        %v1805 = vpop.f32.mrb[0].mxu0
        %v1806 = vadd.f32 0.0, %v1805
        %v1807 = vpop.f32.mrb[0].mxu0
        %v1808 = vadd.f32 0.0, %v1807
        %v1809 = vpop.f32.mrb[0].mxu0
        %v1810 = vadd.f32 0.0, %v1809
        %1811 = vmatprep.mubr.bf16.mxu0 0
        %1812 = vmatmul.mubr.bf16.gmra.mrb[0].mxu0 %v897
        %v1813 = vpop.f32.mrb[0].mxu0
        %v1814 = vadd.f32 0.0, %v1813
        %v1815 = vpop.f32.mrb[0].mxu0
        %v1816 = vadd.f32 0.0, %v1815
        %v1817 = vpop.f32.mrb[0].mxu0
        %v1818 = vadd.f32 0.0, %v1817
        %v1819 = vpop.f32.mrb[0].mxu0
        %v1820 = vadd.f32 0.0, %v1819
        %1821 = vmatprep.mubr.bf16.mxu0 0
        %1822 = vmatmul.mubr.bf16.gmra.mrb[0].mxu0 %v900
        %v1823 = vpop.f32.mrb[0].mxu0
        %v1824 = vadd.f32 0.0, %v1823
        %v1825 = vpop.f32.mrb[0].mxu0
        %v1826 = vadd.f32 0.0, %v1825
        %v1827 = vpop.f32.mrb[0].mxu0
        %v1828 = vadd.f32 0.0, %v1827
        %v1829 = vpop.f32.mrb[0].mxu0
        %v1830 = vadd.f32 0.0, %v1829
        %1831 = vmatprep.mubr.bf16.mxu0 0
        %1832 = vmatmul.mubr.bf16.gmra.mrb[0].mxu0 %v903
        %v1833 = vpop.f32.mrb[0].mxu0
        %v1834 = vadd.f32 0.0, %v1833
        %v1835 = vpop.f32.mrb[0].mxu0
        %v1836 = vadd.f32 0.0, %v1835
        %v1837 = vpop.f32.mrb[0].mxu0
        %v1838 = vadd.f32 0.0, %v1837
        %v1839 = vpop.f32.mrb[0].mxu0
        %v1840 = vadd.f32 0.0, %v1839
        %1841 = vmatprep.mubr.bf16.mxu0 0
        %1842 = vmatmul.mubr.bf16.gmra.mrb[0].mxu0 %v906
        %v1843 = vpop.f32.mrb[0].mxu0
        %v1844 = vadd.f32 0.0, %v1843
        %v1845 = vpop.f32.mrb[0].mxu0
        %v1846 = vadd.f32 0.0, %v1845
        %v1847 = vpop.f32.mrb[0].mxu0
        %v1848 = vadd.f32 0.0, %v1847
        %v1849 = vpop.f32.mrb[0].mxu0
        %v1850 = vadd.f32 0.0, %v1849
        %1851 = vmatprep.mubr.bf16.mxu0 0
        %1852 = vmatmul.mubr.bf16.gmra.mrb[0].mxu0 %v909
        %v1853 = vpop.f32.mrb[0].mxu0
        %v1854 = vadd.f32 0.0, %v1853
        %v1855 = vpop.f32.mrb[0].mxu0
        %v1856 = vadd.f32 0.0, %v1855
        %v1857 = vpop.f32.mrb[0].mxu0
        %v1858 = vadd.f32 0.0, %v1857
        %v1859 = vpop.f32.mrb[0].mxu0
        %v1860 = vadd.f32 0.0, %v1859
        %1861 = vmatprep.mubr.bf16.mxu0 0
        %1862 = vmatmul.mubr.bf16.gmra.mrb[0].mxu0 %v912
        %v1863 = vpop.f32.mrb[0].mxu0
        %v1864 = vadd.f32 0.0, %v1863
        %v1865 = vpop.f32.mrb[0].mxu0
        %v1866 = vadd.f32 0.0, %v1865
        %v1867 = vpop.f32.mrb[0].mxu0
        %v1868 = vadd.f32 0.0, %v1867
        %v1869 = vpop.f32.mrb[0].mxu0
        %v1870 = vadd.f32 0.0, %v1869
        %1871 = vmatprep.mubr.bf16.mxu0 0
        %1872 = vmatmul.mubr.bf16.gmra.mrb[0].mxu0 %v915
        %v1873 = vpop.f32.mrb[0].mxu0
        %v1874 = vadd.f32 0.0, %v1873
        %v1875 = vpop.f32.mrb[0].mxu0
        %v1876 = vadd.f32 0.0, %v1875
        %v1877 = vpop.f32.mrb[0].mxu0
        %v1878 = vadd.f32 0.0, %v1877
        %v1879 = vpop.f32.mrb[0].mxu0
        %v1880 = vadd.f32 0.0, %v1879
        %1881 = vdwg.mxu0
        %1882 = vmatprep.subr.bf16.mxu0 %v751
        %1883 = vmatpush1.bf16.msra.mxu0 %v750
        %1884 = vmatprep.subr.bf16.mxu0 %v783
        %1885 = vmatpush1.bf16.msra.mxu0 %v782
        %1886 = vmatprep.subr.bf16.mxu0 0
        %1887 = vmatpush1.bf16.msra.mxu0 0
        %1888 = vmatprep.subr.bf16.mxu0 0
        %1889 = vmatpush1.bf16.msra.mxu0 0
        %1890 = vmatprep.subr.bf16.mxu0 0
        %1891 = vmatpush1.bf16.msra.mxu0 0
        %1892 = vmatprep.subr.bf16.mxu0 0
        %1893 = vmatpush1.bf16.msra.mxu0 0
        %1894 = vmatprep.subr.bf16.mxu0 0
        %1895 = vmatpush1.bf16.msra.mxu0 0
        %1896 = vmatprep.subr.bf16.mxu0 0
        %1897 = vmatpush1.bf16.msra.mxu0 0
        %1898 = vmatprep.subr.bf16.mxu0 0
        %1899 = vmatpush1.bf16.msra.mxu0 0
        %1900 = vmatprep.subr.bf16.mxu0 0
        %1901 = vmatpush1.bf16.msra.mxu0 0
        %1902 = vmatprep.subr.bf16.mxu0 0
        %1903 = vmatpush1.bf16.msra.mxu0 0
        %1904 = vmatprep.subr.bf16.mxu0 0
        %1905 = vmatpush1.bf16.msra.mxu0 0
        %1906 = vmatprep.subr.bf16.mxu0 0
        %1907 = vmatpush1.bf16.msra.mxu0 0
        %1908 = vmatprep.subr.bf16.mxu0 0
        %1909 = vmatpush1.bf16.msra.mxu0 0
        %1910 = vmatprep.subr.bf16.mxu0 0
        %1911 = vmatpush1.bf16.msra.mxu0 0
        %1912 = vmatprep.subr.bf16.mxu0 0
        %1913 = vmatpush1.bf16.msra.mxu0 0
        %1914 = vmatprep.mubr.bf16.mxu0 0
        %1915 = vmatmul.mubr.bf16.gmra.mrb[0].mxu0 %v870
        %v1916 = vpop.f32.mrb[0].mxu0
        %v1917 = vadd.f32 0.0, %v1916
        %v1918 = vpop.f32.mrb[0].mxu0
        %v1919 = vadd.f32 0.0, %v1918
        %v1920 = vpop.f32.mrb[0].mxu0
        %v1921 = vadd.f32 0.0, %v1920
        %v1922 = vpop.f32.mrb[0].mxu0
        %v1923 = vadd.f32 0.0, %v1922
        %1924 = vmatprep.mubr.bf16.mxu0 0
        %1925 = vmatmul.mubr.bf16.gmra.mrb[0].mxu0 %v873
        %v1926 = vpop.f32.mrb[0].mxu0
        %v1927 = vadd.f32 0.0, %v1926
        %v1928 = vpop.f32.mrb[0].mxu0
        %v1929 = vadd.f32 0.0, %v1928
        %v1930 = vpop.f32.mrb[0].mxu0
        %v1931 = vadd.f32 0.0, %v1930
        %v1932 = vpop.f32.mrb[0].mxu0
        %v1933 = vadd.f32 0.0, %v1932
        %1934 = vmatprep.mubr.bf16.mxu0 0
        %1935 = vmatmul.mubr.bf16.gmra.mrb[0].mxu0 %v876
        %v1936 = vpop.f32.mrb[0].mxu0
        %v1937 = vadd.f32 0.0, %v1936
        %v1938 = vpop.f32.mrb[0].mxu0
        %v1939 = vadd.f32 0.0, %v1938
        %v1940 = vpop.f32.mrb[0].mxu0
        %v1941 = vadd.f32 0.0, %v1940
        %v1942 = vpop.f32.mrb[0].mxu0
        %v1943 = vadd.f32 0.0, %v1942
        %1944 = vmatprep.mubr.bf16.mxu0 0
        %1945 = vmatmul.mubr.bf16.gmra.mrb[0].mxu0 %v879
        %v1946 = vpop.f32.mrb[0].mxu0
        %v1947 = vadd.f32 0.0, %v1946
        %v1948 = vpop.f32.mrb[0].mxu0
        %v1949 = vadd.f32 0.0, %v1948
        %v1950 = vpop.f32.mrb[0].mxu0
        %v1951 = vadd.f32 0.0, %v1950
        %v1952 = vpop.f32.mrb[0].mxu0
        %v1953 = vadd.f32 0.0, %v1952
        %1954 = vmatprep.mubr.bf16.mxu0 0
        %1955 = vmatmul.mubr.bf16.gmra.mrb[0].mxu0 %v882
        %v1956 = vpop.f32.mrb[0].mxu0
        %v1957 = vadd.f32 0.0, %v1956
        %v1958 = vpop.f32.mrb[0].mxu0
        %v1959 = vadd.f32 0.0, %v1958
        %v1960 = vpop.f32.mrb[0].mxu0
        %v1961 = vadd.f32 0.0, %v1960
        %v1962 = vpop.f32.mrb[0].mxu0
        %v1963 = vadd.f32 0.0, %v1962
        %1964 = vmatprep.mubr.bf16.mxu0 0
        %1965 = vmatmul.mubr.bf16.gmra.mrb[0].mxu0 %v885
        %v1966 = vpop.f32.mrb[0].mxu0
        %v1967 = vadd.f32 0.0, %v1966
        %v1968 = vpop.f32.mrb[0].mxu0
        %v1969 = vadd.f32 0.0, %v1968
        %v1970 = vpop.f32.mrb[0].mxu0
        %v1971 = vadd.f32 0.0, %v1970
        %v1972 = vpop.f32.mrb[0].mxu0
        %v1973 = vadd.f32 0.0, %v1972
        %1974 = vmatprep.mubr.bf16.mxu0 0
        %1975 = vmatmul.mubr.bf16.gmra.mrb[0].mxu0 %v888
        %v1976 = vpop.f32.mrb[0].mxu0
        %v1977 = vadd.f32 0.0, %v1976
        %v1978 = vpop.f32.mrb[0].mxu0
        %v1979 = vadd.f32 0.0, %v1978
        %v1980 = vpop.f32.mrb[0].mxu0
        %v1981 = vadd.f32 0.0, %v1980
        %v1982 = vpop.f32.mrb[0].mxu0
        %v1983 = vadd.f32 0.0, %v1982
        %1984 = vmatprep.mubr.bf16.mxu0 0
        %1985 = vmatmul.mubr.bf16.gmra.mrb[0].mxu0 %v891
        %v1986 = vpop.f32.mrb[0].mxu0
        %v1987 = vadd.f32 0.0, %v1986
        %v1988 = vpop.f32.mrb[0].mxu0
        %v1989 = vadd.f32 0.0, %v1988
        %v1990 = vpop.f32.mrb[0].mxu0
        %v1991 = vadd.f32 0.0, %v1990
        %v1992 = vpop.f32.mrb[0].mxu0
        %v1993 = vadd.f32 0.0, %v1992
        %1994 = vmatprep.mubr.bf16.mxu0 0
        %1995 = vmatmul.mubr.bf16.gmra.mrb[0].mxu0 %v894
        %v1996 = vpop.f32.mrb[0].mxu0
        %v1997 = vadd.f32 0.0, %v1996
        %v1998 = vpop.f32.mrb[0].mxu0
        %v1999 = vadd.f32 0.0, %v1998
        %v2000 = vpop.f32.mrb[0].mxu0
        %v2001 = vadd.f32 0.0, %v2000
        %v2002 = vpop.f32.mrb[0].mxu0
        %v2003 = vadd.f32 0.0, %v2002
        %2004 = vmatprep.mubr.bf16.mxu0 0
        %2005 = vmatmul.mubr.bf16.gmra.mrb[0].mxu0 %v897
        %v2006 = vpop.f32.mrb[0].mxu0
        %v2007 = vadd.f32 0.0, %v2006
        %v2008 = vpop.f32.mrb[0].mxu0
        %v2009 = vadd.f32 0.0, %v2008
        %v2010 = vpop.f32.mrb[0].mxu0
        %v2011 = vadd.f32 0.0, %v2010
        %v2012 = vpop.f32.mrb[0].mxu0
        %v2013 = vadd.f32 0.0, %v2012
        %2014 = vmatprep.mubr.bf16.mxu0 0
        %2015 = vmatmul.mubr.bf16.gmra.mrb[0].mxu0 %v900
        %v2016 = vpop.f32.mrb[0].mxu0
        %v2017 = vadd.f32 0.0, %v2016
        %v2018 = vpop.f32.mrb[0].mxu0
        %v2019 = vadd.f32 0.0, %v2018
        %v2020 = vpop.f32.mrb[0].mxu0
        %v2021 = vadd.f32 0.0, %v2020
        %v2022 = vpop.f32.mrb[0].mxu0
        %v2023 = vadd.f32 0.0, %v2022
        %2024 = vmatprep.mubr.bf16.mxu0 0
        %2025 = vmatmul.mubr.bf16.gmra.mrb[0].mxu0 %v903
        %v2026 = vpop.f32.mrb[0].mxu0
        %v2027 = vadd.f32 0.0, %v2026
        %v2028 = vpop.f32.mrb[0].mxu0
        %v2029 = vadd.f32 0.0, %v2028
        %v2030 = vpop.f32.mrb[0].mxu0
        %v2031 = vadd.f32 0.0, %v2030
        %v2032 = vpop.f32.mrb[0].mxu0
        %v2033 = vadd.f32 0.0, %v2032
        %2034 = vmatprep.mubr.bf16.mxu0 0
        %2035 = vmatmul.mubr.bf16.gmra.mrb[0].mxu0 %v906
        %v2036 = vpop.f32.mrb[0].mxu0
        %v2037 = vadd.f32 0.0, %v2036
        %v2038 = vpop.f32.mrb[0].mxu0
        %v2039 = vadd.f32 0.0, %v2038
        %v2040 = vpop.f32.mrb[0].mxu0
        %v2041 = vadd.f32 0.0, %v2040
        %v2042 = vpop.f32.mrb[0].mxu0
        %v2043 = vadd.f32 0.0, %v2042
        %2044 = vmatprep.mubr.bf16.mxu0 0
        %2045 = vmatmul.mubr.bf16.gmra.mrb[0].mxu0 %v909
        %v2046 = vpop.f32.mrb[0].mxu0
        %v2047 = vadd.f32 0.0, %v2046
        %v2048 = vpop.f32.mrb[0].mxu0
        %v2049 = vadd.f32 0.0, %v2048
        %v2050 = vpop.f32.mrb[0].mxu0
        %v2051 = vadd.f32 0.0, %v2050
        %v2052 = vpop.f32.mrb[0].mxu0
        %v2053 = vadd.f32 0.0, %v2052
        %2054 = vmatprep.mubr.bf16.mxu0 0
        %2055 = vmatmul.mubr.bf16.gmra.mrb[0].mxu0 %v912
        %v2056 = vpop.f32.mrb[0].mxu0
        %v2057 = vadd.f32 0.0, %v2056
        %v2058 = vpop.f32.mrb[0].mxu0
        %v2059 = vadd.f32 0.0, %v2058
        %v2060 = vpop.f32.mrb[0].mxu0
        %v2061 = vadd.f32 0.0, %v2060
        %v2062 = vpop.f32.mrb[0].mxu0
        %v2063 = vadd.f32 0.0, %v2062
        %2064 = vmatprep.mubr.bf16.mxu0 0
        %2065 = vmatmul.mubr.bf16.gmra.mrb[0].mxu0 %v915
        %v2066 = vpop.f32.mrb[0].mxu0
        %v2067 = vadd.f32 0.0, %v2066
        %v2068 = vpop.f32.mrb[0].mxu0
        %v2069 = vadd.f32 0.0, %v2068
        %v2070 = vpop.f32.mrb[0].mxu0
        %v2071 = vadd.f32 0.0, %v2070
        %v2072 = vpop.f32.mrb[0].mxu0
        %v2073 = vadd.f32 0.0, %v2072
        %2074 = vdwg.mxu0
        %2075 = vmatprep.subr.bf16.mxu0 %v753
        %2076 = vmatpush1.bf16.msra.mxu0 %v752
        %2077 = vmatprep.subr.bf16.mxu0 %v785
        %2078 = vmatpush1.bf16.msra.mxu0 %v784
        %2079 = vmatprep.subr.bf16.mxu0 0
        %2080 = vmatpush1.bf16.msra.mxu0 0
        %2081 = vmatprep.subr.bf16.mxu0 0
        %2082 = vmatpush1.bf16.msra.mxu0 0
        %2083 = vmatprep.subr.bf16.mxu0 0
        %2084 = vmatpush1.bf16.msra.mxu0 0
        %2085 = vmatprep.subr.bf16.mxu0 0
        %2086 = vmatpush1.bf16.msra.mxu0 0
        %2087 = vmatprep.subr.bf16.mxu0 0
        %2088 = vmatpush1.bf16.msra.mxu0 0
        %2089 = vmatprep.subr.bf16.mxu0 0
        %2090 = vmatpush1.bf16.msra.mxu0 0
        %2091 = vmatprep.subr.bf16.mxu0 0
        %2092 = vmatpush1.bf16.msra.mxu0 0
        %2093 = vmatprep.subr.bf16.mxu0 0
        %2094 = vmatpush1.bf16.msra.mxu0 0
        %2095 = vmatprep.subr.bf16.mxu0 0
        %2096 = vmatpush1.bf16.msra.mxu0 0
        %2097 = vmatprep.subr.bf16.mxu0 0
        %2098 = vmatpush1.bf16.msra.mxu0 0
        %2099 = vmatprep.subr.bf16.mxu0 0
        %2100 = vmatpush1.bf16.msra.mxu0 0
        %2101 = vmatprep.subr.bf16.mxu0 0
        %2102 = vmatpush1.bf16.msra.mxu0 0
        %2103 = vmatprep.subr.bf16.mxu0 0
        %2104 = vmatpush1.bf16.msra.mxu0 0
        %2105 = vmatprep.subr.bf16.mxu0 0
        %2106 = vmatpush1.bf16.msra.mxu0 0
        %2107 = vmatprep.mubr.bf16.mxu0 0
        %2108 = vmatmul.mubr.bf16.gmra.mrb[0].mxu0 %v870
        %v2109 = vpop.f32.mrb[0].mxu0
        %v2110 = vadd.f32 0.0, %v2109
        %v2111 = vpop.f32.mrb[0].mxu0
        %v2112 = vadd.f32 0.0, %v2111
        %v2113 = vpop.f32.mrb[0].mxu0
        %v2114 = vadd.f32 0.0, %v2113
        %v2115 = vpop.f32.mrb[0].mxu0
        %v2116 = vadd.f32 0.0, %v2115
        %2117 = vmatprep.mubr.bf16.mxu0 0
        %2118 = vmatmul.mubr.bf16.gmra.mrb[0].mxu0 %v873
        %v2119 = vpop.f32.mrb[0].mxu0
        %v2120 = vadd.f32 0.0, %v2119
        %v2121 = vpop.f32.mrb[0].mxu0
        %v2122 = vadd.f32 0.0, %v2121
        %v2123 = vpop.f32.mrb[0].mxu0
        %v2124 = vadd.f32 0.0, %v2123
        %v2125 = vpop.f32.mrb[0].mxu0
        %v2126 = vadd.f32 0.0, %v2125
        %2127 = vmatprep.mubr.bf16.mxu0 0
        %2128 = vmatmul.mubr.bf16.gmra.mrb[0].mxu0 %v876
        %v2129 = vpop.f32.mrb[0].mxu0
        %v2130 = vadd.f32 0.0, %v2129
        %v2131 = vpop.f32.mrb[0].mxu0
        %v2132 = vadd.f32 0.0, %v2131
        %v2133 = vpop.f32.mrb[0].mxu0
        %v2134 = vadd.f32 0.0, %v2133
        %v2135 = vpop.f32.mrb[0].mxu0
        %v2136 = vadd.f32 0.0, %v2135
        %2137 = vmatprep.mubr.bf16.mxu0 0
        %2138 = vmatmul.mubr.bf16.gmra.mrb[0].mxu0 %v879
        %v2139 = vpop.f32.mrb[0].mxu0
        %v2140 = vadd.f32 0.0, %v2139
        %v2141 = vpop.f32.mrb[0].mxu0
        %v2142 = vadd.f32 0.0, %v2141
        %v2143 = vpop.f32.mrb[0].mxu0
        %v2144 = vadd.f32 0.0, %v2143
        %v2145 = vpop.f32.mrb[0].mxu0
        %v2146 = vadd.f32 0.0, %v2145
        %2147 = vmatprep.mubr.bf16.mxu0 0
        %2148 = vmatmul.mubr.bf16.gmra.mrb[0].mxu0 %v882
        %v2149 = vpop.f32.mrb[0].mxu0
        %v2150 = vadd.f32 0.0, %v2149
        %v2151 = vpop.f32.mrb[0].mxu0
        %v2152 = vadd.f32 0.0, %v2151
        %v2153 = vpop.f32.mrb[0].mxu0
        %v2154 = vadd.f32 0.0, %v2153
        %v2155 = vpop.f32.mrb[0].mxu0
        %v2156 = vadd.f32 0.0, %v2155
        %2157 = vmatprep.mubr.bf16.mxu0 0
        %2158 = vmatmul.mubr.bf16.gmra.mrb[0].mxu0 %v885
        %v2159 = vpop.f32.mrb[0].mxu0
        %v2160 = vadd.f32 0.0, %v2159
        %v2161 = vpop.f32.mrb[0].mxu0
        %v2162 = vadd.f32 0.0, %v2161
        %v2163 = vpop.f32.mrb[0].mxu0
        %v2164 = vadd.f32 0.0, %v2163
        %v2165 = vpop.f32.mrb[0].mxu0
        %v2166 = vadd.f32 0.0, %v2165
        %2167 = vmatprep.mubr.bf16.mxu0 0
        %2168 = vmatmul.mubr.bf16.gmra.mrb[0].mxu0 %v888
        %v2169 = vpop.f32.mrb[0].mxu0
        %v2170 = vadd.f32 0.0, %v2169
        %v2171 = vpop.f32.mrb[0].mxu0
        %v2172 = vadd.f32 0.0, %v2171
        %v2173 = vpop.f32.mrb[0].mxu0
        %v2174 = vadd.f32 0.0, %v2173
        %v2175 = vpop.f32.mrb[0].mxu0
        %v2176 = vadd.f32 0.0, %v2175
        %2177 = vmatprep.mubr.bf16.mxu0 0
        %2178 = vmatmul.mubr.bf16.gmra.mrb[0].mxu0 %v891
        %v2179 = vpop.f32.mrb[0].mxu0
        %v2180 = vadd.f32 0.0, %v2179
        %v2181 = vpop.f32.mrb[0].mxu0
        %v2182 = vadd.f32 0.0, %v2181
        %v2183 = vpop.f32.mrb[0].mxu0
        %v2184 = vadd.f32 0.0, %v2183
        %v2185 = vpop.f32.mrb[0].mxu0
        %v2186 = vadd.f32 0.0, %v2185
        %2187 = vmatprep.mubr.bf16.mxu0 0
        %2188 = vmatmul.mubr.bf16.gmra.mrb[0].mxu0 %v894
        %v2189 = vpop.f32.mrb[0].mxu0
        %v2190 = vadd.f32 0.0, %v2189
        %v2191 = vpop.f32.mrb[0].mxu0
        %v2192 = vadd.f32 0.0, %v2191
        %v2193 = vpop.f32.mrb[0].mxu0
        %v2194 = vadd.f32 0.0, %v2193
        %v2195 = vpop.f32.mrb[0].mxu0
        %v2196 = vadd.f32 0.0, %v2195
        %2197 = vmatprep.mubr.bf16.mxu0 0
        %2198 = vmatmul.mubr.bf16.gmra.mrb[0].mxu0 %v897
        %v2199 = vpop.f32.mrb[0].mxu0
        %v2200 = vadd.f32 0.0, %v2199
        %v2201 = vpop.f32.mrb[0].mxu0
        %v2202 = vadd.f32 0.0, %v2201
        %v2203 = vpop.f32.mrb[0].mxu0
        %v2204 = vadd.f32 0.0, %v2203
        %v2205 = vpop.f32.mrb[0].mxu0
        %v2206 = vadd.f32 0.0, %v2205
        %2207 = vmatprep.mubr.bf16.mxu0 0
        %2208 = vmatmul.mubr.bf16.gmra.mrb[0].mxu0 %v900
        %v2209 = vpop.f32.mrb[0].mxu0
        %v2210 = vadd.f32 0.0, %v2209
        %v2211 = vpop.f32.mrb[0].mxu0
        %v2212 = vadd.f32 0.0, %v2211
        %v2213 = vpop.f32.mrb[0].mxu0
        %v2214 = vadd.f32 0.0, %v2213
        %v2215 = vpop.f32.mrb[0].mxu0
        %v2216 = vadd.f32 0.0, %v2215
        %2217 = vmatprep.mubr.bf16.mxu0 0
        %2218 = vmatmul.mubr.bf16.gmra.mrb[0].mxu0 %v903
        %v2219 = vpop.f32.mrb[0].mxu0
        %v2220 = vadd.f32 0.0, %v2219
        %v2221 = vpop.f32.mrb[0].mxu0
        %v2222 = vadd.f32 0.0, %v2221
        %v2223 = vpop.f32.mrb[0].mxu0
        %v2224 = vadd.f32 0.0, %v2223
        %v2225 = vpop.f32.mrb[0].mxu0
        %v2226 = vadd.f32 0.0, %v2225
        %2227 = vmatprep.mubr.bf16.mxu0 0
        %2228 = vmatmul.mubr.bf16.gmra.mrb[0].mxu0 %v906
        %v2229 = vpop.f32.mrb[0].mxu0
        %v2230 = vadd.f32 0.0, %v2229
        %v2231 = vpop.f32.mrb[0].mxu0
        %v2232 = vadd.f32 0.0, %v2231
        %v2233 = vpop.f32.mrb[0].mxu0
        %v2234 = vadd.f32 0.0, %v2233
        %v2235 = vpop.f32.mrb[0].mxu0
        %v2236 = vadd.f32 0.0, %v2235
        %2237 = vmatprep.mubr.bf16.mxu0 0
        %2238 = vmatmul.mubr.bf16.gmra.mrb[0].mxu0 %v909
        %v2239 = vpop.f32.mrb[0].mxu0
        %v2240 = vadd.f32 0.0, %v2239
        %v2241 = vpop.f32.mrb[0].mxu0
        %v2242 = vadd.f32 0.0, %v2241
        %v2243 = vpop.f32.mrb[0].mxu0
        %v2244 = vadd.f32 0.0, %v2243
        %v2245 = vpop.f32.mrb[0].mxu0
        %v2246 = vadd.f32 0.0, %v2245
        %2247 = vmatprep.mubr.bf16.mxu0 0
        %2248 = vmatmul.mubr.bf16.gmra.mrb[0].mxu0 %v912
        %v2249 = vpop.f32.mrb[0].mxu0
        %v2250 = vadd.f32 0.0, %v2249
        %v2251 = vpop.f32.mrb[0].mxu0
        %v2252 = vadd.f32 0.0, %v2251
        %v2253 = vpop.f32.mrb[0].mxu0
        %v2254 = vadd.f32 0.0, %v2253
        %v2255 = vpop.f32.mrb[0].mxu0
        %v2256 = vadd.f32 0.0, %v2255
        %2257 = vmatprep.mubr.bf16.mxu0 0
        %2258 = vmatmul.mubr.bf16.gmra.mrb[0].mxu0 %v915
        %v2259 = vpop.f32.mrb[0].mxu0
        %v2260 = vadd.f32 0.0, %v2259
        %v2261 = vpop.f32.mrb[0].mxu0
        %v2262 = vadd.f32 0.0, %v2261
        %v2263 = vpop.f32.mrb[0].mxu0
        %v2264 = vadd.f32 0.0, %v2263
        %v2265 = vpop.f32.mrb[0].mxu0
        %v2266 = vadd.f32 0.0, %v2265
        %2267 = vdwg.mxu0
        %2268 = vmatprep.subr.bf16.mxu0 %v755
        %2269 = vmatpush1.bf16.msra.mxu0 %v754
        %2270 = vmatprep.subr.bf16.mxu0 %v787
        %2271 = vmatpush1.bf16.msra.mxu0 %v786
        %2272 = vmatprep.subr.bf16.mxu0 0
        %2273 = vmatpush1.bf16.msra.mxu0 0
        %2274 = vmatprep.subr.bf16.mxu0 0
        %2275 = vmatpush1.bf16.msra.mxu0 0
        %2276 = vmatprep.subr.bf16.mxu0 0
        %2277 = vmatpush1.bf16.msra.mxu0 0
        %2278 = vmatprep.subr.bf16.mxu0 0
        %2279 = vmatpush1.bf16.msra.mxu0 0
        %2280 = vmatprep.subr.bf16.mxu0 0
        %2281 = vmatpush1.bf16.msra.mxu0 0
        %2282 = vmatprep.subr.bf16.mxu0 0
        %2283 = vmatpush1.bf16.msra.mxu0 0
        %2284 = vmatprep.subr.bf16.mxu0 0
        %2285 = vmatpush1.bf16.msra.mxu0 0
        %2286 = vmatprep.subr.bf16.mxu0 0
        %2287 = vmatpush1.bf16.msra.mxu0 0
        %2288 = vmatprep.subr.bf16.mxu0 0
        %2289 = vmatpush1.bf16.msra.mxu0 0
        %2290 = vmatprep.subr.bf16.mxu0 0
        %2291 = vmatpush1.bf16.msra.mxu0 0
        %2292 = vmatprep.subr.bf16.mxu0 0
        %2293 = vmatpush1.bf16.msra.mxu0 0
        %2294 = vmatprep.subr.bf16.mxu0 0
        %2295 = vmatpush1.bf16.msra.mxu0 0
        %2296 = vmatprep.subr.bf16.mxu0 0
        %2297 = vmatpush1.bf16.msra.mxu0 0
        %2298 = vmatprep.subr.bf16.mxu0 0
        %2299 = vmatpush1.bf16.msra.mxu0 0
        %2300 = vmatprep.mubr.bf16.mxu0 0
        %2301 = vmatmul.mubr.bf16.gmra.mrb[0].mxu0 %v870
        %v2302 = vpop.f32.mrb[0].mxu0
        %v2303 = vadd.f32 0.0, %v2302
        %v2304 = vpop.f32.mrb[0].mxu0
        %v2305 = vadd.f32 0.0, %v2304
        %v2306 = vpop.f32.mrb[0].mxu0
        %v2307 = vadd.f32 0.0, %v2306
        %v2308 = vpop.f32.mrb[0].mxu0
        %v2309 = vadd.f32 0.0, %v2308
        %2310 = vmatprep.mubr.bf16.mxu0 0
        %2311 = vmatmul.mubr.bf16.gmra.mrb[0].mxu0 %v873
        %v2312 = vpop.f32.mrb[0].mxu0
        %v2313 = vadd.f32 0.0, %v2312
        %v2314 = vpop.f32.mrb[0].mxu0
        %v2315 = vadd.f32 0.0, %v2314
        %v2316 = vpop.f32.mrb[0].mxu0
        %v2317 = vadd.f32 0.0, %v2316
        %v2318 = vpop.f32.mrb[0].mxu0
        %v2319 = vadd.f32 0.0, %v2318
        %2320 = vmatprep.mubr.bf16.mxu0 0
        %2321 = vmatmul.mubr.bf16.gmra.mrb[0].mxu0 %v876
        %v2322 = vpop.f32.mrb[0].mxu0
        %v2323 = vadd.f32 0.0, %v2322
        %v2324 = vpop.f32.mrb[0].mxu0
        %v2325 = vadd.f32 0.0, %v2324
        %v2326 = vpop.f32.mrb[0].mxu0
        %v2327 = vadd.f32 0.0, %v2326
        %v2328 = vpop.f32.mrb[0].mxu0
        %v2329 = vadd.f32 0.0, %v2328
        %2330 = vmatprep.mubr.bf16.mxu0 0
        %2331 = vmatmul.mubr.bf16.gmra.mrb[0].mxu0 %v879
        %v2332 = vpop.f32.mrb[0].mxu0
        %v2333 = vadd.f32 0.0, %v2332
        %v2334 = vpop.f32.mrb[0].mxu0
        %v2335 = vadd.f32 0.0, %v2334
        %v2336 = vpop.f32.mrb[0].mxu0
        %v2337 = vadd.f32 0.0, %v2336
        %v2338 = vpop.f32.mrb[0].mxu0
        %v2339 = vadd.f32 0.0, %v2338
        %2340 = vmatprep.mubr.bf16.mxu0 0
        %2341 = vmatmul.mubr.bf16.gmra.mrb[0].mxu0 %v882
        %v2342 = vpop.f32.mrb[0].mxu0
        %v2343 = vadd.f32 0.0, %v2342
        %v2344 = vpop.f32.mrb[0].mxu0
        %v2345 = vadd.f32 0.0, %v2344
        %v2346 = vpop.f32.mrb[0].mxu0
        %v2347 = vadd.f32 0.0, %v2346
        %v2348 = vpop.f32.mrb[0].mxu0
        %v2349 = vadd.f32 0.0, %v2348
        %2350 = vmatprep.mubr.bf16.mxu0 0
        %2351 = vmatmul.mubr.bf16.gmra.mrb[0].mxu0 %v885
        %v2352 = vpop.f32.mrb[0].mxu0
        %v2353 = vadd.f32 0.0, %v2352
        %v2354 = vpop.f32.mrb[0].mxu0
        %v2355 = vadd.f32 0.0, %v2354
        %v2356 = vpop.f32.mrb[0].mxu0
        %v2357 = vadd.f32 0.0, %v2356
        %v2358 = vpop.f32.mrb[0].mxu0
        %v2359 = vadd.f32 0.0, %v2358
        %2360 = vmatprep.mubr.bf16.mxu0 0
        %2361 = vmatmul.mubr.bf16.gmra.mrb[0].mxu0 %v888
        %v2362 = vpop.f32.mrb[0].mxu0
        %v2363 = vadd.f32 0.0, %v2362
        %v2364 = vpop.f32.mrb[0].mxu0
        %v2365 = vadd.f32 0.0, %v2364
        %v2366 = vpop.f32.mrb[0].mxu0
        %v2367 = vadd.f32 0.0, %v2366
        %v2368 = vpop.f32.mrb[0].mxu0
        %v2369 = vadd.f32 0.0, %v2368
        %2370 = vmatprep.mubr.bf16.mxu0 0
        %2371 = vmatmul.mubr.bf16.gmra.mrb[0].mxu0 %v891
        %v2372 = vpop.f32.mrb[0].mxu0
        %v2373 = vadd.f32 0.0, %v2372
        %v2374 = vpop.f32.mrb[0].mxu0
        %v2375 = vadd.f32 0.0, %v2374
        %v2376 = vpop.f32.mrb[0].mxu0
        %v2377 = vadd.f32 0.0, %v2376
        %v2378 = vpop.f32.mrb[0].mxu0
        %v2379 = vadd.f32 0.0, %v2378
        %2380 = vmatprep.mubr.bf16.mxu0 0
        %2381 = vmatmul.mubr.bf16.gmra.mrb[0].mxu0 %v894
        %v2382 = vpop.f32.mrb[0].mxu0
        %v2383 = vadd.f32 0.0, %v2382
        %v2384 = vpop.f32.mrb[0].mxu0
        %v2385 = vadd.f32 0.0, %v2384
        %v2386 = vpop.f32.mrb[0].mxu0
        %v2387 = vadd.f32 0.0, %v2386
        %v2388 = vpop.f32.mrb[0].mxu0
        %v2389 = vadd.f32 0.0, %v2388
        %2390 = vmatprep.mubr.bf16.mxu0 0
        %2391 = vmatmul.mubr.bf16.gmra.mrb[0].mxu0 %v897
        %v2392 = vpop.f32.mrb[0].mxu0
        %v2393 = vadd.f32 0.0, %v2392
        %v2394 = vpop.f32.mrb[0].mxu0
        %v2395 = vadd.f32 0.0, %v2394
        %v2396 = vpop.f32.mrb[0].mxu0
        %v2397 = vadd.f32 0.0, %v2396
        %v2398 = vpop.f32.mrb[0].mxu0
        %v2399 = vadd.f32 0.0, %v2398
        %2400 = vmatprep.mubr.bf16.mxu0 0
        %2401 = vmatmul.mubr.bf16.gmra.mrb[0].mxu0 %v900
        %v2402 = vpop.f32.mrb[0].mxu0
        %v2403 = vadd.f32 0.0, %v2402
        %v2404 = vpop.f32.mrb[0].mxu0
        %v2405 = vadd.f32 0.0, %v2404
        %v2406 = vpop.f32.mrb[0].mxu0
        %v2407 = vadd.f32 0.0, %v2406
        %v2408 = vpop.f32.mrb[0].mxu0
        %v2409 = vadd.f32 0.0, %v2408
        %2410 = vmatprep.mubr.bf16.mxu0 0
        %2411 = vmatmul.mubr.bf16.gmra.mrb[0].mxu0 %v903
        %v2412 = vpop.f32.mrb[0].mxu0
        %v2413 = vadd.f32 0.0, %v2412
        %v2414 = vpop.f32.mrb[0].mxu0
        %v2415 = vadd.f32 0.0, %v2414
        %v2416 = vpop.f32.mrb[0].mxu0
        %v2417 = vadd.f32 0.0, %v2416
        %v2418 = vpop.f32.mrb[0].mxu0
        %v2419 = vadd.f32 0.0, %v2418
        %2420 = vmatprep.mubr.bf16.mxu0 0
        %2421 = vmatmul.mubr.bf16.gmra.mrb[0].mxu0 %v906
        %v2422 = vpop.f32.mrb[0].mxu0
        %v2423 = vadd.f32 0.0, %v2422
        %v2424 = vpop.f32.mrb[0].mxu0
        %v2425 = vadd.f32 0.0, %v2424
        %v2426 = vpop.f32.mrb[0].mxu0
        %v2427 = vadd.f32 0.0, %v2426
        %v2428 = vpop.f32.mrb[0].mxu0
        %v2429 = vadd.f32 0.0, %v2428
        %2430 = vmatprep.mubr.bf16.mxu0 0
        %2431 = vmatmul.mubr.bf16.gmra.mrb[0].mxu0 %v909
        %v2432 = vpop.f32.mrb[0].mxu0
        %v2433 = vadd.f32 0.0, %v2432
        %v2434 = vpop.f32.mrb[0].mxu0
        %v2435 = vadd.f32 0.0, %v2434
        %v2436 = vpop.f32.mrb[0].mxu0
        %v2437 = vadd.f32 0.0, %v2436
        %v2438 = vpop.f32.mrb[0].mxu0
        %v2439 = vadd.f32 0.0, %v2438
        %2440 = vmatprep.mubr.bf16.mxu0 0
        %2441 = vmatmul.mubr.bf16.gmra.mrb[0].mxu0 %v912
        %v2442 = vpop.f32.mrb[0].mxu0
        %v2443 = vadd.f32 0.0, %v2442
        %v2444 = vpop.f32.mrb[0].mxu0
        %v2445 = vadd.f32 0.0, %v2444
        %v2446 = vpop.f32.mrb[0].mxu0
        %v2447 = vadd.f32 0.0, %v2446
        %v2448 = vpop.f32.mrb[0].mxu0
        %v2449 = vadd.f32 0.0, %v2448
        %2450 = vmatprep.mubr.bf16.mxu0 0
        %2451 = vmatmul.mubr.bf16.gmra.mrb[0].mxu0 %v915
        %v2452 = vpop.f32.mrb[0].mxu0
        %v2453 = vadd.f32 0.0, %v2452
        %v2454 = vpop.f32.mrb[0].mxu0
        %v2455 = vadd.f32 0.0, %v2454
        %v2456 = vpop.f32.mrb[0].mxu0
        %v2457 = vadd.f32 0.0, %v2456
        %v2458 = vpop.f32.mrb[0].mxu0
        %v2459 = vadd.f32 0.0, %v2458
        %2460 = vdwg.mxu0
        %2461 = vmatprep.subr.bf16.mxu0 %v757
        %2462 = vmatpush1.bf16.msra.mxu0 %v756
        %2463 = vmatprep.subr.bf16.mxu0 %v789
        %2464 = vmatpush1.bf16.msra.mxu0 %v788
        %2465 = vmatprep.subr.bf16.mxu0 0
        %2466 = vmatpush1.bf16.msra.mxu0 0
        %2467 = vmatprep.subr.bf16.mxu0 0
        %2468 = vmatpush1.bf16.msra.mxu0 0
        %2469 = vmatprep.subr.bf16.mxu0 0
        %2470 = vmatpush1.bf16.msra.mxu0 0
        %2471 = vmatprep.subr.bf16.mxu0 0
        %2472 = vmatpush1.bf16.msra.mxu0 0
        %2473 = vmatprep.subr.bf16.mxu0 0
        %2474 = vmatpush1.bf16.msra.mxu0 0
        %2475 = vmatprep.subr.bf16.mxu0 0
        %2476 = vmatpush1.bf16.msra.mxu0 0
        %2477 = vmatprep.subr.bf16.mxu0 0
        %2478 = vmatpush1.bf16.msra.mxu0 0
        %2479 = vmatprep.subr.bf16.mxu0 0
        %2480 = vmatpush1.bf16.msra.mxu0 0
        %2481 = vmatprep.subr.bf16.mxu0 0
        %2482 = vmatpush1.bf16.msra.mxu0 0
        %2483 = vmatprep.subr.bf16.mxu0 0
        %2484 = vmatpush1.bf16.msra.mxu0 0
        %2485 = vmatprep.subr.bf16.mxu0 0
        %2486 = vmatpush1.bf16.msra.mxu0 0
        %2487 = vmatprep.subr.bf16.mxu0 0
        %2488 = vmatpush1.bf16.msra.mxu0 0
        %2489 = vmatprep.subr.bf16.mxu0 0
        %2490 = vmatpush1.bf16.msra.mxu0 0
        %2491 = vmatprep.subr.bf16.mxu0 0
        %2492 = vmatpush1.bf16.msra.mxu0 0
        %2493 = vmatprep.mubr.bf16.mxu0 0
        %2494 = vmatmul.mubr.bf16.gmra.mrb[0].mxu0 %v870
        %v2495 = vpop.f32.mrb[0].mxu0
        %v2496 = vadd.f32 0.0, %v2495
        %v2497 = vpop.f32.mrb[0].mxu0
        %v2498 = vadd.f32 0.0, %v2497
        %v2499 = vpop.f32.mrb[0].mxu0
        %v2500 = vadd.f32 0.0, %v2499
        %v2501 = vpop.f32.mrb[0].mxu0
        %v2502 = vadd.f32 0.0, %v2501
        %2503 = vmatprep.mubr.bf16.mxu0 0
        %2504 = vmatmul.mubr.bf16.gmra.mrb[0].mxu0 %v873
        %v2505 = vpop.f32.mrb[0].mxu0
        %v2506 = vadd.f32 0.0, %v2505
        %v2507 = vpop.f32.mrb[0].mxu0
        %v2508 = vadd.f32 0.0, %v2507
        %v2509 = vpop.f32.mrb[0].mxu0
        %v2510 = vadd.f32 0.0, %v2509
        %v2511 = vpop.f32.mrb[0].mxu0
        %v2512 = vadd.f32 0.0, %v2511
        %2513 = vmatprep.mubr.bf16.mxu0 0
        %2514 = vmatmul.mubr.bf16.gmra.mrb[0].mxu0 %v876
        %v2515 = vpop.f32.mrb[0].mxu0
        %v2516 = vadd.f32 0.0, %v2515
        %v2517 = vpop.f32.mrb[0].mxu0
        %v2518 = vadd.f32 0.0, %v2517
        %v2519 = vpop.f32.mrb[0].mxu0
        %v2520 = vadd.f32 0.0, %v2519
        %v2521 = vpop.f32.mrb[0].mxu0
        %v2522 = vadd.f32 0.0, %v2521
        %2523 = vmatprep.mubr.bf16.mxu0 0
        %2524 = vmatmul.mubr.bf16.gmra.mrb[0].mxu0 %v879
        %v2525 = vpop.f32.mrb[0].mxu0
        %v2526 = vadd.f32 0.0, %v2525
        %v2527 = vpop.f32.mrb[0].mxu0
        %v2528 = vadd.f32 0.0, %v2527
        %v2529 = vpop.f32.mrb[0].mxu0
        %v2530 = vadd.f32 0.0, %v2529
        %v2531 = vpop.f32.mrb[0].mxu0
        %v2532 = vadd.f32 0.0, %v2531
        %2533 = vmatprep.mubr.bf16.mxu0 0
        %2534 = vmatmul.mubr.bf16.gmra.mrb[0].mxu0 %v882
        %v2535 = vpop.f32.mrb[0].mxu0
        %v2536 = vadd.f32 0.0, %v2535
        %v2537 = vpop.f32.mrb[0].mxu0
        %v2538 = vadd.f32 0.0, %v2537
        %v2539 = vpop.f32.mrb[0].mxu0
        %v2540 = vadd.f32 0.0, %v2539
        %v2541 = vpop.f32.mrb[0].mxu0
        %v2542 = vadd.f32 0.0, %v2541
        %2543 = vmatprep.mubr.bf16.mxu0 0
        %2544 = vmatmul.mubr.bf16.gmra.mrb[0].mxu0 %v885
        %v2545 = vpop.f32.mrb[0].mxu0
        %v2546 = vadd.f32 0.0, %v2545
        %v2547 = vpop.f32.mrb[0].mxu0
        %v2548 = vadd.f32 0.0, %v2547
        %v2549 = vpop.f32.mrb[0].mxu0
        %v2550 = vadd.f32 0.0, %v2549
        %v2551 = vpop.f32.mrb[0].mxu0
        %v2552 = vadd.f32 0.0, %v2551
        %2553 = vmatprep.mubr.bf16.mxu0 0
        %2554 = vmatmul.mubr.bf16.gmra.mrb[0].mxu0 %v888
        %v2555 = vpop.f32.mrb[0].mxu0
        %v2556 = vadd.f32 0.0, %v2555
        %v2557 = vpop.f32.mrb[0].mxu0
        %v2558 = vadd.f32 0.0, %v2557
        %v2559 = vpop.f32.mrb[0].mxu0
        %v2560 = vadd.f32 0.0, %v2559
        %v2561 = vpop.f32.mrb[0].mxu0
        %v2562 = vadd.f32 0.0, %v2561
        %2563 = vmatprep.mubr.bf16.mxu0 0
        %2564 = vmatmul.mubr.bf16.gmra.mrb[0].mxu0 %v891
        %v2565 = vpop.f32.mrb[0].mxu0
        %v2566 = vadd.f32 0.0, %v2565
        %v2567 = vpop.f32.mrb[0].mxu0
        %v2568 = vadd.f32 0.0, %v2567
        %v2569 = vpop.f32.mrb[0].mxu0
        %v2570 = vadd.f32 0.0, %v2569
        %v2571 = vpop.f32.mrb[0].mxu0
        %v2572 = vadd.f32 0.0, %v2571
        %2573 = vmatprep.mubr.bf16.mxu0 0
        %2574 = vmatmul.mubr.bf16.gmra.mrb[0].mxu0 %v894
        %v2575 = vpop.f32.mrb[0].mxu0
        %v2576 = vadd.f32 0.0, %v2575
        %v2577 = vpop.f32.mrb[0].mxu0
        %v2578 = vadd.f32 0.0, %v2577
        %v2579 = vpop.f32.mrb[0].mxu0
        %v2580 = vadd.f32 0.0, %v2579
        %v2581 = vpop.f32.mrb[0].mxu0
        %v2582 = vadd.f32 0.0, %v2581
        %2583 = vmatprep.mubr.bf16.mxu0 0
        %2584 = vmatmul.mubr.bf16.gmra.mrb[0].mxu0 %v897
        %v2585 = vpop.f32.mrb[0].mxu0
        %v2586 = vadd.f32 0.0, %v2585
        %v2587 = vpop.f32.mrb[0].mxu0
        %v2588 = vadd.f32 0.0, %v2587
        %v2589 = vpop.f32.mrb[0].mxu0
        %v2590 = vadd.f32 0.0, %v2589
        %v2591 = vpop.f32.mrb[0].mxu0
        %v2592 = vadd.f32 0.0, %v2591
        %2593 = vmatprep.mubr.bf16.mxu0 0
        %2594 = vmatmul.mubr.bf16.gmra.mrb[0].mxu0 %v900
        %v2595 = vpop.f32.mrb[0].mxu0
        %v2596 = vadd.f32 0.0, %v2595
        %v2597 = vpop.f32.mrb[0].mxu0
        %v2598 = vadd.f32 0.0, %v2597
        %v2599 = vpop.f32.mrb[0].mxu0
        %v2600 = vadd.f32 0.0, %v2599
        %v2601 = vpop.f32.mrb[0].mxu0
        %v2602 = vadd.f32 0.0, %v2601
        %2603 = vmatprep.mubr.bf16.mxu0 0
        %2604 = vmatmul.mubr.bf16.gmra.mrb[0].mxu0 %v903
        %v2605 = vpop.f32.mrb[0].mxu0
        %v2606 = vadd.f32 0.0, %v2605
        %v2607 = vpop.f32.mrb[0].mxu0
        %v2608 = vadd.f32 0.0, %v2607
        %v2609 = vpop.f32.mrb[0].mxu0
        %v2610 = vadd.f32 0.0, %v2609
        %v2611 = vpop.f32.mrb[0].mxu0
        %v2612 = vadd.f32 0.0, %v2611
        %2613 = vmatprep.mubr.bf16.mxu0 0
        %2614 = vmatmul.mubr.bf16.gmra.mrb[0].mxu0 %v906
        %v2615 = vpop.f32.mrb[0].mxu0
        %v2616 = vadd.f32 0.0, %v2615
        %v2617 = vpop.f32.mrb[0].mxu0
        %v2618 = vadd.f32 0.0, %v2617
        %v2619 = vpop.f32.mrb[0].mxu0
        %v2620 = vadd.f32 0.0, %v2619
        %v2621 = vpop.f32.mrb[0].mxu0
        %v2622 = vadd.f32 0.0, %v2621
        %2623 = vmatprep.mubr.bf16.mxu0 0
        %2624 = vmatmul.mubr.bf16.gmra.mrb[0].mxu0 %v909
        %v2625 = vpop.f32.mrb[0].mxu0
        %v2626 = vadd.f32 0.0, %v2625
        %v2627 = vpop.f32.mrb[0].mxu0
        %v2628 = vadd.f32 0.0, %v2627
        %v2629 = vpop.f32.mrb[0].mxu0
        %v2630 = vadd.f32 0.0, %v2629
        %v2631 = vpop.f32.mrb[0].mxu0
        %v2632 = vadd.f32 0.0, %v2631
        %2633 = vmatprep.mubr.bf16.mxu0 0
        %2634 = vmatmul.mubr.bf16.gmra.mrb[0].mxu0 %v912
        %v2635 = vpop.f32.mrb[0].mxu0
        %v2636 = vadd.f32 0.0, %v2635
        %v2637 = vpop.f32.mrb[0].mxu0
        %v2638 = vadd.f32 0.0, %v2637
        %v2639 = vpop.f32.mrb[0].mxu0
        %v2640 = vadd.f32 0.0, %v2639
        %v2641 = vpop.f32.mrb[0].mxu0
        %v2642 = vadd.f32 0.0, %v2641
        %2643 = vmatprep.mubr.bf16.mxu0 0
        %2644 = vmatmul.mubr.bf16.gmra.mrb[0].mxu0 %v915
        %v2645 = vpop.f32.mrb[0].mxu0
        %v2646 = vadd.f32 0.0, %v2645
        %v2647 = vpop.f32.mrb[0].mxu0
        %v2648 = vadd.f32 0.0, %v2647
        %v2649 = vpop.f32.mrb[0].mxu0
        %v2650 = vadd.f32 0.0, %v2649
        %v2651 = vpop.f32.mrb[0].mxu0
        %v2652 = vadd.f32 0.0, %v2651
        %2653 = vdwg.mxu0
        %2654 = vmatprep.subr.bf16.mxu0 %v759
        %2655 = vmatpush1.bf16.msra.mxu0 %v758
        %2656 = vmatprep.subr.bf16.mxu0 %v791
        %2657 = vmatpush1.bf16.msra.mxu0 %v790
        %2658 = vmatprep.subr.bf16.mxu0 0
        %2659 = vmatpush1.bf16.msra.mxu0 0
        %2660 = vmatprep.subr.bf16.mxu0 0
        %2661 = vmatpush1.bf16.msra.mxu0 0
        %2662 = vmatprep.subr.bf16.mxu0 0
        %2663 = vmatpush1.bf16.msra.mxu0 0
        %2664 = vmatprep.subr.bf16.mxu0 0
        %2665 = vmatpush1.bf16.msra.mxu0 0
        %2666 = vmatprep.subr.bf16.mxu0 0
        %2667 = vmatpush1.bf16.msra.mxu0 0
        %2668 = vmatprep.subr.bf16.mxu0 0
        %2669 = vmatpush1.bf16.msra.mxu0 0
        %2670 = vmatprep.subr.bf16.mxu0 0
        %2671 = vmatpush1.bf16.msra.mxu0 0
        %2672 = vmatprep.subr.bf16.mxu0 0
        %2673 = vmatpush1.bf16.msra.mxu0 0
        %2674 = vmatprep.subr.bf16.mxu0 0
        %2675 = vmatpush1.bf16.msra.mxu0 0
        %2676 = vmatprep.subr.bf16.mxu0 0
        %2677 = vmatpush1.bf16.msra.mxu0 0
        %2678 = vmatprep.subr.bf16.mxu0 0
        %2679 = vmatpush1.bf16.msra.mxu0 0
        %2680 = vmatprep.subr.bf16.mxu0 0
        %2681 = vmatpush1.bf16.msra.mxu0 0
        %2682 = vmatprep.subr.bf16.mxu0 0
        %2683 = vmatpush1.bf16.msra.mxu0 0
        %2684 = vmatprep.subr.bf16.mxu0 0
        %2685 = vmatpush1.bf16.msra.mxu0 0
        %2686 = vmatprep.mubr.bf16.mxu0 0
        %2687 = vmatmul.mubr.bf16.gmra.mrb[0].mxu0 %v870
        %v2688 = vpop.f32.mrb[0].mxu0
        %v2689 = vadd.f32 0.0, %v2688
        %v2690 = vpop.f32.mrb[0].mxu0
        %v2691 = vadd.f32 0.0, %v2690
        %v2692 = vpop.f32.mrb[0].mxu0
        %v2693 = vadd.f32 0.0, %v2692
        %v2694 = vpop.f32.mrb[0].mxu0
        %v2695 = vadd.f32 0.0, %v2694
        %2696 = vmatprep.mubr.bf16.mxu0 0
        %2697 = vmatmul.mubr.bf16.gmra.mrb[0].mxu0 %v873
        %v2698 = vpop.f32.mrb[0].mxu0
        %v2699 = vadd.f32 0.0, %v2698
        %v2700 = vpop.f32.mrb[0].mxu0
        %v2701 = vadd.f32 0.0, %v2700
        %v2702 = vpop.f32.mrb[0].mxu0
        %v2703 = vadd.f32 0.0, %v2702
        %v2704 = vpop.f32.mrb[0].mxu0
        %v2705 = vadd.f32 0.0, %v2704
        %2706 = vmatprep.mubr.bf16.mxu0 0
        %2707 = vmatmul.mubr.bf16.gmra.mrb[0].mxu0 %v876
        %v2708 = vpop.f32.mrb[0].mxu0
        %v2709 = vadd.f32 0.0, %v2708
        %v2710 = vpop.f32.mrb[0].mxu0
        %v2711 = vadd.f32 0.0, %v2710
        %v2712 = vpop.f32.mrb[0].mxu0
        %v2713 = vadd.f32 0.0, %v2712
        %v2714 = vpop.f32.mrb[0].mxu0
        %v2715 = vadd.f32 0.0, %v2714
        %2716 = vmatprep.mubr.bf16.mxu0 0
        %2717 = vmatmul.mubr.bf16.gmra.mrb[0].mxu0 %v879
        %v2718 = vpop.f32.mrb[0].mxu0
        %v2719 = vadd.f32 0.0, %v2718
        %v2720 = vpop.f32.mrb[0].mxu0
        %v2721 = vadd.f32 0.0, %v2720
        %v2722 = vpop.f32.mrb[0].mxu0
        %v2723 = vadd.f32 0.0, %v2722
        %v2724 = vpop.f32.mrb[0].mxu0
        %v2725 = vadd.f32 0.0, %v2724
        %2726 = vmatprep.mubr.bf16.mxu0 0
        %2727 = vmatmul.mubr.bf16.gmra.mrb[0].mxu0 %v882
        %v2728 = vpop.f32.mrb[0].mxu0
        %v2729 = vadd.f32 0.0, %v2728
        %v2730 = vpop.f32.mrb[0].mxu0
        %v2731 = vadd.f32 0.0, %v2730
        %v2732 = vpop.f32.mrb[0].mxu0
        %v2733 = vadd.f32 0.0, %v2732
        %v2734 = vpop.f32.mrb[0].mxu0
        %v2735 = vadd.f32 0.0, %v2734
        %2736 = vmatprep.mubr.bf16.mxu0 0
        %2737 = vmatmul.mubr.bf16.gmra.mrb[0].mxu0 %v885
        %v2738 = vpop.f32.mrb[0].mxu0
        %v2739 = vadd.f32 0.0, %v2738
        %v2740 = vpop.f32.mrb[0].mxu0
        %v2741 = vadd.f32 0.0, %v2740
        %v2742 = vpop.f32.mrb[0].mxu0
        %v2743 = vadd.f32 0.0, %v2742
        %v2744 = vpop.f32.mrb[0].mxu0
        %v2745 = vadd.f32 0.0, %v2744
        %2746 = vmatprep.mubr.bf16.mxu0 0
        %2747 = vmatmul.mubr.bf16.gmra.mrb[0].mxu0 %v888
        %v2748 = vpop.f32.mrb[0].mxu0
        %v2749 = vadd.f32 0.0, %v2748
        %v2750 = vpop.f32.mrb[0].mxu0
        %v2751 = vadd.f32 0.0, %v2750
        %v2752 = vpop.f32.mrb[0].mxu0
        %v2753 = vadd.f32 0.0, %v2752
        %v2754 = vpop.f32.mrb[0].mxu0
        %v2755 = vadd.f32 0.0, %v2754
        %2756 = vmatprep.mubr.bf16.mxu0 0
        %2757 = vmatmul.mubr.bf16.gmra.mrb[0].mxu0 %v891
        %v2758 = vpop.f32.mrb[0].mxu0
        %v2759 = vadd.f32 0.0, %v2758
        %v2760 = vpop.f32.mrb[0].mxu0
        %v2761 = vadd.f32 0.0, %v2760
        %v2762 = vpop.f32.mrb[0].mxu0
        %v2763 = vadd.f32 0.0, %v2762
        %v2764 = vpop.f32.mrb[0].mxu0
        %v2765 = vadd.f32 0.0, %v2764
        %2766 = vmatprep.mubr.bf16.mxu0 0
        %2767 = vmatmul.mubr.bf16.gmra.mrb[0].mxu0 %v894
        %v2768 = vpop.f32.mrb[0].mxu0
        %v2769 = vadd.f32 0.0, %v2768
        %v2770 = vpop.f32.mrb[0].mxu0
        %v2771 = vadd.f32 0.0, %v2770
        %v2772 = vpop.f32.mrb[0].mxu0
        %v2773 = vadd.f32 0.0, %v2772
        %v2774 = vpop.f32.mrb[0].mxu0
        %v2775 = vadd.f32 0.0, %v2774
        %2776 = vmatprep.mubr.bf16.mxu0 0
        %2777 = vmatmul.mubr.bf16.gmra.mrb[0].mxu0 %v897
        %v2778 = vpop.f32.mrb[0].mxu0
        %v2779 = vadd.f32 0.0, %v2778
        %v2780 = vpop.f32.mrb[0].mxu0
        %v2781 = vadd.f32 0.0, %v2780
        %v2782 = vpop.f32.mrb[0].mxu0
        %v2783 = vadd.f32 0.0, %v2782
        %v2784 = vpop.f32.mrb[0].mxu0
        %v2785 = vadd.f32 0.0, %v2784
        %2786 = vmatprep.mubr.bf16.mxu0 0
        %2787 = vmatmul.mubr.bf16.gmra.mrb[0].mxu0 %v900
        %v2788 = vpop.f32.mrb[0].mxu0
        %v2789 = vadd.f32 0.0, %v2788
        %v2790 = vpop.f32.mrb[0].mxu0
        %v2791 = vadd.f32 0.0, %v2790
        %v2792 = vpop.f32.mrb[0].mxu0
        %v2793 = vadd.f32 0.0, %v2792
        %v2794 = vpop.f32.mrb[0].mxu0
        %v2795 = vadd.f32 0.0, %v2794
        %2796 = vmatprep.mubr.bf16.mxu0 0
        %2797 = vmatmul.mubr.bf16.gmra.mrb[0].mxu0 %v903
        %v2798 = vpop.f32.mrb[0].mxu0
        %v2799 = vadd.f32 0.0, %v2798
        %v2800 = vpop.f32.mrb[0].mxu0
        %v2801 = vadd.f32 0.0, %v2800
        %v2802 = vpop.f32.mrb[0].mxu0
        %v2803 = vadd.f32 0.0, %v2802
        %v2804 = vpop.f32.mrb[0].mxu0
        %v2805 = vadd.f32 0.0, %v2804
        %2806 = vmatprep.mubr.bf16.mxu0 0
        %2807 = vmatmul.mubr.bf16.gmra.mrb[0].mxu0 %v906
        %v2808 = vpop.f32.mrb[0].mxu0
        %v2809 = vadd.f32 0.0, %v2808
        %v2810 = vpop.f32.mrb[0].mxu0
        %v2811 = vadd.f32 0.0, %v2810
        %v2812 = vpop.f32.mrb[0].mxu0
        %v2813 = vadd.f32 0.0, %v2812
        %v2814 = vpop.f32.mrb[0].mxu0
        %v2815 = vadd.f32 0.0, %v2814
        %2816 = vmatprep.mubr.bf16.mxu0 0
        %2817 = vmatmul.mubr.bf16.gmra.mrb[0].mxu0 %v909
        %v2818 = vpop.f32.mrb[0].mxu0
        %v2819 = vadd.f32 0.0, %v2818
        %v2820 = vpop.f32.mrb[0].mxu0
        %v2821 = vadd.f32 0.0, %v2820
        %v2822 = vpop.f32.mrb[0].mxu0
        %v2823 = vadd.f32 0.0, %v2822
        %v2824 = vpop.f32.mrb[0].mxu0
        %v2825 = vadd.f32 0.0, %v2824
        %2826 = vmatprep.mubr.bf16.mxu0 0
        %2827 = vmatmul.mubr.bf16.gmra.mrb[0].mxu0 %v912
        %v2828 = vpop.f32.mrb[0].mxu0
        %v2829 = vadd.f32 0.0, %v2828
        %v2830 = vpop.f32.mrb[0].mxu0
        %v2831 = vadd.f32 0.0, %v2830
        %v2832 = vpop.f32.mrb[0].mxu0
        %v2833 = vadd.f32 0.0, %v2832
        %v2834 = vpop.f32.mrb[0].mxu0
        %v2835 = vadd.f32 0.0, %v2834
        %2836 = vmatprep.mubr.bf16.mxu0 0
        %2837 = vmatmul.mubr.bf16.gmra.mrb[0].mxu0 %v915
        %v2838 = vpop.f32.mrb[0].mxu0
        %v2839 = vadd.f32 0.0, %v2838
        %v2840 = vpop.f32.mrb[0].mxu0
        %v2841 = vadd.f32 0.0, %v2840
        %v2842 = vpop.f32.mrb[0].mxu0
        %v2843 = vadd.f32 0.0, %v2842
        %v2844 = vpop.f32.mrb[0].mxu0
        %v2845 = vadd.f32 0.0, %v2844
        %2846 = vdwg.mxu0
        %2847 = vmatprep.subr.bf16.mxu0 %v761
        %2848 = vmatpush1.bf16.msra.mxu0 %v760
        %2849 = vmatprep.subr.bf16.mxu0 %v793
        %2850 = vmatpush1.bf16.msra.mxu0 %v792
        %2851 = vmatprep.subr.bf16.mxu0 0
        %2852 = vmatpush1.bf16.msra.mxu0 0
        %2853 = vmatprep.subr.bf16.mxu0 0
        %2854 = vmatpush1.bf16.msra.mxu0 0
        %2855 = vmatprep.subr.bf16.mxu0 0
        %2856 = vmatpush1.bf16.msra.mxu0 0
        %2857 = vmatprep.subr.bf16.mxu0 0
        %2858 = vmatpush1.bf16.msra.mxu0 0
        %2859 = vmatprep.subr.bf16.mxu0 0
        %2860 = vmatpush1.bf16.msra.mxu0 0
        %2861 = vmatprep.subr.bf16.mxu0 0
        %2862 = vmatpush1.bf16.msra.mxu0 0
        %2863 = vmatprep.subr.bf16.mxu0 0
        %2864 = vmatpush1.bf16.msra.mxu0 0
        %2865 = vmatprep.subr.bf16.mxu0 0
        %2866 = vmatpush1.bf16.msra.mxu0 0
        %2867 = vmatprep.subr.bf16.mxu0 0
        %2868 = vmatpush1.bf16.msra.mxu0 0
        %2869 = vmatprep.subr.bf16.mxu0 0
        %2870 = vmatpush1.bf16.msra.mxu0 0
        %2871 = vmatprep.subr.bf16.mxu0 0
        %2872 = vmatpush1.bf16.msra.mxu0 0
        %2873 = vmatprep.subr.bf16.mxu0 0
        %2874 = vmatpush1.bf16.msra.mxu0 0
        %2875 = vmatprep.subr.bf16.mxu0 0
        %2876 = vmatpush1.bf16.msra.mxu0 0
        %2877 = vmatprep.subr.bf16.mxu0 0
        %2878 = vmatpush1.bf16.msra.mxu0 0
        %2879 = vmatprep.mubr.bf16.mxu0 0
        %2880 = vmatmul.mubr.bf16.gmra.mrb[0].mxu0 %v870
        %v2881 = vpop.f32.mrb[0].mxu0
        %v2882 = vadd.f32 0.0, %v2881
        %v2883 = vpop.f32.mrb[0].mxu0
        %v2884 = vadd.f32 0.0, %v2883
        %v2885 = vpop.f32.mrb[0].mxu0
        %v2886 = vadd.f32 0.0, %v2885
        %v2887 = vpop.f32.mrb[0].mxu0
        %v2888 = vadd.f32 0.0, %v2887
        %2889 = vmatprep.mubr.bf16.mxu0 0
        %2890 = vmatmul.mubr.bf16.gmra.mrb[0].mxu0 %v873
        %v2891 = vpop.f32.mrb[0].mxu0
        %v2892 = vadd.f32 0.0, %v2891
        %v2893 = vpop.f32.mrb[0].mxu0
        %v2894 = vadd.f32 0.0, %v2893
        %v2895 = vpop.f32.mrb[0].mxu0
        %v2896 = vadd.f32 0.0, %v2895
        %v2897 = vpop.f32.mrb[0].mxu0
        %v2898 = vadd.f32 0.0, %v2897
        %2899 = vmatprep.mubr.bf16.mxu0 0
        %2900 = vmatmul.mubr.bf16.gmra.mrb[0].mxu0 %v876
        %v2901 = vpop.f32.mrb[0].mxu0
        %v2902 = vadd.f32 0.0, %v2901
        %v2903 = vpop.f32.mrb[0].mxu0
        %v2904 = vadd.f32 0.0, %v2903
        %v2905 = vpop.f32.mrb[0].mxu0
        %v2906 = vadd.f32 0.0, %v2905
        %v2907 = vpop.f32.mrb[0].mxu0
        %v2908 = vadd.f32 0.0, %v2907
        %2909 = vmatprep.mubr.bf16.mxu0 0
        %2910 = vmatmul.mubr.bf16.gmra.mrb[0].mxu0 %v879
        %v2911 = vpop.f32.mrb[0].mxu0
        %v2912 = vadd.f32 0.0, %v2911
        %v2913 = vpop.f32.mrb[0].mxu0
        %v2914 = vadd.f32 0.0, %v2913
        %v2915 = vpop.f32.mrb[0].mxu0
        %v2916 = vadd.f32 0.0, %v2915
        %v2917 = vpop.f32.mrb[0].mxu0
        %v2918 = vadd.f32 0.0, %v2917
        %2919 = vmatprep.mubr.bf16.mxu0 0
        %2920 = vmatmul.mubr.bf16.gmra.mrb[0].mxu0 %v882
        %v2921 = vpop.f32.mrb[0].mxu0
        %v2922 = vadd.f32 0.0, %v2921
        %v2923 = vpop.f32.mrb[0].mxu0
        %v2924 = vadd.f32 0.0, %v2923
        %v2925 = vpop.f32.mrb[0].mxu0
        %v2926 = vadd.f32 0.0, %v2925
        %v2927 = vpop.f32.mrb[0].mxu0
        %v2928 = vadd.f32 0.0, %v2927
        %2929 = vmatprep.mubr.bf16.mxu0 0
        %2930 = vmatmul.mubr.bf16.gmra.mrb[0].mxu0 %v885
        %v2931 = vpop.f32.mrb[0].mxu0
        %v2932 = vadd.f32 0.0, %v2931
        %v2933 = vpop.f32.mrb[0].mxu0
        %v2934 = vadd.f32 0.0, %v2933
        %v2935 = vpop.f32.mrb[0].mxu0
        %v2936 = vadd.f32 0.0, %v2935
        %v2937 = vpop.f32.mrb[0].mxu0
        %v2938 = vadd.f32 0.0, %v2937
        %2939 = vmatprep.mubr.bf16.mxu0 0
        %2940 = vmatmul.mubr.bf16.gmra.mrb[0].mxu0 %v888
        %v2941 = vpop.f32.mrb[0].mxu0
        %v2942 = vadd.f32 0.0, %v2941
        %v2943 = vpop.f32.mrb[0].mxu0
        %v2944 = vadd.f32 0.0, %v2943
        %v2945 = vpop.f32.mrb[0].mxu0
        %v2946 = vadd.f32 0.0, %v2945
        %v2947 = vpop.f32.mrb[0].mxu0
        %v2948 = vadd.f32 0.0, %v2947
        %2949 = vmatprep.mubr.bf16.mxu0 0
        %2950 = vmatmul.mubr.bf16.gmra.mrb[0].mxu0 %v891
        %v2951 = vpop.f32.mrb[0].mxu0
        %v2952 = vadd.f32 0.0, %v2951
        %v2953 = vpop.f32.mrb[0].mxu0
        %v2954 = vadd.f32 0.0, %v2953
        %v2955 = vpop.f32.mrb[0].mxu0
        %v2956 = vadd.f32 0.0, %v2955
        %v2957 = vpop.f32.mrb[0].mxu0
        %v2958 = vadd.f32 0.0, %v2957
        %2959 = vmatprep.mubr.bf16.mxu0 0
        %2960 = vmatmul.mubr.bf16.gmra.mrb[0].mxu0 %v894
        %v2961 = vpop.f32.mrb[0].mxu0
        %v2962 = vadd.f32 0.0, %v2961
        %v2963 = vpop.f32.mrb[0].mxu0
        %v2964 = vadd.f32 0.0, %v2963
        %v2965 = vpop.f32.mrb[0].mxu0
        %v2966 = vadd.f32 0.0, %v2965
        %v2967 = vpop.f32.mrb[0].mxu0
        %v2968 = vadd.f32 0.0, %v2967
        %2969 = vmatprep.mubr.bf16.mxu0 0
        %2970 = vmatmul.mubr.bf16.gmra.mrb[0].mxu0 %v897
        %v2971 = vpop.f32.mrb[0].mxu0
        %v2972 = vadd.f32 0.0, %v2971
        %v2973 = vpop.f32.mrb[0].mxu0
        %v2974 = vadd.f32 0.0, %v2973
        %v2975 = vpop.f32.mrb[0].mxu0
        %v2976 = vadd.f32 0.0, %v2975
        %v2977 = vpop.f32.mrb[0].mxu0
        %v2978 = vadd.f32 0.0, %v2977
        %2979 = vmatprep.mubr.bf16.mxu0 0
        %2980 = vmatmul.mubr.bf16.gmra.mrb[0].mxu0 %v900
        %v2981 = vpop.f32.mrb[0].mxu0
        %v2982 = vadd.f32 0.0, %v2981
        %v2983 = vpop.f32.mrb[0].mxu0
        %v2984 = vadd.f32 0.0, %v2983
        %v2985 = vpop.f32.mrb[0].mxu0
        %v2986 = vadd.f32 0.0, %v2985
        %v2987 = vpop.f32.mrb[0].mxu0
        %v2988 = vadd.f32 0.0, %v2987
        %2989 = vmatprep.mubr.bf16.mxu0 0
        %2990 = vmatmul.mubr.bf16.gmra.mrb[0].mxu0 %v903
        %v2991 = vpop.f32.mrb[0].mxu0
        %v2992 = vadd.f32 0.0, %v2991
        %v2993 = vpop.f32.mrb[0].mxu0
        %v2994 = vadd.f32 0.0, %v2993
        %v2995 = vpop.f32.mrb[0].mxu0
        %v2996 = vadd.f32 0.0, %v2995
        %v2997 = vpop.f32.mrb[0].mxu0
        %v2998 = vadd.f32 0.0, %v2997
        %2999 = vmatprep.mubr.bf16.mxu0 0
        %3000 = vmatmul.mubr.bf16.gmra.mrb[0].mxu0 %v906
        %v3001 = vpop.f32.mrb[0].mxu0
        %v3002 = vadd.f32 0.0, %v3001
        %v3003 = vpop.f32.mrb[0].mxu0
        %v3004 = vadd.f32 0.0, %v3003
        %v3005 = vpop.f32.mrb[0].mxu0
        %v3006 = vadd.f32 0.0, %v3005
        %v3007 = vpop.f32.mrb[0].mxu0
        %v3008 = vadd.f32 0.0, %v3007
        %3009 = vmatprep.mubr.bf16.mxu0 0
        %3010 = vmatmul.mubr.bf16.gmra.mrb[0].mxu0 %v909
        %v3011 = vpop.f32.mrb[0].mxu0
        %v3012 = vadd.f32 0.0, %v3011
        %v3013 = vpop.f32.mrb[0].mxu0
        %v3014 = vadd.f32 0.0, %v3013
        %v3015 = vpop.f32.mrb[0].mxu0
        %v3016 = vadd.f32 0.0, %v3015
        %v3017 = vpop.f32.mrb[0].mxu0
        %v3018 = vadd.f32 0.0, %v3017
        %3019 = vmatprep.mubr.bf16.mxu0 0
        %3020 = vmatmul.mubr.bf16.gmra.mrb[0].mxu0 %v912
        %v3021 = vpop.f32.mrb[0].mxu0
        %v3022 = vadd.f32 0.0, %v3021
        %v3023 = vpop.f32.mrb[0].mxu0
        %v3024 = vadd.f32 0.0, %v3023
        %v3025 = vpop.f32.mrb[0].mxu0
        %v3026 = vadd.f32 0.0, %v3025
        %v3027 = vpop.f32.mrb[0].mxu0
        %v3028 = vadd.f32 0.0, %v3027
        %3029 = vmatprep.mubr.bf16.mxu0 0
        %3030 = vmatmul.mubr.bf16.gmra.mrb[0].mxu0 %v915
        %v3031 = vpop.f32.mrb[0].mxu0
        %v3032 = vadd.f32 0.0, %v3031
        %v3033 = vpop.f32.mrb[0].mxu0
        %v3034 = vadd.f32 0.0, %v3033
        %v3035 = vpop.f32.mrb[0].mxu0
        %v3036 = vadd.f32 0.0, %v3035
        %v3037 = vpop.f32.mrb[0].mxu0
        %v3038 = vadd.f32 0.0, %v3037
        %3039 = vdwg.mxu0
        %3040 = vmatprep.subr.bf16.mxu0 %v763
        %3041 = vmatpush1.bf16.msra.mxu0 %v762
        %3042 = vmatprep.subr.bf16.mxu0 %v795
        %3043 = vmatpush1.bf16.msra.mxu0 %v794
        %3044 = vmatprep.subr.bf16.mxu0 0
        %3045 = vmatpush1.bf16.msra.mxu0 0
        %3046 = vmatprep.subr.bf16.mxu0 0
        %3047 = vmatpush1.bf16.msra.mxu0 0
        %3048 = vmatprep.subr.bf16.mxu0 0
        %3049 = vmatpush1.bf16.msra.mxu0 0
        %3050 = vmatprep.subr.bf16.mxu0 0
        %3051 = vmatpush1.bf16.msra.mxu0 0
        %3052 = vmatprep.subr.bf16.mxu0 0
        %3053 = vmatpush1.bf16.msra.mxu0 0
        %3054 = vmatprep.subr.bf16.mxu0 0
        %3055 = vmatpush1.bf16.msra.mxu0 0
        %3056 = vmatprep.subr.bf16.mxu0 0
        %3057 = vmatpush1.bf16.msra.mxu0 0
        %3058 = vmatprep.subr.bf16.mxu0 0
        %3059 = vmatpush1.bf16.msra.mxu0 0
        %3060 = vmatprep.subr.bf16.mxu0 0
        %3061 = vmatpush1.bf16.msra.mxu0 0
        %3062 = vmatprep.subr.bf16.mxu0 0
        %3063 = vmatpush1.bf16.msra.mxu0 0
        %3064 = vmatprep.subr.bf16.mxu0 0
        %3065 = vmatpush1.bf16.msra.mxu0 0
        %3066 = vmatprep.subr.bf16.mxu0 0
        %3067 = vmatpush1.bf16.msra.mxu0 0
        %3068 = vmatprep.subr.bf16.mxu0 0
        %3069 = vmatpush1.bf16.msra.mxu0 0
        %3070 = vmatprep.subr.bf16.mxu0 0
        %3071 = vmatpush1.bf16.msra.mxu0 0
        %3072 = vmatprep.mubr.bf16.mxu0 0
        %3073 = vmatmul.mubr.bf16.gmra.mrb[0].mxu0 %v870
        %v3074 = vpop.f32.mrb[0].mxu0
        %v3075 = vadd.f32 0.0, %v3074
        %v3076 = vpop.f32.mrb[0].mxu0
        %v3077 = vadd.f32 0.0, %v3076
        %v3078 = vpop.f32.mrb[0].mxu0
        %v3079 = vadd.f32 0.0, %v3078
        %v3080 = vpop.f32.mrb[0].mxu0
        %v3081 = vadd.f32 0.0, %v3080
        %3082 = vmatprep.mubr.bf16.mxu0 0
        %3083 = vmatmul.mubr.bf16.gmra.mrb[0].mxu0 %v873
        %v3084 = vpop.f32.mrb[0].mxu0
        %v3085 = vadd.f32 0.0, %v3084
        %v3086 = vpop.f32.mrb[0].mxu0
        %v3087 = vadd.f32 0.0, %v3086
        %v3088 = vpop.f32.mrb[0].mxu0
        %v3089 = vadd.f32 0.0, %v3088
        %v3090 = vpop.f32.mrb[0].mxu0
        %v3091 = vadd.f32 0.0, %v3090
        %3092 = vmatprep.mubr.bf16.mxu0 0
        %3093 = vmatmul.mubr.bf16.gmra.mrb[0].mxu0 %v876
        %v3094 = vpop.f32.mrb[0].mxu0
        %v3095 = vadd.f32 0.0, %v3094
        %v3096 = vpop.f32.mrb[0].mxu0
        %v3097 = vadd.f32 0.0, %v3096
        %v3098 = vpop.f32.mrb[0].mxu0
        %v3099 = vadd.f32 0.0, %v3098
        %v3100 = vpop.f32.mrb[0].mxu0
        %v3101 = vadd.f32 0.0, %v3100
        %3102 = vmatprep.mubr.bf16.mxu0 0
        %3103 = vmatmul.mubr.bf16.gmra.mrb[0].mxu0 %v879
        %v3104 = vpop.f32.mrb[0].mxu0
        %v3105 = vadd.f32 0.0, %v3104
        %v3106 = vpop.f32.mrb[0].mxu0
        %v3107 = vadd.f32 0.0, %v3106
        %v3108 = vpop.f32.mrb[0].mxu0
        %v3109 = vadd.f32 0.0, %v3108
        %v3110 = vpop.f32.mrb[0].mxu0
        %v3111 = vadd.f32 0.0, %v3110
        %3112 = vmatprep.mubr.bf16.mxu0 0
        %3113 = vmatmul.mubr.bf16.gmra.mrb[0].mxu0 %v882
        %v3114 = vpop.f32.mrb[0].mxu0
        %v3115 = vadd.f32 0.0, %v3114
        %v3116 = vpop.f32.mrb[0].mxu0
        %v3117 = vadd.f32 0.0, %v3116
        %v3118 = vpop.f32.mrb[0].mxu0
        %v3119 = vadd.f32 0.0, %v3118
        %v3120 = vpop.f32.mrb[0].mxu0
        %v3121 = vadd.f32 0.0, %v3120
        %3122 = vmatprep.mubr.bf16.mxu0 0
        %3123 = vmatmul.mubr.bf16.gmra.mrb[0].mxu0 %v885
        %v3124 = vpop.f32.mrb[0].mxu0
        %v3125 = vadd.f32 0.0, %v3124
        %v3126 = vpop.f32.mrb[0].mxu0
        %v3127 = vadd.f32 0.0, %v3126
        %v3128 = vpop.f32.mrb[0].mxu0
        %v3129 = vadd.f32 0.0, %v3128
        %v3130 = vpop.f32.mrb[0].mxu0
        %v3131 = vadd.f32 0.0, %v3130
        %3132 = vmatprep.mubr.bf16.mxu0 0
        %3133 = vmatmul.mubr.bf16.gmra.mrb[0].mxu0 %v888
        %v3134 = vpop.f32.mrb[0].mxu0
        %v3135 = vadd.f32 0.0, %v3134
        %v3136 = vpop.f32.mrb[0].mxu0
        %v3137 = vadd.f32 0.0, %v3136
        %v3138 = vpop.f32.mrb[0].mxu0
        %v3139 = vadd.f32 0.0, %v3138
        %v3140 = vpop.f32.mrb[0].mxu0
        %v3141 = vadd.f32 0.0, %v3140
        %3142 = vmatprep.mubr.bf16.mxu0 0
        %3143 = vmatmul.mubr.bf16.gmra.mrb[0].mxu0 %v891
        %v3144 = vpop.f32.mrb[0].mxu0
        %v3145 = vadd.f32 0.0, %v3144
        %v3146 = vpop.f32.mrb[0].mxu0
        %v3147 = vadd.f32 0.0, %v3146
        %v3148 = vpop.f32.mrb[0].mxu0
        %v3149 = vadd.f32 0.0, %v3148
        %v3150 = vpop.f32.mrb[0].mxu0
        %v3151 = vadd.f32 0.0, %v3150
        %3152 = vmatprep.mubr.bf16.mxu0 0
        %3153 = vmatmul.mubr.bf16.gmra.mrb[0].mxu0 %v894
        %v3154 = vpop.f32.mrb[0].mxu0
        %v3155 = vadd.f32 0.0, %v3154
        %v3156 = vpop.f32.mrb[0].mxu0
        %v3157 = vadd.f32 0.0, %v3156
        %v3158 = vpop.f32.mrb[0].mxu0
        %v3159 = vadd.f32 0.0, %v3158
        %v3160 = vpop.f32.mrb[0].mxu0
        %v3161 = vadd.f32 0.0, %v3160
        %3162 = vmatprep.mubr.bf16.mxu0 0
        %3163 = vmatmul.mubr.bf16.gmra.mrb[0].mxu0 %v897
        %v3164 = vpop.f32.mrb[0].mxu0
        %v3165 = vadd.f32 0.0, %v3164
        %v3166 = vpop.f32.mrb[0].mxu0
        %v3167 = vadd.f32 0.0, %v3166
        %v3168 = vpop.f32.mrb[0].mxu0
        %v3169 = vadd.f32 0.0, %v3168
        %v3170 = vpop.f32.mrb[0].mxu0
        %v3171 = vadd.f32 0.0, %v3170
        %3172 = vmatprep.mubr.bf16.mxu0 0
        %3173 = vmatmul.mubr.bf16.gmra.mrb[0].mxu0 %v900
        %v3174 = vpop.f32.mrb[0].mxu0
        %v3175 = vadd.f32 0.0, %v3174
        %v3176 = vpop.f32.mrb[0].mxu0
        %v3177 = vadd.f32 0.0, %v3176
        %v3178 = vpop.f32.mrb[0].mxu0
        %v3179 = vadd.f32 0.0, %v3178
        %v3180 = vpop.f32.mrb[0].mxu0
        %v3181 = vadd.f32 0.0, %v3180
        %3182 = vmatprep.mubr.bf16.mxu0 0
        %3183 = vmatmul.mubr.bf16.gmra.mrb[0].mxu0 %v903
        %v3184 = vpop.f32.mrb[0].mxu0
        %v3185 = vadd.f32 0.0, %v3184
        %v3186 = vpop.f32.mrb[0].mxu0
        %v3187 = vadd.f32 0.0, %v3186
        %v3188 = vpop.f32.mrb[0].mxu0
        %v3189 = vadd.f32 0.0, %v3188
        %v3190 = vpop.f32.mrb[0].mxu0
        %v3191 = vadd.f32 0.0, %v3190
        %3192 = vmatprep.mubr.bf16.mxu0 0
        %3193 = vmatmul.mubr.bf16.gmra.mrb[0].mxu0 %v906
        %v3194 = vpop.f32.mrb[0].mxu0
        %v3195 = vadd.f32 0.0, %v3194
        %v3196 = vpop.f32.mrb[0].mxu0
        %v3197 = vadd.f32 0.0, %v3196
        %v3198 = vpop.f32.mrb[0].mxu0
        %v3199 = vadd.f32 0.0, %v3198
        %v3200 = vpop.f32.mrb[0].mxu0
        %v3201 = vadd.f32 0.0, %v3200
        %3202 = vmatprep.mubr.bf16.mxu0 0
        %3203 = vmatmul.mubr.bf16.gmra.mrb[0].mxu0 %v909
        %v3204 = vpop.f32.mrb[0].mxu0
        %v3205 = vadd.f32 0.0, %v3204
        %v3206 = vpop.f32.mrb[0].mxu0
        %v3207 = vadd.f32 0.0, %v3206
        %v3208 = vpop.f32.mrb[0].mxu0
        %v3209 = vadd.f32 0.0, %v3208
        %v3210 = vpop.f32.mrb[0].mxu0
        %v3211 = vadd.f32 0.0, %v3210
        %3212 = vmatprep.mubr.bf16.mxu0 0
        %3213 = vmatmul.mubr.bf16.gmra.mrb[0].mxu0 %v912
        %v3214 = vpop.f32.mrb[0].mxu0
        %v3215 = vadd.f32 0.0, %v3214
        %v3216 = vpop.f32.mrb[0].mxu0
        %v3217 = vadd.f32 0.0, %v3216
        %v3218 = vpop.f32.mrb[0].mxu0
        %v3219 = vadd.f32 0.0, %v3218
        %v3220 = vpop.f32.mrb[0].mxu0
        %v3221 = vadd.f32 0.0, %v3220
        %3222 = vmatprep.mubr.bf16.mxu0 0
        %3223 = vmatmul.mubr.bf16.gmra.mrb[0].mxu0 %v915
        %v3224 = vpop.f32.mrb[0].mxu0
        %v3225 = vadd.f32 0.0, %v3224
        %v3226 = vpop.f32.mrb[0].mxu0
        %v3227 = vadd.f32 0.0, %v3226
        %v3228 = vpop.f32.mrb[0].mxu0
        %v3229 = vadd.f32 0.0, %v3228
        %v3230 = vpop.f32.mrb[0].mxu0
        %v3231 = vadd.f32 0.0, %v3230
        %3232 = vdwg.mxu0
        %3233 = vmatprep.subr.bf16.mxu0 %v765
        %3234 = vmatpush1.bf16.msra.mxu0 %v764
        %3235 = vmatprep.subr.bf16.mxu0 %v797
        %3236 = vmatpush1.bf16.msra.mxu0 %v796
        %3237 = vmatprep.subr.bf16.mxu0 0
        %3238 = vmatpush1.bf16.msra.mxu0 0
        %3239 = vmatprep.subr.bf16.mxu0 0
        %3240 = vmatpush1.bf16.msra.mxu0 0
        %3241 = vmatprep.subr.bf16.mxu0 0
        %3242 = vmatpush1.bf16.msra.mxu0 0
        %3243 = vmatprep.subr.bf16.mxu0 0
        %3244 = vmatpush1.bf16.msra.mxu0 0
        %3245 = vmatprep.subr.bf16.mxu0 0
        %3246 = vmatpush1.bf16.msra.mxu0 0
        %3247 = vmatprep.subr.bf16.mxu0 0
        %3248 = vmatpush1.bf16.msra.mxu0 0
        %3249 = vmatprep.subr.bf16.mxu0 0
        %3250 = vmatpush1.bf16.msra.mxu0 0
        %3251 = vmatprep.subr.bf16.mxu0 0
        %3252 = vmatpush1.bf16.msra.mxu0 0
        %3253 = vmatprep.subr.bf16.mxu0 0
        %3254 = vmatpush1.bf16.msra.mxu0 0
        %3255 = vmatprep.subr.bf16.mxu0 0
        %3256 = vmatpush1.bf16.msra.mxu0 0
        %3257 = vmatprep.subr.bf16.mxu0 0
        %3258 = vmatpush1.bf16.msra.mxu0 0
        %3259 = vmatprep.subr.bf16.mxu0 0
        %3260 = vmatpush1.bf16.msra.mxu0 0
        %3261 = vmatprep.subr.bf16.mxu0 0
        %3262 = vmatpush1.bf16.msra.mxu0 0
        %3263 = vmatprep.subr.bf16.mxu0 0
        %3264 = vmatpush1.bf16.msra.mxu0 0
        %3265 = vmatprep.mubr.bf16.mxu0 0
        %3266 = vmatmul.mubr.bf16.gmra.mrb[0].mxu0 %v870
        %v3267 = vpop.f32.mrb[0].mxu0
        %v3268 = vadd.f32 0.0, %v3267
        %v3269 = vpop.f32.mrb[0].mxu0
        %v3270 = vadd.f32 0.0, %v3269
        %v3271 = vpop.f32.mrb[0].mxu0
        %v3272 = vadd.f32 0.0, %v3271
        %v3273 = vpop.f32.mrb[0].mxu0
        %v3274 = vadd.f32 0.0, %v3273
        %3275 = vmatprep.mubr.bf16.mxu0 0
        %3276 = vmatmul.mubr.bf16.gmra.mrb[0].mxu0 %v873
        %v3277 = vpop.f32.mrb[0].mxu0
        %v3278 = vadd.f32 0.0, %v3277
        %v3279 = vpop.f32.mrb[0].mxu0
        %v3280 = vadd.f32 0.0, %v3279
        %v3281 = vpop.f32.mrb[0].mxu0
        %v3282 = vadd.f32 0.0, %v3281
        %v3283 = vpop.f32.mrb[0].mxu0
        %v3284 = vadd.f32 0.0, %v3283
        %3285 = vmatprep.mubr.bf16.mxu0 0
        %3286 = vmatmul.mubr.bf16.gmra.mrb[0].mxu0 %v876
        %v3287 = vpop.f32.mrb[0].mxu0
        %v3288 = vadd.f32 0.0, %v3287
        %v3289 = vpop.f32.mrb[0].mxu0
        %v3290 = vadd.f32 0.0, %v3289
        %v3291 = vpop.f32.mrb[0].mxu0
        %v3292 = vadd.f32 0.0, %v3291
        %v3293 = vpop.f32.mrb[0].mxu0
        %v3294 = vadd.f32 0.0, %v3293
        %3295 = vmatprep.mubr.bf16.mxu0 0
        %3296 = vmatmul.mubr.bf16.gmra.mrb[0].mxu0 %v879
        %v3297 = vpop.f32.mrb[0].mxu0
        %v3298 = vadd.f32 0.0, %v3297
        %v3299 = vpop.f32.mrb[0].mxu0
        %v3300 = vadd.f32 0.0, %v3299
        %v3301 = vpop.f32.mrb[0].mxu0
        %v3302 = vadd.f32 0.0, %v3301
        %v3303 = vpop.f32.mrb[0].mxu0
        %v3304 = vadd.f32 0.0, %v3303
        %3305 = vmatprep.mubr.bf16.mxu0 0
        %3306 = vmatmul.mubr.bf16.gmra.mrb[0].mxu0 %v882
        %v3307 = vpop.f32.mrb[0].mxu0
        %v3308 = vadd.f32 0.0, %v3307
        %v3309 = vpop.f32.mrb[0].mxu0
        %v3310 = vadd.f32 0.0, %v3309
        %v3311 = vpop.f32.mrb[0].mxu0
        %v3312 = vadd.f32 0.0, %v3311
        %v3313 = vpop.f32.mrb[0].mxu0
        %v3314 = vadd.f32 0.0, %v3313
        %3315 = vmatprep.mubr.bf16.mxu0 0
        %3316 = vmatmul.mubr.bf16.gmra.mrb[0].mxu0 %v885
        %v3317 = vpop.f32.mrb[0].mxu0
        %v3318 = vadd.f32 0.0, %v3317
        %v3319 = vpop.f32.mrb[0].mxu0
        %v3320 = vadd.f32 0.0, %v3319
        %v3321 = vpop.f32.mrb[0].mxu0
        %v3322 = vadd.f32 0.0, %v3321
        %v3323 = vpop.f32.mrb[0].mxu0
        %v3324 = vadd.f32 0.0, %v3323
        %3325 = vmatprep.mubr.bf16.mxu0 0
        %3326 = vmatmul.mubr.bf16.gmra.mrb[0].mxu0 %v888
        %v3327 = vpop.f32.mrb[0].mxu0
        %v3328 = vadd.f32 0.0, %v3327
        %v3329 = vpop.f32.mrb[0].mxu0
        %v3330 = vadd.f32 0.0, %v3329
        %v3331 = vpop.f32.mrb[0].mxu0
        %v3332 = vadd.f32 0.0, %v3331
        %v3333 = vpop.f32.mrb[0].mxu0
        %v3334 = vadd.f32 0.0, %v3333
        %3335 = vmatprep.mubr.bf16.mxu0 0
        %3336 = vmatmul.mubr.bf16.gmra.mrb[0].mxu0 %v891
        %v3337 = vpop.f32.mrb[0].mxu0
        %v3338 = vadd.f32 0.0, %v3337
        %v3339 = vpop.f32.mrb[0].mxu0
        %v3340 = vadd.f32 0.0, %v3339
        %v3341 = vpop.f32.mrb[0].mxu0
        %v3342 = vadd.f32 0.0, %v3341
        %v3343 = vpop.f32.mrb[0].mxu0
        %v3344 = vadd.f32 0.0, %v3343
        %3345 = vmatprep.mubr.bf16.mxu0 0
        %3346 = vmatmul.mubr.bf16.gmra.mrb[0].mxu0 %v894
        %v3347 = vpop.f32.mrb[0].mxu0
        %v3348 = vadd.f32 0.0, %v3347
        %v3349 = vpop.f32.mrb[0].mxu0
        %v3350 = vadd.f32 0.0, %v3349
        %v3351 = vpop.f32.mrb[0].mxu0
        %v3352 = vadd.f32 0.0, %v3351
        %v3353 = vpop.f32.mrb[0].mxu0
        %v3354 = vadd.f32 0.0, %v3353
        %3355 = vmatprep.mubr.bf16.mxu0 0
        %3356 = vmatmul.mubr.bf16.gmra.mrb[0].mxu0 %v897
        %v3357 = vpop.f32.mrb[0].mxu0
        %v3358 = vadd.f32 0.0, %v3357
        %v3359 = vpop.f32.mrb[0].mxu0
        %v3360 = vadd.f32 0.0, %v3359
        %v3361 = vpop.f32.mrb[0].mxu0
        %v3362 = vadd.f32 0.0, %v3361
        %v3363 = vpop.f32.mrb[0].mxu0
        %v3364 = vadd.f32 0.0, %v3363
        %3365 = vmatprep.mubr.bf16.mxu0 0
        %3366 = vmatmul.mubr.bf16.gmra.mrb[0].mxu0 %v900
        %v3367 = vpop.f32.mrb[0].mxu0
        %v3368 = vadd.f32 0.0, %v3367
        %v3369 = vpop.f32.mrb[0].mxu0
        %v3370 = vadd.f32 0.0, %v3369
        %v3371 = vpop.f32.mrb[0].mxu0
        %v3372 = vadd.f32 0.0, %v3371
        %v3373 = vpop.f32.mrb[0].mxu0
        %v3374 = vadd.f32 0.0, %v3373
        %3375 = vmatprep.mubr.bf16.mxu0 0
        %3376 = vmatmul.mubr.bf16.gmra.mrb[0].mxu0 %v903
        %v3377 = vpop.f32.mrb[0].mxu0
        %v3378 = vadd.f32 0.0, %v3377
        %v3379 = vpop.f32.mrb[0].mxu0
        %v3380 = vadd.f32 0.0, %v3379
        %v3381 = vpop.f32.mrb[0].mxu0
        %v3382 = vadd.f32 0.0, %v3381
        %v3383 = vpop.f32.mrb[0].mxu0
        %v3384 = vadd.f32 0.0, %v3383
        %3385 = vmatprep.mubr.bf16.mxu0 0
        %3386 = vmatmul.mubr.bf16.gmra.mrb[0].mxu0 %v906
        %v3387 = vpop.f32.mrb[0].mxu0
        %v3388 = vadd.f32 0.0, %v3387
        %v3389 = vpop.f32.mrb[0].mxu0
        %v3390 = vadd.f32 0.0, %v3389
        %v3391 = vpop.f32.mrb[0].mxu0
        %v3392 = vadd.f32 0.0, %v3391
        %v3393 = vpop.f32.mrb[0].mxu0
        %v3394 = vadd.f32 0.0, %v3393
        %3395 = vmatprep.mubr.bf16.mxu0 0
        %3396 = vmatmul.mubr.bf16.gmra.mrb[0].mxu0 %v909
        %v3397 = vpop.f32.mrb[0].mxu0
        %v3398 = vadd.f32 0.0, %v3397
        %v3399 = vpop.f32.mrb[0].mxu0
        %v3400 = vadd.f32 0.0, %v3399
        %v3401 = vpop.f32.mrb[0].mxu0
        %v3402 = vadd.f32 0.0, %v3401
        %v3403 = vpop.f32.mrb[0].mxu0
        %v3404 = vadd.f32 0.0, %v3403
        %3405 = vmatprep.mubr.bf16.mxu0 0
        %3406 = vmatmul.mubr.bf16.gmra.mrb[0].mxu0 %v912
        %v3407 = vpop.f32.mrb[0].mxu0
        %v3408 = vadd.f32 0.0, %v3407
        %v3409 = vpop.f32.mrb[0].mxu0
        %v3410 = vadd.f32 0.0, %v3409
        %v3411 = vpop.f32.mrb[0].mxu0
        %v3412 = vadd.f32 0.0, %v3411
        %v3413 = vpop.f32.mrb[0].mxu0
        %v3414 = vadd.f32 0.0, %v3413
        %3415 = vmatprep.mubr.bf16.mxu0 0
        %3416 = vmatmul.mubr.bf16.gmra.mrb[0].mxu0 %v915
        %v3417 = vpop.f32.mrb[0].mxu0
        %v3418 = vadd.f32 0.0, %v3417
        %v3419 = vpop.f32.mrb[0].mxu0
        %v3420 = vadd.f32 0.0, %v3419
        %v3421 = vpop.f32.mrb[0].mxu0
        %v3422 = vadd.f32 0.0, %v3421
        %v3423 = vpop.f32.mrb[0].mxu0
        %v3424 = vadd.f32 0.0, %v3423
        %3425 = vdwg.mxu0
        %3426 = vmatprep.subr.bf16.mxu0 %v767
        %3427 = vmatpush1.bf16.msra.mxu0 %v766
        %3428 = vmatprep.subr.bf16.mxu0 %v799
        %3429 = vmatpush1.bf16.msra.mxu0 %v798
        %3430 = vmatprep.subr.bf16.mxu0 0
        %3431 = vmatpush1.bf16.msra.mxu0 0
        %3432 = vmatprep.subr.bf16.mxu0 0
        %3433 = vmatpush1.bf16.msra.mxu0 0
        %3434 = vmatprep.subr.bf16.mxu0 0
        %3435 = vmatpush1.bf16.msra.mxu0 0
        %3436 = vmatprep.subr.bf16.mxu0 0
        %3437 = vmatpush1.bf16.msra.mxu0 0
        %3438 = vmatprep.subr.bf16.mxu0 0
        %3439 = vmatpush1.bf16.msra.mxu0 0
        %3440 = vmatprep.subr.bf16.mxu0 0
        %3441 = vmatpush1.bf16.msra.mxu0 0
        %3442 = vmatprep.subr.bf16.mxu0 0
        %3443 = vmatpush1.bf16.msra.mxu0 0
        %3444 = vmatprep.subr.bf16.mxu0 0
        %3445 = vmatpush1.bf16.msra.mxu0 0
        %3446 = vmatprep.subr.bf16.mxu0 0
        %3447 = vmatpush1.bf16.msra.mxu0 0
        %3448 = vmatprep.subr.bf16.mxu0 0
        %3449 = vmatpush1.bf16.msra.mxu0 0
        %3450 = vmatprep.subr.bf16.mxu0 0
        %3451 = vmatpush1.bf16.msra.mxu0 0
        %3452 = vmatprep.subr.bf16.mxu0 0
        %3453 = vmatpush1.bf16.msra.mxu0 0
        %3454 = vmatprep.subr.bf16.mxu0 0
        %3455 = vmatpush1.bf16.msra.mxu0 0
        %3456 = vmatprep.subr.bf16.mxu0 0
        %3457 = vmatpush1.bf16.msra.mxu0 0
        %3458 = vmatprep.mubr.bf16.mxu0 0
        %3459 = vmatmul.mubr.bf16.gmra.mrb[0].mxu0 %v870
        %v3460 = vpop.f32.mrb[0].mxu0
        %v3461 = vadd.f32 0.0, %v3460
        %v3462 = vpop.f32.mrb[0].mxu0
        %v3463 = vadd.f32 0.0, %v3462
        %v3464 = vpop.f32.mrb[0].mxu0
        %v3465 = vadd.f32 0.0, %v3464
        %v3466 = vpop.f32.mrb[0].mxu0
        %v3467 = vadd.f32 0.0, %v3466
        %3468 = vmatprep.mubr.bf16.mxu0 0
        %3469 = vmatmul.mubr.bf16.gmra.mrb[0].mxu0 %v873
        %v3470 = vpop.f32.mrb[0].mxu0
        %v3471 = vadd.f32 0.0, %v3470
        %v3472 = vpop.f32.mrb[0].mxu0
        %v3473 = vadd.f32 0.0, %v3472
        %v3474 = vpop.f32.mrb[0].mxu0
        %v3475 = vadd.f32 0.0, %v3474
        %v3476 = vpop.f32.mrb[0].mxu0
        %v3477 = vadd.f32 0.0, %v3476
        %3478 = vmatprep.mubr.bf16.mxu0 0
        %3479 = vmatmul.mubr.bf16.gmra.mrb[0].mxu0 %v876
        %v3480 = vpop.f32.mrb[0].mxu0
        %v3481 = vadd.f32 0.0, %v3480
        %v3482 = vpop.f32.mrb[0].mxu0
        %v3483 = vadd.f32 0.0, %v3482
        %v3484 = vpop.f32.mrb[0].mxu0
        %v3485 = vadd.f32 0.0, %v3484
        %v3486 = vpop.f32.mrb[0].mxu0
        %v3487 = vadd.f32 0.0, %v3486
        %3488 = vmatprep.mubr.bf16.mxu0 0
        %3489 = vmatmul.mubr.bf16.gmra.mrb[0].mxu0 %v879
        %v3490 = vpop.f32.mrb[0].mxu0
        %v3491 = vadd.f32 0.0, %v3490
        %v3492 = vpop.f32.mrb[0].mxu0
        %v3493 = vadd.f32 0.0, %v3492
        %v3494 = vpop.f32.mrb[0].mxu0
        %v3495 = vadd.f32 0.0, %v3494
        %v3496 = vpop.f32.mrb[0].mxu0
        %v3497 = vadd.f32 0.0, %v3496
        %3498 = vmatprep.mubr.bf16.mxu0 0
        %3499 = vmatmul.mubr.bf16.gmra.mrb[0].mxu0 %v882
        %v3500 = vpop.f32.mrb[0].mxu0
        %v3501 = vadd.f32 0.0, %v3500
        %v3502 = vpop.f32.mrb[0].mxu0
        %v3503 = vadd.f32 0.0, %v3502
        %v3504 = vpop.f32.mrb[0].mxu0
        %v3505 = vadd.f32 0.0, %v3504
        %v3506 = vpop.f32.mrb[0].mxu0
        %v3507 = vadd.f32 0.0, %v3506
        %3508 = vmatprep.mubr.bf16.mxu0 0
        %3509 = vmatmul.mubr.bf16.gmra.mrb[0].mxu0 %v885
        %v3510 = vpop.f32.mrb[0].mxu0
        %v3511 = vadd.f32 0.0, %v3510
        %v3512 = vpop.f32.mrb[0].mxu0
        %v3513 = vadd.f32 0.0, %v3512
        %v3514 = vpop.f32.mrb[0].mxu0
        %v3515 = vadd.f32 0.0, %v3514
        %v3516 = vpop.f32.mrb[0].mxu0
        %v3517 = vadd.f32 0.0, %v3516
        %3518 = vmatprep.mubr.bf16.mxu0 0
        %3519 = vmatmul.mubr.bf16.gmra.mrb[0].mxu0 %v888
        %v3520 = vpop.f32.mrb[0].mxu0
        %v3521 = vadd.f32 0.0, %v3520
        %v3522 = vpop.f32.mrb[0].mxu0
        %v3523 = vadd.f32 0.0, %v3522
        %v3524 = vpop.f32.mrb[0].mxu0
        %v3525 = vadd.f32 0.0, %v3524
        %v3526 = vpop.f32.mrb[0].mxu0
        %v3527 = vadd.f32 0.0, %v3526
        %3528 = vmatprep.mubr.bf16.mxu0 0
        %3529 = vmatmul.mubr.bf16.gmra.mrb[0].mxu0 %v891
        %v3530 = vpop.f32.mrb[0].mxu0
        %v3531 = vadd.f32 0.0, %v3530
        %v3532 = vpop.f32.mrb[0].mxu0
        %v3533 = vadd.f32 0.0, %v3532
        %v3534 = vpop.f32.mrb[0].mxu0
        %v3535 = vadd.f32 0.0, %v3534
        %v3536 = vpop.f32.mrb[0].mxu0
        %v3537 = vadd.f32 0.0, %v3536
        %3538 = vmatprep.mubr.bf16.mxu0 0
        %3539 = vmatmul.mubr.bf16.gmra.mrb[0].mxu0 %v894
        %v3540 = vpop.f32.mrb[0].mxu0
        %v3541 = vadd.f32 0.0, %v3540
        %v3542 = vpop.f32.mrb[0].mxu0
        %v3543 = vadd.f32 0.0, %v3542
        %v3544 = vpop.f32.mrb[0].mxu0
        %v3545 = vadd.f32 0.0, %v3544
        %v3546 = vpop.f32.mrb[0].mxu0
        %v3547 = vadd.f32 0.0, %v3546
        %3548 = vmatprep.mubr.bf16.mxu0 0
        %3549 = vmatmul.mubr.bf16.gmra.mrb[0].mxu0 %v897
        %v3550 = vpop.f32.mrb[0].mxu0
        %v3551 = vadd.f32 0.0, %v3550
        %v3552 = vpop.f32.mrb[0].mxu0
        %v3553 = vadd.f32 0.0, %v3552
        %v3554 = vpop.f32.mrb[0].mxu0
        %v3555 = vadd.f32 0.0, %v3554
        %v3556 = vpop.f32.mrb[0].mxu0
        %v3557 = vadd.f32 0.0, %v3556
        %3558 = vmatprep.mubr.bf16.mxu0 0
        %3559 = vmatmul.mubr.bf16.gmra.mrb[0].mxu0 %v900
        %v3560 = vpop.f32.mrb[0].mxu0
        %v3561 = vadd.f32 0.0, %v3560
        %v3562 = vpop.f32.mrb[0].mxu0
        %v3563 = vadd.f32 0.0, %v3562
        %v3564 = vpop.f32.mrb[0].mxu0
        %v3565 = vadd.f32 0.0, %v3564
        %v3566 = vpop.f32.mrb[0].mxu0
        %v3567 = vadd.f32 0.0, %v3566
        %3568 = vmatprep.mubr.bf16.mxu0 0
        %3569 = vmatmul.mubr.bf16.gmra.mrb[0].mxu0 %v903
        %v3570 = vpop.f32.mrb[0].mxu0
        %v3571 = vadd.f32 0.0, %v3570
        %v3572 = vpop.f32.mrb[0].mxu0
        %v3573 = vadd.f32 0.0, %v3572
        %v3574 = vpop.f32.mrb[0].mxu0
        %v3575 = vadd.f32 0.0, %v3574
        %v3576 = vpop.f32.mrb[0].mxu0
        %v3577 = vadd.f32 0.0, %v3576
        %3578 = vmatprep.mubr.bf16.mxu0 0
        %3579 = vmatmul.mubr.bf16.gmra.mrb[0].mxu0 %v906
        %v3580 = vpop.f32.mrb[0].mxu0
        %v3581 = vadd.f32 0.0, %v3580
        %v3582 = vpop.f32.mrb[0].mxu0
        %v3583 = vadd.f32 0.0, %v3582
        %v3584 = vpop.f32.mrb[0].mxu0
        %v3585 = vadd.f32 0.0, %v3584
        %v3586 = vpop.f32.mrb[0].mxu0
        %v3587 = vadd.f32 0.0, %v3586
        %3588 = vmatprep.mubr.bf16.mxu0 0
        %3589 = vmatmul.mubr.bf16.gmra.mrb[0].mxu0 %v909
        %v3590 = vpop.f32.mrb[0].mxu0
        %v3591 = vadd.f32 0.0, %v3590
        %v3592 = vpop.f32.mrb[0].mxu0
        %v3593 = vadd.f32 0.0, %v3592
        %v3594 = vpop.f32.mrb[0].mxu0
        %v3595 = vadd.f32 0.0, %v3594
        %v3596 = vpop.f32.mrb[0].mxu0
        %v3597 = vadd.f32 0.0, %v3596
        %3598 = vmatprep.mubr.bf16.mxu0 0
        %3599 = vmatmul.mubr.bf16.gmra.mrb[0].mxu0 %v912
        %v3600 = vpop.f32.mrb[0].mxu0
        %v3601 = vadd.f32 0.0, %v3600
        %v3602 = vpop.f32.mrb[0].mxu0
        %v3603 = vadd.f32 0.0, %v3602
        %v3604 = vpop.f32.mrb[0].mxu0
        %v3605 = vadd.f32 0.0, %v3604
        %v3606 = vpop.f32.mrb[0].mxu0
        %v3607 = vadd.f32 0.0, %v3606
        %3608 = vmatprep.mubr.bf16.mxu0 0
        %3609 = vmatmul.mubr.bf16.gmra.mrb[0].mxu0 %v915
        %v3610 = vpop.f32.mrb[0].mxu0
        %v3611 = vadd.f32 0.0, %v3610
        %v3612 = vpop.f32.mrb[0].mxu0
        %v3613 = vadd.f32 0.0, %v3612
        %v3614 = vpop.f32.mrb[0].mxu0
        %v3615 = vadd.f32 0.0, %v3614
        %v3616 = vpop.f32.mrb[0].mxu0
        %v3617 = vadd.f32 0.0, %v3616
        %3618 = vdwg.mxu0
        %3619 = vmatprep.subr.bf16.mxu0 %v769
        %3620 = vmatpush1.bf16.msra.mxu0 %v768
        %3621 = vmatprep.subr.bf16.mxu0 %v801
        %3622 = vmatpush1.bf16.msra.mxu0 %v800
        %3623 = vmatprep.subr.bf16.mxu0 0
        %3624 = vmatpush1.bf16.msra.mxu0 0
        %3625 = vmatprep.subr.bf16.mxu0 0
        %3626 = vmatpush1.bf16.msra.mxu0 0
        %3627 = vmatprep.subr.bf16.mxu0 0
        %3628 = vmatpush1.bf16.msra.mxu0 0
        %3629 = vmatprep.subr.bf16.mxu0 0
        %3630 = vmatpush1.bf16.msra.mxu0 0
        %3631 = vmatprep.subr.bf16.mxu0 0
        %3632 = vmatpush1.bf16.msra.mxu0 0
        %3633 = vmatprep.subr.bf16.mxu0 0
        %3634 = vmatpush1.bf16.msra.mxu0 0
        %3635 = vmatprep.subr.bf16.mxu0 0
        %3636 = vmatpush1.bf16.msra.mxu0 0
        %3637 = vmatprep.subr.bf16.mxu0 0
        %3638 = vmatpush1.bf16.msra.mxu0 0
        %3639 = vmatprep.subr.bf16.mxu0 0
        %3640 = vmatpush1.bf16.msra.mxu0 0
        %3641 = vmatprep.subr.bf16.mxu0 0
        %3642 = vmatpush1.bf16.msra.mxu0 0
        %3643 = vmatprep.subr.bf16.mxu0 0
        %3644 = vmatpush1.bf16.msra.mxu0 0
        %3645 = vmatprep.subr.bf16.mxu0 0
        %3646 = vmatpush1.bf16.msra.mxu0 0
        %3647 = vmatprep.subr.bf16.mxu0 0
        %3648 = vmatpush1.bf16.msra.mxu0 0
        %3649 = vmatprep.subr.bf16.mxu0 0
        %3650 = vmatpush1.bf16.msra.mxu0 0
        %3651 = vmatprep.mubr.bf16.mxu0 0
        %3652 = vmatmul.mubr.bf16.gmra.mrb[0].mxu0 %v870
        %v3653 = vpop.f32.mrb[0].mxu0
        %v3654 = vadd.f32 0.0, %v3653
        %v3655 = vpop.f32.mrb[0].mxu0
        %v3656 = vadd.f32 0.0, %v3655
        %v3657 = vpop.f32.mrb[0].mxu0
        %v3658 = vadd.f32 0.0, %v3657
        %v3659 = vpop.f32.mrb[0].mxu0
        %v3660 = vadd.f32 0.0, %v3659
        %3661 = vmatprep.mubr.bf16.mxu0 0
        %3662 = vmatmul.mubr.bf16.gmra.mrb[0].mxu0 %v873
        %v3663 = vpop.f32.mrb[0].mxu0
        %v3664 = vadd.f32 0.0, %v3663
        %v3665 = vpop.f32.mrb[0].mxu0
        %v3666 = vadd.f32 0.0, %v3665
        %v3667 = vpop.f32.mrb[0].mxu0
        %v3668 = vadd.f32 0.0, %v3667
        %v3669 = vpop.f32.mrb[0].mxu0
        %v3670 = vadd.f32 0.0, %v3669
        %3671 = vmatprep.mubr.bf16.mxu0 0
        %3672 = vmatmul.mubr.bf16.gmra.mrb[0].mxu0 %v876
        %v3673 = vpop.f32.mrb[0].mxu0
        %v3674 = vadd.f32 0.0, %v3673
        %v3675 = vpop.f32.mrb[0].mxu0
        %v3676 = vadd.f32 0.0, %v3675
        %v3677 = vpop.f32.mrb[0].mxu0
        %v3678 = vadd.f32 0.0, %v3677
        %v3679 = vpop.f32.mrb[0].mxu0
        %v3680 = vadd.f32 0.0, %v3679
        %3681 = vmatprep.mubr.bf16.mxu0 0
        %3682 = vmatmul.mubr.bf16.gmra.mrb[0].mxu0 %v879
        %v3683 = vpop.f32.mrb[0].mxu0
        %v3684 = vadd.f32 0.0, %v3683
        %v3685 = vpop.f32.mrb[0].mxu0
        %v3686 = vadd.f32 0.0, %v3685
        %v3687 = vpop.f32.mrb[0].mxu0
        %v3688 = vadd.f32 0.0, %v3687
        %v3689 = vpop.f32.mrb[0].mxu0
        %v3690 = vadd.f32 0.0, %v3689
        %3691 = vmatprep.mubr.bf16.mxu0 0
        %3692 = vmatmul.mubr.bf16.gmra.mrb[0].mxu0 %v882
        %v3693 = vpop.f32.mrb[0].mxu0
        %v3694 = vadd.f32 0.0, %v3693
        %v3695 = vpop.f32.mrb[0].mxu0
        %v3696 = vadd.f32 0.0, %v3695
        %v3697 = vpop.f32.mrb[0].mxu0
        %v3698 = vadd.f32 0.0, %v3697
        %v3699 = vpop.f32.mrb[0].mxu0
        %v3700 = vadd.f32 0.0, %v3699
        %3701 = vmatprep.mubr.bf16.mxu0 0
        %3702 = vmatmul.mubr.bf16.gmra.mrb[0].mxu0 %v885
        %v3703 = vpop.f32.mrb[0].mxu0
        %v3704 = vadd.f32 0.0, %v3703
        %v3705 = vpop.f32.mrb[0].mxu0
        %v3706 = vadd.f32 0.0, %v3705
        %v3707 = vpop.f32.mrb[0].mxu0
        %v3708 = vadd.f32 0.0, %v3707
        %v3709 = vpop.f32.mrb[0].mxu0
        %v3710 = vadd.f32 0.0, %v3709
        %3711 = vmatprep.mubr.bf16.mxu0 0
        %3712 = vmatmul.mubr.bf16.gmra.mrb[0].mxu0 %v888
        %v3713 = vpop.f32.mrb[0].mxu0
        %v3714 = vadd.f32 0.0, %v3713
        %v3715 = vpop.f32.mrb[0].mxu0
        %v3716 = vadd.f32 0.0, %v3715
        %v3717 = vpop.f32.mrb[0].mxu0
        %v3718 = vadd.f32 0.0, %v3717
        %v3719 = vpop.f32.mrb[0].mxu0
        %v3720 = vadd.f32 0.0, %v3719
        %3721 = vmatprep.mubr.bf16.mxu0 0
        %3722 = vmatmul.mubr.bf16.gmra.mrb[0].mxu0 %v891
        %v3723 = vpop.f32.mrb[0].mxu0
        %v3724 = vadd.f32 0.0, %v3723
        %v3725 = vpop.f32.mrb[0].mxu0
        %v3726 = vadd.f32 0.0, %v3725
        %v3727 = vpop.f32.mrb[0].mxu0
        %v3728 = vadd.f32 0.0, %v3727
        %v3729 = vpop.f32.mrb[0].mxu0
        %v3730 = vadd.f32 0.0, %v3729
        %3731 = vmatprep.mubr.bf16.mxu0 0
        %3732 = vmatmul.mubr.bf16.gmra.mrb[0].mxu0 %v894
        %v3733 = vpop.f32.mrb[0].mxu0
        %v3734 = vadd.f32 0.0, %v3733
        %v3735 = vpop.f32.mrb[0].mxu0
        %v3736 = vadd.f32 0.0, %v3735
        %v3737 = vpop.f32.mrb[0].mxu0
        %v3738 = vadd.f32 0.0, %v3737
        %v3739 = vpop.f32.mrb[0].mxu0
        %v3740 = vadd.f32 0.0, %v3739
        %3741 = vmatprep.mubr.bf16.mxu0 0
        %3742 = vmatmul.mubr.bf16.gmra.mrb[0].mxu0 %v897
        %v3743 = vpop.f32.mrb[0].mxu0
        %v3744 = vadd.f32 0.0, %v3743
        %v3745 = vpop.f32.mrb[0].mxu0
        %v3746 = vadd.f32 0.0, %v3745
        %v3747 = vpop.f32.mrb[0].mxu0
        %v3748 = vadd.f32 0.0, %v3747
        %v3749 = vpop.f32.mrb[0].mxu0
        %v3750 = vadd.f32 0.0, %v3749
        %3751 = vmatprep.mubr.bf16.mxu0 0
        %3752 = vmatmul.mubr.bf16.gmra.mrb[0].mxu0 %v900
        %v3753 = vpop.f32.mrb[0].mxu0
        %v3754 = vadd.f32 0.0, %v3753
        %v3755 = vpop.f32.mrb[0].mxu0
        %v3756 = vadd.f32 0.0, %v3755
        %v3757 = vpop.f32.mrb[0].mxu0
        %v3758 = vadd.f32 0.0, %v3757
        %v3759 = vpop.f32.mrb[0].mxu0
        %v3760 = vadd.f32 0.0, %v3759
        %3761 = vmatprep.mubr.bf16.mxu0 0
        %3762 = vmatmul.mubr.bf16.gmra.mrb[0].mxu0 %v903
        %v3763 = vpop.f32.mrb[0].mxu0
        %v3764 = vadd.f32 0.0, %v3763
        %v3765 = vpop.f32.mrb[0].mxu0
        %v3766 = vadd.f32 0.0, %v3765
        %v3767 = vpop.f32.mrb[0].mxu0
        %v3768 = vadd.f32 0.0, %v3767
        %v3769 = vpop.f32.mrb[0].mxu0
        %v3770 = vadd.f32 0.0, %v3769
        %3771 = vmatprep.mubr.bf16.mxu0 0
        %3772 = vmatmul.mubr.bf16.gmra.mrb[0].mxu0 %v906
        %v3773 = vpop.f32.mrb[0].mxu0
        %v3774 = vadd.f32 0.0, %v3773
        %v3775 = vpop.f32.mrb[0].mxu0
        %v3776 = vadd.f32 0.0, %v3775
        %v3777 = vpop.f32.mrb[0].mxu0
        %v3778 = vadd.f32 0.0, %v3777
        %v3779 = vpop.f32.mrb[0].mxu0
        %v3780 = vadd.f32 0.0, %v3779
        %3781 = vmatprep.mubr.bf16.mxu0 0
        %3782 = vmatmul.mubr.bf16.gmra.mrb[0].mxu0 %v909
        %v3783 = vpop.f32.mrb[0].mxu0
        %v3784 = vadd.f32 0.0, %v3783
        %v3785 = vpop.f32.mrb[0].mxu0
        %v3786 = vadd.f32 0.0, %v3785
        %v3787 = vpop.f32.mrb[0].mxu0
        %v3788 = vadd.f32 0.0, %v3787
        %v3789 = vpop.f32.mrb[0].mxu0
        %v3790 = vadd.f32 0.0, %v3789
        %3791 = vmatprep.mubr.bf16.mxu0 0
        %3792 = vmatmul.mubr.bf16.gmra.mrb[0].mxu0 %v912
        %v3793 = vpop.f32.mrb[0].mxu0
        %v3794 = vadd.f32 0.0, %v3793
        %v3795 = vpop.f32.mrb[0].mxu0
        %v3796 = vadd.f32 0.0, %v3795
        %v3797 = vpop.f32.mrb[0].mxu0
        %v3798 = vadd.f32 0.0, %v3797
        %v3799 = vpop.f32.mrb[0].mxu0
        %v3800 = vadd.f32 0.0, %v3799
        %3801 = vmatprep.mubr.bf16.mxu0 0
        %3802 = vmatmul.mubr.bf16.gmra.mrb[0].mxu0 %v915
        %v3803 = vpop.f32.mrb[0].mxu0
        %v3804 = vadd.f32 0.0, %v3803
        %v3805 = vpop.f32.mrb[0].mxu0
        %v3806 = vadd.f32 0.0, %v3805
        %v3807 = vpop.f32.mrb[0].mxu0
        %v3808 = vadd.f32 0.0, %v3807
        %v3809 = vpop.f32.mrb[0].mxu0
        %v3810 = vadd.f32 0.0, %v3809
        %3811 = vdwg.mxu0
        %3812 = vmatprep.subr.bf16.mxu0 %v771
        %3813 = vmatpush1.bf16.msra.mxu0 %v770
        %3814 = vmatprep.subr.bf16.mxu0 %v803
        %3815 = vmatpush1.bf16.msra.mxu0 %v802
        %3816 = vmatprep.subr.bf16.mxu0 0
        %3817 = vmatpush1.bf16.msra.mxu0 0
        %3818 = vmatprep.subr.bf16.mxu0 0
        %3819 = vmatpush1.bf16.msra.mxu0 0
        %3820 = vmatprep.subr.bf16.mxu0 0
        %3821 = vmatpush1.bf16.msra.mxu0 0
        %3822 = vmatprep.subr.bf16.mxu0 0
        %3823 = vmatpush1.bf16.msra.mxu0 0
        %3824 = vmatprep.subr.bf16.mxu0 0
        %3825 = vmatpush1.bf16.msra.mxu0 0
        %3826 = vmatprep.subr.bf16.mxu0 0
        %3827 = vmatpush1.bf16.msra.mxu0 0
        %3828 = vmatprep.subr.bf16.mxu0 0
        %3829 = vmatpush1.bf16.msra.mxu0 0
        %3830 = vmatprep.subr.bf16.mxu0 0
        %3831 = vmatpush1.bf16.msra.mxu0 0
        %3832 = vmatprep.subr.bf16.mxu0 0
        %3833 = vmatpush1.bf16.msra.mxu0 0
        %3834 = vmatprep.subr.bf16.mxu0 0
        %3835 = vmatpush1.bf16.msra.mxu0 0
        %3836 = vmatprep.subr.bf16.mxu0 0
        %3837 = vmatpush1.bf16.msra.mxu0 0
        %3838 = vmatprep.subr.bf16.mxu0 0
        %3839 = vmatpush1.bf16.msra.mxu0 0
        %3840 = vmatprep.subr.bf16.mxu0 0
        %3841 = vmatpush1.bf16.msra.mxu0 0
        %3842 = vmatprep.subr.bf16.mxu0 0
        %3843 = vmatpush1.bf16.msra.mxu0 0
        %3844 = vmatprep.mubr.bf16.mxu0 0
        %3845 = vmatmul.mubr.bf16.gmra.mrb[0].mxu0 %v870
        %v3846 = vpop.f32.mrb[0].mxu0
        %v3847 = vadd.f32 0.0, %v3846
        %v3848 = vpop.f32.mrb[0].mxu0
        %v3849 = vadd.f32 0.0, %v3848
        %v3850 = vpop.f32.mrb[0].mxu0
        %v3851 = vadd.f32 0.0, %v3850
        %v3852 = vpop.f32.mrb[0].mxu0
        %v3853 = vadd.f32 0.0, %v3852
        %3854 = vmatprep.mubr.bf16.mxu0 0
        %3855 = vmatmul.mubr.bf16.gmra.mrb[0].mxu0 %v873
        %v3856 = vpop.f32.mrb[0].mxu0
        %v3857 = vadd.f32 0.0, %v3856
        %v3858 = vpop.f32.mrb[0].mxu0
        %v3859 = vadd.f32 0.0, %v3858
        %v3860 = vpop.f32.mrb[0].mxu0
        %v3861 = vadd.f32 0.0, %v3860
        %v3862 = vpop.f32.mrb[0].mxu0
        %v3863 = vadd.f32 0.0, %v3862
        %3864 = vmatprep.mubr.bf16.mxu0 0
        %3865 = vmatmul.mubr.bf16.gmra.mrb[0].mxu0 %v876
        %v3866 = vpop.f32.mrb[0].mxu0
        %v3867 = vadd.f32 0.0, %v3866
        %v3868 = vpop.f32.mrb[0].mxu0
        %v3869 = vadd.f32 0.0, %v3868
        %v3870 = vpop.f32.mrb[0].mxu0
        %v3871 = vadd.f32 0.0, %v3870
        %v3872 = vpop.f32.mrb[0].mxu0
        %v3873 = vadd.f32 0.0, %v3872
        %3874 = vmatprep.mubr.bf16.mxu0 0
        %3875 = vmatmul.mubr.bf16.gmra.mrb[0].mxu0 %v879
        %v3876 = vpop.f32.mrb[0].mxu0
        %v3877 = vadd.f32 0.0, %v3876
        %v3878 = vpop.f32.mrb[0].mxu0
        %v3879 = vadd.f32 0.0, %v3878
        %v3880 = vpop.f32.mrb[0].mxu0
        %v3881 = vadd.f32 0.0, %v3880
        %v3882 = vpop.f32.mrb[0].mxu0
        %v3883 = vadd.f32 0.0, %v3882
        %3884 = vmatprep.mubr.bf16.mxu0 0
        %3885 = vmatmul.mubr.bf16.gmra.mrb[0].mxu0 %v882
        %v3886 = vpop.f32.mrb[0].mxu0
        %v3887 = vadd.f32 0.0, %v3886
        %v3888 = vpop.f32.mrb[0].mxu0
        %v3889 = vadd.f32 0.0, %v3888
        %v3890 = vpop.f32.mrb[0].mxu0
        %v3891 = vadd.f32 0.0, %v3890
        %v3892 = vpop.f32.mrb[0].mxu0
        %v3893 = vadd.f32 0.0, %v3892
        %3894 = vmatprep.mubr.bf16.mxu0 0
        %3895 = vmatmul.mubr.bf16.gmra.mrb[0].mxu0 %v885
        %v3896 = vpop.f32.mrb[0].mxu0
        %v3897 = vadd.f32 0.0, %v3896
        %v3898 = vpop.f32.mrb[0].mxu0
        %v3899 = vadd.f32 0.0, %v3898
        %v3900 = vpop.f32.mrb[0].mxu0
        %v3901 = vadd.f32 0.0, %v3900
        %v3902 = vpop.f32.mrb[0].mxu0
        %v3903 = vadd.f32 0.0, %v3902
        %3904 = vmatprep.mubr.bf16.mxu0 0
        %3905 = vmatmul.mubr.bf16.gmra.mrb[0].mxu0 %v888
        %v3906 = vpop.f32.mrb[0].mxu0
        %v3907 = vadd.f32 0.0, %v3906
        %v3908 = vpop.f32.mrb[0].mxu0
        %v3909 = vadd.f32 0.0, %v3908
        %v3910 = vpop.f32.mrb[0].mxu0
        %v3911 = vadd.f32 0.0, %v3910
        %v3912 = vpop.f32.mrb[0].mxu0
        %v3913 = vadd.f32 0.0, %v3912
        %3914 = vmatprep.mubr.bf16.mxu0 0
        %3915 = vmatmul.mubr.bf16.gmra.mrb[0].mxu0 %v891
        %v3916 = vpop.f32.mrb[0].mxu0
        %v3917 = vadd.f32 0.0, %v3916
        %v3918 = vpop.f32.mrb[0].mxu0
        %v3919 = vadd.f32 0.0, %v3918
        %v3920 = vpop.f32.mrb[0].mxu0
        %v3921 = vadd.f32 0.0, %v3920
        %v3922 = vpop.f32.mrb[0].mxu0
        %v3923 = vadd.f32 0.0, %v3922
        %3924 = vmatprep.mubr.bf16.mxu0 0
        %3925 = vmatmul.mubr.bf16.gmra.mrb[0].mxu0 %v894
        %v3926 = vpop.f32.mrb[0].mxu0
        %v3927 = vadd.f32 0.0, %v3926
        %v3928 = vpop.f32.mrb[0].mxu0
        %v3929 = vadd.f32 0.0, %v3928
        %v3930 = vpop.f32.mrb[0].mxu0
        %v3931 = vadd.f32 0.0, %v3930
        %v3932 = vpop.f32.mrb[0].mxu0
        %v3933 = vadd.f32 0.0, %v3932
        %3934 = vmatprep.mubr.bf16.mxu0 0
        %3935 = vmatmul.mubr.bf16.gmra.mrb[0].mxu0 %v897
        %v3936 = vpop.f32.mrb[0].mxu0
        %v3937 = vadd.f32 0.0, %v3936
        %v3938 = vpop.f32.mrb[0].mxu0
        %v3939 = vadd.f32 0.0, %v3938
        %v3940 = vpop.f32.mrb[0].mxu0
        %v3941 = vadd.f32 0.0, %v3940
        %v3942 = vpop.f32.mrb[0].mxu0
        %v3943 = vadd.f32 0.0, %v3942
        %3944 = vmatprep.mubr.bf16.mxu0 0
        %3945 = vmatmul.mubr.bf16.gmra.mrb[0].mxu0 %v900
        %v3946 = vpop.f32.mrb[0].mxu0
        %v3947 = vadd.f32 0.0, %v3946
        %v3948 = vpop.f32.mrb[0].mxu0
        %v3949 = vadd.f32 0.0, %v3948
        %v3950 = vpop.f32.mrb[0].mxu0
        %v3951 = vadd.f32 0.0, %v3950
        %v3952 = vpop.f32.mrb[0].mxu0
        %v3953 = vadd.f32 0.0, %v3952
        %3954 = vmatprep.mubr.bf16.mxu0 0
        %3955 = vmatmul.mubr.bf16.gmra.mrb[0].mxu0 %v903
        %v3956 = vpop.f32.mrb[0].mxu0
        %v3957 = vadd.f32 0.0, %v3956
        %v3958 = vpop.f32.mrb[0].mxu0
        %v3959 = vadd.f32 0.0, %v3958
        %v3960 = vpop.f32.mrb[0].mxu0
        %v3961 = vadd.f32 0.0, %v3960
        %v3962 = vpop.f32.mrb[0].mxu0
        %v3963 = vadd.f32 0.0, %v3962
        %3964 = vmatprep.mubr.bf16.mxu0 0
        %3965 = vmatmul.mubr.bf16.gmra.mrb[0].mxu0 %v906
        %v3966 = vpop.f32.mrb[0].mxu0
        %v3967 = vadd.f32 0.0, %v3966
        %v3968 = vpop.f32.mrb[0].mxu0
        %v3969 = vadd.f32 0.0, %v3968
        %v3970 = vpop.f32.mrb[0].mxu0
        %v3971 = vadd.f32 0.0, %v3970
        %v3972 = vpop.f32.mrb[0].mxu0
        %v3973 = vadd.f32 0.0, %v3972
        %3974 = vmatprep.mubr.bf16.mxu0 0
        %3975 = vmatmul.mubr.bf16.gmra.mrb[0].mxu0 %v909
        %v3976 = vpop.f32.mrb[0].mxu0
        %v3977 = vadd.f32 0.0, %v3976
        %v3978 = vpop.f32.mrb[0].mxu0
        %v3979 = vadd.f32 0.0, %v3978
        %v3980 = vpop.f32.mrb[0].mxu0
        %v3981 = vadd.f32 0.0, %v3980
        %v3982 = vpop.f32.mrb[0].mxu0
        %v3983 = vadd.f32 0.0, %v3982
        %3984 = vmatprep.mubr.bf16.mxu0 0
        %3985 = vmatmul.mubr.bf16.gmra.mrb[0].mxu0 %v912
        %v3986 = vpop.f32.mrb[0].mxu0
        %v3987 = vadd.f32 0.0, %v3986
        %v3988 = vpop.f32.mrb[0].mxu0
        %v3989 = vadd.f32 0.0, %v3988
        %v3990 = vpop.f32.mrb[0].mxu0
        %v3991 = vadd.f32 0.0, %v3990
        %v3992 = vpop.f32.mrb[0].mxu0
        %v3993 = vadd.f32 0.0, %v3992
        %3994 = vmatprep.mubr.bf16.mxu0 0
        %3995 = vmatmul.mubr.bf16.gmra.mrb[0].mxu0 %v915
        %v3996 = vpop.f32.mrb[0].mxu0
        %v3997 = vadd.f32 0.0, %v3996
        %v3998 = vpop.f32.mrb[0].mxu0
        %v3999 = vadd.f32 0.0, %v3998
        %v4000 = vpop.f32.mrb[0].mxu0
        %v4001 = vadd.f32 0.0, %v4000
        %v4002 = vpop.f32.mrb[0].mxu0
        %v4003 = vadd.f32 0.0, %v4002
        %4004 = vdwg.mxu0
        %v4005 = vpack.c.bf16 %v956, %v952
        %v4006 = vpack.c.bf16 %v958, %v954
        %v4007 = vpack.c.bf16 %v1149, %v1145
        %v4008 = vpack.c.bf16 %v1151, %v1147
        %v4009 = vpack.c.bf16 %v1342, %v1338
        %v4010 = vpack.c.bf16 %v1344, %v1340
        %v4011 = vpack.c.bf16 %v1535, %v1531
        %v4012 = vpack.c.bf16 %v1537, %v1533
        %v4013 = vpack.c.bf16 %v1728, %v1724
        %v4014 = vpack.c.bf16 %v1730, %v1726
        %v4015 = vpack.c.bf16 %v1921, %v1917
        %v4016 = vpack.c.bf16 %v1923, %v1919
        %v4017 = vpack.c.bf16 %v2114, %v2110
        %v4018 = vpack.c.bf16 %v2116, %v2112
        %v4019 = vpack.c.bf16 %v2307, %v2303
        %v4020 = vpack.c.bf16 %v2309, %v2305
        %v4021 = vpack.c.bf16 %v2500, %v2496
        %v4022 = vpack.c.bf16 %v2502, %v2498
        %v4023 = vpack.c.bf16 %v2693, %v2689
        %v4024 = vpack.c.bf16 %v2695, %v2691
        %v4025 = vpack.c.bf16 %v2886, %v2882
        %v4026 = vpack.c.bf16 %v2888, %v2884
        %v4027 = vpack.c.bf16 %v3079, %v3075
        %v4028 = vpack.c.bf16 %v3081, %v3077
        %v4029 = vpack.c.bf16 %v3272, %v3268
        %v4030 = vpack.c.bf16 %v3274, %v3270
        %v4031 = vpack.c.bf16 %v3465, %v3461
        %v4032 = vpack.c.bf16 %v3467, %v3463
        %v4033 = vpack.c.bf16 %v3658, %v3654
        %v4034 = vpack.c.bf16 %v3660, %v3656
        %v4035 = vpack.c.bf16 %v3851, %v3847
        %v4036 = vpack.c.bf16 %v3853, %v3849
        %v4037 = vpack.c.bf16 %v966, %v962
        %v4038 = vpack.c.bf16 %v968, %v964
        %v4039 = vpack.c.bf16 %v1159, %v1155
        %v4040 = vpack.c.bf16 %v1161, %v1157
        %v4041 = vpack.c.bf16 %v1352, %v1348
        %v4042 = vpack.c.bf16 %v1354, %v1350
        %v4043 = vpack.c.bf16 %v1545, %v1541
        %v4044 = vpack.c.bf16 %v1547, %v1543
        %v4045 = vpack.c.bf16 %v1738, %v1734
        %v4046 = vpack.c.bf16 %v1740, %v1736
        %v4047 = vpack.c.bf16 %v1931, %v1927
        %v4048 = vpack.c.bf16 %v1933, %v1929
        %v4049 = vpack.c.bf16 %v2124, %v2120
        %v4050 = vpack.c.bf16 %v2126, %v2122
        %v4051 = vpack.c.bf16 %v2317, %v2313
        %v4052 = vpack.c.bf16 %v2319, %v2315
        %v4053 = vpack.c.bf16 %v2510, %v2506
        %v4054 = vpack.c.bf16 %v2512, %v2508
        %v4055 = vpack.c.bf16 %v2703, %v2699
        %v4056 = vpack.c.bf16 %v2705, %v2701
        %v4057 = vpack.c.bf16 %v2896, %v2892
        %v4058 = vpack.c.bf16 %v2898, %v2894
        %v4059 = vpack.c.bf16 %v3089, %v3085
        %v4060 = vpack.c.bf16 %v3091, %v3087
        %v4061 = vpack.c.bf16 %v3282, %v3278
        %v4062 = vpack.c.bf16 %v3284, %v3280
        %v4063 = vpack.c.bf16 %v3475, %v3471
        %v4064 = vpack.c.bf16 %v3477, %v3473
        %v4065 = vpack.c.bf16 %v3668, %v3664
        %v4066 = vpack.c.bf16 %v3670, %v3666
        %v4067 = vpack.c.bf16 %v3861, %v3857
        %v4068 = vpack.c.bf16 %v3863, %v3859
        %v4069 = vpack.c.bf16 %v976, %v972
        %v4070 = vpack.c.bf16 %v978, %v974
        %v4071 = vpack.c.bf16 %v1169, %v1165
        %v4072 = vpack.c.bf16 %v1171, %v1167
        %v4073 = vpack.c.bf16 %v1362, %v1358
        %v4074 = vpack.c.bf16 %v1364, %v1360
        %v4075 = vpack.c.bf16 %v1555, %v1551
        %v4076 = vpack.c.bf16 %v1557, %v1553
        %v4077 = vpack.c.bf16 %v1748, %v1744
        %v4078 = vpack.c.bf16 %v1750, %v1746
        %v4079 = vpack.c.bf16 %v1941, %v1937
        %v4080 = vpack.c.bf16 %v1943, %v1939
        %v4081 = vpack.c.bf16 %v2134, %v2130
        %v4082 = vpack.c.bf16 %v2136, %v2132
        %v4083 = vpack.c.bf16 %v2327, %v2323
        %v4084 = vpack.c.bf16 %v2329, %v2325
        %v4085 = vpack.c.bf16 %v2520, %v2516
        %v4086 = vpack.c.bf16 %v2522, %v2518
        %v4087 = vpack.c.bf16 %v2713, %v2709
        %v4088 = vpack.c.bf16 %v2715, %v2711
        %v4089 = vpack.c.bf16 %v2906, %v2902
        %v4090 = vpack.c.bf16 %v2908, %v2904
        %v4091 = vpack.c.bf16 %v3099, %v3095
        %v4092 = vpack.c.bf16 %v3101, %v3097
        %v4093 = vpack.c.bf16 %v3292, %v3288
        %v4094 = vpack.c.bf16 %v3294, %v3290
        %v4095 = vpack.c.bf16 %v3485, %v3481
        %v4096 = vpack.c.bf16 %v3487, %v3483
        %v4097 = vpack.c.bf16 %v3678, %v3674
        %v4098 = vpack.c.bf16 %v3680, %v3676
        %v4099 = vpack.c.bf16 %v3871, %v3867
        %v4100 = vpack.c.bf16 %v3873, %v3869
        %v4101 = vpack.c.bf16 %v986, %v982
        %v4102 = vpack.c.bf16 %v988, %v984
        %v4103 = vpack.c.bf16 %v1179, %v1175
        %v4104 = vpack.c.bf16 %v1181, %v1177
        %v4105 = vpack.c.bf16 %v1372, %v1368
        %v4106 = vpack.c.bf16 %v1374, %v1370
        %v4107 = vpack.c.bf16 %v1565, %v1561
        %v4108 = vpack.c.bf16 %v1567, %v1563
        %v4109 = vpack.c.bf16 %v1758, %v1754
        %v4110 = vpack.c.bf16 %v1760, %v1756
        %v4111 = vpack.c.bf16 %v1951, %v1947
        %v4112 = vpack.c.bf16 %v1953, %v1949
        %v4113 = vpack.c.bf16 %v2144, %v2140
        %v4114 = vpack.c.bf16 %v2146, %v2142
        %v4115 = vpack.c.bf16 %v2337, %v2333
        %v4116 = vpack.c.bf16 %v2339, %v2335
        %v4117 = vpack.c.bf16 %v2530, %v2526
        %v4118 = vpack.c.bf16 %v2532, %v2528
        %v4119 = vpack.c.bf16 %v2723, %v2719
        %v4120 = vpack.c.bf16 %v2725, %v2721
        %v4121 = vpack.c.bf16 %v2916, %v2912
        %v4122 = vpack.c.bf16 %v2918, %v2914
        %v4123 = vpack.c.bf16 %v3109, %v3105
        %v4124 = vpack.c.bf16 %v3111, %v3107
        %v4125 = vpack.c.bf16 %v3302, %v3298
        %v4126 = vpack.c.bf16 %v3304, %v3300
        %v4127 = vpack.c.bf16 %v3495, %v3491
        %v4128 = vpack.c.bf16 %v3497, %v3493
        %v4129 = vpack.c.bf16 %v3688, %v3684
        %v4130 = vpack.c.bf16 %v3690, %v3686
        %v4131 = vpack.c.bf16 %v3881, %v3877
        %v4132 = vpack.c.bf16 %v3883, %v3879
        %v4133 = vpack.c.bf16 %v996, %v992
        %v4134 = vpack.c.bf16 %v998, %v994
        %v4135 = vpack.c.bf16 %v1189, %v1185
        %v4136 = vpack.c.bf16 %v1191, %v1187
        %v4137 = vpack.c.bf16 %v1382, %v1378
        %v4138 = vpack.c.bf16 %v1384, %v1380
        %v4139 = vpack.c.bf16 %v1575, %v1571
        %v4140 = vpack.c.bf16 %v1577, %v1573
        %v4141 = vpack.c.bf16 %v1768, %v1764
        %v4142 = vpack.c.bf16 %v1770, %v1766
        %v4143 = vpack.c.bf16 %v1961, %v1957
        %v4144 = vpack.c.bf16 %v1963, %v1959
        %v4145 = vpack.c.bf16 %v2154, %v2150
        %v4146 = vpack.c.bf16 %v2156, %v2152
        %v4147 = vpack.c.bf16 %v2347, %v2343
        %v4148 = vpack.c.bf16 %v2349, %v2345
        %v4149 = vpack.c.bf16 %v2540, %v2536
        %v4150 = vpack.c.bf16 %v2542, %v2538
        %v4151 = vpack.c.bf16 %v2733, %v2729
        %v4152 = vpack.c.bf16 %v2735, %v2731
        %v4153 = vpack.c.bf16 %v2926, %v2922
        %v4154 = vpack.c.bf16 %v2928, %v2924
        %v4155 = vpack.c.bf16 %v3119, %v3115
        %v4156 = vpack.c.bf16 %v3121, %v3117
        %v4157 = vpack.c.bf16 %v3312, %v3308
        %v4158 = vpack.c.bf16 %v3314, %v3310
        %v4159 = vpack.c.bf16 %v3505, %v3501
        %v4160 = vpack.c.bf16 %v3507, %v3503
        %v4161 = vpack.c.bf16 %v3698, %v3694
        %v4162 = vpack.c.bf16 %v3700, %v3696
        %v4163 = vpack.c.bf16 %v3891, %v3887
        %v4164 = vpack.c.bf16 %v3893, %v3889
        %v4165 = vpack.c.bf16 %v1006, %v1002
        %v4166 = vpack.c.bf16 %v1008, %v1004
        %v4167 = vpack.c.bf16 %v1199, %v1195
        %v4168 = vpack.c.bf16 %v1201, %v1197
        %v4169 = vpack.c.bf16 %v1392, %v1388
        %v4170 = vpack.c.bf16 %v1394, %v1390
        %v4171 = vpack.c.bf16 %v1585, %v1581
        %v4172 = vpack.c.bf16 %v1587, %v1583
        %v4173 = vpack.c.bf16 %v1778, %v1774
        %v4174 = vpack.c.bf16 %v1780, %v1776
        %v4175 = vpack.c.bf16 %v1971, %v1967
        %v4176 = vpack.c.bf16 %v1973, %v1969
        %v4177 = vpack.c.bf16 %v2164, %v2160
        %v4178 = vpack.c.bf16 %v2166, %v2162
        %v4179 = vpack.c.bf16 %v2357, %v2353
        %v4180 = vpack.c.bf16 %v2359, %v2355
        %v4181 = vpack.c.bf16 %v2550, %v2546
        %v4182 = vpack.c.bf16 %v2552, %v2548
        %v4183 = vpack.c.bf16 %v2743, %v2739
        %v4184 = vpack.c.bf16 %v2745, %v2741
        %v4185 = vpack.c.bf16 %v2936, %v2932
        %v4186 = vpack.c.bf16 %v2938, %v2934
        %v4187 = vpack.c.bf16 %v3129, %v3125
        %v4188 = vpack.c.bf16 %v3131, %v3127
        %v4189 = vpack.c.bf16 %v3322, %v3318
        %v4190 = vpack.c.bf16 %v3324, %v3320
        %v4191 = vpack.c.bf16 %v3515, %v3511
        %v4192 = vpack.c.bf16 %v3517, %v3513
        %v4193 = vpack.c.bf16 %v3708, %v3704
        %v4194 = vpack.c.bf16 %v3710, %v3706
        %v4195 = vpack.c.bf16 %v3901, %v3897
        %v4196 = vpack.c.bf16 %v3903, %v3899
        %v4197 = vpack.c.bf16 %v1016, %v1012
        %v4198 = vpack.c.bf16 %v1018, %v1014
        %v4199 = vpack.c.bf16 %v1209, %v1205
        %v4200 = vpack.c.bf16 %v1211, %v1207
        %v4201 = vpack.c.bf16 %v1402, %v1398
        %v4202 = vpack.c.bf16 %v1404, %v1400
        %v4203 = vpack.c.bf16 %v1595, %v1591
        %v4204 = vpack.c.bf16 %v1597, %v1593
        %v4205 = vpack.c.bf16 %v1788, %v1784
        %v4206 = vpack.c.bf16 %v1790, %v1786
        %v4207 = vpack.c.bf16 %v1981, %v1977
        %v4208 = vpack.c.bf16 %v1983, %v1979
        %v4209 = vpack.c.bf16 %v2174, %v2170
        %v4210 = vpack.c.bf16 %v2176, %v2172
        %v4211 = vpack.c.bf16 %v2367, %v2363
        %v4212 = vpack.c.bf16 %v2369, %v2365
        %v4213 = vpack.c.bf16 %v2560, %v2556
        %v4214 = vpack.c.bf16 %v2562, %v2558
        %v4215 = vpack.c.bf16 %v2753, %v2749
        %v4216 = vpack.c.bf16 %v2755, %v2751
        %v4217 = vpack.c.bf16 %v2946, %v2942
        %v4218 = vpack.c.bf16 %v2948, %v2944
        %v4219 = vpack.c.bf16 %v3139, %v3135
        %v4220 = vpack.c.bf16 %v3141, %v3137
        %v4221 = vpack.c.bf16 %v3332, %v3328
        %v4222 = vpack.c.bf16 %v3334, %v3330
        %v4223 = vpack.c.bf16 %v3525, %v3521
        %v4224 = vpack.c.bf16 %v3527, %v3523
        %v4225 = vpack.c.bf16 %v3718, %v3714
        %v4226 = vpack.c.bf16 %v3720, %v3716
        %v4227 = vpack.c.bf16 %v3911, %v3907
        %v4228 = vpack.c.bf16 %v3913, %v3909
        %v4229 = vpack.c.bf16 %v1026, %v1022
        %v4230 = vpack.c.bf16 %v1028, %v1024
        %v4231 = vpack.c.bf16 %v1219, %v1215
        %v4232 = vpack.c.bf16 %v1221, %v1217
        %v4233 = vpack.c.bf16 %v1412, %v1408
        %v4234 = vpack.c.bf16 %v1414, %v1410
        %v4235 = vpack.c.bf16 %v1605, %v1601
        %v4236 = vpack.c.bf16 %v1607, %v1603
        %v4237 = vpack.c.bf16 %v1798, %v1794
        %v4238 = vpack.c.bf16 %v1800, %v1796
        %v4239 = vpack.c.bf16 %v1991, %v1987
        %v4240 = vpack.c.bf16 %v1993, %v1989
        %v4241 = vpack.c.bf16 %v2184, %v2180
        %v4242 = vpack.c.bf16 %v2186, %v2182
        %v4243 = vpack.c.bf16 %v2377, %v2373
        %v4244 = vpack.c.bf16 %v2379, %v2375
        %v4245 = vpack.c.bf16 %v2570, %v2566
        %v4246 = vpack.c.bf16 %v2572, %v2568
        %v4247 = vpack.c.bf16 %v2763, %v2759
        %v4248 = vpack.c.bf16 %v2765, %v2761
        %v4249 = vpack.c.bf16 %v2956, %v2952
        %v4250 = vpack.c.bf16 %v2958, %v2954
        %v4251 = vpack.c.bf16 %v3149, %v3145
        %v4252 = vpack.c.bf16 %v3151, %v3147
        %v4253 = vpack.c.bf16 %v3342, %v3338
        %v4254 = vpack.c.bf16 %v3344, %v3340
        %v4255 = vpack.c.bf16 %v3535, %v3531
        %v4256 = vpack.c.bf16 %v3537, %v3533
        %v4257 = vpack.c.bf16 %v3728, %v3724
        %v4258 = vpack.c.bf16 %v3730, %v3726
        %v4259 = vpack.c.bf16 %v3921, %v3917
        %v4260 = vpack.c.bf16 %v3923, %v3919
        %v4261 = vpack.c.bf16 %v1036, %v1032
        %v4262 = vpack.c.bf16 %v1038, %v1034
        %v4263 = vpack.c.bf16 %v1229, %v1225
        %v4264 = vpack.c.bf16 %v1231, %v1227
        %v4265 = vpack.c.bf16 %v1422, %v1418
        %v4266 = vpack.c.bf16 %v1424, %v1420
        %v4267 = vpack.c.bf16 %v1615, %v1611
        %v4268 = vpack.c.bf16 %v1617, %v1613
        %v4269 = vpack.c.bf16 %v1808, %v1804
        %v4270 = vpack.c.bf16 %v1810, %v1806
        %v4271 = vpack.c.bf16 %v2001, %v1997
        %v4272 = vpack.c.bf16 %v2003, %v1999
        %v4273 = vpack.c.bf16 %v2194, %v2190
        %v4274 = vpack.c.bf16 %v2196, %v2192
        %v4275 = vpack.c.bf16 %v2387, %v2383
        %v4276 = vpack.c.bf16 %v2389, %v2385
        %v4277 = vpack.c.bf16 %v2580, %v2576
        %v4278 = vpack.c.bf16 %v2582, %v2578
        %v4279 = vpack.c.bf16 %v2773, %v2769
        %v4280 = vpack.c.bf16 %v2775, %v2771
        %v4281 = vpack.c.bf16 %v2966, %v2962
        %v4282 = vpack.c.bf16 %v2968, %v2964
        %v4283 = vpack.c.bf16 %v3159, %v3155
        %v4284 = vpack.c.bf16 %v3161, %v3157
        %v4285 = vpack.c.bf16 %v3352, %v3348
        %v4286 = vpack.c.bf16 %v3354, %v3350
        %v4287 = vpack.c.bf16 %v3545, %v3541
        %v4288 = vpack.c.bf16 %v3547, %v3543
        %v4289 = vpack.c.bf16 %v3738, %v3734
        %v4290 = vpack.c.bf16 %v3740, %v3736
        %v4291 = vpack.c.bf16 %v3931, %v3927
        %v4292 = vpack.c.bf16 %v3933, %v3929
        %v4293 = vpack.c.bf16 %v1046, %v1042
        %v4294 = vpack.c.bf16 %v1048, %v1044
        %v4295 = vpack.c.bf16 %v1239, %v1235
        %v4296 = vpack.c.bf16 %v1241, %v1237
        %v4297 = vpack.c.bf16 %v1432, %v1428
        %v4298 = vpack.c.bf16 %v1434, %v1430
        %v4299 = vpack.c.bf16 %v1625, %v1621
        %v4300 = vpack.c.bf16 %v1627, %v1623
        %v4301 = vpack.c.bf16 %v1818, %v1814
        %v4302 = vpack.c.bf16 %v1820, %v1816
        %v4303 = vpack.c.bf16 %v2011, %v2007
        %v4304 = vpack.c.bf16 %v2013, %v2009
        %v4305 = vpack.c.bf16 %v2204, %v2200
        %v4306 = vpack.c.bf16 %v2206, %v2202
        %v4307 = vpack.c.bf16 %v2397, %v2393
        %v4308 = vpack.c.bf16 %v2399, %v2395
        %v4309 = vpack.c.bf16 %v2590, %v2586
        %v4310 = vpack.c.bf16 %v2592, %v2588
        %v4311 = vpack.c.bf16 %v2783, %v2779
        %v4312 = vpack.c.bf16 %v2785, %v2781
        %v4313 = vpack.c.bf16 %v2976, %v2972
        %v4314 = vpack.c.bf16 %v2978, %v2974
        %v4315 = vpack.c.bf16 %v3169, %v3165
        %v4316 = vpack.c.bf16 %v3171, %v3167
        %v4317 = vpack.c.bf16 %v3362, %v3358
        %v4318 = vpack.c.bf16 %v3364, %v3360
        %v4319 = vpack.c.bf16 %v3555, %v3551
        %v4320 = vpack.c.bf16 %v3557, %v3553
        %v4321 = vpack.c.bf16 %v3748, %v3744
        %v4322 = vpack.c.bf16 %v3750, %v3746
        %v4323 = vpack.c.bf16 %v3941, %v3937
        %v4324 = vpack.c.bf16 %v3943, %v3939
        %v4325 = vpack.c.bf16 %v1056, %v1052
        %v4326 = vpack.c.bf16 %v1058, %v1054
        %v4327 = vpack.c.bf16 %v1249, %v1245
        %v4328 = vpack.c.bf16 %v1251, %v1247
        %v4329 = vpack.c.bf16 %v1442, %v1438
        %v4330 = vpack.c.bf16 %v1444, %v1440
        %v4331 = vpack.c.bf16 %v1635, %v1631
        %v4332 = vpack.c.bf16 %v1637, %v1633
        %v4333 = vpack.c.bf16 %v1828, %v1824
        %v4334 = vpack.c.bf16 %v1830, %v1826
        %v4335 = vpack.c.bf16 %v2021, %v2017
        %v4336 = vpack.c.bf16 %v2023, %v2019
        %v4337 = vpack.c.bf16 %v2214, %v2210
        %v4338 = vpack.c.bf16 %v2216, %v2212
        %v4339 = vpack.c.bf16 %v2407, %v2403
        %v4340 = vpack.c.bf16 %v2409, %v2405
        %v4341 = vpack.c.bf16 %v2600, %v2596
        %v4342 = vpack.c.bf16 %v2602, %v2598
        %v4343 = vpack.c.bf16 %v2793, %v2789
        %v4344 = vpack.c.bf16 %v2795, %v2791
        %v4345 = vpack.c.bf16 %v2986, %v2982
        %v4346 = vpack.c.bf16 %v2988, %v2984
        %v4347 = vpack.c.bf16 %v3179, %v3175
        %v4348 = vpack.c.bf16 %v3181, %v3177
        %v4349 = vpack.c.bf16 %v3372, %v3368
        %v4350 = vpack.c.bf16 %v3374, %v3370
        %v4351 = vpack.c.bf16 %v3565, %v3561
        %v4352 = vpack.c.bf16 %v3567, %v3563
        %v4353 = vpack.c.bf16 %v3758, %v3754
        %v4354 = vpack.c.bf16 %v3760, %v3756
        %v4355 = vpack.c.bf16 %v3951, %v3947
        %v4356 = vpack.c.bf16 %v3953, %v3949
        %v4357 = vpack.c.bf16 %v1066, %v1062
        %v4358 = vpack.c.bf16 %v1068, %v1064
        %v4359 = vpack.c.bf16 %v1259, %v1255
        %v4360 = vpack.c.bf16 %v1261, %v1257
        %v4361 = vpack.c.bf16 %v1452, %v1448
        %v4362 = vpack.c.bf16 %v1454, %v1450
        %v4363 = vpack.c.bf16 %v1645, %v1641
        %v4364 = vpack.c.bf16 %v1647, %v1643
        %v4365 = vpack.c.bf16 %v1838, %v1834
        %v4366 = vpack.c.bf16 %v1840, %v1836
        %v4367 = vpack.c.bf16 %v2031, %v2027
        %v4368 = vpack.c.bf16 %v2033, %v2029
        %v4369 = vpack.c.bf16 %v2224, %v2220
        %v4370 = vpack.c.bf16 %v2226, %v2222
        %v4371 = vpack.c.bf16 %v2417, %v2413
        %v4372 = vpack.c.bf16 %v2419, %v2415
        %v4373 = vpack.c.bf16 %v2610, %v2606
        %v4374 = vpack.c.bf16 %v2612, %v2608
        %v4375 = vpack.c.bf16 %v2803, %v2799
        %v4376 = vpack.c.bf16 %v2805, %v2801
        %v4377 = vpack.c.bf16 %v2996, %v2992
        %v4378 = vpack.c.bf16 %v2998, %v2994
        %v4379 = vpack.c.bf16 %v3189, %v3185
        %v4380 = vpack.c.bf16 %v3191, %v3187
        %v4381 = vpack.c.bf16 %v3382, %v3378
        %v4382 = vpack.c.bf16 %v3384, %v3380
        %v4383 = vpack.c.bf16 %v3575, %v3571
        %v4384 = vpack.c.bf16 %v3577, %v3573
        %v4385 = vpack.c.bf16 %v3768, %v3764
        %v4386 = vpack.c.bf16 %v3770, %v3766
        %v4387 = vpack.c.bf16 %v3961, %v3957
        %v4388 = vpack.c.bf16 %v3963, %v3959
        %v4389 = vpack.c.bf16 %v1076, %v1072
        %v4390 = vpack.c.bf16 %v1078, %v1074
        %v4391 = vpack.c.bf16 %v1269, %v1265
        %v4392 = vpack.c.bf16 %v1271, %v1267
        %v4393 = vpack.c.bf16 %v1462, %v1458
        %v4394 = vpack.c.bf16 %v1464, %v1460
        %v4395 = vpack.c.bf16 %v1655, %v1651
        %v4396 = vpack.c.bf16 %v1657, %v1653
        %v4397 = vpack.c.bf16 %v1848, %v1844
        %v4398 = vpack.c.bf16 %v1850, %v1846
        %v4399 = vpack.c.bf16 %v2041, %v2037
        %v4400 = vpack.c.bf16 %v2043, %v2039
        %v4401 = vpack.c.bf16 %v2234, %v2230
        %v4402 = vpack.c.bf16 %v2236, %v2232
        %v4403 = vpack.c.bf16 %v2427, %v2423
        %v4404 = vpack.c.bf16 %v2429, %v2425
        %v4405 = vpack.c.bf16 %v2620, %v2616
        %v4406 = vpack.c.bf16 %v2622, %v2618
        %v4407 = vpack.c.bf16 %v2813, %v2809
        %v4408 = vpack.c.bf16 %v2815, %v2811
        %v4409 = vpack.c.bf16 %v3006, %v3002
        %v4410 = vpack.c.bf16 %v3008, %v3004
        %v4411 = vpack.c.bf16 %v3199, %v3195
        %v4412 = vpack.c.bf16 %v3201, %v3197
        %v4413 = vpack.c.bf16 %v3392, %v3388
        %v4414 = vpack.c.bf16 %v3394, %v3390
        %v4415 = vpack.c.bf16 %v3585, %v3581
        %v4416 = vpack.c.bf16 %v3587, %v3583
        %v4417 = vpack.c.bf16 %v3778, %v3774
        %v4418 = vpack.c.bf16 %v3780, %v3776
        %v4419 = vpack.c.bf16 %v3971, %v3967
        %v4420 = vpack.c.bf16 %v3973, %v3969
        %v4421 = vpack.c.bf16 %v1086, %v1082
        %v4422 = vpack.c.bf16 %v1088, %v1084
        %v4423 = vpack.c.bf16 %v1279, %v1275
        %v4424 = vpack.c.bf16 %v1281, %v1277
        %v4425 = vpack.c.bf16 %v1472, %v1468
        %v4426 = vpack.c.bf16 %v1474, %v1470
        %v4427 = vpack.c.bf16 %v1665, %v1661
        %v4428 = vpack.c.bf16 %v1667, %v1663
        %v4429 = vpack.c.bf16 %v1858, %v1854
        %v4430 = vpack.c.bf16 %v1860, %v1856
        %v4431 = vpack.c.bf16 %v2051, %v2047
        %v4432 = vpack.c.bf16 %v2053, %v2049
        %v4433 = vpack.c.bf16 %v2244, %v2240
        %v4434 = vpack.c.bf16 %v2246, %v2242
        %v4435 = vpack.c.bf16 %v2437, %v2433
        %v4436 = vpack.c.bf16 %v2439, %v2435
        %v4437 = vpack.c.bf16 %v2630, %v2626
        %v4438 = vpack.c.bf16 %v2632, %v2628
        %v4439 = vpack.c.bf16 %v2823, %v2819
        %v4440 = vpack.c.bf16 %v2825, %v2821
        %v4441 = vpack.c.bf16 %v3016, %v3012
        %v4442 = vpack.c.bf16 %v3018, %v3014
        %v4443 = vpack.c.bf16 %v3209, %v3205
        %v4444 = vpack.c.bf16 %v3211, %v3207
        %v4445 = vpack.c.bf16 %v3402, %v3398
        %v4446 = vpack.c.bf16 %v3404, %v3400
        %v4447 = vpack.c.bf16 %v3595, %v3591
        %v4448 = vpack.c.bf16 %v3597, %v3593
        %v4449 = vpack.c.bf16 %v3788, %v3784
        %v4450 = vpack.c.bf16 %v3790, %v3786
        %v4451 = vpack.c.bf16 %v3981, %v3977
        %v4452 = vpack.c.bf16 %v3983, %v3979
        %v4453 = vpack.c.bf16 %v1096, %v1092
        %v4454 = vpack.c.bf16 %v1098, %v1094
        %v4455 = vpack.c.bf16 %v1289, %v1285
        %v4456 = vpack.c.bf16 %v1291, %v1287
        %v4457 = vpack.c.bf16 %v1482, %v1478
        %v4458 = vpack.c.bf16 %v1484, %v1480
        %v4459 = vpack.c.bf16 %v1675, %v1671
        %v4460 = vpack.c.bf16 %v1677, %v1673
        %v4461 = vpack.c.bf16 %v1868, %v1864
        %v4462 = vpack.c.bf16 %v1870, %v1866
        %v4463 = vpack.c.bf16 %v2061, %v2057
        %v4464 = vpack.c.bf16 %v2063, %v2059
        %v4465 = vpack.c.bf16 %v2254, %v2250
        %v4466 = vpack.c.bf16 %v2256, %v2252
        %v4467 = vpack.c.bf16 %v2447, %v2443
        %v4468 = vpack.c.bf16 %v2449, %v2445
        %v4469 = vpack.c.bf16 %v2640, %v2636
        %v4470 = vpack.c.bf16 %v2642, %v2638
        %v4471 = vpack.c.bf16 %v2833, %v2829
        %v4472 = vpack.c.bf16 %v2835, %v2831
        %v4473 = vpack.c.bf16 %v3026, %v3022
        %v4474 = vpack.c.bf16 %v3028, %v3024
        %v4475 = vpack.c.bf16 %v3219, %v3215
        %v4476 = vpack.c.bf16 %v3221, %v3217
        %v4477 = vpack.c.bf16 %v3412, %v3408
        %v4478 = vpack.c.bf16 %v3414, %v3410
        %v4479 = vpack.c.bf16 %v3605, %v3601
        %v4480 = vpack.c.bf16 %v3607, %v3603
        %v4481 = vpack.c.bf16 %v3798, %v3794
        %v4482 = vpack.c.bf16 %v3800, %v3796
        %v4483 = vpack.c.bf16 %v3991, %v3987
        %v4484 = vpack.c.bf16 %v3993, %v3989
        %v4485 = vpack.c.bf16 %v1106, %v1102
        %v4486 = vpack.c.bf16 %v1108, %v1104
        %v4487 = vpack.c.bf16 %v1299, %v1295
        %v4488 = vpack.c.bf16 %v1301, %v1297
        %v4489 = vpack.c.bf16 %v1492, %v1488
        %v4490 = vpack.c.bf16 %v1494, %v1490
        %v4491 = vpack.c.bf16 %v1685, %v1681
        %v4492 = vpack.c.bf16 %v1687, %v1683
        %v4493 = vpack.c.bf16 %v1878, %v1874
        %v4494 = vpack.c.bf16 %v1880, %v1876
        %v4495 = vpack.c.bf16 %v2071, %v2067
        %v4496 = vpack.c.bf16 %v2073, %v2069
        %v4497 = vpack.c.bf16 %v2264, %v2260
        %v4498 = vpack.c.bf16 %v2266, %v2262
        %v4499 = vpack.c.bf16 %v2457, %v2453
        %v4500 = vpack.c.bf16 %v2459, %v2455
        %v4501 = vpack.c.bf16 %v2650, %v2646
        %v4502 = vpack.c.bf16 %v2652, %v2648
        %v4503 = vpack.c.bf16 %v2843, %v2839
        %v4504 = vpack.c.bf16 %v2845, %v2841
        %v4505 = vpack.c.bf16 %v3036, %v3032
        %v4506 = vpack.c.bf16 %v3038, %v3034
        %v4507 = vpack.c.bf16 %v3229, %v3225
        %v4508 = vpack.c.bf16 %v3231, %v3227
        %v4509 = vpack.c.bf16 %v3422, %v3418
        %v4510 = vpack.c.bf16 %v3424, %v3420
        %v4511 = vpack.c.bf16 %v3615, %v3611
        %v4512 = vpack.c.bf16 %v3617, %v3613
        %v4513 = vpack.c.bf16 %v3808, %v3804
        %v4514 = vpack.c.bf16 %v3810, %v3806
        %v4515 = vpack.c.bf16 %v4001, %v3997
        %v4516 = vpack.c.bf16 %v4003, %v3999
        %v4517 = vmax.bf16 %v4005, 0
        %v4518 = vmax.bf16 %v4006, 0
        %v4519 = vmax.bf16 %v4007, 0
        %v4520 = vmax.bf16 %v4008, 0
        %v4521 = vmax.bf16 %v4009, 0
        %v4522 = vmax.bf16 %v4010, 0
        %v4523 = vmax.bf16 %v4011, 0
        %v4524 = vmax.bf16 %v4012, 0
        %v4525 = vmax.bf16 %v4013, 0
        %v4526 = vmax.bf16 %v4014, 0
        %v4527 = vmax.bf16 %v4015, 0
        %v4528 = vmax.bf16 %v4016, 0
        %v4529 = vmax.bf16 %v4017, 0
        %v4530 = vmax.bf16 %v4018, 0
        %v4531 = vmax.bf16 %v4019, 0
        %v4532 = vmax.bf16 %v4020, 0
        %v4533 = vmax.bf16 %v4021, 0
        %v4534 = vmax.bf16 %v4022, 0
        %v4535 = vmax.bf16 %v4023, 0
        %v4536 = vmax.bf16 %v4024, 0
        %v4537 = vmax.bf16 %v4025, 0
        %v4538 = vmax.bf16 %v4026, 0
        %v4539 = vmax.bf16 %v4027, 0
        %v4540 = vmax.bf16 %v4028, 0
        %v4541 = vmax.bf16 %v4029, 0
        %v4542 = vmax.bf16 %v4030, 0
        %v4543 = vmax.bf16 %v4031, 0
        %v4544 = vmax.bf16 %v4032, 0
        %v4545 = vmax.bf16 %v4033, 0
        %v4546 = vmax.bf16 %v4034, 0
        %v4547 = vmax.bf16 %v4035, 0
        %v4548 = vmax.bf16 %v4036, 0
        %v4549 = vmax.bf16 %v4037, 0
        %v4550 = vmax.bf16 %v4038, 0
        %v4551 = vmax.bf16 %v4039, 0
        %v4552 = vmax.bf16 %v4040, 0
        %v4553 = vmax.bf16 %v4041, 0
        %v4554 = vmax.bf16 %v4042, 0
        %v4555 = vmax.bf16 %v4043, 0
        %v4556 = vmax.bf16 %v4044, 0
        %v4557 = vmax.bf16 %v4045, 0
        %v4558 = vmax.bf16 %v4046, 0
        %v4559 = vmax.bf16 %v4047, 0
        %v4560 = vmax.bf16 %v4048, 0
        %v4561 = vmax.bf16 %v4049, 0
        %v4562 = vmax.bf16 %v4050, 0
        %v4563 = vmax.bf16 %v4051, 0
        %v4564 = vmax.bf16 %v4052, 0
        %v4565 = vmax.bf16 %v4053, 0
        %v4566 = vmax.bf16 %v4054, 0
        %v4567 = vmax.bf16 %v4055, 0
        %v4568 = vmax.bf16 %v4056, 0
        %v4569 = vmax.bf16 %v4057, 0
        %v4570 = vmax.bf16 %v4058, 0
        %v4571 = vmax.bf16 %v4059, 0
        %v4572 = vmax.bf16 %v4060, 0
        %v4573 = vmax.bf16 %v4061, 0
        %v4574 = vmax.bf16 %v4062, 0
        %v4575 = vmax.bf16 %v4063, 0
        %v4576 = vmax.bf16 %v4064, 0
        %v4577 = vmax.bf16 %v4065, 0
        %v4578 = vmax.bf16 %v4066, 0
        %v4579 = vmax.bf16 %v4067, 0
        %v4580 = vmax.bf16 %v4068, 0
        %v4581 = vmax.bf16 %v4069, 0
        %v4582 = vmax.bf16 %v4070, 0
        %v4583 = vmax.bf16 %v4071, 0
        %v4584 = vmax.bf16 %v4072, 0
        %v4585 = vmax.bf16 %v4073, 0
        %v4586 = vmax.bf16 %v4074, 0
        %v4587 = vmax.bf16 %v4075, 0
        %v4588 = vmax.bf16 %v4076, 0
        %v4589 = vmax.bf16 %v4077, 0
        %v4590 = vmax.bf16 %v4078, 0
        %v4591 = vmax.bf16 %v4079, 0
        %v4592 = vmax.bf16 %v4080, 0
        %v4593 = vmax.bf16 %v4081, 0
        %v4594 = vmax.bf16 %v4082, 0
        %v4595 = vmax.bf16 %v4083, 0
        %v4596 = vmax.bf16 %v4084, 0
        %v4597 = vmax.bf16 %v4085, 0
        %v4598 = vmax.bf16 %v4086, 0
        %v4599 = vmax.bf16 %v4087, 0
        %v4600 = vmax.bf16 %v4088, 0
        %v4601 = vmax.bf16 %v4089, 0
        %v4602 = vmax.bf16 %v4090, 0
        %v4603 = vmax.bf16 %v4091, 0
        %v4604 = vmax.bf16 %v4092, 0
        %v4605 = vmax.bf16 %v4093, 0
        %v4606 = vmax.bf16 %v4094, 0
        %v4607 = vmax.bf16 %v4095, 0
        %v4608 = vmax.bf16 %v4096, 0
        %v4609 = vmax.bf16 %v4097, 0
        %v4610 = vmax.bf16 %v4098, 0
        %v4611 = vmax.bf16 %v4099, 0
        %v4612 = vmax.bf16 %v4100, 0
        %v4613 = vmax.bf16 %v4101, 0
        %v4614 = vmax.bf16 %v4102, 0
        %v4615 = vmax.bf16 %v4103, 0
        %v4616 = vmax.bf16 %v4104, 0
        %v4617 = vmax.bf16 %v4105, 0
        %v4618 = vmax.bf16 %v4106, 0
        %v4619 = vmax.bf16 %v4107, 0
        %v4620 = vmax.bf16 %v4108, 0
        %v4621 = vmax.bf16 %v4109, 0
        %v4622 = vmax.bf16 %v4110, 0
        %v4623 = vmax.bf16 %v4111, 0
        %v4624 = vmax.bf16 %v4112, 0
        %v4625 = vmax.bf16 %v4113, 0
        %v4626 = vmax.bf16 %v4114, 0
        %v4627 = vmax.bf16 %v4115, 0
        %v4628 = vmax.bf16 %v4116, 0
        %v4629 = vmax.bf16 %v4117, 0
        %v4630 = vmax.bf16 %v4118, 0
        %v4631 = vmax.bf16 %v4119, 0
        %v4632 = vmax.bf16 %v4120, 0
        %v4633 = vmax.bf16 %v4121, 0
        %v4634 = vmax.bf16 %v4122, 0
        %v4635 = vmax.bf16 %v4123, 0
        %v4636 = vmax.bf16 %v4124, 0
        %v4637 = vmax.bf16 %v4125, 0
        %v4638 = vmax.bf16 %v4126, 0
        %v4639 = vmax.bf16 %v4127, 0
        %v4640 = vmax.bf16 %v4128, 0
        %v4641 = vmax.bf16 %v4129, 0
        %v4642 = vmax.bf16 %v4130, 0
        %v4643 = vmax.bf16 %v4131, 0
        %v4644 = vmax.bf16 %v4132, 0
        %v4645 = vmax.bf16 %v4133, 0
        %v4646 = vmax.bf16 %v4134, 0
        %v4647 = vmax.bf16 %v4135, 0
        %v4648 = vmax.bf16 %v4136, 0
        %v4649 = vmax.bf16 %v4137, 0
        %v4650 = vmax.bf16 %v4138, 0
        %v4651 = vmax.bf16 %v4139, 0
        %v4652 = vmax.bf16 %v4140, 0
        %v4653 = vmax.bf16 %v4141, 0
        %v4654 = vmax.bf16 %v4142, 0
        %v4655 = vmax.bf16 %v4143, 0
        %v4656 = vmax.bf16 %v4144, 0
        %v4657 = vmax.bf16 %v4145, 0
        %v4658 = vmax.bf16 %v4146, 0
        %v4659 = vmax.bf16 %v4147, 0
        %v4660 = vmax.bf16 %v4148, 0
        %v4661 = vmax.bf16 %v4149, 0
        %v4662 = vmax.bf16 %v4150, 0
        %v4663 = vmax.bf16 %v4151, 0
        %v4664 = vmax.bf16 %v4152, 0
        %v4665 = vmax.bf16 %v4153, 0
        %v4666 = vmax.bf16 %v4154, 0
        %v4667 = vmax.bf16 %v4155, 0
        %v4668 = vmax.bf16 %v4156, 0
        %v4669 = vmax.bf16 %v4157, 0
        %v4670 = vmax.bf16 %v4158, 0
        %v4671 = vmax.bf16 %v4159, 0
        %v4672 = vmax.bf16 %v4160, 0
        %v4673 = vmax.bf16 %v4161, 0
        %v4674 = vmax.bf16 %v4162, 0
        %v4675 = vmax.bf16 %v4163, 0
        %v4676 = vmax.bf16 %v4164, 0
        %v4677 = vmax.bf16 %v4165, 0
        %v4678 = vmax.bf16 %v4166, 0
        %v4679 = vmax.bf16 %v4167, 0
        %v4680 = vmax.bf16 %v4168, 0
        %v4681 = vmax.bf16 %v4169, 0
        %v4682 = vmax.bf16 %v4170, 0
        %v4683 = vmax.bf16 %v4171, 0
        %v4684 = vmax.bf16 %v4172, 0
        %v4685 = vmax.bf16 %v4173, 0
        %v4686 = vmax.bf16 %v4174, 0
        %v4687 = vmax.bf16 %v4175, 0
        %v4688 = vmax.bf16 %v4176, 0
        %v4689 = vmax.bf16 %v4177, 0
        %v4690 = vmax.bf16 %v4178, 0
        %v4691 = vmax.bf16 %v4179, 0
        %v4692 = vmax.bf16 %v4180, 0
        %v4693 = vmax.bf16 %v4181, 0
        %v4694 = vmax.bf16 %v4182, 0
        %v4695 = vmax.bf16 %v4183, 0
        %v4696 = vmax.bf16 %v4184, 0
        %v4697 = vmax.bf16 %v4185, 0
        %v4698 = vmax.bf16 %v4186, 0
        %v4699 = vmax.bf16 %v4187, 0
        %v4700 = vmax.bf16 %v4188, 0
        %v4701 = vmax.bf16 %v4189, 0
        %v4702 = vmax.bf16 %v4190, 0
        %v4703 = vmax.bf16 %v4191, 0
        %v4704 = vmax.bf16 %v4192, 0
        %v4705 = vmax.bf16 %v4193, 0
        %v4706 = vmax.bf16 %v4194, 0
        %v4707 = vmax.bf16 %v4195, 0
        %v4708 = vmax.bf16 %v4196, 0
        %v4709 = vmax.bf16 %v4197, 0
        %v4710 = vmax.bf16 %v4198, 0
        %v4711 = vmax.bf16 %v4199, 0
        %v4712 = vmax.bf16 %v4200, 0
        %v4713 = vmax.bf16 %v4201, 0
        %v4714 = vmax.bf16 %v4202, 0
        %v4715 = vmax.bf16 %v4203, 0
        %v4716 = vmax.bf16 %v4204, 0
        %v4717 = vmax.bf16 %v4205, 0
        %v4718 = vmax.bf16 %v4206, 0
        %v4719 = vmax.bf16 %v4207, 0
        %v4720 = vmax.bf16 %v4208, 0
        %v4721 = vmax.bf16 %v4209, 0
        %v4722 = vmax.bf16 %v4210, 0
        %v4723 = vmax.bf16 %v4211, 0
        %v4724 = vmax.bf16 %v4212, 0
        %v4725 = vmax.bf16 %v4213, 0
        %v4726 = vmax.bf16 %v4214, 0
        %v4727 = vmax.bf16 %v4215, 0
        %v4728 = vmax.bf16 %v4216, 0
        %v4729 = vmax.bf16 %v4217, 0
        %v4730 = vmax.bf16 %v4218, 0
        %v4731 = vmax.bf16 %v4219, 0
        %v4732 = vmax.bf16 %v4220, 0
        %v4733 = vmax.bf16 %v4221, 0
        %v4734 = vmax.bf16 %v4222, 0
        %v4735 = vmax.bf16 %v4223, 0
        %v4736 = vmax.bf16 %v4224, 0
        %v4737 = vmax.bf16 %v4225, 0
        %v4738 = vmax.bf16 %v4226, 0
        %v4739 = vmax.bf16 %v4227, 0
        %v4740 = vmax.bf16 %v4228, 0
        %v4741 = vmax.bf16 %v4229, 0
        %v4742 = vmax.bf16 %v4230, 0
        %v4743 = vmax.bf16 %v4231, 0
        %v4744 = vmax.bf16 %v4232, 0
        %v4745 = vmax.bf16 %v4233, 0
        %v4746 = vmax.bf16 %v4234, 0
        %v4747 = vmax.bf16 %v4235, 0
        %v4748 = vmax.bf16 %v4236, 0
        %v4749 = vmax.bf16 %v4237, 0
        %v4750 = vmax.bf16 %v4238, 0
        %v4751 = vmax.bf16 %v4239, 0
        %v4752 = vmax.bf16 %v4240, 0
        %v4753 = vmax.bf16 %v4241, 0
        %v4754 = vmax.bf16 %v4242, 0
        %v4755 = vmax.bf16 %v4243, 0
        %v4756 = vmax.bf16 %v4244, 0
        %v4757 = vmax.bf16 %v4245, 0
        %v4758 = vmax.bf16 %v4246, 0
        %v4759 = vmax.bf16 %v4247, 0
        %v4760 = vmax.bf16 %v4248, 0
        %v4761 = vmax.bf16 %v4249, 0
        %v4762 = vmax.bf16 %v4250, 0
        %v4763 = vmax.bf16 %v4251, 0
        %v4764 = vmax.bf16 %v4252, 0
        %v4765 = vmax.bf16 %v4253, 0
        %v4766 = vmax.bf16 %v4254, 0
        %v4767 = vmax.bf16 %v4255, 0
        %v4768 = vmax.bf16 %v4256, 0
        %v4769 = vmax.bf16 %v4257, 0
        %v4770 = vmax.bf16 %v4258, 0
        %v4771 = vmax.bf16 %v4259, 0
        %v4772 = vmax.bf16 %v4260, 0
        %v4773 = vmax.bf16 %v4261, 0
        %v4774 = vmax.bf16 %v4262, 0
        %v4775 = vmax.bf16 %v4263, 0
        %v4776 = vmax.bf16 %v4264, 0
        %v4777 = vmax.bf16 %v4265, 0
        %v4778 = vmax.bf16 %v4266, 0
        %v4779 = vmax.bf16 %v4267, 0
        %v4780 = vmax.bf16 %v4268, 0
        %v4781 = vmax.bf16 %v4269, 0
        %v4782 = vmax.bf16 %v4270, 0
        %v4783 = vmax.bf16 %v4271, 0
        %v4784 = vmax.bf16 %v4272, 0
        %v4785 = vmax.bf16 %v4273, 0
        %v4786 = vmax.bf16 %v4274, 0
        %v4787 = vmax.bf16 %v4275, 0
        %v4788 = vmax.bf16 %v4276, 0
        %v4789 = vmax.bf16 %v4277, 0
        %v4790 = vmax.bf16 %v4278, 0
        %v4791 = vmax.bf16 %v4279, 0
        %v4792 = vmax.bf16 %v4280, 0
        %v4793 = vmax.bf16 %v4281, 0
        %v4794 = vmax.bf16 %v4282, 0
        %v4795 = vmax.bf16 %v4283, 0
        %v4796 = vmax.bf16 %v4284, 0
        %v4797 = vmax.bf16 %v4285, 0
        %v4798 = vmax.bf16 %v4286, 0
        %v4799 = vmax.bf16 %v4287, 0
        %v4800 = vmax.bf16 %v4288, 0
        %v4801 = vmax.bf16 %v4289, 0
        %v4802 = vmax.bf16 %v4290, 0
        %v4803 = vmax.bf16 %v4291, 0
        %v4804 = vmax.bf16 %v4292, 0
        %v4805 = vmax.bf16 %v4293, 0
        %v4806 = vmax.bf16 %v4294, 0
        %v4807 = vmax.bf16 %v4295, 0
        %v4808 = vmax.bf16 %v4296, 0
        %v4809 = vmax.bf16 %v4297, 0
        %v4810 = vmax.bf16 %v4298, 0
        %v4811 = vmax.bf16 %v4299, 0
        %v4812 = vmax.bf16 %v4300, 0
        %v4813 = vmax.bf16 %v4301, 0
        %v4814 = vmax.bf16 %v4302, 0
        %v4815 = vmax.bf16 %v4303, 0
        %v4816 = vmax.bf16 %v4304, 0
        %v4817 = vmax.bf16 %v4305, 0
        %v4818 = vmax.bf16 %v4306, 0
        %v4819 = vmax.bf16 %v4307, 0
        %v4820 = vmax.bf16 %v4308, 0
        %v4821 = vmax.bf16 %v4309, 0
        %v4822 = vmax.bf16 %v4310, 0
        %v4823 = vmax.bf16 %v4311, 0
        %v4824 = vmax.bf16 %v4312, 0
        %v4825 = vmax.bf16 %v4313, 0
        %v4826 = vmax.bf16 %v4314, 0
        %v4827 = vmax.bf16 %v4315, 0
        %v4828 = vmax.bf16 %v4316, 0
        %v4829 = vmax.bf16 %v4317, 0
        %v4830 = vmax.bf16 %v4318, 0
        %v4831 = vmax.bf16 %v4319, 0
        %v4832 = vmax.bf16 %v4320, 0
        %v4833 = vmax.bf16 %v4321, 0
        %v4834 = vmax.bf16 %v4322, 0
        %v4835 = vmax.bf16 %v4323, 0
        %v4836 = vmax.bf16 %v4324, 0
        %v4837 = vmax.bf16 %v4325, 0
        %v4838 = vmax.bf16 %v4326, 0
        %v4839 = vmax.bf16 %v4327, 0
        %v4840 = vmax.bf16 %v4328, 0
        %v4841 = vmax.bf16 %v4329, 0
        %v4842 = vmax.bf16 %v4330, 0
        %v4843 = vmax.bf16 %v4331, 0
        %v4844 = vmax.bf16 %v4332, 0
        %v4845 = vmax.bf16 %v4333, 0
        %v4846 = vmax.bf16 %v4334, 0
        %v4847 = vmax.bf16 %v4335, 0
        %v4848 = vmax.bf16 %v4336, 0
        %v4849 = vmax.bf16 %v4337, 0
        %v4850 = vmax.bf16 %v4338, 0
        %v4851 = vmax.bf16 %v4339, 0
        %v4852 = vmax.bf16 %v4340, 0
        %v4853 = vmax.bf16 %v4341, 0
        %v4854 = vmax.bf16 %v4342, 0
        %v4855 = vmax.bf16 %v4343, 0
        %v4856 = vmax.bf16 %v4344, 0
        %v4857 = vmax.bf16 %v4345, 0
        %v4858 = vmax.bf16 %v4346, 0
        %v4859 = vmax.bf16 %v4347, 0
        %v4860 = vmax.bf16 %v4348, 0
        %v4861 = vmax.bf16 %v4349, 0
        %v4862 = vmax.bf16 %v4350, 0
        %v4863 = vmax.bf16 %v4351, 0
        %v4864 = vmax.bf16 %v4352, 0
        %v4865 = vmax.bf16 %v4353, 0
        %v4866 = vmax.bf16 %v4354, 0
        %v4867 = vmax.bf16 %v4355, 0
        %v4868 = vmax.bf16 %v4356, 0
        %v4869 = vmax.bf16 %v4357, 0
        %v4870 = vmax.bf16 %v4358, 0
        %v4871 = vmax.bf16 %v4359, 0
        %v4872 = vmax.bf16 %v4360, 0
        %v4873 = vmax.bf16 %v4361, 0
        %v4874 = vmax.bf16 %v4362, 0
        %v4875 = vmax.bf16 %v4363, 0
        %v4876 = vmax.bf16 %v4364, 0
        %v4877 = vmax.bf16 %v4365, 0
        %v4878 = vmax.bf16 %v4366, 0
        %v4879 = vmax.bf16 %v4367, 0
        %v4880 = vmax.bf16 %v4368, 0
        %v4881 = vmax.bf16 %v4369, 0
        %v4882 = vmax.bf16 %v4370, 0
        %v4883 = vmax.bf16 %v4371, 0
        %v4884 = vmax.bf16 %v4372, 0
        %v4885 = vmax.bf16 %v4373, 0
        %v4886 = vmax.bf16 %v4374, 0
        %v4887 = vmax.bf16 %v4375, 0
        %v4888 = vmax.bf16 %v4376, 0
        %v4889 = vmax.bf16 %v4377, 0
        %v4890 = vmax.bf16 %v4378, 0
        %v4891 = vmax.bf16 %v4379, 0
        %v4892 = vmax.bf16 %v4380, 0
        %v4893 = vmax.bf16 %v4381, 0
        %v4894 = vmax.bf16 %v4382, 0
        %v4895 = vmax.bf16 %v4383, 0
        %v4896 = vmax.bf16 %v4384, 0
        %v4897 = vmax.bf16 %v4385, 0
        %v4898 = vmax.bf16 %v4386, 0
        %v4899 = vmax.bf16 %v4387, 0
        %v4900 = vmax.bf16 %v4388, 0
        %v4901 = vmax.bf16 %v4389, 0
        %v4902 = vmax.bf16 %v4390, 0
        %v4903 = vmax.bf16 %v4391, 0
        %v4904 = vmax.bf16 %v4392, 0
        %v4905 = vmax.bf16 %v4393, 0
        %v4906 = vmax.bf16 %v4394, 0
        %v4907 = vmax.bf16 %v4395, 0
        %v4908 = vmax.bf16 %v4396, 0
        %v4909 = vmax.bf16 %v4397, 0
        %v4910 = vmax.bf16 %v4398, 0
        %v4911 = vmax.bf16 %v4399, 0
        %v4912 = vmax.bf16 %v4400, 0
        %v4913 = vmax.bf16 %v4401, 0
        %v4914 = vmax.bf16 %v4402, 0
        %v4915 = vmax.bf16 %v4403, 0
        %v4916 = vmax.bf16 %v4404, 0
        %v4917 = vmax.bf16 %v4405, 0
        %v4918 = vmax.bf16 %v4406, 0
        %v4919 = vmax.bf16 %v4407, 0
        %v4920 = vmax.bf16 %v4408, 0
        %v4921 = vmax.bf16 %v4409, 0
        %v4922 = vmax.bf16 %v4410, 0
        %v4923 = vmax.bf16 %v4411, 0
        %v4924 = vmax.bf16 %v4412, 0
        %v4925 = vmax.bf16 %v4413, 0
        %v4926 = vmax.bf16 %v4414, 0
        %v4927 = vmax.bf16 %v4415, 0
        %v4928 = vmax.bf16 %v4416, 0
        %v4929 = vmax.bf16 %v4417, 0
        %v4930 = vmax.bf16 %v4418, 0
        %v4931 = vmax.bf16 %v4419, 0
        %v4932 = vmax.bf16 %v4420, 0
        %v4933 = vmax.bf16 %v4421, 0
        %v4934 = vmax.bf16 %v4422, 0
        %v4935 = vmax.bf16 %v4423, 0
        %v4936 = vmax.bf16 %v4424, 0
        %v4937 = vmax.bf16 %v4425, 0
        %v4938 = vmax.bf16 %v4426, 0
        %v4939 = vmax.bf16 %v4427, 0
        %v4940 = vmax.bf16 %v4428, 0
        %v4941 = vmax.bf16 %v4429, 0
        %v4942 = vmax.bf16 %v4430, 0
        %v4943 = vmax.bf16 %v4431, 0
        %v4944 = vmax.bf16 %v4432, 0
        %v4945 = vmax.bf16 %v4433, 0
        %v4946 = vmax.bf16 %v4434, 0
        %v4947 = vmax.bf16 %v4435, 0
        %v4948 = vmax.bf16 %v4436, 0
        %v4949 = vmax.bf16 %v4437, 0
        %v4950 = vmax.bf16 %v4438, 0
        %v4951 = vmax.bf16 %v4439, 0
        %v4952 = vmax.bf16 %v4440, 0
        %v4953 = vmax.bf16 %v4441, 0
        %v4954 = vmax.bf16 %v4442, 0
        %v4955 = vmax.bf16 %v4443, 0
        %v4956 = vmax.bf16 %v4444, 0
        %v4957 = vmax.bf16 %v4445, 0
        %v4958 = vmax.bf16 %v4446, 0
        %v4959 = vmax.bf16 %v4447, 0
        %v4960 = vmax.bf16 %v4448, 0
        %v4961 = vmax.bf16 %v4449, 0
        %v4962 = vmax.bf16 %v4450, 0
        %v4963 = vmax.bf16 %v4451, 0
        %v4964 = vmax.bf16 %v4452, 0
        %v4965 = vmax.bf16 %v4453, 0
        %v4966 = vmax.bf16 %v4454, 0
        %v4967 = vmax.bf16 %v4455, 0
        %v4968 = vmax.bf16 %v4456, 0
        %v4969 = vmax.bf16 %v4457, 0
        %v4970 = vmax.bf16 %v4458, 0
        %v4971 = vmax.bf16 %v4459, 0
        %v4972 = vmax.bf16 %v4460, 0
        %v4973 = vmax.bf16 %v4461, 0
        %v4974 = vmax.bf16 %v4462, 0
        %v4975 = vmax.bf16 %v4463, 0
        %v4976 = vmax.bf16 %v4464, 0
        %v4977 = vmax.bf16 %v4465, 0
        %v4978 = vmax.bf16 %v4466, 0
        %v4979 = vmax.bf16 %v4467, 0
        %v4980 = vmax.bf16 %v4468, 0
        %v4981 = vmax.bf16 %v4469, 0
        %v4982 = vmax.bf16 %v4470, 0
        %v4983 = vmax.bf16 %v4471, 0
        %v4984 = vmax.bf16 %v4472, 0
        %v4985 = vmax.bf16 %v4473, 0
        %v4986 = vmax.bf16 %v4474, 0
        %v4987 = vmax.bf16 %v4475, 0
        %v4988 = vmax.bf16 %v4476, 0
        %v4989 = vmax.bf16 %v4477, 0
        %v4990 = vmax.bf16 %v4478, 0
        %v4991 = vmax.bf16 %v4479, 0
        %v4992 = vmax.bf16 %v4480, 0
        %v4993 = vmax.bf16 %v4481, 0
        %v4994 = vmax.bf16 %v4482, 0
        %v4995 = vmax.bf16 %v4483, 0
        %v4996 = vmax.bf16 %v4484, 0
        %v4997 = vmax.bf16 %v4485, 0
        %v4998 = vmax.bf16 %v4486, 0
        %v4999 = vmax.bf16 %v4487, 0
        %v5000 = vmax.bf16 %v4488, 0
        %v5001 = vmax.bf16 %v4489, 0
        %v5002 = vmax.bf16 %v4490, 0
        %v5003 = vmax.bf16 %v4491, 0
        %v5004 = vmax.bf16 %v4492, 0
        %v5005 = vmax.bf16 %v4493, 0
        %v5006 = vmax.bf16 %v4494, 0
        %v5007 = vmax.bf16 %v4495, 0
        %v5008 = vmax.bf16 %v4496, 0
        %v5009 = vmax.bf16 %v4497, 0
        %v5010 = vmax.bf16 %v4498, 0
        %v5011 = vmax.bf16 %v4499, 0
        %v5012 = vmax.bf16 %v4500, 0
        %v5013 = vmax.bf16 %v4501, 0
        %v5014 = vmax.bf16 %v4502, 0
        %v5015 = vmax.bf16 %v4503, 0
        %v5016 = vmax.bf16 %v4504, 0
        %v5017 = vmax.bf16 %v4505, 0
        %v5018 = vmax.bf16 %v4506, 0
        %v5019 = vmax.bf16 %v4507, 0
        %v5020 = vmax.bf16 %v4508, 0
        %v5021 = vmax.bf16 %v4509, 0
        %v5022 = vmax.bf16 %v4510, 0
        %v5023 = vmax.bf16 %v4511, 0
        %v5024 = vmax.bf16 %v4512, 0
        %v5025 = vmax.bf16 %v4513, 0
        %v5026 = vmax.bf16 %v4514, 0
        %v5027 = vmax.bf16 %v4515, 0
        %v5028 = vmax.bf16 %v4516, 0
        %v5029 = vld [vmem:[%s2] sm:$0xff]
        %v5030 = vld [vmem:[%s2 + $0x8] sm:$0xff]
        %v5031 = vld [vmem:[%s2 + $0x10] sm:$0xff]
        %v5032 = vld [vmem:[%s2 + $0x18] sm:$0xff]
        %v5033 = vld [vmem:[%s2 + $0x20] sm:$0xff]
        %v5034 = vld [vmem:[%s2 + $0x28] sm:$0xff]
        %v5035 = vld [vmem:[%s2 + $0x30] sm:$0xff]
        %v5036 = vld [vmem:[%s2 + $0x38] sm:$0xff]
        %v5037 = vld [vmem:[%s2 + $0x40] sm:$0xff]
        %v5038 = vld [vmem:[%s2 + $0x48] sm:$0xff]
        %v5039 = vld [vmem:[%s2 + $0x50] sm:$0xff]
        %v5040 = vld [vmem:[%s2 + $0x58] sm:$0xff]
        %v5041 = vld [vmem:[%s2 + $0x60] sm:$0xff]
        %v5042 = vld [vmem:[%s2 + $0x68] sm:$0xff]
        %v5043 = vld [vmem:[%s2 + $0x70] sm:$0xff]
        %v5044 = vld [vmem:[%s2 + $0x78] sm:$0xff]
        %v5061 = vunpack.c.l.b16 %v5029
        %v5062 = vunpack.c.h.b16 %v5029
        %v5063 = vunpack.c.l.b16 %v5030
        %v5064 = vunpack.c.h.b16 %v5030
        %v5065 = vunpack.c.l.b16 %v5031
        %v5066 = vunpack.c.h.b16 %v5031
        %v5067 = vunpack.c.l.b16 %v5032
        %v5068 = vunpack.c.h.b16 %v5032
        %v5069 = vunpack.c.l.b16 %v5033
        %v5070 = vunpack.c.h.b16 %v5033
        %v5071 = vunpack.c.l.b16 %v5034
        %v5072 = vunpack.c.h.b16 %v5034
        %v5073 = vunpack.c.l.b16 %v5035
        %v5074 = vunpack.c.h.b16 %v5035
        %v5075 = vunpack.c.l.b16 %v5036
        %v5076 = vunpack.c.h.b16 %v5036
        %v5077 = vunpack.c.l.b16 %v5037
        %v5078 = vunpack.c.h.b16 %v5037
        %v5079 = vunpack.c.l.b16 %v5038
        %v5080 = vunpack.c.h.b16 %v5038
        %v5081 = vunpack.c.l.b16 %v5039
        %v5082 = vunpack.c.h.b16 %v5039
        %v5083 = vunpack.c.l.b16 %v5040
        %v5084 = vunpack.c.h.b16 %v5040
        %v5085 = vunpack.c.l.b16 %v5041
        %v5086 = vunpack.c.h.b16 %v5041
        %v5087 = vunpack.c.l.b16 %v5042
        %v5088 = vunpack.c.h.b16 %v5042
        %v5089 = vunpack.c.l.b16 %v5043
        %v5090 = vunpack.c.h.b16 %v5043
        %v5091 = vunpack.c.l.b16 %v5044
        %v5092 = vunpack.c.h.b16 %v5044
        %v5093 = vpack.c.b16 %v5063, %v5061
        %v5094 = vpack.c.b16 %v5064, %v5062
        %v5095 = vpack.c.b16 %v5067, %v5065
        %v5096 = vpack.c.b16 %v5068, %v5066
        %v5097 = vpack.c.b16 %v5071, %v5069
        %v5098 = vpack.c.b16 %v5072, %v5070
        %v5099 = vpack.c.b16 %v5075, %v5073
        %v5100 = vpack.c.b16 %v5076, %v5074
        %v5101 = vpack.c.b16 %v5079, %v5077
        %v5102 = vpack.c.b16 %v5080, %v5078
        %v5103 = vpack.c.b16 %v5083, %v5081
        %v5104 = vpack.c.b16 %v5084, %v5082
        %v5105 = vpack.c.b16 %v5087, %v5085
        %v5106 = vpack.c.b16 %v5088, %v5086
        %v5107 = vpack.c.b16 %v5091, %v5089
        %v5108 = vpack.c.b16 %v5092, %v5090
        %5125 = vmatprep.subr.bf16.mxu0 %v4518
        %5126 = vmatpush1.bf16.msra.mxu0 %v4517
        %5127 = vmatprep.subr.bf16.mxu0 %v4550
        %5128 = vmatpush1.bf16.msra.mxu0 %v4549
        %5129 = vmatprep.subr.bf16.mxu0 %v4582
        %5130 = vmatpush1.bf16.msra.mxu0 %v4581
        %5131 = vmatprep.subr.bf16.mxu0 %v4614
        %5132 = vmatpush1.bf16.msra.mxu0 %v4613
        %5133 = vmatprep.subr.bf16.mxu0 %v4646
        %5134 = vmatpush1.bf16.msra.mxu0 %v4645
        %5135 = vmatprep.subr.bf16.mxu0 %v4678
        %5136 = vmatpush1.bf16.msra.mxu0 %v4677
        %5137 = vmatprep.subr.bf16.mxu0 %v4710
        %5138 = vmatpush1.bf16.msra.mxu0 %v4709
        %5139 = vmatprep.subr.bf16.mxu0 %v4742
        %5140 = vmatpush1.bf16.msra.mxu0 %v4741
        %5141 = vmatprep.subr.bf16.mxu0 %v4774
        %5142 = vmatpush1.bf16.msra.mxu0 %v4773
        %5143 = vmatprep.subr.bf16.mxu0 %v4806
        %5144 = vmatpush1.bf16.msra.mxu0 %v4805
        %5145 = vmatprep.subr.bf16.mxu0 %v4838
        %5146 = vmatpush1.bf16.msra.mxu0 %v4837
        %5147 = vmatprep.subr.bf16.mxu0 %v4870
        %5148 = vmatpush1.bf16.msra.mxu0 %v4869
        %5149 = vmatprep.subr.bf16.mxu0 %v4902
        %5150 = vmatpush1.bf16.msra.mxu0 %v4901
        %5151 = vmatprep.subr.bf16.mxu0 %v4934
        %5152 = vmatpush1.bf16.msra.mxu0 %v4933
        %5153 = vmatprep.subr.bf16.mxu0 %v4966
        %5154 = vmatpush1.bf16.msra.mxu0 %v4965
        %5155 = vmatprep.subr.bf16.mxu0 %v4998
        %5156 = vmatpush1.bf16.msra.mxu0 %v4997
        %5157 = vmatprep.mubr.bf16.mxu0 %v5094
        %5158 = vmatmul.mubr.bf16.gmra.mrb[0].mxu0 %v5093
        %v5159 = vpop.f32.mrb[0].mxu0
        %v5160 = vadd.f32 0.0, %v5159
        %v5161 = vpop.f32.mrb[0].mxu0
        %v5162 = vadd.f32 0.0, %v5161
        %v5163 = vpop.f32.mrb[0].mxu0
        %v5164 = vadd.f32 0.0, %v5163
        %v5165 = vpop.f32.mrb[0].mxu0
        %v5166 = vadd.f32 0.0, %v5165
        %5167 = vmatprep.mubr.bf16.mxu0 %v5096
        %5168 = vmatmul.mubr.bf16.gmra.mrb[0].mxu0 %v5095
        %v5169 = vpop.f32.mrb[0].mxu0
        %v5170 = vadd.f32 0.0, %v5169
        %v5171 = vpop.f32.mrb[0].mxu0
        %v5172 = vadd.f32 0.0, %v5171
        %v5173 = vpop.f32.mrb[0].mxu0
        %v5174 = vadd.f32 0.0, %v5173
        %v5175 = vpop.f32.mrb[0].mxu0
        %v5176 = vadd.f32 0.0, %v5175
        %5177 = vmatprep.mubr.bf16.mxu0 %v5098
        %5178 = vmatmul.mubr.bf16.gmra.mrb[0].mxu0 %v5097
        %v5179 = vpop.f32.mrb[0].mxu0
        %v5180 = vadd.f32 0.0, %v5179
        %v5181 = vpop.f32.mrb[0].mxu0
        %v5182 = vadd.f32 0.0, %v5181
        %v5183 = vpop.f32.mrb[0].mxu0
        %v5184 = vadd.f32 0.0, %v5183
        %v5185 = vpop.f32.mrb[0].mxu0
        %v5186 = vadd.f32 0.0, %v5185
        %5187 = vmatprep.mubr.bf16.mxu0 %v5100
        %5188 = vmatmul.mubr.bf16.gmra.mrb[0].mxu0 %v5099
        %v5189 = vpop.f32.mrb[0].mxu0
        %v5190 = vadd.f32 0.0, %v5189
        %v5191 = vpop.f32.mrb[0].mxu0
        %v5192 = vadd.f32 0.0, %v5191
        %v5193 = vpop.f32.mrb[0].mxu0
        %v5194 = vadd.f32 0.0, %v5193
        %v5195 = vpop.f32.mrb[0].mxu0
        %v5196 = vadd.f32 0.0, %v5195
        %5197 = vmatprep.mubr.bf16.mxu0 %v5102
        %5198 = vmatmul.mubr.bf16.gmra.mrb[0].mxu0 %v5101
        %v5199 = vpop.f32.mrb[0].mxu0
        %v5200 = vadd.f32 0.0, %v5199
        %v5201 = vpop.f32.mrb[0].mxu0
        %v5202 = vadd.f32 0.0, %v5201
        %v5203 = vpop.f32.mrb[0].mxu0
        %v5204 = vadd.f32 0.0, %v5203
        %v5205 = vpop.f32.mrb[0].mxu0
        %v5206 = vadd.f32 0.0, %v5205
        %5207 = vmatprep.mubr.bf16.mxu0 %v5104
        %5208 = vmatmul.mubr.bf16.gmra.mrb[0].mxu0 %v5103
        %v5209 = vpop.f32.mrb[0].mxu0
        %v5210 = vadd.f32 0.0, %v5209
        %v5211 = vpop.f32.mrb[0].mxu0
        %v5212 = vadd.f32 0.0, %v5211
        %v5213 = vpop.f32.mrb[0].mxu0
        %v5214 = vadd.f32 0.0, %v5213
        %v5215 = vpop.f32.mrb[0].mxu0
        %v5216 = vadd.f32 0.0, %v5215
        %5217 = vmatprep.mubr.bf16.mxu0 %v5106
        %5218 = vmatmul.mubr.bf16.gmra.mrb[0].mxu0 %v5105
        %v5219 = vpop.f32.mrb[0].mxu0
        %v5220 = vadd.f32 0.0, %v5219
        %v5221 = vpop.f32.mrb[0].mxu0
        %v5222 = vadd.f32 0.0, %v5221
        %v5223 = vpop.f32.mrb[0].mxu0
        %v5224 = vadd.f32 0.0, %v5223
        %v5225 = vpop.f32.mrb[0].mxu0
        %v5226 = vadd.f32 0.0, %v5225
        %5227 = vmatprep.mubr.bf16.mxu0 %v5108
        %5228 = vmatmul.mubr.bf16.gmra.mrb[0].mxu0 %v5107
        %v5229 = vpop.f32.mrb[0].mxu0
        %v5230 = vadd.f32 0.0, %v5229
        %v5231 = vpop.f32.mrb[0].mxu0
        %v5232 = vadd.f32 0.0, %v5231
        %v5233 = vpop.f32.mrb[0].mxu0
        %v5234 = vadd.f32 0.0, %v5233
        %v5235 = vpop.f32.mrb[0].mxu0
        %v5236 = vadd.f32 0.0, %v5235
        %5237 = vdwg.mxu0
        %5238 = vmatprep.subr.bf16.mxu0 %v4520
        %5239 = vmatpush1.bf16.msra.mxu0 %v4519
        %5240 = vmatprep.subr.bf16.mxu0 %v4552
        %5241 = vmatpush1.bf16.msra.mxu0 %v4551
        %5242 = vmatprep.subr.bf16.mxu0 %v4584
        %5243 = vmatpush1.bf16.msra.mxu0 %v4583
        %5244 = vmatprep.subr.bf16.mxu0 %v4616
        %5245 = vmatpush1.bf16.msra.mxu0 %v4615
        %5246 = vmatprep.subr.bf16.mxu0 %v4648
        %5247 = vmatpush1.bf16.msra.mxu0 %v4647
        %5248 = vmatprep.subr.bf16.mxu0 %v4680
        %5249 = vmatpush1.bf16.msra.mxu0 %v4679
        %5250 = vmatprep.subr.bf16.mxu0 %v4712
        %5251 = vmatpush1.bf16.msra.mxu0 %v4711
        %5252 = vmatprep.subr.bf16.mxu0 %v4744
        %5253 = vmatpush1.bf16.msra.mxu0 %v4743
        %5254 = vmatprep.subr.bf16.mxu0 %v4776
        %5255 = vmatpush1.bf16.msra.mxu0 %v4775
        %5256 = vmatprep.subr.bf16.mxu0 %v4808
        %5257 = vmatpush1.bf16.msra.mxu0 %v4807
        %5258 = vmatprep.subr.bf16.mxu0 %v4840
        %5259 = vmatpush1.bf16.msra.mxu0 %v4839
        %5260 = vmatprep.subr.bf16.mxu0 %v4872
        %5261 = vmatpush1.bf16.msra.mxu0 %v4871
        %5262 = vmatprep.subr.bf16.mxu0 %v4904
        %5263 = vmatpush1.bf16.msra.mxu0 %v4903
        %5264 = vmatprep.subr.bf16.mxu0 %v4936
        %5265 = vmatpush1.bf16.msra.mxu0 %v4935
        %5266 = vmatprep.subr.bf16.mxu0 %v4968
        %5267 = vmatpush1.bf16.msra.mxu0 %v4967
        %5268 = vmatprep.subr.bf16.mxu0 %v5000
        %5269 = vmatpush1.bf16.msra.mxu0 %v4999
        %5270 = vmatprep.mubr.bf16.mxu0 %v5094
        %5271 = vmatmul.mubr.bf16.gmra.mrb[0].mxu0 %v5093
        %v5272 = vpop.f32.mrb[0].mxu0
        %v5273 = vadd.f32 0.0, %v5272
        %v5274 = vpop.f32.mrb[0].mxu0
        %v5275 = vadd.f32 0.0, %v5274
        %v5276 = vpop.f32.mrb[0].mxu0
        %v5277 = vadd.f32 0.0, %v5276
        %v5278 = vpop.f32.mrb[0].mxu0
        %v5279 = vadd.f32 0.0, %v5278
        %5280 = vmatprep.mubr.bf16.mxu0 %v5096
        %5281 = vmatmul.mubr.bf16.gmra.mrb[0].mxu0 %v5095
        %v5282 = vpop.f32.mrb[0].mxu0
        %v5283 = vadd.f32 0.0, %v5282
        %v5284 = vpop.f32.mrb[0].mxu0
        %v5285 = vadd.f32 0.0, %v5284
        %v5286 = vpop.f32.mrb[0].mxu0
        %v5287 = vadd.f32 0.0, %v5286
        %v5288 = vpop.f32.mrb[0].mxu0
        %v5289 = vadd.f32 0.0, %v5288
        %5290 = vmatprep.mubr.bf16.mxu0 %v5098
        %5291 = vmatmul.mubr.bf16.gmra.mrb[0].mxu0 %v5097
        %v5292 = vpop.f32.mrb[0].mxu0
        %v5293 = vadd.f32 0.0, %v5292
        %v5294 = vpop.f32.mrb[0].mxu0
        %v5295 = vadd.f32 0.0, %v5294
        %v5296 = vpop.f32.mrb[0].mxu0
        %v5297 = vadd.f32 0.0, %v5296
        %v5298 = vpop.f32.mrb[0].mxu0
        %v5299 = vadd.f32 0.0, %v5298
        %5300 = vmatprep.mubr.bf16.mxu0 %v5100
        %5301 = vmatmul.mubr.bf16.gmra.mrb[0].mxu0 %v5099
        %v5302 = vpop.f32.mrb[0].mxu0
        %v5303 = vadd.f32 0.0, %v5302
        %v5304 = vpop.f32.mrb[0].mxu0
        %v5305 = vadd.f32 0.0, %v5304
        %v5306 = vpop.f32.mrb[0].mxu0
        %v5307 = vadd.f32 0.0, %v5306
        %v5308 = vpop.f32.mrb[0].mxu0
        %v5309 = vadd.f32 0.0, %v5308
        %5310 = vmatprep.mubr.bf16.mxu0 %v5102
        %5311 = vmatmul.mubr.bf16.gmra.mrb[0].mxu0 %v5101
        %v5312 = vpop.f32.mrb[0].mxu0
        %v5313 = vadd.f32 0.0, %v5312
        %v5314 = vpop.f32.mrb[0].mxu0
        %v5315 = vadd.f32 0.0, %v5314
        %v5316 = vpop.f32.mrb[0].mxu0
        %v5317 = vadd.f32 0.0, %v5316
        %v5318 = vpop.f32.mrb[0].mxu0
        %v5319 = vadd.f32 0.0, %v5318
        %5320 = vmatprep.mubr.bf16.mxu0 %v5104
        %5321 = vmatmul.mubr.bf16.gmra.mrb[0].mxu0 %v5103
        %v5322 = vpop.f32.mrb[0].mxu0
        %v5323 = vadd.f32 0.0, %v5322
        %v5324 = vpop.f32.mrb[0].mxu0
        %v5325 = vadd.f32 0.0, %v5324
        %v5326 = vpop.f32.mrb[0].mxu0
        %v5327 = vadd.f32 0.0, %v5326
        %v5328 = vpop.f32.mrb[0].mxu0
        %v5329 = vadd.f32 0.0, %v5328
        %5330 = vmatprep.mubr.bf16.mxu0 %v5106
        %5331 = vmatmul.mubr.bf16.gmra.mrb[0].mxu0 %v5105
        %v5332 = vpop.f32.mrb[0].mxu0
        %v5333 = vadd.f32 0.0, %v5332
        %v5334 = vpop.f32.mrb[0].mxu0
        %v5335 = vadd.f32 0.0, %v5334
        %v5336 = vpop.f32.mrb[0].mxu0
        %v5337 = vadd.f32 0.0, %v5336
        %v5338 = vpop.f32.mrb[0].mxu0
        %v5339 = vadd.f32 0.0, %v5338
        %5340 = vmatprep.mubr.bf16.mxu0 %v5108
        %5341 = vmatmul.mubr.bf16.gmra.mrb[0].mxu0 %v5107
        %v5342 = vpop.f32.mrb[0].mxu0
        %v5343 = vadd.f32 0.0, %v5342
        %v5344 = vpop.f32.mrb[0].mxu0
        %v5345 = vadd.f32 0.0, %v5344
        %v5346 = vpop.f32.mrb[0].mxu0
        %v5347 = vadd.f32 0.0, %v5346
        %v5348 = vpop.f32.mrb[0].mxu0
        %v5349 = vadd.f32 0.0, %v5348
        %5350 = vdwg.mxu0
        %5351 = vmatprep.subr.bf16.mxu0 %v4522
        %5352 = vmatpush1.bf16.msra.mxu0 %v4521
        %5353 = vmatprep.subr.bf16.mxu0 %v4554
        %5354 = vmatpush1.bf16.msra.mxu0 %v4553
        %5355 = vmatprep.subr.bf16.mxu0 %v4586
        %5356 = vmatpush1.bf16.msra.mxu0 %v4585
        %5357 = vmatprep.subr.bf16.mxu0 %v4618
        %5358 = vmatpush1.bf16.msra.mxu0 %v4617
        %5359 = vmatprep.subr.bf16.mxu0 %v4650
        %5360 = vmatpush1.bf16.msra.mxu0 %v4649
        %5361 = vmatprep.subr.bf16.mxu0 %v4682
        %5362 = vmatpush1.bf16.msra.mxu0 %v4681
        %5363 = vmatprep.subr.bf16.mxu0 %v4714
        %5364 = vmatpush1.bf16.msra.mxu0 %v4713
        %5365 = vmatprep.subr.bf16.mxu0 %v4746
        %5366 = vmatpush1.bf16.msra.mxu0 %v4745
        %5367 = vmatprep.subr.bf16.mxu0 %v4778
        %5368 = vmatpush1.bf16.msra.mxu0 %v4777
        %5369 = vmatprep.subr.bf16.mxu0 %v4810
        %5370 = vmatpush1.bf16.msra.mxu0 %v4809
        %5371 = vmatprep.subr.bf16.mxu0 %v4842
        %5372 = vmatpush1.bf16.msra.mxu0 %v4841
        %5373 = vmatprep.subr.bf16.mxu0 %v4874
        %5374 = vmatpush1.bf16.msra.mxu0 %v4873
        %5375 = vmatprep.subr.bf16.mxu0 %v4906
        %5376 = vmatpush1.bf16.msra.mxu0 %v4905
        %5377 = vmatprep.subr.bf16.mxu0 %v4938
        %5378 = vmatpush1.bf16.msra.mxu0 %v4937
        %5379 = vmatprep.subr.bf16.mxu0 %v4970
        %5380 = vmatpush1.bf16.msra.mxu0 %v4969
        %5381 = vmatprep.subr.bf16.mxu0 %v5002
        %5382 = vmatpush1.bf16.msra.mxu0 %v5001
        %5383 = vmatprep.mubr.bf16.mxu0 %v5094
        %5384 = vmatmul.mubr.bf16.gmra.mrb[0].mxu0 %v5093
        %v5385 = vpop.f32.mrb[0].mxu0
        %v5386 = vadd.f32 0.0, %v5385
        %v5387 = vpop.f32.mrb[0].mxu0
        %v5388 = vadd.f32 0.0, %v5387
        %v5389 = vpop.f32.mrb[0].mxu0
        %v5390 = vadd.f32 0.0, %v5389
        %v5391 = vpop.f32.mrb[0].mxu0
        %v5392 = vadd.f32 0.0, %v5391
        %5393 = vmatprep.mubr.bf16.mxu0 %v5096
        %5394 = vmatmul.mubr.bf16.gmra.mrb[0].mxu0 %v5095
        %v5395 = vpop.f32.mrb[0].mxu0
        %v5396 = vadd.f32 0.0, %v5395
        %v5397 = vpop.f32.mrb[0].mxu0
        %v5398 = vadd.f32 0.0, %v5397
        %v5399 = vpop.f32.mrb[0].mxu0
        %v5400 = vadd.f32 0.0, %v5399
        %v5401 = vpop.f32.mrb[0].mxu0
        %v5402 = vadd.f32 0.0, %v5401
        %5403 = vmatprep.mubr.bf16.mxu0 %v5098
        %5404 = vmatmul.mubr.bf16.gmra.mrb[0].mxu0 %v5097
        %v5405 = vpop.f32.mrb[0].mxu0
        %v5406 = vadd.f32 0.0, %v5405
        %v5407 = vpop.f32.mrb[0].mxu0
        %v5408 = vadd.f32 0.0, %v5407
        %v5409 = vpop.f32.mrb[0].mxu0
        %v5410 = vadd.f32 0.0, %v5409
        %v5411 = vpop.f32.mrb[0].mxu0
        %v5412 = vadd.f32 0.0, %v5411
        %5413 = vmatprep.mubr.bf16.mxu0 %v5100
        %5414 = vmatmul.mubr.bf16.gmra.mrb[0].mxu0 %v5099
        %v5415 = vpop.f32.mrb[0].mxu0
        %v5416 = vadd.f32 0.0, %v5415
        %v5417 = vpop.f32.mrb[0].mxu0
        %v5418 = vadd.f32 0.0, %v5417
        %v5419 = vpop.f32.mrb[0].mxu0
        %v5420 = vadd.f32 0.0, %v5419
        %v5421 = vpop.f32.mrb[0].mxu0
        %v5422 = vadd.f32 0.0, %v5421
        %5423 = vmatprep.mubr.bf16.mxu0 %v5102
        %5424 = vmatmul.mubr.bf16.gmra.mrb[0].mxu0 %v5101
        %v5425 = vpop.f32.mrb[0].mxu0
        %v5426 = vadd.f32 0.0, %v5425
        %v5427 = vpop.f32.mrb[0].mxu0
        %v5428 = vadd.f32 0.0, %v5427
        %v5429 = vpop.f32.mrb[0].mxu0
        %v5430 = vadd.f32 0.0, %v5429
        %v5431 = vpop.f32.mrb[0].mxu0
        %v5432 = vadd.f32 0.0, %v5431
        %5433 = vmatprep.mubr.bf16.mxu0 %v5104
        %5434 = vmatmul.mubr.bf16.gmra.mrb[0].mxu0 %v5103
        %v5435 = vpop.f32.mrb[0].mxu0
        %v5436 = vadd.f32 0.0, %v5435
        %v5437 = vpop.f32.mrb[0].mxu0
        %v5438 = vadd.f32 0.0, %v5437
        %v5439 = vpop.f32.mrb[0].mxu0
        %v5440 = vadd.f32 0.0, %v5439
        %v5441 = vpop.f32.mrb[0].mxu0
        %v5442 = vadd.f32 0.0, %v5441
        %5443 = vmatprep.mubr.bf16.mxu0 %v5106
        %5444 = vmatmul.mubr.bf16.gmra.mrb[0].mxu0 %v5105
        %v5445 = vpop.f32.mrb[0].mxu0
        %v5446 = vadd.f32 0.0, %v5445
        %v5447 = vpop.f32.mrb[0].mxu0
        %v5448 = vadd.f32 0.0, %v5447
        %v5449 = vpop.f32.mrb[0].mxu0
        %v5450 = vadd.f32 0.0, %v5449
        %v5451 = vpop.f32.mrb[0].mxu0
        %v5452 = vadd.f32 0.0, %v5451
        %5453 = vmatprep.mubr.bf16.mxu0 %v5108
        %5454 = vmatmul.mubr.bf16.gmra.mrb[0].mxu0 %v5107
        %v5455 = vpop.f32.mrb[0].mxu0
        %v5456 = vadd.f32 0.0, %v5455
        %v5457 = vpop.f32.mrb[0].mxu0
        %v5458 = vadd.f32 0.0, %v5457
        %v5459 = vpop.f32.mrb[0].mxu0
        %v5460 = vadd.f32 0.0, %v5459
        %v5461 = vpop.f32.mrb[0].mxu0
        %v5462 = vadd.f32 0.0, %v5461
        %5463 = vdwg.mxu0
        %5464 = vmatprep.subr.bf16.mxu0 %v4524
        %5465 = vmatpush1.bf16.msra.mxu0 %v4523
        %5466 = vmatprep.subr.bf16.mxu0 %v4556
        %5467 = vmatpush1.bf16.msra.mxu0 %v4555
        %5468 = vmatprep.subr.bf16.mxu0 %v4588
        %5469 = vmatpush1.bf16.msra.mxu0 %v4587
        %5470 = vmatprep.subr.bf16.mxu0 %v4620
        %5471 = vmatpush1.bf16.msra.mxu0 %v4619
        %5472 = vmatprep.subr.bf16.mxu0 %v4652
        %5473 = vmatpush1.bf16.msra.mxu0 %v4651
        %5474 = vmatprep.subr.bf16.mxu0 %v4684
        %5475 = vmatpush1.bf16.msra.mxu0 %v4683
        %5476 = vmatprep.subr.bf16.mxu0 %v4716
        %5477 = vmatpush1.bf16.msra.mxu0 %v4715
        %5478 = vmatprep.subr.bf16.mxu0 %v4748
        %5479 = vmatpush1.bf16.msra.mxu0 %v4747
        %5480 = vmatprep.subr.bf16.mxu0 %v4780
        %5481 = vmatpush1.bf16.msra.mxu0 %v4779
        %5482 = vmatprep.subr.bf16.mxu0 %v4812
        %5483 = vmatpush1.bf16.msra.mxu0 %v4811
        %5484 = vmatprep.subr.bf16.mxu0 %v4844
        %5485 = vmatpush1.bf16.msra.mxu0 %v4843
        %5486 = vmatprep.subr.bf16.mxu0 %v4876
        %5487 = vmatpush1.bf16.msra.mxu0 %v4875
        %5488 = vmatprep.subr.bf16.mxu0 %v4908
        %5489 = vmatpush1.bf16.msra.mxu0 %v4907
        %5490 = vmatprep.subr.bf16.mxu0 %v4940
        %5491 = vmatpush1.bf16.msra.mxu0 %v4939
        %5492 = vmatprep.subr.bf16.mxu0 %v4972
        %5493 = vmatpush1.bf16.msra.mxu0 %v4971
        %5494 = vmatprep.subr.bf16.mxu0 %v5004
        %5495 = vmatpush1.bf16.msra.mxu0 %v5003
        %5496 = vmatprep.mubr.bf16.mxu0 %v5094
        %5497 = vmatmul.mubr.bf16.gmra.mrb[0].mxu0 %v5093
        %v5498 = vpop.f32.mrb[0].mxu0
        %v5499 = vadd.f32 0.0, %v5498
        %v5500 = vpop.f32.mrb[0].mxu0
        %v5501 = vadd.f32 0.0, %v5500
        %v5502 = vpop.f32.mrb[0].mxu0
        %v5503 = vadd.f32 0.0, %v5502
        %v5504 = vpop.f32.mrb[0].mxu0
        %v5505 = vadd.f32 0.0, %v5504
        %5506 = vmatprep.mubr.bf16.mxu0 %v5096
        %5507 = vmatmul.mubr.bf16.gmra.mrb[0].mxu0 %v5095
        %v5508 = vpop.f32.mrb[0].mxu0
        %v5509 = vadd.f32 0.0, %v5508
        %v5510 = vpop.f32.mrb[0].mxu0
        %v5511 = vadd.f32 0.0, %v5510
        %v5512 = vpop.f32.mrb[0].mxu0
        %v5513 = vadd.f32 0.0, %v5512
        %v5514 = vpop.f32.mrb[0].mxu0
        %v5515 = vadd.f32 0.0, %v5514
        %5516 = vmatprep.mubr.bf16.mxu0 %v5098
        %5517 = vmatmul.mubr.bf16.gmra.mrb[0].mxu0 %v5097
        %v5518 = vpop.f32.mrb[0].mxu0
        %v5519 = vadd.f32 0.0, %v5518
        %v5520 = vpop.f32.mrb[0].mxu0
        %v5521 = vadd.f32 0.0, %v5520
        %v5522 = vpop.f32.mrb[0].mxu0
        %v5523 = vadd.f32 0.0, %v5522
        %v5524 = vpop.f32.mrb[0].mxu0
        %v5525 = vadd.f32 0.0, %v5524
        %5526 = vmatprep.mubr.bf16.mxu0 %v5100
        %5527 = vmatmul.mubr.bf16.gmra.mrb[0].mxu0 %v5099
        %v5528 = vpop.f32.mrb[0].mxu0
        %v5529 = vadd.f32 0.0, %v5528
        %v5530 = vpop.f32.mrb[0].mxu0
        %v5531 = vadd.f32 0.0, %v5530
        %v5532 = vpop.f32.mrb[0].mxu0
        %v5533 = vadd.f32 0.0, %v5532
        %v5534 = vpop.f32.mrb[0].mxu0
        %v5535 = vadd.f32 0.0, %v5534
        %5536 = vmatprep.mubr.bf16.mxu0 %v5102
        %5537 = vmatmul.mubr.bf16.gmra.mrb[0].mxu0 %v5101
        %v5538 = vpop.f32.mrb[0].mxu0
        %v5539 = vadd.f32 0.0, %v5538
        %v5540 = vpop.f32.mrb[0].mxu0
        %v5541 = vadd.f32 0.0, %v5540
        %v5542 = vpop.f32.mrb[0].mxu0
        %v5543 = vadd.f32 0.0, %v5542
        %v5544 = vpop.f32.mrb[0].mxu0
        %v5545 = vadd.f32 0.0, %v5544
        %5546 = vmatprep.mubr.bf16.mxu0 %v5104
        %5547 = vmatmul.mubr.bf16.gmra.mrb[0].mxu0 %v5103
        %v5548 = vpop.f32.mrb[0].mxu0
        %v5549 = vadd.f32 0.0, %v5548
        %v5550 = vpop.f32.mrb[0].mxu0
        %v5551 = vadd.f32 0.0, %v5550
        %v5552 = vpop.f32.mrb[0].mxu0
        %v5553 = vadd.f32 0.0, %v5552
        %v5554 = vpop.f32.mrb[0].mxu0
        %v5555 = vadd.f32 0.0, %v5554
        %5556 = vmatprep.mubr.bf16.mxu0 %v5106
        %5557 = vmatmul.mubr.bf16.gmra.mrb[0].mxu0 %v5105
        %v5558 = vpop.f32.mrb[0].mxu0
        %v5559 = vadd.f32 0.0, %v5558
        %v5560 = vpop.f32.mrb[0].mxu0
        %v5561 = vadd.f32 0.0, %v5560
        %v5562 = vpop.f32.mrb[0].mxu0
        %v5563 = vadd.f32 0.0, %v5562
        %v5564 = vpop.f32.mrb[0].mxu0
        %v5565 = vadd.f32 0.0, %v5564
        %5566 = vmatprep.mubr.bf16.mxu0 %v5108
        %5567 = vmatmul.mubr.bf16.gmra.mrb[0].mxu0 %v5107
        %v5568 = vpop.f32.mrb[0].mxu0
        %v5569 = vadd.f32 0.0, %v5568
        %v5570 = vpop.f32.mrb[0].mxu0
        %v5571 = vadd.f32 0.0, %v5570
        %v5572 = vpop.f32.mrb[0].mxu0
        %v5573 = vadd.f32 0.0, %v5572
        %v5574 = vpop.f32.mrb[0].mxu0
        %v5575 = vadd.f32 0.0, %v5574
        %5576 = vdwg.mxu0
        %5577 = vmatprep.subr.bf16.mxu0 %v4526
        %5578 = vmatpush1.bf16.msra.mxu0 %v4525
        %5579 = vmatprep.subr.bf16.mxu0 %v4558
        %5580 = vmatpush1.bf16.msra.mxu0 %v4557
        %5581 = vmatprep.subr.bf16.mxu0 %v4590
        %5582 = vmatpush1.bf16.msra.mxu0 %v4589
        %5583 = vmatprep.subr.bf16.mxu0 %v4622
        %5584 = vmatpush1.bf16.msra.mxu0 %v4621
        %5585 = vmatprep.subr.bf16.mxu0 %v4654
        %5586 = vmatpush1.bf16.msra.mxu0 %v4653
        %5587 = vmatprep.subr.bf16.mxu0 %v4686
        %5588 = vmatpush1.bf16.msra.mxu0 %v4685
        %5589 = vmatprep.subr.bf16.mxu0 %v4718
        %5590 = vmatpush1.bf16.msra.mxu0 %v4717
        %5591 = vmatprep.subr.bf16.mxu0 %v4750
        %5592 = vmatpush1.bf16.msra.mxu0 %v4749
        %5593 = vmatprep.subr.bf16.mxu0 %v4782
        %5594 = vmatpush1.bf16.msra.mxu0 %v4781
        %5595 = vmatprep.subr.bf16.mxu0 %v4814
        %5596 = vmatpush1.bf16.msra.mxu0 %v4813
        %5597 = vmatprep.subr.bf16.mxu0 %v4846
        %5598 = vmatpush1.bf16.msra.mxu0 %v4845
        %5599 = vmatprep.subr.bf16.mxu0 %v4878
        %5600 = vmatpush1.bf16.msra.mxu0 %v4877
        %5601 = vmatprep.subr.bf16.mxu0 %v4910
        %5602 = vmatpush1.bf16.msra.mxu0 %v4909
        %5603 = vmatprep.subr.bf16.mxu0 %v4942
        %5604 = vmatpush1.bf16.msra.mxu0 %v4941
        %5605 = vmatprep.subr.bf16.mxu0 %v4974
        %5606 = vmatpush1.bf16.msra.mxu0 %v4973
        %5607 = vmatprep.subr.bf16.mxu0 %v5006
        %5608 = vmatpush1.bf16.msra.mxu0 %v5005
        %5609 = vmatprep.mubr.bf16.mxu0 %v5094
        %5610 = vmatmul.mubr.bf16.gmra.mrb[0].mxu0 %v5093
        %v5611 = vpop.f32.mrb[0].mxu0
        %v5612 = vadd.f32 0.0, %v5611
        %v5613 = vpop.f32.mrb[0].mxu0
        %v5614 = vadd.f32 0.0, %v5613
        %v5615 = vpop.f32.mrb[0].mxu0
        %v5616 = vadd.f32 0.0, %v5615
        %v5617 = vpop.f32.mrb[0].mxu0
        %v5618 = vadd.f32 0.0, %v5617
        %5619 = vmatprep.mubr.bf16.mxu0 %v5096
        %5620 = vmatmul.mubr.bf16.gmra.mrb[0].mxu0 %v5095
        %v5621 = vpop.f32.mrb[0].mxu0
        %v5622 = vadd.f32 0.0, %v5621
        %v5623 = vpop.f32.mrb[0].mxu0
        %v5624 = vadd.f32 0.0, %v5623
        %v5625 = vpop.f32.mrb[0].mxu0
        %v5626 = vadd.f32 0.0, %v5625
        %v5627 = vpop.f32.mrb[0].mxu0
        %v5628 = vadd.f32 0.0, %v5627
        %5629 = vmatprep.mubr.bf16.mxu0 %v5098
        %5630 = vmatmul.mubr.bf16.gmra.mrb[0].mxu0 %v5097
        %v5631 = vpop.f32.mrb[0].mxu0
        %v5632 = vadd.f32 0.0, %v5631
        %v5633 = vpop.f32.mrb[0].mxu0
        %v5634 = vadd.f32 0.0, %v5633
        %v5635 = vpop.f32.mrb[0].mxu0
        %v5636 = vadd.f32 0.0, %v5635
        %v5637 = vpop.f32.mrb[0].mxu0
        %v5638 = vadd.f32 0.0, %v5637
        %5639 = vmatprep.mubr.bf16.mxu0 %v5100
        %5640 = vmatmul.mubr.bf16.gmra.mrb[0].mxu0 %v5099
        %v5641 = vpop.f32.mrb[0].mxu0
        %v5642 = vadd.f32 0.0, %v5641
        %v5643 = vpop.f32.mrb[0].mxu0
        %v5644 = vadd.f32 0.0, %v5643
        %v5645 = vpop.f32.mrb[0].mxu0
        %v5646 = vadd.f32 0.0, %v5645
        %v5647 = vpop.f32.mrb[0].mxu0
        %v5648 = vadd.f32 0.0, %v5647
        %5649 = vmatprep.mubr.bf16.mxu0 %v5102
        %5650 = vmatmul.mubr.bf16.gmra.mrb[0].mxu0 %v5101
        %v5651 = vpop.f32.mrb[0].mxu0
        %v5652 = vadd.f32 0.0, %v5651
        %v5653 = vpop.f32.mrb[0].mxu0
        %v5654 = vadd.f32 0.0, %v5653
        %v5655 = vpop.f32.mrb[0].mxu0
        %v5656 = vadd.f32 0.0, %v5655
        %v5657 = vpop.f32.mrb[0].mxu0
        %v5658 = vadd.f32 0.0, %v5657
        %5659 = vmatprep.mubr.bf16.mxu0 %v5104
        %5660 = vmatmul.mubr.bf16.gmra.mrb[0].mxu0 %v5103
        %v5661 = vpop.f32.mrb[0].mxu0
        %v5662 = vadd.f32 0.0, %v5661
        %v5663 = vpop.f32.mrb[0].mxu0
        %v5664 = vadd.f32 0.0, %v5663
        %v5665 = vpop.f32.mrb[0].mxu0
        %v5666 = vadd.f32 0.0, %v5665
        %v5667 = vpop.f32.mrb[0].mxu0
        %v5668 = vadd.f32 0.0, %v5667
        %5669 = vmatprep.mubr.bf16.mxu0 %v5106
        %5670 = vmatmul.mubr.bf16.gmra.mrb[0].mxu0 %v5105
        %v5671 = vpop.f32.mrb[0].mxu0
        %v5672 = vadd.f32 0.0, %v5671
        %v5673 = vpop.f32.mrb[0].mxu0
        %v5674 = vadd.f32 0.0, %v5673
        %v5675 = vpop.f32.mrb[0].mxu0
        %v5676 = vadd.f32 0.0, %v5675
        %v5677 = vpop.f32.mrb[0].mxu0
        %v5678 = vadd.f32 0.0, %v5677
        %5679 = vmatprep.mubr.bf16.mxu0 %v5108
        %5680 = vmatmul.mubr.bf16.gmra.mrb[0].mxu0 %v5107
        %v5681 = vpop.f32.mrb[0].mxu0
        %v5682 = vadd.f32 0.0, %v5681
        %v5683 = vpop.f32.mrb[0].mxu0
        %v5684 = vadd.f32 0.0, %v5683
        %v5685 = vpop.f32.mrb[0].mxu0
        %v5686 = vadd.f32 0.0, %v5685
        %v5687 = vpop.f32.mrb[0].mxu0
        %v5688 = vadd.f32 0.0, %v5687
        %5689 = vdwg.mxu0
        %5690 = vmatprep.subr.bf16.mxu0 %v4528
        %5691 = vmatpush1.bf16.msra.mxu0 %v4527
        %5692 = vmatprep.subr.bf16.mxu0 %v4560
        %5693 = vmatpush1.bf16.msra.mxu0 %v4559
        %5694 = vmatprep.subr.bf16.mxu0 %v4592
        %5695 = vmatpush1.bf16.msra.mxu0 %v4591
        %5696 = vmatprep.subr.bf16.mxu0 %v4624
        %5697 = vmatpush1.bf16.msra.mxu0 %v4623
        %5698 = vmatprep.subr.bf16.mxu0 %v4656
        %5699 = vmatpush1.bf16.msra.mxu0 %v4655
        %5700 = vmatprep.subr.bf16.mxu0 %v4688
        %5701 = vmatpush1.bf16.msra.mxu0 %v4687
        %5702 = vmatprep.subr.bf16.mxu0 %v4720
        %5703 = vmatpush1.bf16.msra.mxu0 %v4719
        %5704 = vmatprep.subr.bf16.mxu0 %v4752
        %5705 = vmatpush1.bf16.msra.mxu0 %v4751
        %5706 = vmatprep.subr.bf16.mxu0 %v4784
        %5707 = vmatpush1.bf16.msra.mxu0 %v4783
        %5708 = vmatprep.subr.bf16.mxu0 %v4816
        %5709 = vmatpush1.bf16.msra.mxu0 %v4815
        %5710 = vmatprep.subr.bf16.mxu0 %v4848
        %5711 = vmatpush1.bf16.msra.mxu0 %v4847
        %5712 = vmatprep.subr.bf16.mxu0 %v4880
        %5713 = vmatpush1.bf16.msra.mxu0 %v4879
        %5714 = vmatprep.subr.bf16.mxu0 %v4912
        %5715 = vmatpush1.bf16.msra.mxu0 %v4911
        %5716 = vmatprep.subr.bf16.mxu0 %v4944
        %5717 = vmatpush1.bf16.msra.mxu0 %v4943
        %5718 = vmatprep.subr.bf16.mxu0 %v4976
        %5719 = vmatpush1.bf16.msra.mxu0 %v4975
        %5720 = vmatprep.subr.bf16.mxu0 %v5008
        %5721 = vmatpush1.bf16.msra.mxu0 %v5007
        %5722 = vmatprep.mubr.bf16.mxu0 %v5094
        %5723 = vmatmul.mubr.bf16.gmra.mrb[0].mxu0 %v5093
        %v5724 = vpop.f32.mrb[0].mxu0
        %v5725 = vadd.f32 0.0, %v5724
        %v5726 = vpop.f32.mrb[0].mxu0
        %v5727 = vadd.f32 0.0, %v5726
        %v5728 = vpop.f32.mrb[0].mxu0
        %v5729 = vadd.f32 0.0, %v5728
        %v5730 = vpop.f32.mrb[0].mxu0
        %v5731 = vadd.f32 0.0, %v5730
        %5732 = vmatprep.mubr.bf16.mxu0 %v5096
        %5733 = vmatmul.mubr.bf16.gmra.mrb[0].mxu0 %v5095
        %v5734 = vpop.f32.mrb[0].mxu0
        %v5735 = vadd.f32 0.0, %v5734
        %v5736 = vpop.f32.mrb[0].mxu0
        %v5737 = vadd.f32 0.0, %v5736
        %v5738 = vpop.f32.mrb[0].mxu0
        %v5739 = vadd.f32 0.0, %v5738
        %v5740 = vpop.f32.mrb[0].mxu0
        %v5741 = vadd.f32 0.0, %v5740
        %5742 = vmatprep.mubr.bf16.mxu0 %v5098
        %5743 = vmatmul.mubr.bf16.gmra.mrb[0].mxu0 %v5097
        %v5744 = vpop.f32.mrb[0].mxu0
        %v5745 = vadd.f32 0.0, %v5744
        %v5746 = vpop.f32.mrb[0].mxu0
        %v5747 = vadd.f32 0.0, %v5746
        %v5748 = vpop.f32.mrb[0].mxu0
        %v5749 = vadd.f32 0.0, %v5748
        %v5750 = vpop.f32.mrb[0].mxu0
        %v5751 = vadd.f32 0.0, %v5750
        %5752 = vmatprep.mubr.bf16.mxu0 %v5100
        %5753 = vmatmul.mubr.bf16.gmra.mrb[0].mxu0 %v5099
        %v5754 = vpop.f32.mrb[0].mxu0
        %v5755 = vadd.f32 0.0, %v5754
        %v5756 = vpop.f32.mrb[0].mxu0
        %v5757 = vadd.f32 0.0, %v5756
        %v5758 = vpop.f32.mrb[0].mxu0
        %v5759 = vadd.f32 0.0, %v5758
        %v5760 = vpop.f32.mrb[0].mxu0
        %v5761 = vadd.f32 0.0, %v5760
        %5762 = vmatprep.mubr.bf16.mxu0 %v5102
        %5763 = vmatmul.mubr.bf16.gmra.mrb[0].mxu0 %v5101
        %v5764 = vpop.f32.mrb[0].mxu0
        %v5765 = vadd.f32 0.0, %v5764
        %v5766 = vpop.f32.mrb[0].mxu0
        %v5767 = vadd.f32 0.0, %v5766
        %v5768 = vpop.f32.mrb[0].mxu0
        %v5769 = vadd.f32 0.0, %v5768
        %v5770 = vpop.f32.mrb[0].mxu0
        %v5771 = vadd.f32 0.0, %v5770
        %5772 = vmatprep.mubr.bf16.mxu0 %v5104
        %5773 = vmatmul.mubr.bf16.gmra.mrb[0].mxu0 %v5103
        %v5774 = vpop.f32.mrb[0].mxu0
        %v5775 = vadd.f32 0.0, %v5774
        %v5776 = vpop.f32.mrb[0].mxu0
        %v5777 = vadd.f32 0.0, %v5776
        %v5778 = vpop.f32.mrb[0].mxu0
        %v5779 = vadd.f32 0.0, %v5778
        %v5780 = vpop.f32.mrb[0].mxu0
        %v5781 = vadd.f32 0.0, %v5780
        %5782 = vmatprep.mubr.bf16.mxu0 %v5106
        %5783 = vmatmul.mubr.bf16.gmra.mrb[0].mxu0 %v5105
        %v5784 = vpop.f32.mrb[0].mxu0
        %v5785 = vadd.f32 0.0, %v5784
        %v5786 = vpop.f32.mrb[0].mxu0
        %v5787 = vadd.f32 0.0, %v5786
        %v5788 = vpop.f32.mrb[0].mxu0
        %v5789 = vadd.f32 0.0, %v5788
        %v5790 = vpop.f32.mrb[0].mxu0
        %v5791 = vadd.f32 0.0, %v5790
        %5792 = vmatprep.mubr.bf16.mxu0 %v5108
        %5793 = vmatmul.mubr.bf16.gmra.mrb[0].mxu0 %v5107
        %v5794 = vpop.f32.mrb[0].mxu0
        %v5795 = vadd.f32 0.0, %v5794
        %v5796 = vpop.f32.mrb[0].mxu0
        %v5797 = vadd.f32 0.0, %v5796
        %v5798 = vpop.f32.mrb[0].mxu0
        %v5799 = vadd.f32 0.0, %v5798
        %v5800 = vpop.f32.mrb[0].mxu0
        %v5801 = vadd.f32 0.0, %v5800
        %5802 = vdwg.mxu0
        %5803 = vmatprep.subr.bf16.mxu0 %v4530
        %5804 = vmatpush1.bf16.msra.mxu0 %v4529
        %5805 = vmatprep.subr.bf16.mxu0 %v4562
        %5806 = vmatpush1.bf16.msra.mxu0 %v4561
        %5807 = vmatprep.subr.bf16.mxu0 %v4594
        %5808 = vmatpush1.bf16.msra.mxu0 %v4593
        %5809 = vmatprep.subr.bf16.mxu0 %v4626
        %5810 = vmatpush1.bf16.msra.mxu0 %v4625
        %5811 = vmatprep.subr.bf16.mxu0 %v4658
        %5812 = vmatpush1.bf16.msra.mxu0 %v4657
        %5813 = vmatprep.subr.bf16.mxu0 %v4690
        %5814 = vmatpush1.bf16.msra.mxu0 %v4689
        %5815 = vmatprep.subr.bf16.mxu0 %v4722
        %5816 = vmatpush1.bf16.msra.mxu0 %v4721
        %5817 = vmatprep.subr.bf16.mxu0 %v4754
        %5818 = vmatpush1.bf16.msra.mxu0 %v4753
        %5819 = vmatprep.subr.bf16.mxu0 %v4786
        %5820 = vmatpush1.bf16.msra.mxu0 %v4785
        %5821 = vmatprep.subr.bf16.mxu0 %v4818
        %5822 = vmatpush1.bf16.msra.mxu0 %v4817
        %5823 = vmatprep.subr.bf16.mxu0 %v4850
        %5824 = vmatpush1.bf16.msra.mxu0 %v4849
        %5825 = vmatprep.subr.bf16.mxu0 %v4882
        %5826 = vmatpush1.bf16.msra.mxu0 %v4881
        %5827 = vmatprep.subr.bf16.mxu0 %v4914
        %5828 = vmatpush1.bf16.msra.mxu0 %v4913
        %5829 = vmatprep.subr.bf16.mxu0 %v4946
        %5830 = vmatpush1.bf16.msra.mxu0 %v4945
        %5831 = vmatprep.subr.bf16.mxu0 %v4978
        %5832 = vmatpush1.bf16.msra.mxu0 %v4977
        %5833 = vmatprep.subr.bf16.mxu0 %v5010
        %5834 = vmatpush1.bf16.msra.mxu0 %v5009
        %5835 = vmatprep.mubr.bf16.mxu0 %v5094
        %5836 = vmatmul.mubr.bf16.gmra.mrb[0].mxu0 %v5093
        %v5837 = vpop.f32.mrb[0].mxu0
        %v5838 = vadd.f32 0.0, %v5837
        %v5839 = vpop.f32.mrb[0].mxu0
        %v5840 = vadd.f32 0.0, %v5839
        %v5841 = vpop.f32.mrb[0].mxu0
        %v5842 = vadd.f32 0.0, %v5841
        %v5843 = vpop.f32.mrb[0].mxu0
        %v5844 = vadd.f32 0.0, %v5843
        %5845 = vmatprep.mubr.bf16.mxu0 %v5096
        %5846 = vmatmul.mubr.bf16.gmra.mrb[0].mxu0 %v5095
        %v5847 = vpop.f32.mrb[0].mxu0
        %v5848 = vadd.f32 0.0, %v5847
        %v5849 = vpop.f32.mrb[0].mxu0
        %v5850 = vadd.f32 0.0, %v5849
        %v5851 = vpop.f32.mrb[0].mxu0
        %v5852 = vadd.f32 0.0, %v5851
        %v5853 = vpop.f32.mrb[0].mxu0
        %v5854 = vadd.f32 0.0, %v5853
        %5855 = vmatprep.mubr.bf16.mxu0 %v5098
        %5856 = vmatmul.mubr.bf16.gmra.mrb[0].mxu0 %v5097
        %v5857 = vpop.f32.mrb[0].mxu0
        %v5858 = vadd.f32 0.0, %v5857
        %v5859 = vpop.f32.mrb[0].mxu0
        %v5860 = vadd.f32 0.0, %v5859
        %v5861 = vpop.f32.mrb[0].mxu0
        %v5862 = vadd.f32 0.0, %v5861
        %v5863 = vpop.f32.mrb[0].mxu0
        %v5864 = vadd.f32 0.0, %v5863
        %5865 = vmatprep.mubr.bf16.mxu0 %v5100
        %5866 = vmatmul.mubr.bf16.gmra.mrb[0].mxu0 %v5099
        %v5867 = vpop.f32.mrb[0].mxu0
        %v5868 = vadd.f32 0.0, %v5867
        %v5869 = vpop.f32.mrb[0].mxu0
        %v5870 = vadd.f32 0.0, %v5869
        %v5871 = vpop.f32.mrb[0].mxu0
        %v5872 = vadd.f32 0.0, %v5871
        %v5873 = vpop.f32.mrb[0].mxu0
        %v5874 = vadd.f32 0.0, %v5873
        %5875 = vmatprep.mubr.bf16.mxu0 %v5102
        %5876 = vmatmul.mubr.bf16.gmra.mrb[0].mxu0 %v5101
        %v5877 = vpop.f32.mrb[0].mxu0
        %v5878 = vadd.f32 0.0, %v5877
        %v5879 = vpop.f32.mrb[0].mxu0
        %v5880 = vadd.f32 0.0, %v5879
        %v5881 = vpop.f32.mrb[0].mxu0
        %v5882 = vadd.f32 0.0, %v5881
        %v5883 = vpop.f32.mrb[0].mxu0
        %v5884 = vadd.f32 0.0, %v5883
        %5885 = vmatprep.mubr.bf16.mxu0 %v5104
        %5886 = vmatmul.mubr.bf16.gmra.mrb[0].mxu0 %v5103
        %v5887 = vpop.f32.mrb[0].mxu0
        %v5888 = vadd.f32 0.0, %v5887
        %v5889 = vpop.f32.mrb[0].mxu0
        %v5890 = vadd.f32 0.0, %v5889
        %v5891 = vpop.f32.mrb[0].mxu0
        %v5892 = vadd.f32 0.0, %v5891
        %v5893 = vpop.f32.mrb[0].mxu0
        %v5894 = vadd.f32 0.0, %v5893
        %5895 = vmatprep.mubr.bf16.mxu0 %v5106
        %5896 = vmatmul.mubr.bf16.gmra.mrb[0].mxu0 %v5105
        %v5897 = vpop.f32.mrb[0].mxu0
        %v5898 = vadd.f32 0.0, %v5897
        %v5899 = vpop.f32.mrb[0].mxu0
        %v5900 = vadd.f32 0.0, %v5899
        %v5901 = vpop.f32.mrb[0].mxu0
        %v5902 = vadd.f32 0.0, %v5901
        %v5903 = vpop.f32.mrb[0].mxu0
        %v5904 = vadd.f32 0.0, %v5903
        %5905 = vmatprep.mubr.bf16.mxu0 %v5108
        %5906 = vmatmul.mubr.bf16.gmra.mrb[0].mxu0 %v5107
        %v5907 = vpop.f32.mrb[0].mxu0
        %v5908 = vadd.f32 0.0, %v5907
        %v5909 = vpop.f32.mrb[0].mxu0
        %v5910 = vadd.f32 0.0, %v5909
        %v5911 = vpop.f32.mrb[0].mxu0
        %v5912 = vadd.f32 0.0, %v5911
        %v5913 = vpop.f32.mrb[0].mxu0
        %v5914 = vadd.f32 0.0, %v5913
        %5915 = vdwg.mxu0
        %5916 = vmatprep.subr.bf16.mxu0 %v4532
        %5917 = vmatpush1.bf16.msra.mxu0 %v4531
        %5918 = vmatprep.subr.bf16.mxu0 %v4564
        %5919 = vmatpush1.bf16.msra.mxu0 %v4563
        %5920 = vmatprep.subr.bf16.mxu0 %v4596
        %5921 = vmatpush1.bf16.msra.mxu0 %v4595
        %5922 = vmatprep.subr.bf16.mxu0 %v4628
        %5923 = vmatpush1.bf16.msra.mxu0 %v4627
        %5924 = vmatprep.subr.bf16.mxu0 %v4660
        %5925 = vmatpush1.bf16.msra.mxu0 %v4659
        %5926 = vmatprep.subr.bf16.mxu0 %v4692
        %5927 = vmatpush1.bf16.msra.mxu0 %v4691
        %5928 = vmatprep.subr.bf16.mxu0 %v4724
        %5929 = vmatpush1.bf16.msra.mxu0 %v4723
        %5930 = vmatprep.subr.bf16.mxu0 %v4756
        %5931 = vmatpush1.bf16.msra.mxu0 %v4755
        %5932 = vmatprep.subr.bf16.mxu0 %v4788
        %5933 = vmatpush1.bf16.msra.mxu0 %v4787
        %5934 = vmatprep.subr.bf16.mxu0 %v4820
        %5935 = vmatpush1.bf16.msra.mxu0 %v4819
        %5936 = vmatprep.subr.bf16.mxu0 %v4852
        %5937 = vmatpush1.bf16.msra.mxu0 %v4851
        %5938 = vmatprep.subr.bf16.mxu0 %v4884
        %5939 = vmatpush1.bf16.msra.mxu0 %v4883
        %5940 = vmatprep.subr.bf16.mxu0 %v4916
        %5941 = vmatpush1.bf16.msra.mxu0 %v4915
        %5942 = vmatprep.subr.bf16.mxu0 %v4948
        %5943 = vmatpush1.bf16.msra.mxu0 %v4947
        %5944 = vmatprep.subr.bf16.mxu0 %v4980
        %5945 = vmatpush1.bf16.msra.mxu0 %v4979
        %5946 = vmatprep.subr.bf16.mxu0 %v5012
        %5947 = vmatpush1.bf16.msra.mxu0 %v5011
        %5948 = vmatprep.mubr.bf16.mxu0 %v5094
        %5949 = vmatmul.mubr.bf16.gmra.mrb[0].mxu0 %v5093
        %v5950 = vpop.f32.mrb[0].mxu0
        %v5951 = vadd.f32 0.0, %v5950
        %v5952 = vpop.f32.mrb[0].mxu0
        %v5953 = vadd.f32 0.0, %v5952
        %v5954 = vpop.f32.mrb[0].mxu0
        %v5955 = vadd.f32 0.0, %v5954
        %v5956 = vpop.f32.mrb[0].mxu0
        %v5957 = vadd.f32 0.0, %v5956
        %5958 = vmatprep.mubr.bf16.mxu0 %v5096
        %5959 = vmatmul.mubr.bf16.gmra.mrb[0].mxu0 %v5095
        %v5960 = vpop.f32.mrb[0].mxu0
        %v5961 = vadd.f32 0.0, %v5960
        %v5962 = vpop.f32.mrb[0].mxu0
        %v5963 = vadd.f32 0.0, %v5962
        %v5964 = vpop.f32.mrb[0].mxu0
        %v5965 = vadd.f32 0.0, %v5964
        %v5966 = vpop.f32.mrb[0].mxu0
        %v5967 = vadd.f32 0.0, %v5966
        %5968 = vmatprep.mubr.bf16.mxu0 %v5098
        %5969 = vmatmul.mubr.bf16.gmra.mrb[0].mxu0 %v5097
        %v5970 = vpop.f32.mrb[0].mxu0
        %v5971 = vadd.f32 0.0, %v5970
        %v5972 = vpop.f32.mrb[0].mxu0
        %v5973 = vadd.f32 0.0, %v5972
        %v5974 = vpop.f32.mrb[0].mxu0
        %v5975 = vadd.f32 0.0, %v5974
        %v5976 = vpop.f32.mrb[0].mxu0
        %v5977 = vadd.f32 0.0, %v5976
        %5978 = vmatprep.mubr.bf16.mxu0 %v5100
        %5979 = vmatmul.mubr.bf16.gmra.mrb[0].mxu0 %v5099
        %v5980 = vpop.f32.mrb[0].mxu0
        %v5981 = vadd.f32 0.0, %v5980
        %v5982 = vpop.f32.mrb[0].mxu0
        %v5983 = vadd.f32 0.0, %v5982
        %v5984 = vpop.f32.mrb[0].mxu0
        %v5985 = vadd.f32 0.0, %v5984
        %v5986 = vpop.f32.mrb[0].mxu0
        %v5987 = vadd.f32 0.0, %v5986
        %5988 = vmatprep.mubr.bf16.mxu0 %v5102
        %5989 = vmatmul.mubr.bf16.gmra.mrb[0].mxu0 %v5101
        %v5990 = vpop.f32.mrb[0].mxu0
        %v5991 = vadd.f32 0.0, %v5990
        %v5992 = vpop.f32.mrb[0].mxu0
        %v5993 = vadd.f32 0.0, %v5992
        %v5994 = vpop.f32.mrb[0].mxu0
        %v5995 = vadd.f32 0.0, %v5994
        %v5996 = vpop.f32.mrb[0].mxu0
        %v5997 = vadd.f32 0.0, %v5996
        %5998 = vmatprep.mubr.bf16.mxu0 %v5104
        %5999 = vmatmul.mubr.bf16.gmra.mrb[0].mxu0 %v5103
        %v6000 = vpop.f32.mrb[0].mxu0
        %v6001 = vadd.f32 0.0, %v6000
        %v6002 = vpop.f32.mrb[0].mxu0
        %v6003 = vadd.f32 0.0, %v6002
        %v6004 = vpop.f32.mrb[0].mxu0
        %v6005 = vadd.f32 0.0, %v6004
        %v6006 = vpop.f32.mrb[0].mxu0
        %v6007 = vadd.f32 0.0, %v6006
        %6008 = vmatprep.mubr.bf16.mxu0 %v5106
        %6009 = vmatmul.mubr.bf16.gmra.mrb[0].mxu0 %v5105
        %v6010 = vpop.f32.mrb[0].mxu0
        %v6011 = vadd.f32 0.0, %v6010
        %v6012 = vpop.f32.mrb[0].mxu0
        %v6013 = vadd.f32 0.0, %v6012
        %v6014 = vpop.f32.mrb[0].mxu0
        %v6015 = vadd.f32 0.0, %v6014
        %v6016 = vpop.f32.mrb[0].mxu0
        %v6017 = vadd.f32 0.0, %v6016
        %6018 = vmatprep.mubr.bf16.mxu0 %v5108
        %6019 = vmatmul.mubr.bf16.gmra.mrb[0].mxu0 %v5107
        %v6020 = vpop.f32.mrb[0].mxu0
        %v6021 = vadd.f32 0.0, %v6020
        %v6022 = vpop.f32.mrb[0].mxu0
        %v6023 = vadd.f32 0.0, %v6022
        %v6024 = vpop.f32.mrb[0].mxu0
        %v6025 = vadd.f32 0.0, %v6024
        %v6026 = vpop.f32.mrb[0].mxu0
        %v6027 = vadd.f32 0.0, %v6026
        %6028 = vdwg.mxu0
        %6029 = vmatprep.subr.bf16.mxu0 %v4534
        %6030 = vmatpush1.bf16.msra.mxu0 %v4533
        %6031 = vmatprep.subr.bf16.mxu0 %v4566
        %6032 = vmatpush1.bf16.msra.mxu0 %v4565
        %6033 = vmatprep.subr.bf16.mxu0 %v4598
        %6034 = vmatpush1.bf16.msra.mxu0 %v4597
        %6035 = vmatprep.subr.bf16.mxu0 %v4630
        %6036 = vmatpush1.bf16.msra.mxu0 %v4629
        %6037 = vmatprep.subr.bf16.mxu0 %v4662
        %6038 = vmatpush1.bf16.msra.mxu0 %v4661
        %6039 = vmatprep.subr.bf16.mxu0 %v4694
        %6040 = vmatpush1.bf16.msra.mxu0 %v4693
        %6041 = vmatprep.subr.bf16.mxu0 %v4726
        %6042 = vmatpush1.bf16.msra.mxu0 %v4725
        %6043 = vmatprep.subr.bf16.mxu0 %v4758
        %6044 = vmatpush1.bf16.msra.mxu0 %v4757
        %6045 = vmatprep.subr.bf16.mxu0 %v4790
        %6046 = vmatpush1.bf16.msra.mxu0 %v4789
        %6047 = vmatprep.subr.bf16.mxu0 %v4822
        %6048 = vmatpush1.bf16.msra.mxu0 %v4821
        %6049 = vmatprep.subr.bf16.mxu0 %v4854
        %6050 = vmatpush1.bf16.msra.mxu0 %v4853
        %6051 = vmatprep.subr.bf16.mxu0 %v4886
        %6052 = vmatpush1.bf16.msra.mxu0 %v4885
        %6053 = vmatprep.subr.bf16.mxu0 %v4918
        %6054 = vmatpush1.bf16.msra.mxu0 %v4917
        %6055 = vmatprep.subr.bf16.mxu0 %v4950
        %6056 = vmatpush1.bf16.msra.mxu0 %v4949
        %6057 = vmatprep.subr.bf16.mxu0 %v4982
        %6058 = vmatpush1.bf16.msra.mxu0 %v4981
        %6059 = vmatprep.subr.bf16.mxu0 %v5014
        %6060 = vmatpush1.bf16.msra.mxu0 %v5013
        %6061 = vmatprep.mubr.bf16.mxu0 %v5094
        %6062 = vmatmul.mubr.bf16.gmra.mrb[0].mxu0 %v5093
        %v6063 = vpop.f32.mrb[0].mxu0
        %v6064 = vadd.f32 0.0, %v6063
        %v6065 = vpop.f32.mrb[0].mxu0
        %v6066 = vadd.f32 0.0, %v6065
        %v6067 = vpop.f32.mrb[0].mxu0
        %v6068 = vadd.f32 0.0, %v6067
        %v6069 = vpop.f32.mrb[0].mxu0
        %v6070 = vadd.f32 0.0, %v6069
        %6071 = vmatprep.mubr.bf16.mxu0 %v5096
        %6072 = vmatmul.mubr.bf16.gmra.mrb[0].mxu0 %v5095
        %v6073 = vpop.f32.mrb[0].mxu0
        %v6074 = vadd.f32 0.0, %v6073
        %v6075 = vpop.f32.mrb[0].mxu0
        %v6076 = vadd.f32 0.0, %v6075
        %v6077 = vpop.f32.mrb[0].mxu0
        %v6078 = vadd.f32 0.0, %v6077
        %v6079 = vpop.f32.mrb[0].mxu0
        %v6080 = vadd.f32 0.0, %v6079
        %6081 = vmatprep.mubr.bf16.mxu0 %v5098
        %6082 = vmatmul.mubr.bf16.gmra.mrb[0].mxu0 %v5097
        %v6083 = vpop.f32.mrb[0].mxu0
        %v6084 = vadd.f32 0.0, %v6083
        %v6085 = vpop.f32.mrb[0].mxu0
        %v6086 = vadd.f32 0.0, %v6085
        %v6087 = vpop.f32.mrb[0].mxu0
        %v6088 = vadd.f32 0.0, %v6087
        %v6089 = vpop.f32.mrb[0].mxu0
        %v6090 = vadd.f32 0.0, %v6089
        %6091 = vmatprep.mubr.bf16.mxu0 %v5100
        %6092 = vmatmul.mubr.bf16.gmra.mrb[0].mxu0 %v5099
        %v6093 = vpop.f32.mrb[0].mxu0
        %v6094 = vadd.f32 0.0, %v6093
        %v6095 = vpop.f32.mrb[0].mxu0
        %v6096 = vadd.f32 0.0, %v6095
        %v6097 = vpop.f32.mrb[0].mxu0
        %v6098 = vadd.f32 0.0, %v6097
        %v6099 = vpop.f32.mrb[0].mxu0
        %v6100 = vadd.f32 0.0, %v6099
        %6101 = vmatprep.mubr.bf16.mxu0 %v5102
        %6102 = vmatmul.mubr.bf16.gmra.mrb[0].mxu0 %v5101
        %v6103 = vpop.f32.mrb[0].mxu0
        %v6104 = vadd.f32 0.0, %v6103
        %v6105 = vpop.f32.mrb[0].mxu0
        %v6106 = vadd.f32 0.0, %v6105
        %v6107 = vpop.f32.mrb[0].mxu0
        %v6108 = vadd.f32 0.0, %v6107
        %v6109 = vpop.f32.mrb[0].mxu0
        %v6110 = vadd.f32 0.0, %v6109
        %6111 = vmatprep.mubr.bf16.mxu0 %v5104
        %6112 = vmatmul.mubr.bf16.gmra.mrb[0].mxu0 %v5103
        %v6113 = vpop.f32.mrb[0].mxu0
        %v6114 = vadd.f32 0.0, %v6113
        %v6115 = vpop.f32.mrb[0].mxu0
        %v6116 = vadd.f32 0.0, %v6115
        %v6117 = vpop.f32.mrb[0].mxu0
        %v6118 = vadd.f32 0.0, %v6117
        %v6119 = vpop.f32.mrb[0].mxu0
        %v6120 = vadd.f32 0.0, %v6119
        %6121 = vmatprep.mubr.bf16.mxu0 %v5106
        %6122 = vmatmul.mubr.bf16.gmra.mrb[0].mxu0 %v5105
        %v6123 = vpop.f32.mrb[0].mxu0
        %v6124 = vadd.f32 0.0, %v6123
        %v6125 = vpop.f32.mrb[0].mxu0
        %v6126 = vadd.f32 0.0, %v6125
        %v6127 = vpop.f32.mrb[0].mxu0
        %v6128 = vadd.f32 0.0, %v6127
        %v6129 = vpop.f32.mrb[0].mxu0
        %v6130 = vadd.f32 0.0, %v6129
        %6131 = vmatprep.mubr.bf16.mxu0 %v5108
        %6132 = vmatmul.mubr.bf16.gmra.mrb[0].mxu0 %v5107
        %v6133 = vpop.f32.mrb[0].mxu0
        %v6134 = vadd.f32 0.0, %v6133
        %v6135 = vpop.f32.mrb[0].mxu0
        %v6136 = vadd.f32 0.0, %v6135
        %v6137 = vpop.f32.mrb[0].mxu0
        %v6138 = vadd.f32 0.0, %v6137
        %v6139 = vpop.f32.mrb[0].mxu0
        %v6140 = vadd.f32 0.0, %v6139
        %6141 = vdwg.mxu0
        %6142 = vmatprep.subr.bf16.mxu0 %v4536
        %6143 = vmatpush1.bf16.msra.mxu0 %v4535
        %6144 = vmatprep.subr.bf16.mxu0 %v4568
        %6145 = vmatpush1.bf16.msra.mxu0 %v4567
        %6146 = vmatprep.subr.bf16.mxu0 %v4600
        %6147 = vmatpush1.bf16.msra.mxu0 %v4599
        %6148 = vmatprep.subr.bf16.mxu0 %v4632
        %6149 = vmatpush1.bf16.msra.mxu0 %v4631
        %6150 = vmatprep.subr.bf16.mxu0 %v4664
        %6151 = vmatpush1.bf16.msra.mxu0 %v4663
        %6152 = vmatprep.subr.bf16.mxu0 %v4696
        %6153 = vmatpush1.bf16.msra.mxu0 %v4695
        %6154 = vmatprep.subr.bf16.mxu0 %v4728
        %6155 = vmatpush1.bf16.msra.mxu0 %v4727
        %6156 = vmatprep.subr.bf16.mxu0 %v4760
        %6157 = vmatpush1.bf16.msra.mxu0 %v4759
        %6158 = vmatprep.subr.bf16.mxu0 %v4792
        %6159 = vmatpush1.bf16.msra.mxu0 %v4791
        %6160 = vmatprep.subr.bf16.mxu0 %v4824
        %6161 = vmatpush1.bf16.msra.mxu0 %v4823
        %6162 = vmatprep.subr.bf16.mxu0 %v4856
        %6163 = vmatpush1.bf16.msra.mxu0 %v4855
        %6164 = vmatprep.subr.bf16.mxu0 %v4888
        %6165 = vmatpush1.bf16.msra.mxu0 %v4887
        %6166 = vmatprep.subr.bf16.mxu0 %v4920
        %6167 = vmatpush1.bf16.msra.mxu0 %v4919
        %6168 = vmatprep.subr.bf16.mxu0 %v4952
        %6169 = vmatpush1.bf16.msra.mxu0 %v4951
        %6170 = vmatprep.subr.bf16.mxu0 %v4984
        %6171 = vmatpush1.bf16.msra.mxu0 %v4983
        %6172 = vmatprep.subr.bf16.mxu0 %v5016
        %6173 = vmatpush1.bf16.msra.mxu0 %v5015
        %6174 = vmatprep.mubr.bf16.mxu0 %v5094
        %6175 = vmatmul.mubr.bf16.gmra.mrb[0].mxu0 %v5093
        %v6176 = vpop.f32.mrb[0].mxu0
        %v6177 = vadd.f32 0.0, %v6176
        %v6178 = vpop.f32.mrb[0].mxu0
        %v6179 = vadd.f32 0.0, %v6178
        %v6180 = vpop.f32.mrb[0].mxu0
        %v6181 = vadd.f32 0.0, %v6180
        %v6182 = vpop.f32.mrb[0].mxu0
        %v6183 = vadd.f32 0.0, %v6182
        %6184 = vmatprep.mubr.bf16.mxu0 %v5096
        %6185 = vmatmul.mubr.bf16.gmra.mrb[0].mxu0 %v5095
        %v6186 = vpop.f32.mrb[0].mxu0
        %v6187 = vadd.f32 0.0, %v6186
        %v6188 = vpop.f32.mrb[0].mxu0
        %v6189 = vadd.f32 0.0, %v6188
        %v6190 = vpop.f32.mrb[0].mxu0
        %v6191 = vadd.f32 0.0, %v6190
        %v6192 = vpop.f32.mrb[0].mxu0
        %v6193 = vadd.f32 0.0, %v6192
        %6194 = vmatprep.mubr.bf16.mxu0 %v5098
        %6195 = vmatmul.mubr.bf16.gmra.mrb[0].mxu0 %v5097
        %v6196 = vpop.f32.mrb[0].mxu0
        %v6197 = vadd.f32 0.0, %v6196
        %v6198 = vpop.f32.mrb[0].mxu0
        %v6199 = vadd.f32 0.0, %v6198
        %v6200 = vpop.f32.mrb[0].mxu0
        %v6201 = vadd.f32 0.0, %v6200
        %v6202 = vpop.f32.mrb[0].mxu0
        %v6203 = vadd.f32 0.0, %v6202
        %6204 = vmatprep.mubr.bf16.mxu0 %v5100
        %6205 = vmatmul.mubr.bf16.gmra.mrb[0].mxu0 %v5099
        %v6206 = vpop.f32.mrb[0].mxu0
        %v6207 = vadd.f32 0.0, %v6206
        %v6208 = vpop.f32.mrb[0].mxu0
        %v6209 = vadd.f32 0.0, %v6208
        %v6210 = vpop.f32.mrb[0].mxu0
        %v6211 = vadd.f32 0.0, %v6210
        %v6212 = vpop.f32.mrb[0].mxu0
        %v6213 = vadd.f32 0.0, %v6212
        %6214 = vmatprep.mubr.bf16.mxu0 %v5102
        %6215 = vmatmul.mubr.bf16.gmra.mrb[0].mxu0 %v5101
        %v6216 = vpop.f32.mrb[0].mxu0
        %v6217 = vadd.f32 0.0, %v6216
        %v6218 = vpop.f32.mrb[0].mxu0
        %v6219 = vadd.f32 0.0, %v6218
        %v6220 = vpop.f32.mrb[0].mxu0
        %v6221 = vadd.f32 0.0, %v6220
        %v6222 = vpop.f32.mrb[0].mxu0
        %v6223 = vadd.f32 0.0, %v6222
        %6224 = vmatprep.mubr.bf16.mxu0 %v5104
        %6225 = vmatmul.mubr.bf16.gmra.mrb[0].mxu0 %v5103
        %v6226 = vpop.f32.mrb[0].mxu0
        %v6227 = vadd.f32 0.0, %v6226
        %v6228 = vpop.f32.mrb[0].mxu0
        %v6229 = vadd.f32 0.0, %v6228
        %v6230 = vpop.f32.mrb[0].mxu0
        %v6231 = vadd.f32 0.0, %v6230
        %v6232 = vpop.f32.mrb[0].mxu0
        %v6233 = vadd.f32 0.0, %v6232
        %6234 = vmatprep.mubr.bf16.mxu0 %v5106
        %6235 = vmatmul.mubr.bf16.gmra.mrb[0].mxu0 %v5105
        %v6236 = vpop.f32.mrb[0].mxu0
        %v6237 = vadd.f32 0.0, %v6236
        %v6238 = vpop.f32.mrb[0].mxu0
        %v6239 = vadd.f32 0.0, %v6238
        %v6240 = vpop.f32.mrb[0].mxu0
        %v6241 = vadd.f32 0.0, %v6240
        %v6242 = vpop.f32.mrb[0].mxu0
        %v6243 = vadd.f32 0.0, %v6242
        %6244 = vmatprep.mubr.bf16.mxu0 %v5108
        %6245 = vmatmul.mubr.bf16.gmra.mrb[0].mxu0 %v5107
        %v6246 = vpop.f32.mrb[0].mxu0
        %v6247 = vadd.f32 0.0, %v6246
        %v6248 = vpop.f32.mrb[0].mxu0
        %v6249 = vadd.f32 0.0, %v6248
        %v6250 = vpop.f32.mrb[0].mxu0
        %v6251 = vadd.f32 0.0, %v6250
        %v6252 = vpop.f32.mrb[0].mxu0
        %v6253 = vadd.f32 0.0, %v6252
        %6254 = vdwg.mxu0
        %6255 = vmatprep.subr.bf16.mxu0 %v4538
        %6256 = vmatpush1.bf16.msra.mxu0 %v4537
        %6257 = vmatprep.subr.bf16.mxu0 %v4570
        %6258 = vmatpush1.bf16.msra.mxu0 %v4569
        %6259 = vmatprep.subr.bf16.mxu0 %v4602
        %6260 = vmatpush1.bf16.msra.mxu0 %v4601
        %6261 = vmatprep.subr.bf16.mxu0 %v4634
        %6262 = vmatpush1.bf16.msra.mxu0 %v4633
        %6263 = vmatprep.subr.bf16.mxu0 %v4666
        %6264 = vmatpush1.bf16.msra.mxu0 %v4665
        %6265 = vmatprep.subr.bf16.mxu0 %v4698
        %6266 = vmatpush1.bf16.msra.mxu0 %v4697
        %6267 = vmatprep.subr.bf16.mxu0 %v4730
        %6268 = vmatpush1.bf16.msra.mxu0 %v4729
        %6269 = vmatprep.subr.bf16.mxu0 %v4762
        %6270 = vmatpush1.bf16.msra.mxu0 %v4761
        %6271 = vmatprep.subr.bf16.mxu0 %v4794
        %6272 = vmatpush1.bf16.msra.mxu0 %v4793
        %6273 = vmatprep.subr.bf16.mxu0 %v4826
        %6274 = vmatpush1.bf16.msra.mxu0 %v4825
        %6275 = vmatprep.subr.bf16.mxu0 %v4858
        %6276 = vmatpush1.bf16.msra.mxu0 %v4857
        %6277 = vmatprep.subr.bf16.mxu0 %v4890
        %6278 = vmatpush1.bf16.msra.mxu0 %v4889
        %6279 = vmatprep.subr.bf16.mxu0 %v4922
        %6280 = vmatpush1.bf16.msra.mxu0 %v4921
        %6281 = vmatprep.subr.bf16.mxu0 %v4954
        %6282 = vmatpush1.bf16.msra.mxu0 %v4953
        %6283 = vmatprep.subr.bf16.mxu0 %v4986
        %6284 = vmatpush1.bf16.msra.mxu0 %v4985
        %6285 = vmatprep.subr.bf16.mxu0 %v5018
        %6286 = vmatpush1.bf16.msra.mxu0 %v5017
        %6287 = vmatprep.mubr.bf16.mxu0 %v5094
        %6288 = vmatmul.mubr.bf16.gmra.mrb[0].mxu0 %v5093
        %v6289 = vpop.f32.mrb[0].mxu0
        %v6290 = vadd.f32 0.0, %v6289
        %v6291 = vpop.f32.mrb[0].mxu0
        %v6292 = vadd.f32 0.0, %v6291
        %v6293 = vpop.f32.mrb[0].mxu0
        %v6294 = vadd.f32 0.0, %v6293
        %v6295 = vpop.f32.mrb[0].mxu0
        %v6296 = vadd.f32 0.0, %v6295
        %6297 = vmatprep.mubr.bf16.mxu0 %v5096
        %6298 = vmatmul.mubr.bf16.gmra.mrb[0].mxu0 %v5095
        %v6299 = vpop.f32.mrb[0].mxu0
        %v6300 = vadd.f32 0.0, %v6299
        %v6301 = vpop.f32.mrb[0].mxu0
        %v6302 = vadd.f32 0.0, %v6301
        %v6303 = vpop.f32.mrb[0].mxu0
        %v6304 = vadd.f32 0.0, %v6303
        %v6305 = vpop.f32.mrb[0].mxu0
        %v6306 = vadd.f32 0.0, %v6305
        %6307 = vmatprep.mubr.bf16.mxu0 %v5098
        %6308 = vmatmul.mubr.bf16.gmra.mrb[0].mxu0 %v5097
        %v6309 = vpop.f32.mrb[0].mxu0
        %v6310 = vadd.f32 0.0, %v6309
        %v6311 = vpop.f32.mrb[0].mxu0
        %v6312 = vadd.f32 0.0, %v6311
        %v6313 = vpop.f32.mrb[0].mxu0
        %v6314 = vadd.f32 0.0, %v6313
        %v6315 = vpop.f32.mrb[0].mxu0
        %v6316 = vadd.f32 0.0, %v6315
        %6317 = vmatprep.mubr.bf16.mxu0 %v5100
        %6318 = vmatmul.mubr.bf16.gmra.mrb[0].mxu0 %v5099
        %v6319 = vpop.f32.mrb[0].mxu0
        %v6320 = vadd.f32 0.0, %v6319
        %v6321 = vpop.f32.mrb[0].mxu0
        %v6322 = vadd.f32 0.0, %v6321
        %v6323 = vpop.f32.mrb[0].mxu0
        %v6324 = vadd.f32 0.0, %v6323
        %v6325 = vpop.f32.mrb[0].mxu0
        %v6326 = vadd.f32 0.0, %v6325
        %6327 = vmatprep.mubr.bf16.mxu0 %v5102
        %6328 = vmatmul.mubr.bf16.gmra.mrb[0].mxu0 %v5101
        %v6329 = vpop.f32.mrb[0].mxu0
        %v6330 = vadd.f32 0.0, %v6329
        %v6331 = vpop.f32.mrb[0].mxu0
        %v6332 = vadd.f32 0.0, %v6331
        %v6333 = vpop.f32.mrb[0].mxu0
        %v6334 = vadd.f32 0.0, %v6333
        %v6335 = vpop.f32.mrb[0].mxu0
        %v6336 = vadd.f32 0.0, %v6335
        %6337 = vmatprep.mubr.bf16.mxu0 %v5104
        %6338 = vmatmul.mubr.bf16.gmra.mrb[0].mxu0 %v5103
        %v6339 = vpop.f32.mrb[0].mxu0
        %v6340 = vadd.f32 0.0, %v6339
        %v6341 = vpop.f32.mrb[0].mxu0
        %v6342 = vadd.f32 0.0, %v6341
        %v6343 = vpop.f32.mrb[0].mxu0
        %v6344 = vadd.f32 0.0, %v6343
        %v6345 = vpop.f32.mrb[0].mxu0
        %v6346 = vadd.f32 0.0, %v6345
        %6347 = vmatprep.mubr.bf16.mxu0 %v5106
        %6348 = vmatmul.mubr.bf16.gmra.mrb[0].mxu0 %v5105
        %v6349 = vpop.f32.mrb[0].mxu0
        %v6350 = vadd.f32 0.0, %v6349
        %v6351 = vpop.f32.mrb[0].mxu0
        %v6352 = vadd.f32 0.0, %v6351
        %v6353 = vpop.f32.mrb[0].mxu0
        %v6354 = vadd.f32 0.0, %v6353
        %v6355 = vpop.f32.mrb[0].mxu0
        %v6356 = vadd.f32 0.0, %v6355
        %6357 = vmatprep.mubr.bf16.mxu0 %v5108
        %6358 = vmatmul.mubr.bf16.gmra.mrb[0].mxu0 %v5107
        %v6359 = vpop.f32.mrb[0].mxu0
        %v6360 = vadd.f32 0.0, %v6359
        %v6361 = vpop.f32.mrb[0].mxu0
        %v6362 = vadd.f32 0.0, %v6361
        %v6363 = vpop.f32.mrb[0].mxu0
        %v6364 = vadd.f32 0.0, %v6363
        %v6365 = vpop.f32.mrb[0].mxu0
        %v6366 = vadd.f32 0.0, %v6365
        %6367 = vdwg.mxu0
        %6368 = vmatprep.subr.bf16.mxu0 %v4540
        %6369 = vmatpush1.bf16.msra.mxu0 %v4539
        %6370 = vmatprep.subr.bf16.mxu0 %v4572
        %6371 = vmatpush1.bf16.msra.mxu0 %v4571
        %6372 = vmatprep.subr.bf16.mxu0 %v4604
        %6373 = vmatpush1.bf16.msra.mxu0 %v4603
        %6374 = vmatprep.subr.bf16.mxu0 %v4636
        %6375 = vmatpush1.bf16.msra.mxu0 %v4635
        %6376 = vmatprep.subr.bf16.mxu0 %v4668
        %6377 = vmatpush1.bf16.msra.mxu0 %v4667
        %6378 = vmatprep.subr.bf16.mxu0 %v4700
        %6379 = vmatpush1.bf16.msra.mxu0 %v4699
        %6380 = vmatprep.subr.bf16.mxu0 %v4732
        %6381 = vmatpush1.bf16.msra.mxu0 %v4731
        %6382 = vmatprep.subr.bf16.mxu0 %v4764
        %6383 = vmatpush1.bf16.msra.mxu0 %v4763
        %6384 = vmatprep.subr.bf16.mxu0 %v4796
        %6385 = vmatpush1.bf16.msra.mxu0 %v4795
        %6386 = vmatprep.subr.bf16.mxu0 %v4828
        %6387 = vmatpush1.bf16.msra.mxu0 %v4827
        %6388 = vmatprep.subr.bf16.mxu0 %v4860
        %6389 = vmatpush1.bf16.msra.mxu0 %v4859
        %6390 = vmatprep.subr.bf16.mxu0 %v4892
        %6391 = vmatpush1.bf16.msra.mxu0 %v4891
        %6392 = vmatprep.subr.bf16.mxu0 %v4924
        %6393 = vmatpush1.bf16.msra.mxu0 %v4923
        %6394 = vmatprep.subr.bf16.mxu0 %v4956
        %6395 = vmatpush1.bf16.msra.mxu0 %v4955
        %6396 = vmatprep.subr.bf16.mxu0 %v4988
        %6397 = vmatpush1.bf16.msra.mxu0 %v4987
        %6398 = vmatprep.subr.bf16.mxu0 %v5020
        %6399 = vmatpush1.bf16.msra.mxu0 %v5019
        %6400 = vmatprep.mubr.bf16.mxu0 %v5094
        %6401 = vmatmul.mubr.bf16.gmra.mrb[0].mxu0 %v5093
        %v6402 = vpop.f32.mrb[0].mxu0
        %v6403 = vadd.f32 0.0, %v6402
        %v6404 = vpop.f32.mrb[0].mxu0
        %v6405 = vadd.f32 0.0, %v6404
        %v6406 = vpop.f32.mrb[0].mxu0
        %v6407 = vadd.f32 0.0, %v6406
        %v6408 = vpop.f32.mrb[0].mxu0
        %v6409 = vadd.f32 0.0, %v6408
        %6410 = vmatprep.mubr.bf16.mxu0 %v5096
        %6411 = vmatmul.mubr.bf16.gmra.mrb[0].mxu0 %v5095
        %v6412 = vpop.f32.mrb[0].mxu0
        %v6413 = vadd.f32 0.0, %v6412
        %v6414 = vpop.f32.mrb[0].mxu0
        %v6415 = vadd.f32 0.0, %v6414
        %v6416 = vpop.f32.mrb[0].mxu0
        %v6417 = vadd.f32 0.0, %v6416
        %v6418 = vpop.f32.mrb[0].mxu0
        %v6419 = vadd.f32 0.0, %v6418
        %6420 = vmatprep.mubr.bf16.mxu0 %v5098
        %6421 = vmatmul.mubr.bf16.gmra.mrb[0].mxu0 %v5097
        %v6422 = vpop.f32.mrb[0].mxu0
        %v6423 = vadd.f32 0.0, %v6422
        %v6424 = vpop.f32.mrb[0].mxu0
        %v6425 = vadd.f32 0.0, %v6424
        %v6426 = vpop.f32.mrb[0].mxu0
        %v6427 = vadd.f32 0.0, %v6426
        %v6428 = vpop.f32.mrb[0].mxu0
        %v6429 = vadd.f32 0.0, %v6428
        %6430 = vmatprep.mubr.bf16.mxu0 %v5100
        %6431 = vmatmul.mubr.bf16.gmra.mrb[0].mxu0 %v5099
        %v6432 = vpop.f32.mrb[0].mxu0
        %v6433 = vadd.f32 0.0, %v6432
        %v6434 = vpop.f32.mrb[0].mxu0
        %v6435 = vadd.f32 0.0, %v6434
        %v6436 = vpop.f32.mrb[0].mxu0
        %v6437 = vadd.f32 0.0, %v6436
        %v6438 = vpop.f32.mrb[0].mxu0
        %v6439 = vadd.f32 0.0, %v6438
        %6440 = vmatprep.mubr.bf16.mxu0 %v5102
        %6441 = vmatmul.mubr.bf16.gmra.mrb[0].mxu0 %v5101
        %v6442 = vpop.f32.mrb[0].mxu0
        %v6443 = vadd.f32 0.0, %v6442
        %v6444 = vpop.f32.mrb[0].mxu0
        %v6445 = vadd.f32 0.0, %v6444
        %v6446 = vpop.f32.mrb[0].mxu0
        %v6447 = vadd.f32 0.0, %v6446
        %v6448 = vpop.f32.mrb[0].mxu0
        %v6449 = vadd.f32 0.0, %v6448
        %6450 = vmatprep.mubr.bf16.mxu0 %v5104
        %6451 = vmatmul.mubr.bf16.gmra.mrb[0].mxu0 %v5103
        %v6452 = vpop.f32.mrb[0].mxu0
        %v6453 = vadd.f32 0.0, %v6452
        %v6454 = vpop.f32.mrb[0].mxu0
        %v6455 = vadd.f32 0.0, %v6454
        %v6456 = vpop.f32.mrb[0].mxu0
        %v6457 = vadd.f32 0.0, %v6456
        %v6458 = vpop.f32.mrb[0].mxu0
        %v6459 = vadd.f32 0.0, %v6458
        %6460 = vmatprep.mubr.bf16.mxu0 %v5106
        %6461 = vmatmul.mubr.bf16.gmra.mrb[0].mxu0 %v5105
        %v6462 = vpop.f32.mrb[0].mxu0
        %v6463 = vadd.f32 0.0, %v6462
        %v6464 = vpop.f32.mrb[0].mxu0
        %v6465 = vadd.f32 0.0, %v6464
        %v6466 = vpop.f32.mrb[0].mxu0
        %v6467 = vadd.f32 0.0, %v6466
        %v6468 = vpop.f32.mrb[0].mxu0
        %v6469 = vadd.f32 0.0, %v6468
        %6470 = vmatprep.mubr.bf16.mxu0 %v5108
        %6471 = vmatmul.mubr.bf16.gmra.mrb[0].mxu0 %v5107
        %v6472 = vpop.f32.mrb[0].mxu0
        %v6473 = vadd.f32 0.0, %v6472
        %v6474 = vpop.f32.mrb[0].mxu0
        %v6475 = vadd.f32 0.0, %v6474
        %v6476 = vpop.f32.mrb[0].mxu0
        %v6477 = vadd.f32 0.0, %v6476
        %v6478 = vpop.f32.mrb[0].mxu0
        %v6479 = vadd.f32 0.0, %v6478
        %6480 = vdwg.mxu0
        %6481 = vmatprep.subr.bf16.mxu0 %v4542
        %6482 = vmatpush1.bf16.msra.mxu0 %v4541
        %6483 = vmatprep.subr.bf16.mxu0 %v4574
        %6484 = vmatpush1.bf16.msra.mxu0 %v4573
        %6485 = vmatprep.subr.bf16.mxu0 %v4606
        %6486 = vmatpush1.bf16.msra.mxu0 %v4605
        %6487 = vmatprep.subr.bf16.mxu0 %v4638
        %6488 = vmatpush1.bf16.msra.mxu0 %v4637
        %6489 = vmatprep.subr.bf16.mxu0 %v4670
        %6490 = vmatpush1.bf16.msra.mxu0 %v4669
        %6491 = vmatprep.subr.bf16.mxu0 %v4702
        %6492 = vmatpush1.bf16.msra.mxu0 %v4701
        %6493 = vmatprep.subr.bf16.mxu0 %v4734
        %6494 = vmatpush1.bf16.msra.mxu0 %v4733
        %6495 = vmatprep.subr.bf16.mxu0 %v4766
        %6496 = vmatpush1.bf16.msra.mxu0 %v4765
        %6497 = vmatprep.subr.bf16.mxu0 %v4798
        %6498 = vmatpush1.bf16.msra.mxu0 %v4797
        %6499 = vmatprep.subr.bf16.mxu0 %v4830
        %6500 = vmatpush1.bf16.msra.mxu0 %v4829
        %6501 = vmatprep.subr.bf16.mxu0 %v4862
        %6502 = vmatpush1.bf16.msra.mxu0 %v4861
        %6503 = vmatprep.subr.bf16.mxu0 %v4894
        %6504 = vmatpush1.bf16.msra.mxu0 %v4893
        %6505 = vmatprep.subr.bf16.mxu0 %v4926
        %6506 = vmatpush1.bf16.msra.mxu0 %v4925
        %6507 = vmatprep.subr.bf16.mxu0 %v4958
        %6508 = vmatpush1.bf16.msra.mxu0 %v4957
        %6509 = vmatprep.subr.bf16.mxu0 %v4990
        %6510 = vmatpush1.bf16.msra.mxu0 %v4989
        %6511 = vmatprep.subr.bf16.mxu0 %v5022
        %6512 = vmatpush1.bf16.msra.mxu0 %v5021
        %6513 = vmatprep.mubr.bf16.mxu0 %v5094
        %6514 = vmatmul.mubr.bf16.gmra.mrb[0].mxu0 %v5093
        %v6515 = vpop.f32.mrb[0].mxu0
        %v6516 = vadd.f32 0.0, %v6515
        %v6517 = vpop.f32.mrb[0].mxu0
        %v6518 = vadd.f32 0.0, %v6517
        %v6519 = vpop.f32.mrb[0].mxu0
        %v6520 = vadd.f32 0.0, %v6519
        %v6521 = vpop.f32.mrb[0].mxu0
        %v6522 = vadd.f32 0.0, %v6521
        %6523 = vmatprep.mubr.bf16.mxu0 %v5096
        %6524 = vmatmul.mubr.bf16.gmra.mrb[0].mxu0 %v5095
        %v6525 = vpop.f32.mrb[0].mxu0
        %v6526 = vadd.f32 0.0, %v6525
        %v6527 = vpop.f32.mrb[0].mxu0
        %v6528 = vadd.f32 0.0, %v6527
        %v6529 = vpop.f32.mrb[0].mxu0
        %v6530 = vadd.f32 0.0, %v6529
        %v6531 = vpop.f32.mrb[0].mxu0
        %v6532 = vadd.f32 0.0, %v6531
        %6533 = vmatprep.mubr.bf16.mxu0 %v5098
        %6534 = vmatmul.mubr.bf16.gmra.mrb[0].mxu0 %v5097
        %v6535 = vpop.f32.mrb[0].mxu0
        %v6536 = vadd.f32 0.0, %v6535
        %v6537 = vpop.f32.mrb[0].mxu0
        %v6538 = vadd.f32 0.0, %v6537
        %v6539 = vpop.f32.mrb[0].mxu0
        %v6540 = vadd.f32 0.0, %v6539
        %v6541 = vpop.f32.mrb[0].mxu0
        %v6542 = vadd.f32 0.0, %v6541
        %6543 = vmatprep.mubr.bf16.mxu0 %v5100
        %6544 = vmatmul.mubr.bf16.gmra.mrb[0].mxu0 %v5099
        %v6545 = vpop.f32.mrb[0].mxu0
        %v6546 = vadd.f32 0.0, %v6545
        %v6547 = vpop.f32.mrb[0].mxu0
        %v6548 = vadd.f32 0.0, %v6547
        %v6549 = vpop.f32.mrb[0].mxu0
        %v6550 = vadd.f32 0.0, %v6549
        %v6551 = vpop.f32.mrb[0].mxu0
        %v6552 = vadd.f32 0.0, %v6551
        %6553 = vmatprep.mubr.bf16.mxu0 %v5102
        %6554 = vmatmul.mubr.bf16.gmra.mrb[0].mxu0 %v5101
        %v6555 = vpop.f32.mrb[0].mxu0
        %v6556 = vadd.f32 0.0, %v6555
        %v6557 = vpop.f32.mrb[0].mxu0
        %v6558 = vadd.f32 0.0, %v6557
        %v6559 = vpop.f32.mrb[0].mxu0
        %v6560 = vadd.f32 0.0, %v6559
        %v6561 = vpop.f32.mrb[0].mxu0
        %v6562 = vadd.f32 0.0, %v6561
        %6563 = vmatprep.mubr.bf16.mxu0 %v5104
        %6564 = vmatmul.mubr.bf16.gmra.mrb[0].mxu0 %v5103
        %v6565 = vpop.f32.mrb[0].mxu0
        %v6566 = vadd.f32 0.0, %v6565
        %v6567 = vpop.f32.mrb[0].mxu0
        %v6568 = vadd.f32 0.0, %v6567
        %v6569 = vpop.f32.mrb[0].mxu0
        %v6570 = vadd.f32 0.0, %v6569
        %v6571 = vpop.f32.mrb[0].mxu0
        %v6572 = vadd.f32 0.0, %v6571
        %6573 = vmatprep.mubr.bf16.mxu0 %v5106
        %6574 = vmatmul.mubr.bf16.gmra.mrb[0].mxu0 %v5105
        %v6575 = vpop.f32.mrb[0].mxu0
        %v6576 = vadd.f32 0.0, %v6575
        %v6577 = vpop.f32.mrb[0].mxu0
        %v6578 = vadd.f32 0.0, %v6577
        %v6579 = vpop.f32.mrb[0].mxu0
        %v6580 = vadd.f32 0.0, %v6579
        %v6581 = vpop.f32.mrb[0].mxu0
        %v6582 = vadd.f32 0.0, %v6581
        %6583 = vmatprep.mubr.bf16.mxu0 %v5108
        %6584 = vmatmul.mubr.bf16.gmra.mrb[0].mxu0 %v5107
        %v6585 = vpop.f32.mrb[0].mxu0
        %v6586 = vadd.f32 0.0, %v6585
        %v6587 = vpop.f32.mrb[0].mxu0
        %v6588 = vadd.f32 0.0, %v6587
        %v6589 = vpop.f32.mrb[0].mxu0
        %v6590 = vadd.f32 0.0, %v6589
        %v6591 = vpop.f32.mrb[0].mxu0
        %v6592 = vadd.f32 0.0, %v6591
        %6593 = vdwg.mxu0
        %6594 = vmatprep.subr.bf16.mxu0 %v4544
        %6595 = vmatpush1.bf16.msra.mxu0 %v4543
        %6596 = vmatprep.subr.bf16.mxu0 %v4576
        %6597 = vmatpush1.bf16.msra.mxu0 %v4575
        %6598 = vmatprep.subr.bf16.mxu0 %v4608
        %6599 = vmatpush1.bf16.msra.mxu0 %v4607
        %6600 = vmatprep.subr.bf16.mxu0 %v4640
        %6601 = vmatpush1.bf16.msra.mxu0 %v4639
        %6602 = vmatprep.subr.bf16.mxu0 %v4672
        %6603 = vmatpush1.bf16.msra.mxu0 %v4671
        %6604 = vmatprep.subr.bf16.mxu0 %v4704
        %6605 = vmatpush1.bf16.msra.mxu0 %v4703
        %6606 = vmatprep.subr.bf16.mxu0 %v4736
        %6607 = vmatpush1.bf16.msra.mxu0 %v4735
        %6608 = vmatprep.subr.bf16.mxu0 %v4768
        %6609 = vmatpush1.bf16.msra.mxu0 %v4767
        %6610 = vmatprep.subr.bf16.mxu0 %v4800
        %6611 = vmatpush1.bf16.msra.mxu0 %v4799
        %6612 = vmatprep.subr.bf16.mxu0 %v4832
        %6613 = vmatpush1.bf16.msra.mxu0 %v4831
        %6614 = vmatprep.subr.bf16.mxu0 %v4864
        %6615 = vmatpush1.bf16.msra.mxu0 %v4863
        %6616 = vmatprep.subr.bf16.mxu0 %v4896
        %6617 = vmatpush1.bf16.msra.mxu0 %v4895
        %6618 = vmatprep.subr.bf16.mxu0 %v4928
        %6619 = vmatpush1.bf16.msra.mxu0 %v4927
        %6620 = vmatprep.subr.bf16.mxu0 %v4960
        %6621 = vmatpush1.bf16.msra.mxu0 %v4959
        %6622 = vmatprep.subr.bf16.mxu0 %v4992
        %6623 = vmatpush1.bf16.msra.mxu0 %v4991
        %6624 = vmatprep.subr.bf16.mxu0 %v5024
        %6625 = vmatpush1.bf16.msra.mxu0 %v5023
        %6626 = vmatprep.mubr.bf16.mxu0 %v5094
        %6627 = vmatmul.mubr.bf16.gmra.mrb[0].mxu0 %v5093
        %v6628 = vpop.f32.mrb[0].mxu0
        %v6629 = vadd.f32 0.0, %v6628
        %v6630 = vpop.f32.mrb[0].mxu0
        %v6631 = vadd.f32 0.0, %v6630
        %v6632 = vpop.f32.mrb[0].mxu0
        %v6633 = vadd.f32 0.0, %v6632
        %v6634 = vpop.f32.mrb[0].mxu0
        %v6635 = vadd.f32 0.0, %v6634
        %6636 = vmatprep.mubr.bf16.mxu0 %v5096
        %6637 = vmatmul.mubr.bf16.gmra.mrb[0].mxu0 %v5095
        %v6638 = vpop.f32.mrb[0].mxu0
        %v6639 = vadd.f32 0.0, %v6638
        %v6640 = vpop.f32.mrb[0].mxu0
        %v6641 = vadd.f32 0.0, %v6640
        %v6642 = vpop.f32.mrb[0].mxu0
        %v6643 = vadd.f32 0.0, %v6642
        %v6644 = vpop.f32.mrb[0].mxu0
        %v6645 = vadd.f32 0.0, %v6644
        %6646 = vmatprep.mubr.bf16.mxu0 %v5098
        %6647 = vmatmul.mubr.bf16.gmra.mrb[0].mxu0 %v5097
        %v6648 = vpop.f32.mrb[0].mxu0
        %v6649 = vadd.f32 0.0, %v6648
        %v6650 = vpop.f32.mrb[0].mxu0
        %v6651 = vadd.f32 0.0, %v6650
        %v6652 = vpop.f32.mrb[0].mxu0
        %v6653 = vadd.f32 0.0, %v6652
        %v6654 = vpop.f32.mrb[0].mxu0
        %v6655 = vadd.f32 0.0, %v6654
        %6656 = vmatprep.mubr.bf16.mxu0 %v5100
        %6657 = vmatmul.mubr.bf16.gmra.mrb[0].mxu0 %v5099
        %v6658 = vpop.f32.mrb[0].mxu0
        %v6659 = vadd.f32 0.0, %v6658
        %v6660 = vpop.f32.mrb[0].mxu0
        %v6661 = vadd.f32 0.0, %v6660
        %v6662 = vpop.f32.mrb[0].mxu0
        %v6663 = vadd.f32 0.0, %v6662
        %v6664 = vpop.f32.mrb[0].mxu0
        %v6665 = vadd.f32 0.0, %v6664
        %6666 = vmatprep.mubr.bf16.mxu0 %v5102
        %6667 = vmatmul.mubr.bf16.gmra.mrb[0].mxu0 %v5101
        %v6668 = vpop.f32.mrb[0].mxu0
        %v6669 = vadd.f32 0.0, %v6668
        %v6670 = vpop.f32.mrb[0].mxu0
        %v6671 = vadd.f32 0.0, %v6670
        %v6672 = vpop.f32.mrb[0].mxu0
        %v6673 = vadd.f32 0.0, %v6672
        %v6674 = vpop.f32.mrb[0].mxu0
        %v6675 = vadd.f32 0.0, %v6674
        %6676 = vmatprep.mubr.bf16.mxu0 %v5104
        %6677 = vmatmul.mubr.bf16.gmra.mrb[0].mxu0 %v5103
        %v6678 = vpop.f32.mrb[0].mxu0
        %v6679 = vadd.f32 0.0, %v6678
        %v6680 = vpop.f32.mrb[0].mxu0
        %v6681 = vadd.f32 0.0, %v6680
        %v6682 = vpop.f32.mrb[0].mxu0
        %v6683 = vadd.f32 0.0, %v6682
        %v6684 = vpop.f32.mrb[0].mxu0
        %v6685 = vadd.f32 0.0, %v6684
        %6686 = vmatprep.mubr.bf16.mxu0 %v5106
        %6687 = vmatmul.mubr.bf16.gmra.mrb[0].mxu0 %v5105
        %v6688 = vpop.f32.mrb[0].mxu0
        %v6689 = vadd.f32 0.0, %v6688
        %v6690 = vpop.f32.mrb[0].mxu0
        %v6691 = vadd.f32 0.0, %v6690
        %v6692 = vpop.f32.mrb[0].mxu0
        %v6693 = vadd.f32 0.0, %v6692
        %v6694 = vpop.f32.mrb[0].mxu0
        %v6695 = vadd.f32 0.0, %v6694
        %6696 = vmatprep.mubr.bf16.mxu0 %v5108
        %6697 = vmatmul.mubr.bf16.gmra.mrb[0].mxu0 %v5107
        %v6698 = vpop.f32.mrb[0].mxu0
        %v6699 = vadd.f32 0.0, %v6698
        %v6700 = vpop.f32.mrb[0].mxu0
        %v6701 = vadd.f32 0.0, %v6700
        %v6702 = vpop.f32.mrb[0].mxu0
        %v6703 = vadd.f32 0.0, %v6702
        %v6704 = vpop.f32.mrb[0].mxu0
        %v6705 = vadd.f32 0.0, %v6704
        %6706 = vdwg.mxu0
        %6707 = vmatprep.subr.bf16.mxu0 %v4546
        %6708 = vmatpush1.bf16.msra.mxu0 %v4545
        %6709 = vmatprep.subr.bf16.mxu0 %v4578
        %6710 = vmatpush1.bf16.msra.mxu0 %v4577
        %6711 = vmatprep.subr.bf16.mxu0 %v4610
        %6712 = vmatpush1.bf16.msra.mxu0 %v4609
        %6713 = vmatprep.subr.bf16.mxu0 %v4642
        %6714 = vmatpush1.bf16.msra.mxu0 %v4641
        %6715 = vmatprep.subr.bf16.mxu0 %v4674
        %6716 = vmatpush1.bf16.msra.mxu0 %v4673
        %6717 = vmatprep.subr.bf16.mxu0 %v4706
        %6718 = vmatpush1.bf16.msra.mxu0 %v4705
        %6719 = vmatprep.subr.bf16.mxu0 %v4738
        %6720 = vmatpush1.bf16.msra.mxu0 %v4737
        %6721 = vmatprep.subr.bf16.mxu0 %v4770
        %6722 = vmatpush1.bf16.msra.mxu0 %v4769
        %6723 = vmatprep.subr.bf16.mxu0 %v4802
        %6724 = vmatpush1.bf16.msra.mxu0 %v4801
        %6725 = vmatprep.subr.bf16.mxu0 %v4834
        %6726 = vmatpush1.bf16.msra.mxu0 %v4833
        %6727 = vmatprep.subr.bf16.mxu0 %v4866
        %6728 = vmatpush1.bf16.msra.mxu0 %v4865
        %6729 = vmatprep.subr.bf16.mxu0 %v4898
        %6730 = vmatpush1.bf16.msra.mxu0 %v4897
        %6731 = vmatprep.subr.bf16.mxu0 %v4930
        %6732 = vmatpush1.bf16.msra.mxu0 %v4929
        %6733 = vmatprep.subr.bf16.mxu0 %v4962
        %6734 = vmatpush1.bf16.msra.mxu0 %v4961
        %6735 = vmatprep.subr.bf16.mxu0 %v4994
        %6736 = vmatpush1.bf16.msra.mxu0 %v4993
        %6737 = vmatprep.subr.bf16.mxu0 %v5026
        %6738 = vmatpush1.bf16.msra.mxu0 %v5025
        %6739 = vmatprep.mubr.bf16.mxu0 %v5094
        %6740 = vmatmul.mubr.bf16.gmra.mrb[0].mxu0 %v5093
        %v6741 = vpop.f32.mrb[0].mxu0
        %v6742 = vadd.f32 0.0, %v6741
        %v6743 = vpop.f32.mrb[0].mxu0
        %v6744 = vadd.f32 0.0, %v6743
        %v6745 = vpop.f32.mrb[0].mxu0
        %v6746 = vadd.f32 0.0, %v6745
        %v6747 = vpop.f32.mrb[0].mxu0
        %v6748 = vadd.f32 0.0, %v6747
        %6749 = vmatprep.mubr.bf16.mxu0 %v5096
        %6750 = vmatmul.mubr.bf16.gmra.mrb[0].mxu0 %v5095
        %v6751 = vpop.f32.mrb[0].mxu0
        %v6752 = vadd.f32 0.0, %v6751
        %v6753 = vpop.f32.mrb[0].mxu0
        %v6754 = vadd.f32 0.0, %v6753
        %v6755 = vpop.f32.mrb[0].mxu0
        %v6756 = vadd.f32 0.0, %v6755
        %v6757 = vpop.f32.mrb[0].mxu0
        %v6758 = vadd.f32 0.0, %v6757
        %6759 = vmatprep.mubr.bf16.mxu0 %v5098
        %6760 = vmatmul.mubr.bf16.gmra.mrb[0].mxu0 %v5097
        %v6761 = vpop.f32.mrb[0].mxu0
        %v6762 = vadd.f32 0.0, %v6761
        %v6763 = vpop.f32.mrb[0].mxu0
        %v6764 = vadd.f32 0.0, %v6763
        %v6765 = vpop.f32.mrb[0].mxu0
        %v6766 = vadd.f32 0.0, %v6765
        %v6767 = vpop.f32.mrb[0].mxu0
        %v6768 = vadd.f32 0.0, %v6767
        %6769 = vmatprep.mubr.bf16.mxu0 %v5100
        %6770 = vmatmul.mubr.bf16.gmra.mrb[0].mxu0 %v5099
        %v6771 = vpop.f32.mrb[0].mxu0
        %v6772 = vadd.f32 0.0, %v6771
        %v6773 = vpop.f32.mrb[0].mxu0
        %v6774 = vadd.f32 0.0, %v6773
        %v6775 = vpop.f32.mrb[0].mxu0
        %v6776 = vadd.f32 0.0, %v6775
        %v6777 = vpop.f32.mrb[0].mxu0
        %v6778 = vadd.f32 0.0, %v6777
        %6779 = vmatprep.mubr.bf16.mxu0 %v5102
        %6780 = vmatmul.mubr.bf16.gmra.mrb[0].mxu0 %v5101
        %v6781 = vpop.f32.mrb[0].mxu0
        %v6782 = vadd.f32 0.0, %v6781
        %v6783 = vpop.f32.mrb[0].mxu0
        %v6784 = vadd.f32 0.0, %v6783
        %v6785 = vpop.f32.mrb[0].mxu0
        %v6786 = vadd.f32 0.0, %v6785
        %v6787 = vpop.f32.mrb[0].mxu0
        %v6788 = vadd.f32 0.0, %v6787
        %6789 = vmatprep.mubr.bf16.mxu0 %v5104
        %6790 = vmatmul.mubr.bf16.gmra.mrb[0].mxu0 %v5103
        %v6791 = vpop.f32.mrb[0].mxu0
        %v6792 = vadd.f32 0.0, %v6791
        %v6793 = vpop.f32.mrb[0].mxu0
        %v6794 = vadd.f32 0.0, %v6793
        %v6795 = vpop.f32.mrb[0].mxu0
        %v6796 = vadd.f32 0.0, %v6795
        %v6797 = vpop.f32.mrb[0].mxu0
        %v6798 = vadd.f32 0.0, %v6797
        %6799 = vmatprep.mubr.bf16.mxu0 %v5106
        %6800 = vmatmul.mubr.bf16.gmra.mrb[0].mxu0 %v5105
        %v6801 = vpop.f32.mrb[0].mxu0
        %v6802 = vadd.f32 0.0, %v6801
        %v6803 = vpop.f32.mrb[0].mxu0
        %v6804 = vadd.f32 0.0, %v6803
        %v6805 = vpop.f32.mrb[0].mxu0
        %v6806 = vadd.f32 0.0, %v6805
        %v6807 = vpop.f32.mrb[0].mxu0
        %v6808 = vadd.f32 0.0, %v6807
        %6809 = vmatprep.mubr.bf16.mxu0 %v5108
        %6810 = vmatmul.mubr.bf16.gmra.mrb[0].mxu0 %v5107
        %v6811 = vpop.f32.mrb[0].mxu0
        %v6812 = vadd.f32 0.0, %v6811
        %v6813 = vpop.f32.mrb[0].mxu0
        %v6814 = vadd.f32 0.0, %v6813
        %v6815 = vpop.f32.mrb[0].mxu0
        %v6816 = vadd.f32 0.0, %v6815
        %v6817 = vpop.f32.mrb[0].mxu0
        %v6818 = vadd.f32 0.0, %v6817
        %6819 = vdwg.mxu0
        %6820 = vmatprep.subr.bf16.mxu0 %v4548
        %6821 = vmatpush1.bf16.msra.mxu0 %v4547
        %6822 = vmatprep.subr.bf16.mxu0 %v4580
        %6823 = vmatpush1.bf16.msra.mxu0 %v4579
        %6824 = vmatprep.subr.bf16.mxu0 %v4612
        %6825 = vmatpush1.bf16.msra.mxu0 %v4611
        %6826 = vmatprep.subr.bf16.mxu0 %v4644
        %6827 = vmatpush1.bf16.msra.mxu0 %v4643
        %6828 = vmatprep.subr.bf16.mxu0 %v4676
        %6829 = vmatpush1.bf16.msra.mxu0 %v4675
        %6830 = vmatprep.subr.bf16.mxu0 %v4708
        %6831 = vmatpush1.bf16.msra.mxu0 %v4707
        %6832 = vmatprep.subr.bf16.mxu0 %v4740
        %6833 = vmatpush1.bf16.msra.mxu0 %v4739
        %6834 = vmatprep.subr.bf16.mxu0 %v4772
        %6835 = vmatpush1.bf16.msra.mxu0 %v4771
        %6836 = vmatprep.subr.bf16.mxu0 %v4804
        %6837 = vmatpush1.bf16.msra.mxu0 %v4803
        %6838 = vmatprep.subr.bf16.mxu0 %v4836
        %6839 = vmatpush1.bf16.msra.mxu0 %v4835
        %6840 = vmatprep.subr.bf16.mxu0 %v4868
        %6841 = vmatpush1.bf16.msra.mxu0 %v4867
        %6842 = vmatprep.subr.bf16.mxu0 %v4900
        %6843 = vmatpush1.bf16.msra.mxu0 %v4899
        %6844 = vmatprep.subr.bf16.mxu0 %v4932
        %6845 = vmatpush1.bf16.msra.mxu0 %v4931
        %6846 = vmatprep.subr.bf16.mxu0 %v4964
        %6847 = vmatpush1.bf16.msra.mxu0 %v4963
        %6848 = vmatprep.subr.bf16.mxu0 %v4996
        %6849 = vmatpush1.bf16.msra.mxu0 %v4995
        %6850 = vmatprep.subr.bf16.mxu0 %v5028
        %6851 = vmatpush1.bf16.msra.mxu0 %v5027
        %6852 = vmatprep.mubr.bf16.mxu0 %v5094
        %6853 = vmatmul.mubr.bf16.gmra.mrb[0].mxu0 %v5093
        %v6854 = vpop.f32.mrb[0].mxu0
        %v6855 = vadd.f32 0.0, %v6854
        %v6856 = vpop.f32.mrb[0].mxu0
        %v6857 = vadd.f32 0.0, %v6856
        %v6858 = vpop.f32.mrb[0].mxu0
        %v6859 = vadd.f32 0.0, %v6858
        %v6860 = vpop.f32.mrb[0].mxu0
        %v6861 = vadd.f32 0.0, %v6860
        %6862 = vmatprep.mubr.bf16.mxu0 %v5096
        %6863 = vmatmul.mubr.bf16.gmra.mrb[0].mxu0 %v5095
        %v6864 = vpop.f32.mrb[0].mxu0
        %v6865 = vadd.f32 0.0, %v6864
        %v6866 = vpop.f32.mrb[0].mxu0
        %v6867 = vadd.f32 0.0, %v6866
        %v6868 = vpop.f32.mrb[0].mxu0
        %v6869 = vadd.f32 0.0, %v6868
        %v6870 = vpop.f32.mrb[0].mxu0
        %v6871 = vadd.f32 0.0, %v6870
        %6872 = vmatprep.mubr.bf16.mxu0 %v5098
        %6873 = vmatmul.mubr.bf16.gmra.mrb[0].mxu0 %v5097
        %v6874 = vpop.f32.mrb[0].mxu0
        %v6875 = vadd.f32 0.0, %v6874
        %v6876 = vpop.f32.mrb[0].mxu0
        %v6877 = vadd.f32 0.0, %v6876
        %v6878 = vpop.f32.mrb[0].mxu0
        %v6879 = vadd.f32 0.0, %v6878
        %v6880 = vpop.f32.mrb[0].mxu0
        %v6881 = vadd.f32 0.0, %v6880
        %6882 = vmatprep.mubr.bf16.mxu0 %v5100
        %6883 = vmatmul.mubr.bf16.gmra.mrb[0].mxu0 %v5099
        %v6884 = vpop.f32.mrb[0].mxu0
        %v6885 = vadd.f32 0.0, %v6884
        %v6886 = vpop.f32.mrb[0].mxu0
        %v6887 = vadd.f32 0.0, %v6886
        %v6888 = vpop.f32.mrb[0].mxu0
        %v6889 = vadd.f32 0.0, %v6888
        %v6890 = vpop.f32.mrb[0].mxu0
        %v6891 = vadd.f32 0.0, %v6890
        %6892 = vmatprep.mubr.bf16.mxu0 %v5102
        %6893 = vmatmul.mubr.bf16.gmra.mrb[0].mxu0 %v5101
        %v6894 = vpop.f32.mrb[0].mxu0
        %v6895 = vadd.f32 0.0, %v6894
        %v6896 = vpop.f32.mrb[0].mxu0
        %v6897 = vadd.f32 0.0, %v6896
        %v6898 = vpop.f32.mrb[0].mxu0
        %v6899 = vadd.f32 0.0, %v6898
        %v6900 = vpop.f32.mrb[0].mxu0
        %v6901 = vadd.f32 0.0, %v6900
        %6902 = vmatprep.mubr.bf16.mxu0 %v5104
        %6903 = vmatmul.mubr.bf16.gmra.mrb[0].mxu0 %v5103
        %v6904 = vpop.f32.mrb[0].mxu0
        %v6905 = vadd.f32 0.0, %v6904
        %v6906 = vpop.f32.mrb[0].mxu0
        %v6907 = vadd.f32 0.0, %v6906
        %v6908 = vpop.f32.mrb[0].mxu0
        %v6909 = vadd.f32 0.0, %v6908
        %v6910 = vpop.f32.mrb[0].mxu0
        %v6911 = vadd.f32 0.0, %v6910
        %6912 = vmatprep.mubr.bf16.mxu0 %v5106
        %6913 = vmatmul.mubr.bf16.gmra.mrb[0].mxu0 %v5105
        %v6914 = vpop.f32.mrb[0].mxu0
        %v6915 = vadd.f32 0.0, %v6914
        %v6916 = vpop.f32.mrb[0].mxu0
        %v6917 = vadd.f32 0.0, %v6916
        %v6918 = vpop.f32.mrb[0].mxu0
        %v6919 = vadd.f32 0.0, %v6918
        %v6920 = vpop.f32.mrb[0].mxu0
        %v6921 = vadd.f32 0.0, %v6920
        %6922 = vmatprep.mubr.bf16.mxu0 %v5108
        %6923 = vmatmul.mubr.bf16.gmra.mrb[0].mxu0 %v5107
        %v6924 = vpop.f32.mrb[0].mxu0
        %v6925 = vadd.f32 0.0, %v6924
        %v6926 = vpop.f32.mrb[0].mxu0
        %v6927 = vadd.f32 0.0, %v6926
        %v6928 = vpop.f32.mrb[0].mxu0
        %v6929 = vadd.f32 0.0, %v6928
        %v6930 = vpop.f32.mrb[0].mxu0
        %v6931 = vadd.f32 0.0, %v6930
        %6932 = vdwg.mxu0
        %v6933 = vpack.c.bf16 %v5164, %v5160
        %v6934 = vpack.c.bf16 %v5166, %v5162
        %v6935 = vpack.c.bf16 %v5277, %v5273
        %v6936 = vpack.c.bf16 %v5279, %v5275
        %v6937 = vpack.c.bf16 %v5390, %v5386
        %v6938 = vpack.c.bf16 %v5392, %v5388
        %v6939 = vpack.c.bf16 %v5503, %v5499
        %v6940 = vpack.c.bf16 %v5505, %v5501
        %v6941 = vpack.c.bf16 %v5616, %v5612
        %v6942 = vpack.c.bf16 %v5618, %v5614
        %v6943 = vpack.c.bf16 %v5729, %v5725
        %v6944 = vpack.c.bf16 %v5731, %v5727
        %v6945 = vpack.c.bf16 %v5842, %v5838
        %v6946 = vpack.c.bf16 %v5844, %v5840
        %v6947 = vpack.c.bf16 %v5955, %v5951
        %v6948 = vpack.c.bf16 %v5957, %v5953
        %v6949 = vpack.c.bf16 %v6068, %v6064
        %v6950 = vpack.c.bf16 %v6070, %v6066
        %v6951 = vpack.c.bf16 %v6181, %v6177
        %v6952 = vpack.c.bf16 %v6183, %v6179
        %v6953 = vpack.c.bf16 %v6294, %v6290
        %v6954 = vpack.c.bf16 %v6296, %v6292
        %v6955 = vpack.c.bf16 %v6407, %v6403
        %v6956 = vpack.c.bf16 %v6409, %v6405
        %v6957 = vpack.c.bf16 %v6520, %v6516
        %v6958 = vpack.c.bf16 %v6522, %v6518
        %v6959 = vpack.c.bf16 %v6633, %v6629
        %v6960 = vpack.c.bf16 %v6635, %v6631
        %v6961 = vpack.c.bf16 %v6746, %v6742
        %v6962 = vpack.c.bf16 %v6748, %v6744
        %v6963 = vpack.c.bf16 %v6859, %v6855
        %v6964 = vpack.c.bf16 %v6861, %v6857
        %v6965 = vpack.c.bf16 %v5174, %v5170
        %v6966 = vpack.c.bf16 %v5176, %v5172
        %v6967 = vpack.c.bf16 %v5287, %v5283
        %v6968 = vpack.c.bf16 %v5289, %v5285
        %v6969 = vpack.c.bf16 %v5400, %v5396
        %v6970 = vpack.c.bf16 %v5402, %v5398
        %v6971 = vpack.c.bf16 %v5513, %v5509
        %v6972 = vpack.c.bf16 %v5515, %v5511
        %v6973 = vpack.c.bf16 %v5626, %v5622
        %v6974 = vpack.c.bf16 %v5628, %v5624
        %v6975 = vpack.c.bf16 %v5739, %v5735
        %v6976 = vpack.c.bf16 %v5741, %v5737
        %v6977 = vpack.c.bf16 %v5852, %v5848
        %v6978 = vpack.c.bf16 %v5854, %v5850
        %v6979 = vpack.c.bf16 %v5965, %v5961
        %v6980 = vpack.c.bf16 %v5967, %v5963
        %v6981 = vpack.c.bf16 %v6078, %v6074
        %v6982 = vpack.c.bf16 %v6080, %v6076
        %v6983 = vpack.c.bf16 %v6191, %v6187
        %v6984 = vpack.c.bf16 %v6193, %v6189
        %v6985 = vpack.c.bf16 %v6304, %v6300
        %v6986 = vpack.c.bf16 %v6306, %v6302
        %v6987 = vpack.c.bf16 %v6417, %v6413
        %v6988 = vpack.c.bf16 %v6419, %v6415
        %v6989 = vpack.c.bf16 %v6530, %v6526
        %v6990 = vpack.c.bf16 %v6532, %v6528
        %v6991 = vpack.c.bf16 %v6643, %v6639
        %v6992 = vpack.c.bf16 %v6645, %v6641
        %v6993 = vpack.c.bf16 %v6756, %v6752
        %v6994 = vpack.c.bf16 %v6758, %v6754
        %v6995 = vpack.c.bf16 %v6869, %v6865
        %v6996 = vpack.c.bf16 %v6871, %v6867
        %v6997 = vpack.c.bf16 %v5184, %v5180
        %v6998 = vpack.c.bf16 %v5186, %v5182
        %v6999 = vpack.c.bf16 %v5297, %v5293
        %v7000 = vpack.c.bf16 %v5299, %v5295
        %v7001 = vpack.c.bf16 %v5410, %v5406
        %v7002 = vpack.c.bf16 %v5412, %v5408
        %v7003 = vpack.c.bf16 %v5523, %v5519
        %v7004 = vpack.c.bf16 %v5525, %v5521
        %v7005 = vpack.c.bf16 %v5636, %v5632
        %v7006 = vpack.c.bf16 %v5638, %v5634
        %v7007 = vpack.c.bf16 %v5749, %v5745
        %v7008 = vpack.c.bf16 %v5751, %v5747
        %v7009 = vpack.c.bf16 %v5862, %v5858
        %v7010 = vpack.c.bf16 %v5864, %v5860
        %v7011 = vpack.c.bf16 %v5975, %v5971
        %v7012 = vpack.c.bf16 %v5977, %v5973
        %v7013 = vpack.c.bf16 %v6088, %v6084
        %v7014 = vpack.c.bf16 %v6090, %v6086
        %v7015 = vpack.c.bf16 %v6201, %v6197
        %v7016 = vpack.c.bf16 %v6203, %v6199
        %v7017 = vpack.c.bf16 %v6314, %v6310
        %v7018 = vpack.c.bf16 %v6316, %v6312
        %v7019 = vpack.c.bf16 %v6427, %v6423
        %v7020 = vpack.c.bf16 %v6429, %v6425
        %v7021 = vpack.c.bf16 %v6540, %v6536
        %v7022 = vpack.c.bf16 %v6542, %v6538
        %v7023 = vpack.c.bf16 %v6653, %v6649
        %v7024 = vpack.c.bf16 %v6655, %v6651
        %v7025 = vpack.c.bf16 %v6766, %v6762
        %v7026 = vpack.c.bf16 %v6768, %v6764
        %v7027 = vpack.c.bf16 %v6879, %v6875
        %v7028 = vpack.c.bf16 %v6881, %v6877
        %v7029 = vpack.c.bf16 %v5194, %v5190
        %v7030 = vpack.c.bf16 %v5196, %v5192
        %v7031 = vpack.c.bf16 %v5307, %v5303
        %v7032 = vpack.c.bf16 %v5309, %v5305
        %v7033 = vpack.c.bf16 %v5420, %v5416
        %v7034 = vpack.c.bf16 %v5422, %v5418
        %v7035 = vpack.c.bf16 %v5533, %v5529
        %v7036 = vpack.c.bf16 %v5535, %v5531
        %v7037 = vpack.c.bf16 %v5646, %v5642
        %v7038 = vpack.c.bf16 %v5648, %v5644
        %v7039 = vpack.c.bf16 %v5759, %v5755
        %v7040 = vpack.c.bf16 %v5761, %v5757
        %v7041 = vpack.c.bf16 %v5872, %v5868
        %v7042 = vpack.c.bf16 %v5874, %v5870
        %v7043 = vpack.c.bf16 %v5985, %v5981
        %v7044 = vpack.c.bf16 %v5987, %v5983
        %v7045 = vpack.c.bf16 %v6098, %v6094
        %v7046 = vpack.c.bf16 %v6100, %v6096
        %v7047 = vpack.c.bf16 %v6211, %v6207
        %v7048 = vpack.c.bf16 %v6213, %v6209
        %v7049 = vpack.c.bf16 %v6324, %v6320
        %v7050 = vpack.c.bf16 %v6326, %v6322
        %v7051 = vpack.c.bf16 %v6437, %v6433
        %v7052 = vpack.c.bf16 %v6439, %v6435
        %v7053 = vpack.c.bf16 %v6550, %v6546
        %v7054 = vpack.c.bf16 %v6552, %v6548
        %v7055 = vpack.c.bf16 %v6663, %v6659
        %v7056 = vpack.c.bf16 %v6665, %v6661
        %v7057 = vpack.c.bf16 %v6776, %v6772
        %v7058 = vpack.c.bf16 %v6778, %v6774
        %v7059 = vpack.c.bf16 %v6889, %v6885
        %v7060 = vpack.c.bf16 %v6891, %v6887
        %v7061 = vpack.c.bf16 %v5204, %v5200
        %v7062 = vpack.c.bf16 %v5206, %v5202
        %v7063 = vpack.c.bf16 %v5317, %v5313
        %v7064 = vpack.c.bf16 %v5319, %v5315
        %v7065 = vpack.c.bf16 %v5430, %v5426
        %v7066 = vpack.c.bf16 %v5432, %v5428
        %v7067 = vpack.c.bf16 %v5543, %v5539
        %v7068 = vpack.c.bf16 %v5545, %v5541
        %v7069 = vpack.c.bf16 %v5656, %v5652
        %v7070 = vpack.c.bf16 %v5658, %v5654
        %v7071 = vpack.c.bf16 %v5769, %v5765
        %v7072 = vpack.c.bf16 %v5771, %v5767
        %v7073 = vpack.c.bf16 %v5882, %v5878
        %v7074 = vpack.c.bf16 %v5884, %v5880
        %v7075 = vpack.c.bf16 %v5995, %v5991
        %v7076 = vpack.c.bf16 %v5997, %v5993
        %v7077 = vpack.c.bf16 %v6108, %v6104
        %v7078 = vpack.c.bf16 %v6110, %v6106
        %v7079 = vpack.c.bf16 %v6221, %v6217
        %v7080 = vpack.c.bf16 %v6223, %v6219
        %v7081 = vpack.c.bf16 %v6334, %v6330
        %v7082 = vpack.c.bf16 %v6336, %v6332
        %v7083 = vpack.c.bf16 %v6447, %v6443
        %v7084 = vpack.c.bf16 %v6449, %v6445
        %v7085 = vpack.c.bf16 %v6560, %v6556
        %v7086 = vpack.c.bf16 %v6562, %v6558
        %v7087 = vpack.c.bf16 %v6673, %v6669
        %v7088 = vpack.c.bf16 %v6675, %v6671
        %v7089 = vpack.c.bf16 %v6786, %v6782
        %v7090 = vpack.c.bf16 %v6788, %v6784
        %v7091 = vpack.c.bf16 %v6899, %v6895
        %v7092 = vpack.c.bf16 %v6901, %v6897
        %v7093 = vpack.c.bf16 %v5214, %v5210
        %v7094 = vpack.c.bf16 %v5216, %v5212
        %v7095 = vpack.c.bf16 %v5327, %v5323
        %v7096 = vpack.c.bf16 %v5329, %v5325
        %v7097 = vpack.c.bf16 %v5440, %v5436
        %v7098 = vpack.c.bf16 %v5442, %v5438
        %v7099 = vpack.c.bf16 %v5553, %v5549
        %v7100 = vpack.c.bf16 %v5555, %v5551
        %v7101 = vpack.c.bf16 %v5666, %v5662
        %v7102 = vpack.c.bf16 %v5668, %v5664
        %v7103 = vpack.c.bf16 %v5779, %v5775
        %v7104 = vpack.c.bf16 %v5781, %v5777
        %v7105 = vpack.c.bf16 %v5892, %v5888
        %v7106 = vpack.c.bf16 %v5894, %v5890
        %v7107 = vpack.c.bf16 %v6005, %v6001
        %v7108 = vpack.c.bf16 %v6007, %v6003
        %v7109 = vpack.c.bf16 %v6118, %v6114
        %v7110 = vpack.c.bf16 %v6120, %v6116
        %v7111 = vpack.c.bf16 %v6231, %v6227
        %v7112 = vpack.c.bf16 %v6233, %v6229
        %v7113 = vpack.c.bf16 %v6344, %v6340
        %v7114 = vpack.c.bf16 %v6346, %v6342
        %v7115 = vpack.c.bf16 %v6457, %v6453
        %v7116 = vpack.c.bf16 %v6459, %v6455
        %v7117 = vpack.c.bf16 %v6570, %v6566
        %v7118 = vpack.c.bf16 %v6572, %v6568
        %v7119 = vpack.c.bf16 %v6683, %v6679
        %v7120 = vpack.c.bf16 %v6685, %v6681
        %v7121 = vpack.c.bf16 %v6796, %v6792
        %v7122 = vpack.c.bf16 %v6798, %v6794
        %v7123 = vpack.c.bf16 %v6909, %v6905
        %v7124 = vpack.c.bf16 %v6911, %v6907
        %v7125 = vpack.c.bf16 %v5224, %v5220
        %v7126 = vpack.c.bf16 %v5226, %v5222
        %v7127 = vpack.c.bf16 %v5337, %v5333
        %v7128 = vpack.c.bf16 %v5339, %v5335
        %v7129 = vpack.c.bf16 %v5450, %v5446
        %v7130 = vpack.c.bf16 %v5452, %v5448
        %v7131 = vpack.c.bf16 %v5563, %v5559
        %v7132 = vpack.c.bf16 %v5565, %v5561
        %v7133 = vpack.c.bf16 %v5676, %v5672
        %v7134 = vpack.c.bf16 %v5678, %v5674
        %v7135 = vpack.c.bf16 %v5789, %v5785
        %v7136 = vpack.c.bf16 %v5791, %v5787
        %v7137 = vpack.c.bf16 %v5902, %v5898
        %v7138 = vpack.c.bf16 %v5904, %v5900
        %v7139 = vpack.c.bf16 %v6015, %v6011
        %v7140 = vpack.c.bf16 %v6017, %v6013
        %v7141 = vpack.c.bf16 %v6128, %v6124
        %v7142 = vpack.c.bf16 %v6130, %v6126
        %v7143 = vpack.c.bf16 %v6241, %v6237
        %v7144 = vpack.c.bf16 %v6243, %v6239
        %v7145 = vpack.c.bf16 %v6354, %v6350
        %v7146 = vpack.c.bf16 %v6356, %v6352
        %v7147 = vpack.c.bf16 %v6467, %v6463
        %v7148 = vpack.c.bf16 %v6469, %v6465
        %v7149 = vpack.c.bf16 %v6580, %v6576
        %v7150 = vpack.c.bf16 %v6582, %v6578
        %v7151 = vpack.c.bf16 %v6693, %v6689
        %v7152 = vpack.c.bf16 %v6695, %v6691
        %v7153 = vpack.c.bf16 %v6806, %v6802
        %v7154 = vpack.c.bf16 %v6808, %v6804
        %v7155 = vpack.c.bf16 %v6919, %v6915
        %v7156 = vpack.c.bf16 %v6921, %v6917
        %v7157 = vpack.c.bf16 %v5234, %v5230
        %v7158 = vpack.c.bf16 %v5236, %v5232
        %v7159 = vpack.c.bf16 %v5347, %v5343
        %v7160 = vpack.c.bf16 %v5349, %v5345
        %v7161 = vpack.c.bf16 %v5460, %v5456
        %v7162 = vpack.c.bf16 %v5462, %v5458
        %v7163 = vpack.c.bf16 %v5573, %v5569
        %v7164 = vpack.c.bf16 %v5575, %v5571
        %v7165 = vpack.c.bf16 %v5686, %v5682
        %v7166 = vpack.c.bf16 %v5688, %v5684
        %v7167 = vpack.c.bf16 %v5799, %v5795
        %v7168 = vpack.c.bf16 %v5801, %v5797
        %v7169 = vpack.c.bf16 %v5912, %v5908
        %v7170 = vpack.c.bf16 %v5914, %v5910
        %v7171 = vpack.c.bf16 %v6025, %v6021
        %v7172 = vpack.c.bf16 %v6027, %v6023
        %v7173 = vpack.c.bf16 %v6138, %v6134
        %v7174 = vpack.c.bf16 %v6140, %v6136
        %v7175 = vpack.c.bf16 %v6251, %v6247
        %v7176 = vpack.c.bf16 %v6253, %v6249
        %v7177 = vpack.c.bf16 %v6364, %v6360
        %v7178 = vpack.c.bf16 %v6366, %v6362
        %v7179 = vpack.c.bf16 %v6477, %v6473
        %v7180 = vpack.c.bf16 %v6479, %v6475
        %v7181 = vpack.c.bf16 %v6590, %v6586
        %v7182 = vpack.c.bf16 %v6592, %v6588
        %v7183 = vpack.c.bf16 %v6703, %v6699
        %v7184 = vpack.c.bf16 %v6705, %v6701
        %v7185 = vpack.c.bf16 %v6816, %v6812
        %v7186 = vpack.c.bf16 %v6818, %v6814
        %v7187 = vpack.c.bf16 %v6929, %v6925
        %v7188 = vpack.c.bf16 %v6931, %v6927
        %v7189 = vmax.bf16 %v6933, 0
        %v7190 = vmax.bf16 %v6934, 0
        %v7191 = vmax.bf16 %v6935, 0
        %v7192 = vmax.bf16 %v6936, 0
        %v7193 = vmax.bf16 %v6937, 0
        %v7194 = vmax.bf16 %v6938, 0
        %v7195 = vmax.bf16 %v6939, 0
        %v7196 = vmax.bf16 %v6940, 0
        %v7197 = vmax.bf16 %v6941, 0
        %v7198 = vmax.bf16 %v6942, 0
        %v7199 = vmax.bf16 %v6943, 0
        %v7200 = vmax.bf16 %v6944, 0
        %v7201 = vmax.bf16 %v6945, 0
        %v7202 = vmax.bf16 %v6946, 0
        %v7203 = vmax.bf16 %v6947, 0
        %v7204 = vmax.bf16 %v6948, 0
        %v7205 = vmax.bf16 %v6949, 0
        %v7206 = vmax.bf16 %v6950, 0
        %v7207 = vmax.bf16 %v6951, 0
        %v7208 = vmax.bf16 %v6952, 0
        %v7209 = vmax.bf16 %v6953, 0
        %v7210 = vmax.bf16 %v6954, 0
        %v7211 = vmax.bf16 %v6955, 0
        %v7212 = vmax.bf16 %v6956, 0
        %v7213 = vmax.bf16 %v6957, 0
        %v7214 = vmax.bf16 %v6958, 0
        %v7215 = vmax.bf16 %v6959, 0
        %v7216 = vmax.bf16 %v6960, 0
        %v7217 = vmax.bf16 %v6961, 0
        %v7218 = vmax.bf16 %v6962, 0
        %v7219 = vmax.bf16 %v6963, 0
        %v7220 = vmax.bf16 %v6964, 0
        %v7221 = vmax.bf16 %v6965, 0
        %v7222 = vmax.bf16 %v6966, 0
        %v7223 = vmax.bf16 %v6967, 0
        %v7224 = vmax.bf16 %v6968, 0
        %v7225 = vmax.bf16 %v6969, 0
        %v7226 = vmax.bf16 %v6970, 0
        %v7227 = vmax.bf16 %v6971, 0
        %v7228 = vmax.bf16 %v6972, 0
        %v7229 = vmax.bf16 %v6973, 0
        %v7230 = vmax.bf16 %v6974, 0
        %v7231 = vmax.bf16 %v6975, 0
        %v7232 = vmax.bf16 %v6976, 0
        %v7233 = vmax.bf16 %v6977, 0
        %v7234 = vmax.bf16 %v6978, 0
        %v7235 = vmax.bf16 %v6979, 0
        %v7236 = vmax.bf16 %v6980, 0
        %v7237 = vmax.bf16 %v6981, 0
        %v7238 = vmax.bf16 %v6982, 0
        %v7239 = vmax.bf16 %v6983, 0
        %v7240 = vmax.bf16 %v6984, 0
        %v7241 = vmax.bf16 %v6985, 0
        %v7242 = vmax.bf16 %v6986, 0
        %v7243 = vmax.bf16 %v6987, 0
        %v7244 = vmax.bf16 %v6988, 0
        %v7245 = vmax.bf16 %v6989, 0
        %v7246 = vmax.bf16 %v6990, 0
        %v7247 = vmax.bf16 %v6991, 0
        %v7248 = vmax.bf16 %v6992, 0
        %v7249 = vmax.bf16 %v6993, 0
        %v7250 = vmax.bf16 %v6994, 0
        %v7251 = vmax.bf16 %v6995, 0
        %v7252 = vmax.bf16 %v6996, 0
        %v7253 = vmax.bf16 %v6997, 0
        %v7254 = vmax.bf16 %v6998, 0
        %v7255 = vmax.bf16 %v6999, 0
        %v7256 = vmax.bf16 %v7000, 0
        %v7257 = vmax.bf16 %v7001, 0
        %v7258 = vmax.bf16 %v7002, 0
        %v7259 = vmax.bf16 %v7003, 0
        %v7260 = vmax.bf16 %v7004, 0
        %v7261 = vmax.bf16 %v7005, 0
        %v7262 = vmax.bf16 %v7006, 0
        %v7263 = vmax.bf16 %v7007, 0
        %v7264 = vmax.bf16 %v7008, 0
        %v7265 = vmax.bf16 %v7009, 0
        %v7266 = vmax.bf16 %v7010, 0
        %v7267 = vmax.bf16 %v7011, 0
        %v7268 = vmax.bf16 %v7012, 0
        %v7269 = vmax.bf16 %v7013, 0
        %v7270 = vmax.bf16 %v7014, 0
        %v7271 = vmax.bf16 %v7015, 0
        %v7272 = vmax.bf16 %v7016, 0
        %v7273 = vmax.bf16 %v7017, 0
        %v7274 = vmax.bf16 %v7018, 0
        %v7275 = vmax.bf16 %v7019, 0
        %v7276 = vmax.bf16 %v7020, 0
        %v7277 = vmax.bf16 %v7021, 0
        %v7278 = vmax.bf16 %v7022, 0
        %v7279 = vmax.bf16 %v7023, 0
        %v7280 = vmax.bf16 %v7024, 0
        %v7281 = vmax.bf16 %v7025, 0
        %v7282 = vmax.bf16 %v7026, 0
        %v7283 = vmax.bf16 %v7027, 0
        %v7284 = vmax.bf16 %v7028, 0
        %v7285 = vmax.bf16 %v7029, 0
        %v7286 = vmax.bf16 %v7030, 0
        %v7287 = vmax.bf16 %v7031, 0
        %v7288 = vmax.bf16 %v7032, 0
        %v7289 = vmax.bf16 %v7033, 0
        %v7290 = vmax.bf16 %v7034, 0
        %v7291 = vmax.bf16 %v7035, 0
        %v7292 = vmax.bf16 %v7036, 0
        %v7293 = vmax.bf16 %v7037, 0
        %v7294 = vmax.bf16 %v7038, 0
        %v7295 = vmax.bf16 %v7039, 0
        %v7296 = vmax.bf16 %v7040, 0
        %v7297 = vmax.bf16 %v7041, 0
        %v7298 = vmax.bf16 %v7042, 0
        %v7299 = vmax.bf16 %v7043, 0
        %v7300 = vmax.bf16 %v7044, 0
        %v7301 = vmax.bf16 %v7045, 0
        %v7302 = vmax.bf16 %v7046, 0
        %v7303 = vmax.bf16 %v7047, 0
        %v7304 = vmax.bf16 %v7048, 0
        %v7305 = vmax.bf16 %v7049, 0
        %v7306 = vmax.bf16 %v7050, 0
        %v7307 = vmax.bf16 %v7051, 0
        %v7308 = vmax.bf16 %v7052, 0
        %v7309 = vmax.bf16 %v7053, 0
        %v7310 = vmax.bf16 %v7054, 0
        %v7311 = vmax.bf16 %v7055, 0
        %v7312 = vmax.bf16 %v7056, 0
        %v7313 = vmax.bf16 %v7057, 0
        %v7314 = vmax.bf16 %v7058, 0
        %v7315 = vmax.bf16 %v7059, 0
        %v7316 = vmax.bf16 %v7060, 0
        %v7317 = vmax.bf16 %v7061, 0
        %v7318 = vmax.bf16 %v7062, 0
        %v7319 = vmax.bf16 %v7063, 0
        %v7320 = vmax.bf16 %v7064, 0
        %v7321 = vmax.bf16 %v7065, 0
        %v7322 = vmax.bf16 %v7066, 0
        %v7323 = vmax.bf16 %v7067, 0
        %v7324 = vmax.bf16 %v7068, 0
        %v7325 = vmax.bf16 %v7069, 0
        %v7326 = vmax.bf16 %v7070, 0
        %v7327 = vmax.bf16 %v7071, 0
        %v7328 = vmax.bf16 %v7072, 0
        %v7329 = vmax.bf16 %v7073, 0
        %v7330 = vmax.bf16 %v7074, 0
        %v7331 = vmax.bf16 %v7075, 0
        %v7332 = vmax.bf16 %v7076, 0
        %v7333 = vmax.bf16 %v7077, 0
        %v7334 = vmax.bf16 %v7078, 0
        %v7335 = vmax.bf16 %v7079, 0
        %v7336 = vmax.bf16 %v7080, 0
        %v7337 = vmax.bf16 %v7081, 0
        %v7338 = vmax.bf16 %v7082, 0
        %v7339 = vmax.bf16 %v7083, 0
        %v7340 = vmax.bf16 %v7084, 0
        %v7341 = vmax.bf16 %v7085, 0
        %v7342 = vmax.bf16 %v7086, 0
        %v7343 = vmax.bf16 %v7087, 0
        %v7344 = vmax.bf16 %v7088, 0
        %v7345 = vmax.bf16 %v7089, 0
        %v7346 = vmax.bf16 %v7090, 0
        %v7347 = vmax.bf16 %v7091, 0
        %v7348 = vmax.bf16 %v7092, 0
        %v7349 = vmax.bf16 %v7093, 0
        %v7350 = vmax.bf16 %v7094, 0
        %v7351 = vmax.bf16 %v7095, 0
        %v7352 = vmax.bf16 %v7096, 0
        %v7353 = vmax.bf16 %v7097, 0
        %v7354 = vmax.bf16 %v7098, 0
        %v7355 = vmax.bf16 %v7099, 0
        %v7356 = vmax.bf16 %v7100, 0
        %v7357 = vmax.bf16 %v7101, 0
        %v7358 = vmax.bf16 %v7102, 0
        %v7359 = vmax.bf16 %v7103, 0
        %v7360 = vmax.bf16 %v7104, 0
        %v7361 = vmax.bf16 %v7105, 0
        %v7362 = vmax.bf16 %v7106, 0
        %v7363 = vmax.bf16 %v7107, 0
        %v7364 = vmax.bf16 %v7108, 0
        %v7365 = vmax.bf16 %v7109, 0
        %v7366 = vmax.bf16 %v7110, 0
        %v7367 = vmax.bf16 %v7111, 0
        %v7368 = vmax.bf16 %v7112, 0
        %v7369 = vmax.bf16 %v7113, 0
        %v7370 = vmax.bf16 %v7114, 0
        %v7371 = vmax.bf16 %v7115, 0
        %v7372 = vmax.bf16 %v7116, 0
        %v7373 = vmax.bf16 %v7117, 0
        %v7374 = vmax.bf16 %v7118, 0
        %v7375 = vmax.bf16 %v7119, 0
        %v7376 = vmax.bf16 %v7120, 0
        %v7377 = vmax.bf16 %v7121, 0
        %v7378 = vmax.bf16 %v7122, 0
        %v7379 = vmax.bf16 %v7123, 0
        %v7380 = vmax.bf16 %v7124, 0
        %v7381 = vmax.bf16 %v7125, 0
        %v7382 = vmax.bf16 %v7126, 0
        %v7383 = vmax.bf16 %v7127, 0
        %v7384 = vmax.bf16 %v7128, 0
        %v7385 = vmax.bf16 %v7129, 0
        %v7386 = vmax.bf16 %v7130, 0
        %v7387 = vmax.bf16 %v7131, 0
        %v7388 = vmax.bf16 %v7132, 0
        %v7389 = vmax.bf16 %v7133, 0
        %v7390 = vmax.bf16 %v7134, 0
        %v7391 = vmax.bf16 %v7135, 0
        %v7392 = vmax.bf16 %v7136, 0
        %v7393 = vmax.bf16 %v7137, 0
        %v7394 = vmax.bf16 %v7138, 0
        %v7395 = vmax.bf16 %v7139, 0
        %v7396 = vmax.bf16 %v7140, 0
        %v7397 = vmax.bf16 %v7141, 0
        %v7398 = vmax.bf16 %v7142, 0
        %v7399 = vmax.bf16 %v7143, 0
        %v7400 = vmax.bf16 %v7144, 0
        %v7401 = vmax.bf16 %v7145, 0
        %v7402 = vmax.bf16 %v7146, 0
        %v7403 = vmax.bf16 %v7147, 0
        %v7404 = vmax.bf16 %v7148, 0
        %v7405 = vmax.bf16 %v7149, 0
        %v7406 = vmax.bf16 %v7150, 0
        %v7407 = vmax.bf16 %v7151, 0
        %v7408 = vmax.bf16 %v7152, 0
        %v7409 = vmax.bf16 %v7153, 0
        %v7410 = vmax.bf16 %v7154, 0
        %v7411 = vmax.bf16 %v7155, 0
        %v7412 = vmax.bf16 %v7156, 0
        %v7413 = vmax.bf16 %v7157, 0
        %v7414 = vmax.bf16 %v7158, 0
        %v7415 = vmax.bf16 %v7159, 0
        %v7416 = vmax.bf16 %v7160, 0
        %v7417 = vmax.bf16 %v7161, 0
        %v7418 = vmax.bf16 %v7162, 0
        %v7419 = vmax.bf16 %v7163, 0
        %v7420 = vmax.bf16 %v7164, 0
        %v7421 = vmax.bf16 %v7165, 0
        %v7422 = vmax.bf16 %v7166, 0
        %v7423 = vmax.bf16 %v7167, 0
        %v7424 = vmax.bf16 %v7168, 0
        %v7425 = vmax.bf16 %v7169, 0
        %v7426 = vmax.bf16 %v7170, 0
        %v7427 = vmax.bf16 %v7171, 0
        %v7428 = vmax.bf16 %v7172, 0
        %v7429 = vmax.bf16 %v7173, 0
        %v7430 = vmax.bf16 %v7174, 0
        %v7431 = vmax.bf16 %v7175, 0
        %v7432 = vmax.bf16 %v7176, 0
        %v7433 = vmax.bf16 %v7177, 0
        %v7434 = vmax.bf16 %v7178, 0
        %v7435 = vmax.bf16 %v7179, 0
        %v7436 = vmax.bf16 %v7180, 0
        %v7437 = vmax.bf16 %v7181, 0
        %v7438 = vmax.bf16 %v7182, 0
        %v7439 = vmax.bf16 %v7183, 0
        %v7440 = vmax.bf16 %v7184, 0
        %v7441 = vmax.bf16 %v7185, 0
        %v7442 = vmax.bf16 %v7186, 0
        %v7443 = vmax.bf16 %v7187, 0
        %v7444 = vmax.bf16 %v7188, 0
        %v7445 = vld [vmem:[%s3] sm:$0xf]
        %v7446 = vld [vmem:[%s3 + $0x4] sm:$0xf]
        %v7447 = vld [vmem:[%s3 + $0x8] sm:$0xf]
        %v7448 = vld [vmem:[%s3 + $0xc] sm:$0xf]
        %v7449 = vld [vmem:[%s3 + $0x10] sm:$0xf]
        %v7450 = vld [vmem:[%s3 + $0x14] sm:$0xf]
        %v7451 = vld [vmem:[%s3 + $0x18] sm:$0xf]
        %v7452 = vld [vmem:[%s3 + $0x1c] sm:$0xf]
        %v7461 = vunpack.c.l.b16 %v7445
        %v7462 = vunpack.c.l.b16 %v7446
        %v7463 = vunpack.c.l.b16 %v7447
        %v7464 = vunpack.c.l.b16 %v7448
        %v7465 = vunpack.c.l.b16 %v7449
        %v7466 = vunpack.c.l.b16 %v7450
        %v7467 = vunpack.c.l.b16 %v7451
        %v7468 = vunpack.c.l.b16 %v7452
        %v7469 = vpack.c.b16 %v7462, %v7461
        %v7470 = vpack.c.b16 %v7464, %v7463
        %v7471 = vpack.c.b16 %v7466, %v7465
        %v7472 = vpack.c.b16 %v7468, %v7467
        %7477 = vmatprep.subr.bf16.mxu0 %v7190
        %7478 = vmatpush1.bf16.msra.mxu0 %v7189
        %7479 = vmatprep.subr.bf16.mxu0 %v7222
        %7480 = vmatpush1.bf16.msra.mxu0 %v7221
        %7481 = vmatprep.subr.bf16.mxu0 %v7254
        %7482 = vmatpush1.bf16.msra.mxu0 %v7253
        %7483 = vmatprep.subr.bf16.mxu0 %v7286
        %7484 = vmatpush1.bf16.msra.mxu0 %v7285
        %7485 = vmatprep.subr.bf16.mxu0 %v7318
        %7486 = vmatpush1.bf16.msra.mxu0 %v7317
        %7487 = vmatprep.subr.bf16.mxu0 %v7350
        %7488 = vmatpush1.bf16.msra.mxu0 %v7349
        %7489 = vmatprep.subr.bf16.mxu0 %v7382
        %7490 = vmatpush1.bf16.msra.mxu0 %v7381
        %7491 = vmatprep.subr.bf16.mxu0 %v7414
        %7492 = vmatpush1.bf16.msra.mxu0 %v7413
        %7493 = vmatprep.subr.bf16.mxu0 0
        %7494 = vmatpush1.bf16.msra.mxu0 0
        %7495 = vmatprep.subr.bf16.mxu0 0
        %7496 = vmatpush1.bf16.msra.mxu0 0
        %7497 = vmatprep.subr.bf16.mxu0 0
        %7498 = vmatpush1.bf16.msra.mxu0 0
        %7499 = vmatprep.subr.bf16.mxu0 0
        %7500 = vmatpush1.bf16.msra.mxu0 0
        %7501 = vmatprep.subr.bf16.mxu0 0
        %7502 = vmatpush1.bf16.msra.mxu0 0
        %7503 = vmatprep.subr.bf16.mxu0 0
        %7504 = vmatpush1.bf16.msra.mxu0 0
        %7505 = vmatprep.subr.bf16.mxu0 0
        %7506 = vmatpush1.bf16.msra.mxu0 0
        %7507 = vmatprep.subr.bf16.mxu0 0
        %7508 = vmatpush1.bf16.msra.mxu0 0
        %7509 = vmatprep.mubr.bf16.mxu0 0
        %7510 = vmatmul.mubr.bf16.gmra.mrb[0].mxu0 %v7469
        %v7511 = vpop.f32.mrb[0].mxu0
        %v7512 = vadd.f32 0.0, %v7511
        %v7513 = vpop.f32.mrb[0].mxu0
        %v7514 = vadd.f32 0.0, %v7513
        %v7515 = vpop.f32.mrb[0].mxu0
        %v7516 = vadd.f32 0.0, %v7515
        %v7517 = vpop.f32.mrb[0].mxu0
        %v7518 = vadd.f32 0.0, %v7517
        %7519 = vmatprep.mubr.bf16.mxu0 0
        %7520 = vmatmul.mubr.bf16.gmra.mrb[0].mxu0 %v7470
        %v7521 = vpop.f32.mrb[0].mxu0
        %v7522 = vadd.f32 0.0, %v7521
        %v7523 = vpop.f32.mrb[0].mxu0
        %v7524 = vadd.f32 0.0, %v7523
        %v7525 = vpop.f32.mrb[0].mxu0
        %v7526 = vadd.f32 0.0, %v7525
        %v7527 = vpop.f32.mrb[0].mxu0
        %v7528 = vadd.f32 0.0, %v7527
        %7529 = vmatprep.mubr.bf16.mxu0 0
        %7530 = vmatmul.mubr.bf16.gmra.mrb[0].mxu0 %v7471
        %v7531 = vpop.f32.mrb[0].mxu0
        %v7532 = vadd.f32 0.0, %v7531
        %v7533 = vpop.f32.mrb[0].mxu0
        %v7534 = vadd.f32 0.0, %v7533
        %v7535 = vpop.f32.mrb[0].mxu0
        %v7536 = vadd.f32 0.0, %v7535
        %v7537 = vpop.f32.mrb[0].mxu0
        %v7538 = vadd.f32 0.0, %v7537
        %7539 = vmatprep.mubr.bf16.mxu0 0
        %7540 = vmatmul.mubr.bf16.gmra.mrb[0].mxu0 %v7472
        %v7541 = vpop.f32.mrb[0].mxu0
        %v7542 = vadd.f32 0.0, %v7541
        %v7543 = vpop.f32.mrb[0].mxu0
        %v7544 = vadd.f32 0.0, %v7543
        %v7545 = vpop.f32.mrb[0].mxu0
        %v7546 = vadd.f32 0.0, %v7545
        %v7547 = vpop.f32.mrb[0].mxu0
        %v7548 = vadd.f32 0.0, %v7547
        %7549 = vdwg.mxu0
        %7550 = vmatprep.subr.bf16.mxu0 %v7192
        %7551 = vmatpush1.bf16.msra.mxu0 %v7191
        %7552 = vmatprep.subr.bf16.mxu0 %v7224
        %7553 = vmatpush1.bf16.msra.mxu0 %v7223
        %7554 = vmatprep.subr.bf16.mxu0 %v7256
        %7555 = vmatpush1.bf16.msra.mxu0 %v7255
        %7556 = vmatprep.subr.bf16.mxu0 %v7288
        %7557 = vmatpush1.bf16.msra.mxu0 %v7287
        %7558 = vmatprep.subr.bf16.mxu0 %v7320
        %7559 = vmatpush1.bf16.msra.mxu0 %v7319
        %7560 = vmatprep.subr.bf16.mxu0 %v7352
        %7561 = vmatpush1.bf16.msra.mxu0 %v7351
        %7562 = vmatprep.subr.bf16.mxu0 %v7384
        %7563 = vmatpush1.bf16.msra.mxu0 %v7383
        %7564 = vmatprep.subr.bf16.mxu0 %v7416
        %7565 = vmatpush1.bf16.msra.mxu0 %v7415
        %7566 = vmatprep.subr.bf16.mxu0 0
        %7567 = vmatpush1.bf16.msra.mxu0 0
        %7568 = vmatprep.subr.bf16.mxu0 0
        %7569 = vmatpush1.bf16.msra.mxu0 0
        %7570 = vmatprep.subr.bf16.mxu0 0
        %7571 = vmatpush1.bf16.msra.mxu0 0
        %7572 = vmatprep.subr.bf16.mxu0 0
        %7573 = vmatpush1.bf16.msra.mxu0 0
        %7574 = vmatprep.subr.bf16.mxu0 0
        %7575 = vmatpush1.bf16.msra.mxu0 0
        %7576 = vmatprep.subr.bf16.mxu0 0
        %7577 = vmatpush1.bf16.msra.mxu0 0
        %7578 = vmatprep.subr.bf16.mxu0 0
        %7579 = vmatpush1.bf16.msra.mxu0 0
        %7580 = vmatprep.subr.bf16.mxu0 0
        %7581 = vmatpush1.bf16.msra.mxu0 0
        %7582 = vmatprep.mubr.bf16.mxu0 0
        %7583 = vmatmul.mubr.bf16.gmra.mrb[0].mxu0 %v7469
        %v7584 = vpop.f32.mrb[0].mxu0
        %v7585 = vadd.f32 0.0, %v7584
        %v7586 = vpop.f32.mrb[0].mxu0
        %v7587 = vadd.f32 0.0, %v7586
        %v7588 = vpop.f32.mrb[0].mxu0
        %v7589 = vadd.f32 0.0, %v7588
        %v7590 = vpop.f32.mrb[0].mxu0
        %v7591 = vadd.f32 0.0, %v7590
        %7592 = vmatprep.mubr.bf16.mxu0 0
        %7593 = vmatmul.mubr.bf16.gmra.mrb[0].mxu0 %v7470
        %v7594 = vpop.f32.mrb[0].mxu0
        %v7595 = vadd.f32 0.0, %v7594
        %v7596 = vpop.f32.mrb[0].mxu0
        %v7597 = vadd.f32 0.0, %v7596
        %v7598 = vpop.f32.mrb[0].mxu0
        %v7599 = vadd.f32 0.0, %v7598
        %v7600 = vpop.f32.mrb[0].mxu0
        %v7601 = vadd.f32 0.0, %v7600
        %7602 = vmatprep.mubr.bf16.mxu0 0
        %7603 = vmatmul.mubr.bf16.gmra.mrb[0].mxu0 %v7471
        %v7604 = vpop.f32.mrb[0].mxu0
        %v7605 = vadd.f32 0.0, %v7604
        %v7606 = vpop.f32.mrb[0].mxu0
        %v7607 = vadd.f32 0.0, %v7606
        %v7608 = vpop.f32.mrb[0].mxu0
        %v7609 = vadd.f32 0.0, %v7608
        %v7610 = vpop.f32.mrb[0].mxu0
        %v7611 = vadd.f32 0.0, %v7610
        %7612 = vmatprep.mubr.bf16.mxu0 0
        %7613 = vmatmul.mubr.bf16.gmra.mrb[0].mxu0 %v7472
        %v7614 = vpop.f32.mrb[0].mxu0
        %v7615 = vadd.f32 0.0, %v7614
        %v7616 = vpop.f32.mrb[0].mxu0
        %v7617 = vadd.f32 0.0, %v7616
        %v7618 = vpop.f32.mrb[0].mxu0
        %v7619 = vadd.f32 0.0, %v7618
        %v7620 = vpop.f32.mrb[0].mxu0
        %v7621 = vadd.f32 0.0, %v7620
        %7622 = vdwg.mxu0
        %7623 = vmatprep.subr.bf16.mxu0 %v7194
        %7624 = vmatpush1.bf16.msra.mxu0 %v7193
        %7625 = vmatprep.subr.bf16.mxu0 %v7226
        %7626 = vmatpush1.bf16.msra.mxu0 %v7225
        %7627 = vmatprep.subr.bf16.mxu0 %v7258
        %7628 = vmatpush1.bf16.msra.mxu0 %v7257
        %7629 = vmatprep.subr.bf16.mxu0 %v7290
        %7630 = vmatpush1.bf16.msra.mxu0 %v7289
        %7631 = vmatprep.subr.bf16.mxu0 %v7322
        %7632 = vmatpush1.bf16.msra.mxu0 %v7321
        %7633 = vmatprep.subr.bf16.mxu0 %v7354
        %7634 = vmatpush1.bf16.msra.mxu0 %v7353
        %7635 = vmatprep.subr.bf16.mxu0 %v7386
        %7636 = vmatpush1.bf16.msra.mxu0 %v7385
        %7637 = vmatprep.subr.bf16.mxu0 %v7418
        %7638 = vmatpush1.bf16.msra.mxu0 %v7417
        %7639 = vmatprep.subr.bf16.mxu0 0
        %7640 = vmatpush1.bf16.msra.mxu0 0
        %7641 = vmatprep.subr.bf16.mxu0 0
        %7642 = vmatpush1.bf16.msra.mxu0 0
        %7643 = vmatprep.subr.bf16.mxu0 0
        %7644 = vmatpush1.bf16.msra.mxu0 0
        %7645 = vmatprep.subr.bf16.mxu0 0
        %7646 = vmatpush1.bf16.msra.mxu0 0
        %7647 = vmatprep.subr.bf16.mxu0 0
        %7648 = vmatpush1.bf16.msra.mxu0 0
        %7649 = vmatprep.subr.bf16.mxu0 0
        %7650 = vmatpush1.bf16.msra.mxu0 0
        %7651 = vmatprep.subr.bf16.mxu0 0
        %7652 = vmatpush1.bf16.msra.mxu0 0
        %7653 = vmatprep.subr.bf16.mxu0 0
        %7654 = vmatpush1.bf16.msra.mxu0 0
        %7655 = vmatprep.mubr.bf16.mxu0 0
        %7656 = vmatmul.mubr.bf16.gmra.mrb[0].mxu0 %v7469
        %v7657 = vpop.f32.mrb[0].mxu0
        %v7658 = vadd.f32 0.0, %v7657
        %v7659 = vpop.f32.mrb[0].mxu0
        %v7660 = vadd.f32 0.0, %v7659
        %v7661 = vpop.f32.mrb[0].mxu0
        %v7662 = vadd.f32 0.0, %v7661
        %v7663 = vpop.f32.mrb[0].mxu0
        %v7664 = vadd.f32 0.0, %v7663
        %7665 = vmatprep.mubr.bf16.mxu0 0
        %7666 = vmatmul.mubr.bf16.gmra.mrb[0].mxu0 %v7470
        %v7667 = vpop.f32.mrb[0].mxu0
        %v7668 = vadd.f32 0.0, %v7667
        %v7669 = vpop.f32.mrb[0].mxu0
        %v7670 = vadd.f32 0.0, %v7669
        %v7671 = vpop.f32.mrb[0].mxu0
        %v7672 = vadd.f32 0.0, %v7671
        %v7673 = vpop.f32.mrb[0].mxu0
        %v7674 = vadd.f32 0.0, %v7673
        %7675 = vmatprep.mubr.bf16.mxu0 0
        %7676 = vmatmul.mubr.bf16.gmra.mrb[0].mxu0 %v7471
        %v7677 = vpop.f32.mrb[0].mxu0
        %v7678 = vadd.f32 0.0, %v7677
        %v7679 = vpop.f32.mrb[0].mxu0
        %v7680 = vadd.f32 0.0, %v7679
        %v7681 = vpop.f32.mrb[0].mxu0
        %v7682 = vadd.f32 0.0, %v7681
        %v7683 = vpop.f32.mrb[0].mxu0
        %v7684 = vadd.f32 0.0, %v7683
        %7685 = vmatprep.mubr.bf16.mxu0 0
        %7686 = vmatmul.mubr.bf16.gmra.mrb[0].mxu0 %v7472
        %v7687 = vpop.f32.mrb[0].mxu0
        %v7688 = vadd.f32 0.0, %v7687
        %v7689 = vpop.f32.mrb[0].mxu0
        %v7690 = vadd.f32 0.0, %v7689
        %v7691 = vpop.f32.mrb[0].mxu0
        %v7692 = vadd.f32 0.0, %v7691
        %v7693 = vpop.f32.mrb[0].mxu0
        %v7694 = vadd.f32 0.0, %v7693
        %7695 = vdwg.mxu0
        %7696 = vmatprep.subr.bf16.mxu0 %v7196
        %7697 = vmatpush1.bf16.msra.mxu0 %v7195
        %7698 = vmatprep.subr.bf16.mxu0 %v7228
        %7699 = vmatpush1.bf16.msra.mxu0 %v7227
        %7700 = vmatprep.subr.bf16.mxu0 %v7260
        %7701 = vmatpush1.bf16.msra.mxu0 %v7259
        %7702 = vmatprep.subr.bf16.mxu0 %v7292
        %7703 = vmatpush1.bf16.msra.mxu0 %v7291
        %7704 = vmatprep.subr.bf16.mxu0 %v7324
        %7705 = vmatpush1.bf16.msra.mxu0 %v7323
        %7706 = vmatprep.subr.bf16.mxu0 %v7356
        %7707 = vmatpush1.bf16.msra.mxu0 %v7355
        %7708 = vmatprep.subr.bf16.mxu0 %v7388
        %7709 = vmatpush1.bf16.msra.mxu0 %v7387
        %7710 = vmatprep.subr.bf16.mxu0 %v7420
        %7711 = vmatpush1.bf16.msra.mxu0 %v7419
        %7712 = vmatprep.subr.bf16.mxu0 0
        %7713 = vmatpush1.bf16.msra.mxu0 0
        %7714 = vmatprep.subr.bf16.mxu0 0
        %7715 = vmatpush1.bf16.msra.mxu0 0
        %7716 = vmatprep.subr.bf16.mxu0 0
        %7717 = vmatpush1.bf16.msra.mxu0 0
        %7718 = vmatprep.subr.bf16.mxu0 0
        %7719 = vmatpush1.bf16.msra.mxu0 0
        %7720 = vmatprep.subr.bf16.mxu0 0
        %7721 = vmatpush1.bf16.msra.mxu0 0
        %7722 = vmatprep.subr.bf16.mxu0 0
        %7723 = vmatpush1.bf16.msra.mxu0 0
        %7724 = vmatprep.subr.bf16.mxu0 0
        %7725 = vmatpush1.bf16.msra.mxu0 0
        %7726 = vmatprep.subr.bf16.mxu0 0
        %7727 = vmatpush1.bf16.msra.mxu0 0
        %7728 = vmatprep.mubr.bf16.mxu0 0
        %7729 = vmatmul.mubr.bf16.gmra.mrb[0].mxu0 %v7469
        %v7730 = vpop.f32.mrb[0].mxu0
        %v7731 = vadd.f32 0.0, %v7730
        %v7732 = vpop.f32.mrb[0].mxu0
        %v7733 = vadd.f32 0.0, %v7732
        %v7734 = vpop.f32.mrb[0].mxu0
        %v7735 = vadd.f32 0.0, %v7734
        %v7736 = vpop.f32.mrb[0].mxu0
        %v7737 = vadd.f32 0.0, %v7736
        %7738 = vmatprep.mubr.bf16.mxu0 0
        %7739 = vmatmul.mubr.bf16.gmra.mrb[0].mxu0 %v7470
        %v7740 = vpop.f32.mrb[0].mxu0
        %v7741 = vadd.f32 0.0, %v7740
        %v7742 = vpop.f32.mrb[0].mxu0
        %v7743 = vadd.f32 0.0, %v7742
        %v7744 = vpop.f32.mrb[0].mxu0
        %v7745 = vadd.f32 0.0, %v7744
        %v7746 = vpop.f32.mrb[0].mxu0
        %v7747 = vadd.f32 0.0, %v7746
        %7748 = vmatprep.mubr.bf16.mxu0 0
        %7749 = vmatmul.mubr.bf16.gmra.mrb[0].mxu0 %v7471
        %v7750 = vpop.f32.mrb[0].mxu0
        %v7751 = vadd.f32 0.0, %v7750
        %v7752 = vpop.f32.mrb[0].mxu0
        %v7753 = vadd.f32 0.0, %v7752
        %v7754 = vpop.f32.mrb[0].mxu0
        %v7755 = vadd.f32 0.0, %v7754
        %v7756 = vpop.f32.mrb[0].mxu0
        %v7757 = vadd.f32 0.0, %v7756
        %7758 = vmatprep.mubr.bf16.mxu0 0
        %7759 = vmatmul.mubr.bf16.gmra.mrb[0].mxu0 %v7472
        %v7760 = vpop.f32.mrb[0].mxu0
        %v7761 = vadd.f32 0.0, %v7760
        %v7762 = vpop.f32.mrb[0].mxu0
        %v7763 = vadd.f32 0.0, %v7762
        %v7764 = vpop.f32.mrb[0].mxu0
        %v7765 = vadd.f32 0.0, %v7764
        %v7766 = vpop.f32.mrb[0].mxu0
        %v7767 = vadd.f32 0.0, %v7766
        %7768 = vdwg.mxu0
        %7769 = vmatprep.subr.bf16.mxu0 %v7198
        %7770 = vmatpush1.bf16.msra.mxu0 %v7197
        %7771 = vmatprep.subr.bf16.mxu0 %v7230
        %7772 = vmatpush1.bf16.msra.mxu0 %v7229
        %7773 = vmatprep.subr.bf16.mxu0 %v7262
        %7774 = vmatpush1.bf16.msra.mxu0 %v7261
        %7775 = vmatprep.subr.bf16.mxu0 %v7294
        %7776 = vmatpush1.bf16.msra.mxu0 %v7293
        %7777 = vmatprep.subr.bf16.mxu0 %v7326
        %7778 = vmatpush1.bf16.msra.mxu0 %v7325
        %7779 = vmatprep.subr.bf16.mxu0 %v7358
        %7780 = vmatpush1.bf16.msra.mxu0 %v7357
        %7781 = vmatprep.subr.bf16.mxu0 %v7390
        %7782 = vmatpush1.bf16.msra.mxu0 %v7389
        %7783 = vmatprep.subr.bf16.mxu0 %v7422
        %7784 = vmatpush1.bf16.msra.mxu0 %v7421
        %7785 = vmatprep.subr.bf16.mxu0 0
        %7786 = vmatpush1.bf16.msra.mxu0 0
        %7787 = vmatprep.subr.bf16.mxu0 0
        %7788 = vmatpush1.bf16.msra.mxu0 0
        %7789 = vmatprep.subr.bf16.mxu0 0
        %7790 = vmatpush1.bf16.msra.mxu0 0
        %7791 = vmatprep.subr.bf16.mxu0 0
        %7792 = vmatpush1.bf16.msra.mxu0 0
        %7793 = vmatprep.subr.bf16.mxu0 0
        %7794 = vmatpush1.bf16.msra.mxu0 0
        %7795 = vmatprep.subr.bf16.mxu0 0
        %7796 = vmatpush1.bf16.msra.mxu0 0
        %7797 = vmatprep.subr.bf16.mxu0 0
        %7798 = vmatpush1.bf16.msra.mxu0 0
        %7799 = vmatprep.subr.bf16.mxu0 0
        %7800 = vmatpush1.bf16.msra.mxu0 0
        %7801 = vmatprep.mubr.bf16.mxu0 0
        %7802 = vmatmul.mubr.bf16.gmra.mrb[0].mxu0 %v7469
        %v7803 = vpop.f32.mrb[0].mxu0
        %v7804 = vadd.f32 0.0, %v7803
        %v7805 = vpop.f32.mrb[0].mxu0
        %v7806 = vadd.f32 0.0, %v7805
        %v7807 = vpop.f32.mrb[0].mxu0
        %v7808 = vadd.f32 0.0, %v7807
        %v7809 = vpop.f32.mrb[0].mxu0
        %v7810 = vadd.f32 0.0, %v7809
        %7811 = vmatprep.mubr.bf16.mxu0 0
        %7812 = vmatmul.mubr.bf16.gmra.mrb[0].mxu0 %v7470
        %v7813 = vpop.f32.mrb[0].mxu0
        %v7814 = vadd.f32 0.0, %v7813
        %v7815 = vpop.f32.mrb[0].mxu0
        %v7816 = vadd.f32 0.0, %v7815
        %v7817 = vpop.f32.mrb[0].mxu0
        %v7818 = vadd.f32 0.0, %v7817
        %v7819 = vpop.f32.mrb[0].mxu0
        %v7820 = vadd.f32 0.0, %v7819
        %7821 = vmatprep.mubr.bf16.mxu0 0
        %7822 = vmatmul.mubr.bf16.gmra.mrb[0].mxu0 %v7471
        %v7823 = vpop.f32.mrb[0].mxu0
        %v7824 = vadd.f32 0.0, %v7823
        %v7825 = vpop.f32.mrb[0].mxu0
        %v7826 = vadd.f32 0.0, %v7825
        %v7827 = vpop.f32.mrb[0].mxu0
        %v7828 = vadd.f32 0.0, %v7827
        %v7829 = vpop.f32.mrb[0].mxu0
        %v7830 = vadd.f32 0.0, %v7829
        %7831 = vmatprep.mubr.bf16.mxu0 0
        %7832 = vmatmul.mubr.bf16.gmra.mrb[0].mxu0 %v7472
        %v7833 = vpop.f32.mrb[0].mxu0
        %v7834 = vadd.f32 0.0, %v7833
        %v7835 = vpop.f32.mrb[0].mxu0
        %v7836 = vadd.f32 0.0, %v7835
        %v7837 = vpop.f32.mrb[0].mxu0
        %v7838 = vadd.f32 0.0, %v7837
        %v7839 = vpop.f32.mrb[0].mxu0
        %v7840 = vadd.f32 0.0, %v7839
        %7841 = vdwg.mxu0
        %7842 = vmatprep.subr.bf16.mxu0 %v7200
        %7843 = vmatpush1.bf16.msra.mxu0 %v7199
        %7844 = vmatprep.subr.bf16.mxu0 %v7232
        %7845 = vmatpush1.bf16.msra.mxu0 %v7231
        %7846 = vmatprep.subr.bf16.mxu0 %v7264
        %7847 = vmatpush1.bf16.msra.mxu0 %v7263
        %7848 = vmatprep.subr.bf16.mxu0 %v7296
        %7849 = vmatpush1.bf16.msra.mxu0 %v7295
        %7850 = vmatprep.subr.bf16.mxu0 %v7328
        %7851 = vmatpush1.bf16.msra.mxu0 %v7327
        %7852 = vmatprep.subr.bf16.mxu0 %v7360
        %7853 = vmatpush1.bf16.msra.mxu0 %v7359
        %7854 = vmatprep.subr.bf16.mxu0 %v7392
        %7855 = vmatpush1.bf16.msra.mxu0 %v7391
        %7856 = vmatprep.subr.bf16.mxu0 %v7424
        %7857 = vmatpush1.bf16.msra.mxu0 %v7423
        %7858 = vmatprep.subr.bf16.mxu0 0
        %7859 = vmatpush1.bf16.msra.mxu0 0
        %7860 = vmatprep.subr.bf16.mxu0 0
        %7861 = vmatpush1.bf16.msra.mxu0 0
        %7862 = vmatprep.subr.bf16.mxu0 0
        %7863 = vmatpush1.bf16.msra.mxu0 0
        %7864 = vmatprep.subr.bf16.mxu0 0
        %7865 = vmatpush1.bf16.msra.mxu0 0
        %7866 = vmatprep.subr.bf16.mxu0 0
        %7867 = vmatpush1.bf16.msra.mxu0 0
        %7868 = vmatprep.subr.bf16.mxu0 0
        %7869 = vmatpush1.bf16.msra.mxu0 0
        %7870 = vmatprep.subr.bf16.mxu0 0
        %7871 = vmatpush1.bf16.msra.mxu0 0
        %7872 = vmatprep.subr.bf16.mxu0 0
        %7873 = vmatpush1.bf16.msra.mxu0 0
        %7874 = vmatprep.mubr.bf16.mxu0 0
        %7875 = vmatmul.mubr.bf16.gmra.mrb[0].mxu0 %v7469
        %v7876 = vpop.f32.mrb[0].mxu0
        %v7877 = vadd.f32 0.0, %v7876
        %v7878 = vpop.f32.mrb[0].mxu0
        %v7879 = vadd.f32 0.0, %v7878
        %v7880 = vpop.f32.mrb[0].mxu0
        %v7881 = vadd.f32 0.0, %v7880
        %v7882 = vpop.f32.mrb[0].mxu0
        %v7883 = vadd.f32 0.0, %v7882
        %7884 = vmatprep.mubr.bf16.mxu0 0
        %7885 = vmatmul.mubr.bf16.gmra.mrb[0].mxu0 %v7470
        %v7886 = vpop.f32.mrb[0].mxu0
        %v7887 = vadd.f32 0.0, %v7886
        %v7888 = vpop.f32.mrb[0].mxu0
        %v7889 = vadd.f32 0.0, %v7888
        %v7890 = vpop.f32.mrb[0].mxu0
        %v7891 = vadd.f32 0.0, %v7890
        %v7892 = vpop.f32.mrb[0].mxu0
        %v7893 = vadd.f32 0.0, %v7892
        %7894 = vmatprep.mubr.bf16.mxu0 0
        %7895 = vmatmul.mubr.bf16.gmra.mrb[0].mxu0 %v7471
        %v7896 = vpop.f32.mrb[0].mxu0
        %v7897 = vadd.f32 0.0, %v7896
        %v7898 = vpop.f32.mrb[0].mxu0
        %v7899 = vadd.f32 0.0, %v7898
        %v7900 = vpop.f32.mrb[0].mxu0
        %v7901 = vadd.f32 0.0, %v7900
        %v7902 = vpop.f32.mrb[0].mxu0
        %v7903 = vadd.f32 0.0, %v7902
        %7904 = vmatprep.mubr.bf16.mxu0 0
        %7905 = vmatmul.mubr.bf16.gmra.mrb[0].mxu0 %v7472
        %v7906 = vpop.f32.mrb[0].mxu0
        %v7907 = vadd.f32 0.0, %v7906
        %v7908 = vpop.f32.mrb[0].mxu0
        %v7909 = vadd.f32 0.0, %v7908
        %v7910 = vpop.f32.mrb[0].mxu0
        %v7911 = vadd.f32 0.0, %v7910
        %v7912 = vpop.f32.mrb[0].mxu0
        %v7913 = vadd.f32 0.0, %v7912
        %7914 = vdwg.mxu0
        %7915 = vmatprep.subr.bf16.mxu0 %v7202
        %7916 = vmatpush1.bf16.msra.mxu0 %v7201
        %7917 = vmatprep.subr.bf16.mxu0 %v7234
        %7918 = vmatpush1.bf16.msra.mxu0 %v7233
        %7919 = vmatprep.subr.bf16.mxu0 %v7266
        %7920 = vmatpush1.bf16.msra.mxu0 %v7265
        %7921 = vmatprep.subr.bf16.mxu0 %v7298
        %7922 = vmatpush1.bf16.msra.mxu0 %v7297
        %7923 = vmatprep.subr.bf16.mxu0 %v7330
        %7924 = vmatpush1.bf16.msra.mxu0 %v7329
        %7925 = vmatprep.subr.bf16.mxu0 %v7362
        %7926 = vmatpush1.bf16.msra.mxu0 %v7361
        %7927 = vmatprep.subr.bf16.mxu0 %v7394
        %7928 = vmatpush1.bf16.msra.mxu0 %v7393
        %7929 = vmatprep.subr.bf16.mxu0 %v7426
        %7930 = vmatpush1.bf16.msra.mxu0 %v7425
        %7931 = vmatprep.subr.bf16.mxu0 0
        %7932 = vmatpush1.bf16.msra.mxu0 0
        %7933 = vmatprep.subr.bf16.mxu0 0
        %7934 = vmatpush1.bf16.msra.mxu0 0
        %7935 = vmatprep.subr.bf16.mxu0 0
        %7936 = vmatpush1.bf16.msra.mxu0 0
        %7937 = vmatprep.subr.bf16.mxu0 0
        %7938 = vmatpush1.bf16.msra.mxu0 0
        %7939 = vmatprep.subr.bf16.mxu0 0
        %7940 = vmatpush1.bf16.msra.mxu0 0
        %7941 = vmatprep.subr.bf16.mxu0 0
        %7942 = vmatpush1.bf16.msra.mxu0 0
        %7943 = vmatprep.subr.bf16.mxu0 0
        %7944 = vmatpush1.bf16.msra.mxu0 0
        %7945 = vmatprep.subr.bf16.mxu0 0
        %7946 = vmatpush1.bf16.msra.mxu0 0
        %7947 = vmatprep.mubr.bf16.mxu0 0
        %7948 = vmatmul.mubr.bf16.gmra.mrb[0].mxu0 %v7469
        %v7949 = vpop.f32.mrb[0].mxu0
        %v7950 = vadd.f32 0.0, %v7949
        %v7951 = vpop.f32.mrb[0].mxu0
        %v7952 = vadd.f32 0.0, %v7951
        %v7953 = vpop.f32.mrb[0].mxu0
        %v7954 = vadd.f32 0.0, %v7953
        %v7955 = vpop.f32.mrb[0].mxu0
        %v7956 = vadd.f32 0.0, %v7955
        %7957 = vmatprep.mubr.bf16.mxu0 0
        %7958 = vmatmul.mubr.bf16.gmra.mrb[0].mxu0 %v7470
        %v7959 = vpop.f32.mrb[0].mxu0
        %v7960 = vadd.f32 0.0, %v7959
        %v7961 = vpop.f32.mrb[0].mxu0
        %v7962 = vadd.f32 0.0, %v7961
        %v7963 = vpop.f32.mrb[0].mxu0
        %v7964 = vadd.f32 0.0, %v7963
        %v7965 = vpop.f32.mrb[0].mxu0
        %v7966 = vadd.f32 0.0, %v7965
        %7967 = vmatprep.mubr.bf16.mxu0 0
        %7968 = vmatmul.mubr.bf16.gmra.mrb[0].mxu0 %v7471
        %v7969 = vpop.f32.mrb[0].mxu0
        %v7970 = vadd.f32 0.0, %v7969
        %v7971 = vpop.f32.mrb[0].mxu0
        %v7972 = vadd.f32 0.0, %v7971
        %v7973 = vpop.f32.mrb[0].mxu0
        %v7974 = vadd.f32 0.0, %v7973
        %v7975 = vpop.f32.mrb[0].mxu0
        %v7976 = vadd.f32 0.0, %v7975
        %7977 = vmatprep.mubr.bf16.mxu0 0
        %7978 = vmatmul.mubr.bf16.gmra.mrb[0].mxu0 %v7472
        %v7979 = vpop.f32.mrb[0].mxu0
        %v7980 = vadd.f32 0.0, %v7979
        %v7981 = vpop.f32.mrb[0].mxu0
        %v7982 = vadd.f32 0.0, %v7981
        %v7983 = vpop.f32.mrb[0].mxu0
        %v7984 = vadd.f32 0.0, %v7983
        %v7985 = vpop.f32.mrb[0].mxu0
        %v7986 = vadd.f32 0.0, %v7985
        %7987 = vdwg.mxu0
        %7988 = vmatprep.subr.bf16.mxu0 %v7204
        %7989 = vmatpush1.bf16.msra.mxu0 %v7203
        %7990 = vmatprep.subr.bf16.mxu0 %v7236
        %7991 = vmatpush1.bf16.msra.mxu0 %v7235
        %7992 = vmatprep.subr.bf16.mxu0 %v7268
        %7993 = vmatpush1.bf16.msra.mxu0 %v7267
        %7994 = vmatprep.subr.bf16.mxu0 %v7300
        %7995 = vmatpush1.bf16.msra.mxu0 %v7299
        %7996 = vmatprep.subr.bf16.mxu0 %v7332
        %7997 = vmatpush1.bf16.msra.mxu0 %v7331
        %7998 = vmatprep.subr.bf16.mxu0 %v7364
        %7999 = vmatpush1.bf16.msra.mxu0 %v7363
        %8000 = vmatprep.subr.bf16.mxu0 %v7396
        %8001 = vmatpush1.bf16.msra.mxu0 %v7395
        %8002 = vmatprep.subr.bf16.mxu0 %v7428
        %8003 = vmatpush1.bf16.msra.mxu0 %v7427
        %8004 = vmatprep.subr.bf16.mxu0 0
        %8005 = vmatpush1.bf16.msra.mxu0 0
        %8006 = vmatprep.subr.bf16.mxu0 0
        %8007 = vmatpush1.bf16.msra.mxu0 0
        %8008 = vmatprep.subr.bf16.mxu0 0
        %8009 = vmatpush1.bf16.msra.mxu0 0
        %8010 = vmatprep.subr.bf16.mxu0 0
        %8011 = vmatpush1.bf16.msra.mxu0 0
        %8012 = vmatprep.subr.bf16.mxu0 0
        %8013 = vmatpush1.bf16.msra.mxu0 0
        %8014 = vmatprep.subr.bf16.mxu0 0
        %8015 = vmatpush1.bf16.msra.mxu0 0
        %8016 = vmatprep.subr.bf16.mxu0 0
        %8017 = vmatpush1.bf16.msra.mxu0 0
        %8018 = vmatprep.subr.bf16.mxu0 0
        %8019 = vmatpush1.bf16.msra.mxu0 0
        %8020 = vmatprep.mubr.bf16.mxu0 0
        %8021 = vmatmul.mubr.bf16.gmra.mrb[0].mxu0 %v7469
        %v8022 = vpop.f32.mrb[0].mxu0
        %v8023 = vadd.f32 0.0, %v8022
        %v8024 = vpop.f32.mrb[0].mxu0
        %v8025 = vadd.f32 0.0, %v8024
        %v8026 = vpop.f32.mrb[0].mxu0
        %v8027 = vadd.f32 0.0, %v8026
        %v8028 = vpop.f32.mrb[0].mxu0
        %v8029 = vadd.f32 0.0, %v8028
        %8030 = vmatprep.mubr.bf16.mxu0 0
        %8031 = vmatmul.mubr.bf16.gmra.mrb[0].mxu0 %v7470
        %v8032 = vpop.f32.mrb[0].mxu0
        %v8033 = vadd.f32 0.0, %v8032
        %v8034 = vpop.f32.mrb[0].mxu0
        %v8035 = vadd.f32 0.0, %v8034
        %v8036 = vpop.f32.mrb[0].mxu0
        %v8037 = vadd.f32 0.0, %v8036
        %v8038 = vpop.f32.mrb[0].mxu0
        %v8039 = vadd.f32 0.0, %v8038
        %8040 = vmatprep.mubr.bf16.mxu0 0
        %8041 = vmatmul.mubr.bf16.gmra.mrb[0].mxu0 %v7471
        %v8042 = vpop.f32.mrb[0].mxu0
        %v8043 = vadd.f32 0.0, %v8042
        %v8044 = vpop.f32.mrb[0].mxu0
        %v8045 = vadd.f32 0.0, %v8044
        %v8046 = vpop.f32.mrb[0].mxu0
        %v8047 = vadd.f32 0.0, %v8046
        %v8048 = vpop.f32.mrb[0].mxu0
        %v8049 = vadd.f32 0.0, %v8048
        %8050 = vmatprep.mubr.bf16.mxu0 0
        %8051 = vmatmul.mubr.bf16.gmra.mrb[0].mxu0 %v7472
        %v8052 = vpop.f32.mrb[0].mxu0
        %v8053 = vadd.f32 0.0, %v8052
        %v8054 = vpop.f32.mrb[0].mxu0
        %v8055 = vadd.f32 0.0, %v8054
        %v8056 = vpop.f32.mrb[0].mxu0
        %v8057 = vadd.f32 0.0, %v8056
        %v8058 = vpop.f32.mrb[0].mxu0
        %v8059 = vadd.f32 0.0, %v8058
        %8060 = vdwg.mxu0
        %8061 = vmatprep.subr.bf16.mxu0 %v7206
        %8062 = vmatpush1.bf16.msra.mxu0 %v7205
        %8063 = vmatprep.subr.bf16.mxu0 %v7238
        %8064 = vmatpush1.bf16.msra.mxu0 %v7237
        %8065 = vmatprep.subr.bf16.mxu0 %v7270
        %8066 = vmatpush1.bf16.msra.mxu0 %v7269
        %8067 = vmatprep.subr.bf16.mxu0 %v7302
        %8068 = vmatpush1.bf16.msra.mxu0 %v7301
        %8069 = vmatprep.subr.bf16.mxu0 %v7334
        %8070 = vmatpush1.bf16.msra.mxu0 %v7333
        %8071 = vmatprep.subr.bf16.mxu0 %v7366
        %8072 = vmatpush1.bf16.msra.mxu0 %v7365
        %8073 = vmatprep.subr.bf16.mxu0 %v7398
        %8074 = vmatpush1.bf16.msra.mxu0 %v7397
        %8075 = vmatprep.subr.bf16.mxu0 %v7430
        %8076 = vmatpush1.bf16.msra.mxu0 %v7429
        %8077 = vmatprep.subr.bf16.mxu0 0
        %8078 = vmatpush1.bf16.msra.mxu0 0
        %8079 = vmatprep.subr.bf16.mxu0 0
        %8080 = vmatpush1.bf16.msra.mxu0 0
        %8081 = vmatprep.subr.bf16.mxu0 0
        %8082 = vmatpush1.bf16.msra.mxu0 0
        %8083 = vmatprep.subr.bf16.mxu0 0
        %8084 = vmatpush1.bf16.msra.mxu0 0
        %8085 = vmatprep.subr.bf16.mxu0 0
        %8086 = vmatpush1.bf16.msra.mxu0 0
        %8087 = vmatprep.subr.bf16.mxu0 0
        %8088 = vmatpush1.bf16.msra.mxu0 0
        %8089 = vmatprep.subr.bf16.mxu0 0
        %8090 = vmatpush1.bf16.msra.mxu0 0
        %8091 = vmatprep.subr.bf16.mxu0 0
        %8092 = vmatpush1.bf16.msra.mxu0 0
        %8093 = vmatprep.mubr.bf16.mxu0 0
        %8094 = vmatmul.mubr.bf16.gmra.mrb[0].mxu0 %v7469
        %v8095 = vpop.f32.mrb[0].mxu0
        %v8096 = vadd.f32 0.0, %v8095
        %v8097 = vpop.f32.mrb[0].mxu0
        %v8098 = vadd.f32 0.0, %v8097
        %v8099 = vpop.f32.mrb[0].mxu0
        %v8100 = vadd.f32 0.0, %v8099
        %v8101 = vpop.f32.mrb[0].mxu0
        %v8102 = vadd.f32 0.0, %v8101
        %8103 = vmatprep.mubr.bf16.mxu0 0
        %8104 = vmatmul.mubr.bf16.gmra.mrb[0].mxu0 %v7470
        %v8105 = vpop.f32.mrb[0].mxu0
        %v8106 = vadd.f32 0.0, %v8105
        %v8107 = vpop.f32.mrb[0].mxu0
        %v8108 = vadd.f32 0.0, %v8107
        %v8109 = vpop.f32.mrb[0].mxu0
        %v8110 = vadd.f32 0.0, %v8109
        %v8111 = vpop.f32.mrb[0].mxu0
        %v8112 = vadd.f32 0.0, %v8111
        %8113 = vmatprep.mubr.bf16.mxu0 0
        %8114 = vmatmul.mubr.bf16.gmra.mrb[0].mxu0 %v7471
        %v8115 = vpop.f32.mrb[0].mxu0
        %v8116 = vadd.f32 0.0, %v8115
        %v8117 = vpop.f32.mrb[0].mxu0
        %v8118 = vadd.f32 0.0, %v8117
        %v8119 = vpop.f32.mrb[0].mxu0
        %v8120 = vadd.f32 0.0, %v8119
        %v8121 = vpop.f32.mrb[0].mxu0
        %v8122 = vadd.f32 0.0, %v8121
        %8123 = vmatprep.mubr.bf16.mxu0 0
        %8124 = vmatmul.mubr.bf16.gmra.mrb[0].mxu0 %v7472
        %v8125 = vpop.f32.mrb[0].mxu0
        %v8126 = vadd.f32 0.0, %v8125
        %v8127 = vpop.f32.mrb[0].mxu0
        %v8128 = vadd.f32 0.0, %v8127
        %v8129 = vpop.f32.mrb[0].mxu0
        %v8130 = vadd.f32 0.0, %v8129
        %v8131 = vpop.f32.mrb[0].mxu0
        %v8132 = vadd.f32 0.0, %v8131
        %8133 = vdwg.mxu0
        %8134 = vmatprep.subr.bf16.mxu0 %v7208
        %8135 = vmatpush1.bf16.msra.mxu0 %v7207
        %8136 = vmatprep.subr.bf16.mxu0 %v7240
        %8137 = vmatpush1.bf16.msra.mxu0 %v7239
        %8138 = vmatprep.subr.bf16.mxu0 %v7272
        %8139 = vmatpush1.bf16.msra.mxu0 %v7271
        %8140 = vmatprep.subr.bf16.mxu0 %v7304
        %8141 = vmatpush1.bf16.msra.mxu0 %v7303
        %8142 = vmatprep.subr.bf16.mxu0 %v7336
        %8143 = vmatpush1.bf16.msra.mxu0 %v7335
        %8144 = vmatprep.subr.bf16.mxu0 %v7368
        %8145 = vmatpush1.bf16.msra.mxu0 %v7367
        %8146 = vmatprep.subr.bf16.mxu0 %v7400
        %8147 = vmatpush1.bf16.msra.mxu0 %v7399
        %8148 = vmatprep.subr.bf16.mxu0 %v7432
        %8149 = vmatpush1.bf16.msra.mxu0 %v7431
        %8150 = vmatprep.subr.bf16.mxu0 0
        %8151 = vmatpush1.bf16.msra.mxu0 0
        %8152 = vmatprep.subr.bf16.mxu0 0
        %8153 = vmatpush1.bf16.msra.mxu0 0
        %8154 = vmatprep.subr.bf16.mxu0 0
        %8155 = vmatpush1.bf16.msra.mxu0 0
        %8156 = vmatprep.subr.bf16.mxu0 0
        %8157 = vmatpush1.bf16.msra.mxu0 0
        %8158 = vmatprep.subr.bf16.mxu0 0
        %8159 = vmatpush1.bf16.msra.mxu0 0
        %8160 = vmatprep.subr.bf16.mxu0 0
        %8161 = vmatpush1.bf16.msra.mxu0 0
        %8162 = vmatprep.subr.bf16.mxu0 0
        %8163 = vmatpush1.bf16.msra.mxu0 0
        %8164 = vmatprep.subr.bf16.mxu0 0
        %8165 = vmatpush1.bf16.msra.mxu0 0
        %8166 = vmatprep.mubr.bf16.mxu0 0
        %8167 = vmatmul.mubr.bf16.gmra.mrb[0].mxu0 %v7469
        %v8168 = vpop.f32.mrb[0].mxu0
        %v8169 = vadd.f32 0.0, %v8168
        %v8170 = vpop.f32.mrb[0].mxu0
        %v8171 = vadd.f32 0.0, %v8170
        %v8172 = vpop.f32.mrb[0].mxu0
        %v8173 = vadd.f32 0.0, %v8172
        %v8174 = vpop.f32.mrb[0].mxu0
        %v8175 = vadd.f32 0.0, %v8174
        %8176 = vmatprep.mubr.bf16.mxu0 0
        %8177 = vmatmul.mubr.bf16.gmra.mrb[0].mxu0 %v7470
        %v8178 = vpop.f32.mrb[0].mxu0
        %v8179 = vadd.f32 0.0, %v8178
        %v8180 = vpop.f32.mrb[0].mxu0
        %v8181 = vadd.f32 0.0, %v8180
        %v8182 = vpop.f32.mrb[0].mxu0
        %v8183 = vadd.f32 0.0, %v8182
        %v8184 = vpop.f32.mrb[0].mxu0
        %v8185 = vadd.f32 0.0, %v8184
        %8186 = vmatprep.mubr.bf16.mxu0 0
        %8187 = vmatmul.mubr.bf16.gmra.mrb[0].mxu0 %v7471
        %v8188 = vpop.f32.mrb[0].mxu0
        %v8189 = vadd.f32 0.0, %v8188
        %v8190 = vpop.f32.mrb[0].mxu0
        %v8191 = vadd.f32 0.0, %v8190
        %v8192 = vpop.f32.mrb[0].mxu0
        %v8193 = vadd.f32 0.0, %v8192
        %v8194 = vpop.f32.mrb[0].mxu0
        %v8195 = vadd.f32 0.0, %v8194
        %8196 = vmatprep.mubr.bf16.mxu0 0
        %8197 = vmatmul.mubr.bf16.gmra.mrb[0].mxu0 %v7472
        %v8198 = vpop.f32.mrb[0].mxu0
        %v8199 = vadd.f32 0.0, %v8198
        %v8200 = vpop.f32.mrb[0].mxu0
        %v8201 = vadd.f32 0.0, %v8200
        %v8202 = vpop.f32.mrb[0].mxu0
        %v8203 = vadd.f32 0.0, %v8202
        %v8204 = vpop.f32.mrb[0].mxu0
        %v8205 = vadd.f32 0.0, %v8204
        %8206 = vdwg.mxu0
        %8207 = vmatprep.subr.bf16.mxu0 %v7210
        %8208 = vmatpush1.bf16.msra.mxu0 %v7209
        %8209 = vmatprep.subr.bf16.mxu0 %v7242
        %8210 = vmatpush1.bf16.msra.mxu0 %v7241
        %8211 = vmatprep.subr.bf16.mxu0 %v7274
        %8212 = vmatpush1.bf16.msra.mxu0 %v7273
        %8213 = vmatprep.subr.bf16.mxu0 %v7306
        %8214 = vmatpush1.bf16.msra.mxu0 %v7305
        %8215 = vmatprep.subr.bf16.mxu0 %v7338
        %8216 = vmatpush1.bf16.msra.mxu0 %v7337
        %8217 = vmatprep.subr.bf16.mxu0 %v7370
        %8218 = vmatpush1.bf16.msra.mxu0 %v7369
        %8219 = vmatprep.subr.bf16.mxu0 %v7402
        %8220 = vmatpush1.bf16.msra.mxu0 %v7401
        %8221 = vmatprep.subr.bf16.mxu0 %v7434
        %8222 = vmatpush1.bf16.msra.mxu0 %v7433
        %8223 = vmatprep.subr.bf16.mxu0 0
        %8224 = vmatpush1.bf16.msra.mxu0 0
        %8225 = vmatprep.subr.bf16.mxu0 0
        %8226 = vmatpush1.bf16.msra.mxu0 0
        %8227 = vmatprep.subr.bf16.mxu0 0
        %8228 = vmatpush1.bf16.msra.mxu0 0
        %8229 = vmatprep.subr.bf16.mxu0 0
        %8230 = vmatpush1.bf16.msra.mxu0 0
        %8231 = vmatprep.subr.bf16.mxu0 0
        %8232 = vmatpush1.bf16.msra.mxu0 0
        %8233 = vmatprep.subr.bf16.mxu0 0
        %8234 = vmatpush1.bf16.msra.mxu0 0
        %8235 = vmatprep.subr.bf16.mxu0 0
        %8236 = vmatpush1.bf16.msra.mxu0 0
        %8237 = vmatprep.subr.bf16.mxu0 0
        %8238 = vmatpush1.bf16.msra.mxu0 0
        %8239 = vmatprep.mubr.bf16.mxu0 0
        %8240 = vmatmul.mubr.bf16.gmra.mrb[0].mxu0 %v7469
        %v8241 = vpop.f32.mrb[0].mxu0
        %v8242 = vadd.f32 0.0, %v8241
        %v8243 = vpop.f32.mrb[0].mxu0
        %v8244 = vadd.f32 0.0, %v8243
        %v8245 = vpop.f32.mrb[0].mxu0
        %v8246 = vadd.f32 0.0, %v8245
        %v8247 = vpop.f32.mrb[0].mxu0
        %v8248 = vadd.f32 0.0, %v8247
        %8249 = vmatprep.mubr.bf16.mxu0 0
        %8250 = vmatmul.mubr.bf16.gmra.mrb[0].mxu0 %v7470
        %v8251 = vpop.f32.mrb[0].mxu0
        %v8252 = vadd.f32 0.0, %v8251
        %v8253 = vpop.f32.mrb[0].mxu0
        %v8254 = vadd.f32 0.0, %v8253
        %v8255 = vpop.f32.mrb[0].mxu0
        %v8256 = vadd.f32 0.0, %v8255
        %v8257 = vpop.f32.mrb[0].mxu0
        %v8258 = vadd.f32 0.0, %v8257
        %8259 = vmatprep.mubr.bf16.mxu0 0
        %8260 = vmatmul.mubr.bf16.gmra.mrb[0].mxu0 %v7471
        %v8261 = vpop.f32.mrb[0].mxu0
        %v8262 = vadd.f32 0.0, %v8261
        %v8263 = vpop.f32.mrb[0].mxu0
        %v8264 = vadd.f32 0.0, %v8263
        %v8265 = vpop.f32.mrb[0].mxu0
        %v8266 = vadd.f32 0.0, %v8265
        %v8267 = vpop.f32.mrb[0].mxu0
        %v8268 = vadd.f32 0.0, %v8267
        %8269 = vmatprep.mubr.bf16.mxu0 0
        %8270 = vmatmul.mubr.bf16.gmra.mrb[0].mxu0 %v7472
        %v8271 = vpop.f32.mrb[0].mxu0
        %v8272 = vadd.f32 0.0, %v8271
        %v8273 = vpop.f32.mrb[0].mxu0
        %v8274 = vadd.f32 0.0, %v8273
        %v8275 = vpop.f32.mrb[0].mxu0
        %v8276 = vadd.f32 0.0, %v8275
        %v8277 = vpop.f32.mrb[0].mxu0
        %v8278 = vadd.f32 0.0, %v8277
        %8279 = vdwg.mxu0
        %8280 = vmatprep.subr.bf16.mxu0 %v7212
        %8281 = vmatpush1.bf16.msra.mxu0 %v7211
        %8282 = vmatprep.subr.bf16.mxu0 %v7244
        %8283 = vmatpush1.bf16.msra.mxu0 %v7243
        %8284 = vmatprep.subr.bf16.mxu0 %v7276
        %8285 = vmatpush1.bf16.msra.mxu0 %v7275
        %8286 = vmatprep.subr.bf16.mxu0 %v7308
        %8287 = vmatpush1.bf16.msra.mxu0 %v7307
        %8288 = vmatprep.subr.bf16.mxu0 %v7340
        %8289 = vmatpush1.bf16.msra.mxu0 %v7339
        %8290 = vmatprep.subr.bf16.mxu0 %v7372
        %8291 = vmatpush1.bf16.msra.mxu0 %v7371
        %8292 = vmatprep.subr.bf16.mxu0 %v7404
        %8293 = vmatpush1.bf16.msra.mxu0 %v7403
        %8294 = vmatprep.subr.bf16.mxu0 %v7436
        %8295 = vmatpush1.bf16.msra.mxu0 %v7435
        %8296 = vmatprep.subr.bf16.mxu0 0
        %8297 = vmatpush1.bf16.msra.mxu0 0
        %8298 = vmatprep.subr.bf16.mxu0 0
        %8299 = vmatpush1.bf16.msra.mxu0 0
        %8300 = vmatprep.subr.bf16.mxu0 0
        %8301 = vmatpush1.bf16.msra.mxu0 0
        %8302 = vmatprep.subr.bf16.mxu0 0
        %8303 = vmatpush1.bf16.msra.mxu0 0
        %8304 = vmatprep.subr.bf16.mxu0 0
        %8305 = vmatpush1.bf16.msra.mxu0 0
        %8306 = vmatprep.subr.bf16.mxu0 0
        %8307 = vmatpush1.bf16.msra.mxu0 0
        %8308 = vmatprep.subr.bf16.mxu0 0
        %8309 = vmatpush1.bf16.msra.mxu0 0
        %8310 = vmatprep.subr.bf16.mxu0 0
        %8311 = vmatpush1.bf16.msra.mxu0 0
        %8312 = vmatprep.mubr.bf16.mxu0 0
        %8313 = vmatmul.mubr.bf16.gmra.mrb[0].mxu0 %v7469
        %v8314 = vpop.f32.mrb[0].mxu0
        %v8315 = vadd.f32 0.0, %v8314
        %v8316 = vpop.f32.mrb[0].mxu0
        %v8317 = vadd.f32 0.0, %v8316
        %v8318 = vpop.f32.mrb[0].mxu0
        %v8319 = vadd.f32 0.0, %v8318
        %v8320 = vpop.f32.mrb[0].mxu0
        %v8321 = vadd.f32 0.0, %v8320
        %8322 = vmatprep.mubr.bf16.mxu0 0
        %8323 = vmatmul.mubr.bf16.gmra.mrb[0].mxu0 %v7470
        %v8324 = vpop.f32.mrb[0].mxu0
        %v8325 = vadd.f32 0.0, %v8324
        %v8326 = vpop.f32.mrb[0].mxu0
        %v8327 = vadd.f32 0.0, %v8326
        %v8328 = vpop.f32.mrb[0].mxu0
        %v8329 = vadd.f32 0.0, %v8328
        %v8330 = vpop.f32.mrb[0].mxu0
        %v8331 = vadd.f32 0.0, %v8330
        %8332 = vmatprep.mubr.bf16.mxu0 0
        %8333 = vmatmul.mubr.bf16.gmra.mrb[0].mxu0 %v7471
        %v8334 = vpop.f32.mrb[0].mxu0
        %v8335 = vadd.f32 0.0, %v8334
        %v8336 = vpop.f32.mrb[0].mxu0
        %v8337 = vadd.f32 0.0, %v8336
        %v8338 = vpop.f32.mrb[0].mxu0
        %v8339 = vadd.f32 0.0, %v8338
        %v8340 = vpop.f32.mrb[0].mxu0
        %v8341 = vadd.f32 0.0, %v8340
        %8342 = vmatprep.mubr.bf16.mxu0 0
        %8343 = vmatmul.mubr.bf16.gmra.mrb[0].mxu0 %v7472
        %v8344 = vpop.f32.mrb[0].mxu0
        %v8345 = vadd.f32 0.0, %v8344
        %v8346 = vpop.f32.mrb[0].mxu0
        %v8347 = vadd.f32 0.0, %v8346
        %v8348 = vpop.f32.mrb[0].mxu0
        %v8349 = vadd.f32 0.0, %v8348
        %v8350 = vpop.f32.mrb[0].mxu0
        %v8351 = vadd.f32 0.0, %v8350
        %8352 = vdwg.mxu0
        %8353 = vmatprep.subr.bf16.mxu0 %v7214
        %8354 = vmatpush1.bf16.msra.mxu0 %v7213
        %8355 = vmatprep.subr.bf16.mxu0 %v7246
        %8356 = vmatpush1.bf16.msra.mxu0 %v7245
        %8357 = vmatprep.subr.bf16.mxu0 %v7278
        %8358 = vmatpush1.bf16.msra.mxu0 %v7277
        %8359 = vmatprep.subr.bf16.mxu0 %v7310
        %8360 = vmatpush1.bf16.msra.mxu0 %v7309
        %8361 = vmatprep.subr.bf16.mxu0 %v7342
        %8362 = vmatpush1.bf16.msra.mxu0 %v7341
        %8363 = vmatprep.subr.bf16.mxu0 %v7374
        %8364 = vmatpush1.bf16.msra.mxu0 %v7373
        %8365 = vmatprep.subr.bf16.mxu0 %v7406
        %8366 = vmatpush1.bf16.msra.mxu0 %v7405
        %8367 = vmatprep.subr.bf16.mxu0 %v7438
        %8368 = vmatpush1.bf16.msra.mxu0 %v7437
        %8369 = vmatprep.subr.bf16.mxu0 0
        %8370 = vmatpush1.bf16.msra.mxu0 0
        %8371 = vmatprep.subr.bf16.mxu0 0
        %8372 = vmatpush1.bf16.msra.mxu0 0
        %8373 = vmatprep.subr.bf16.mxu0 0
        %8374 = vmatpush1.bf16.msra.mxu0 0
        %8375 = vmatprep.subr.bf16.mxu0 0
        %8376 = vmatpush1.bf16.msra.mxu0 0
        %8377 = vmatprep.subr.bf16.mxu0 0
        %8378 = vmatpush1.bf16.msra.mxu0 0
        %8379 = vmatprep.subr.bf16.mxu0 0
        %8380 = vmatpush1.bf16.msra.mxu0 0
        %8381 = vmatprep.subr.bf16.mxu0 0
        %8382 = vmatpush1.bf16.msra.mxu0 0
        %8383 = vmatprep.subr.bf16.mxu0 0
        %8384 = vmatpush1.bf16.msra.mxu0 0
        %8385 = vmatprep.mubr.bf16.mxu0 0
        %8386 = vmatmul.mubr.bf16.gmra.mrb[0].mxu0 %v7469
        %v8387 = vpop.f32.mrb[0].mxu0
        %v8388 = vadd.f32 0.0, %v8387
        %v8389 = vpop.f32.mrb[0].mxu0
        %v8390 = vadd.f32 0.0, %v8389
        %v8391 = vpop.f32.mrb[0].mxu0
        %v8392 = vadd.f32 0.0, %v8391
        %v8393 = vpop.f32.mrb[0].mxu0
        %v8394 = vadd.f32 0.0, %v8393
        %8395 = vmatprep.mubr.bf16.mxu0 0
        %8396 = vmatmul.mubr.bf16.gmra.mrb[0].mxu0 %v7470
        %v8397 = vpop.f32.mrb[0].mxu0
        %v8398 = vadd.f32 0.0, %v8397
        %v8399 = vpop.f32.mrb[0].mxu0
        %v8400 = vadd.f32 0.0, %v8399
        %v8401 = vpop.f32.mrb[0].mxu0
        %v8402 = vadd.f32 0.0, %v8401
        %v8403 = vpop.f32.mrb[0].mxu0
        %v8404 = vadd.f32 0.0, %v8403
        %8405 = vmatprep.mubr.bf16.mxu0 0
        %8406 = vmatmul.mubr.bf16.gmra.mrb[0].mxu0 %v7471
        %v8407 = vpop.f32.mrb[0].mxu0
        %v8408 = vadd.f32 0.0, %v8407
        %v8409 = vpop.f32.mrb[0].mxu0
        %v8410 = vadd.f32 0.0, %v8409
        %v8411 = vpop.f32.mrb[0].mxu0
        %v8412 = vadd.f32 0.0, %v8411
        %v8413 = vpop.f32.mrb[0].mxu0
        %v8414 = vadd.f32 0.0, %v8413
        %8415 = vmatprep.mubr.bf16.mxu0 0
        %8416 = vmatmul.mubr.bf16.gmra.mrb[0].mxu0 %v7472
        %v8417 = vpop.f32.mrb[0].mxu0
        %v8418 = vadd.f32 0.0, %v8417
        %v8419 = vpop.f32.mrb[0].mxu0
        %v8420 = vadd.f32 0.0, %v8419
        %v8421 = vpop.f32.mrb[0].mxu0
        %v8422 = vadd.f32 0.0, %v8421
        %v8423 = vpop.f32.mrb[0].mxu0
        %v8424 = vadd.f32 0.0, %v8423
        %8425 = vdwg.mxu0
        %8426 = vmatprep.subr.bf16.mxu0 %v7216
        %8427 = vmatpush1.bf16.msra.mxu0 %v7215
        %8428 = vmatprep.subr.bf16.mxu0 %v7248
        %8429 = vmatpush1.bf16.msra.mxu0 %v7247
        %8430 = vmatprep.subr.bf16.mxu0 %v7280
        %8431 = vmatpush1.bf16.msra.mxu0 %v7279
        %8432 = vmatprep.subr.bf16.mxu0 %v7312
        %8433 = vmatpush1.bf16.msra.mxu0 %v7311
        %8434 = vmatprep.subr.bf16.mxu0 %v7344
        %8435 = vmatpush1.bf16.msra.mxu0 %v7343
        %8436 = vmatprep.subr.bf16.mxu0 %v7376
        %8437 = vmatpush1.bf16.msra.mxu0 %v7375
        %8438 = vmatprep.subr.bf16.mxu0 %v7408
        %8439 = vmatpush1.bf16.msra.mxu0 %v7407
        %8440 = vmatprep.subr.bf16.mxu0 %v7440
        %8441 = vmatpush1.bf16.msra.mxu0 %v7439
        %8442 = vmatprep.subr.bf16.mxu0 0
        %8443 = vmatpush1.bf16.msra.mxu0 0
        %8444 = vmatprep.subr.bf16.mxu0 0
        %8445 = vmatpush1.bf16.msra.mxu0 0
        %8446 = vmatprep.subr.bf16.mxu0 0
        %8447 = vmatpush1.bf16.msra.mxu0 0
        %8448 = vmatprep.subr.bf16.mxu0 0
        %8449 = vmatpush1.bf16.msra.mxu0 0
        %8450 = vmatprep.subr.bf16.mxu0 0
        %8451 = vmatpush1.bf16.msra.mxu0 0
        %8452 = vmatprep.subr.bf16.mxu0 0
        %8453 = vmatpush1.bf16.msra.mxu0 0
        %8454 = vmatprep.subr.bf16.mxu0 0
        %8455 = vmatpush1.bf16.msra.mxu0 0
        %8456 = vmatprep.subr.bf16.mxu0 0
        %8457 = vmatpush1.bf16.msra.mxu0 0
        %8458 = vmatprep.mubr.bf16.mxu0 0
        %8459 = vmatmul.mubr.bf16.gmra.mrb[0].mxu0 %v7469
        %v8460 = vpop.f32.mrb[0].mxu0
        %v8461 = vadd.f32 0.0, %v8460
        %v8462 = vpop.f32.mrb[0].mxu0
        %v8463 = vadd.f32 0.0, %v8462
        %v8464 = vpop.f32.mrb[0].mxu0
        %v8465 = vadd.f32 0.0, %v8464
        %v8466 = vpop.f32.mrb[0].mxu0
        %v8467 = vadd.f32 0.0, %v8466
        %8468 = vmatprep.mubr.bf16.mxu0 0
        %8469 = vmatmul.mubr.bf16.gmra.mrb[0].mxu0 %v7470
        %v8470 = vpop.f32.mrb[0].mxu0
        %v8471 = vadd.f32 0.0, %v8470
        %v8472 = vpop.f32.mrb[0].mxu0
        %v8473 = vadd.f32 0.0, %v8472
        %v8474 = vpop.f32.mrb[0].mxu0
        %v8475 = vadd.f32 0.0, %v8474
        %v8476 = vpop.f32.mrb[0].mxu0
        %v8477 = vadd.f32 0.0, %v8476
        %8478 = vmatprep.mubr.bf16.mxu0 0
        %8479 = vmatmul.mubr.bf16.gmra.mrb[0].mxu0 %v7471
        %v8480 = vpop.f32.mrb[0].mxu0
        %v8481 = vadd.f32 0.0, %v8480
        %v8482 = vpop.f32.mrb[0].mxu0
        %v8483 = vadd.f32 0.0, %v8482
        %v8484 = vpop.f32.mrb[0].mxu0
        %v8485 = vadd.f32 0.0, %v8484
        %v8486 = vpop.f32.mrb[0].mxu0
        %v8487 = vadd.f32 0.0, %v8486
        %8488 = vmatprep.mubr.bf16.mxu0 0
        %8489 = vmatmul.mubr.bf16.gmra.mrb[0].mxu0 %v7472
        %v8490 = vpop.f32.mrb[0].mxu0
        %v8491 = vadd.f32 0.0, %v8490
        %v8492 = vpop.f32.mrb[0].mxu0
        %v8493 = vadd.f32 0.0, %v8492
        %v8494 = vpop.f32.mrb[0].mxu0
        %v8495 = vadd.f32 0.0, %v8494
        %v8496 = vpop.f32.mrb[0].mxu0
        %v8497 = vadd.f32 0.0, %v8496
        %8498 = vdwg.mxu0
        %8499 = vmatprep.subr.bf16.mxu0 %v7218
        %8500 = vmatpush1.bf16.msra.mxu0 %v7217
        %8501 = vmatprep.subr.bf16.mxu0 %v7250
        %8502 = vmatpush1.bf16.msra.mxu0 %v7249
        %8503 = vmatprep.subr.bf16.mxu0 %v7282
        %8504 = vmatpush1.bf16.msra.mxu0 %v7281
        %8505 = vmatprep.subr.bf16.mxu0 %v7314
        %8506 = vmatpush1.bf16.msra.mxu0 %v7313
        %8507 = vmatprep.subr.bf16.mxu0 %v7346
        %8508 = vmatpush1.bf16.msra.mxu0 %v7345
        %8509 = vmatprep.subr.bf16.mxu0 %v7378
        %8510 = vmatpush1.bf16.msra.mxu0 %v7377
        %8511 = vmatprep.subr.bf16.mxu0 %v7410
        %8512 = vmatpush1.bf16.msra.mxu0 %v7409
        %8513 = vmatprep.subr.bf16.mxu0 %v7442
        %8514 = vmatpush1.bf16.msra.mxu0 %v7441
        %8515 = vmatprep.subr.bf16.mxu0 0
        %8516 = vmatpush1.bf16.msra.mxu0 0
        %8517 = vmatprep.subr.bf16.mxu0 0
        %8518 = vmatpush1.bf16.msra.mxu0 0
        %8519 = vmatprep.subr.bf16.mxu0 0
        %8520 = vmatpush1.bf16.msra.mxu0 0
        %8521 = vmatprep.subr.bf16.mxu0 0
        %8522 = vmatpush1.bf16.msra.mxu0 0
        %8523 = vmatprep.subr.bf16.mxu0 0
        %8524 = vmatpush1.bf16.msra.mxu0 0
        %8525 = vmatprep.subr.bf16.mxu0 0
        %8526 = vmatpush1.bf16.msra.mxu0 0
        %8527 = vmatprep.subr.bf16.mxu0 0
        %8528 = vmatpush1.bf16.msra.mxu0 0
        %8529 = vmatprep.subr.bf16.mxu0 0
        %8530 = vmatpush1.bf16.msra.mxu0 0
        %8531 = vmatprep.mubr.bf16.mxu0 0
        %8532 = vmatmul.mubr.bf16.gmra.mrb[0].mxu0 %v7469
        %v8533 = vpop.f32.mrb[0].mxu0
        %v8534 = vadd.f32 0.0, %v8533
        %v8535 = vpop.f32.mrb[0].mxu0
        %v8536 = vadd.f32 0.0, %v8535
        %v8537 = vpop.f32.mrb[0].mxu0
        %v8538 = vadd.f32 0.0, %v8537
        %v8539 = vpop.f32.mrb[0].mxu0
        %v8540 = vadd.f32 0.0, %v8539
        %8541 = vmatprep.mubr.bf16.mxu0 0
        %8542 = vmatmul.mubr.bf16.gmra.mrb[0].mxu0 %v7470
        %v8543 = vpop.f32.mrb[0].mxu0
        %v8544 = vadd.f32 0.0, %v8543
        %v8545 = vpop.f32.mrb[0].mxu0
        %v8546 = vadd.f32 0.0, %v8545
        %v8547 = vpop.f32.mrb[0].mxu0
        %v8548 = vadd.f32 0.0, %v8547
        %v8549 = vpop.f32.mrb[0].mxu0
        %v8550 = vadd.f32 0.0, %v8549
        %8551 = vmatprep.mubr.bf16.mxu0 0
        %8552 = vmatmul.mubr.bf16.gmra.mrb[0].mxu0 %v7471
        %v8553 = vpop.f32.mrb[0].mxu0
        %v8554 = vadd.f32 0.0, %v8553
        %v8555 = vpop.f32.mrb[0].mxu0
        %v8556 = vadd.f32 0.0, %v8555
        %v8557 = vpop.f32.mrb[0].mxu0
        %v8558 = vadd.f32 0.0, %v8557
        %v8559 = vpop.f32.mrb[0].mxu0
        %v8560 = vadd.f32 0.0, %v8559
        %8561 = vmatprep.mubr.bf16.mxu0 0
        %8562 = vmatmul.mubr.bf16.gmra.mrb[0].mxu0 %v7472
        %v8563 = vpop.f32.mrb[0].mxu0
        %v8564 = vadd.f32 0.0, %v8563
        %v8565 = vpop.f32.mrb[0].mxu0
        %v8566 = vadd.f32 0.0, %v8565
        %v8567 = vpop.f32.mrb[0].mxu0
        %v8568 = vadd.f32 0.0, %v8567
        %v8569 = vpop.f32.mrb[0].mxu0
        %v8570 = vadd.f32 0.0, %v8569
        %8571 = vdwg.mxu0
        %8572 = vmatprep.subr.bf16.mxu0 %v7220
        %8573 = vmatpush1.bf16.msra.mxu0 %v7219
        %8574 = vmatprep.subr.bf16.mxu0 %v7252
        %8575 = vmatpush1.bf16.msra.mxu0 %v7251
        %8576 = vmatprep.subr.bf16.mxu0 %v7284
        %8577 = vmatpush1.bf16.msra.mxu0 %v7283
        %8578 = vmatprep.subr.bf16.mxu0 %v7316
        %8579 = vmatpush1.bf16.msra.mxu0 %v7315
        %8580 = vmatprep.subr.bf16.mxu0 %v7348
        %8581 = vmatpush1.bf16.msra.mxu0 %v7347
        %8582 = vmatprep.subr.bf16.mxu0 %v7380
        %8583 = vmatpush1.bf16.msra.mxu0 %v7379
        %8584 = vmatprep.subr.bf16.mxu0 %v7412
        %8585 = vmatpush1.bf16.msra.mxu0 %v7411
        %8586 = vmatprep.subr.bf16.mxu0 %v7444
        %8587 = vmatpush1.bf16.msra.mxu0 %v7443
        %8588 = vmatprep.subr.bf16.mxu0 0
        %8589 = vmatpush1.bf16.msra.mxu0 0
        %8590 = vmatprep.subr.bf16.mxu0 0
        %8591 = vmatpush1.bf16.msra.mxu0 0
        %8592 = vmatprep.subr.bf16.mxu0 0
        %8593 = vmatpush1.bf16.msra.mxu0 0
        %8594 = vmatprep.subr.bf16.mxu0 0
        %8595 = vmatpush1.bf16.msra.mxu0 0
        %8596 = vmatprep.subr.bf16.mxu0 0
        %8597 = vmatpush1.bf16.msra.mxu0 0
        %8598 = vmatprep.subr.bf16.mxu0 0
        %8599 = vmatpush1.bf16.msra.mxu0 0
        %8600 = vmatprep.subr.bf16.mxu0 0
        %8601 = vmatpush1.bf16.msra.mxu0 0
        %8602 = vmatprep.subr.bf16.mxu0 0
        %8603 = vmatpush1.bf16.msra.mxu0 0
        %8604 = vmatprep.mubr.bf16.mxu0 0
        %8605 = vmatmul.mubr.bf16.gmra.mrb[0].mxu0 %v7469
        %v8606 = vpop.f32.mrb[0].mxu0
        %v8607 = vadd.f32 0.0, %v8606
        %v8608 = vpop.f32.mrb[0].mxu0
        %v8609 = vadd.f32 0.0, %v8608
        %v8610 = vpop.f32.mrb[0].mxu0
        %v8611 = vadd.f32 0.0, %v8610
        %v8612 = vpop.f32.mrb[0].mxu0
        %v8613 = vadd.f32 0.0, %v8612
        %8614 = vmatprep.mubr.bf16.mxu0 0
        %8615 = vmatmul.mubr.bf16.gmra.mrb[0].mxu0 %v7470
        %v8616 = vpop.f32.mrb[0].mxu0
        %v8617 = vadd.f32 0.0, %v8616
        %v8618 = vpop.f32.mrb[0].mxu0
        %v8619 = vadd.f32 0.0, %v8618
        %v8620 = vpop.f32.mrb[0].mxu0
        %v8621 = vadd.f32 0.0, %v8620
        %v8622 = vpop.f32.mrb[0].mxu0
        %v8623 = vadd.f32 0.0, %v8622
        %8624 = vmatprep.mubr.bf16.mxu0 0
        %8625 = vmatmul.mubr.bf16.gmra.mrb[0].mxu0 %v7471
        %v8626 = vpop.f32.mrb[0].mxu0
        %v8627 = vadd.f32 0.0, %v8626
        %v8628 = vpop.f32.mrb[0].mxu0
        %v8629 = vadd.f32 0.0, %v8628
        %v8630 = vpop.f32.mrb[0].mxu0
        %v8631 = vadd.f32 0.0, %v8630
        %v8632 = vpop.f32.mrb[0].mxu0
        %v8633 = vadd.f32 0.0, %v8632
        %8634 = vmatprep.mubr.bf16.mxu0 0
        %8635 = vmatmul.mubr.bf16.gmra.mrb[0].mxu0 %v7472
        %v8636 = vpop.f32.mrb[0].mxu0
        %v8637 = vadd.f32 0.0, %v8636
        %v8638 = vpop.f32.mrb[0].mxu0
        %v8639 = vadd.f32 0.0, %v8638
        %v8640 = vpop.f32.mrb[0].mxu0
        %v8641 = vadd.f32 0.0, %v8640
        %v8642 = vpop.f32.mrb[0].mxu0
        %v8643 = vadd.f32 0.0, %v8642
        %8644 = vdwg.mxu0
        %v8645 = vpack.c.bf16 %v7516, %v7512
        %v8646 = vpack.c.bf16 %v7518, %v7514
        %v8647 = vpack.c.bf16 %v7589, %v7585
        %v8648 = vpack.c.bf16 %v7591, %v7587
        %v8649 = vpack.c.bf16 %v7662, %v7658
        %v8650 = vpack.c.bf16 %v7664, %v7660
        %v8651 = vpack.c.bf16 %v7735, %v7731
        %v8652 = vpack.c.bf16 %v7737, %v7733
        %v8653 = vpack.c.bf16 %v7808, %v7804
        %v8654 = vpack.c.bf16 %v7810, %v7806
        %v8655 = vpack.c.bf16 %v7881, %v7877
        %v8656 = vpack.c.bf16 %v7883, %v7879
        %v8657 = vpack.c.bf16 %v7954, %v7950
        %v8658 = vpack.c.bf16 %v7956, %v7952
        %v8659 = vpack.c.bf16 %v8027, %v8023
        %v8660 = vpack.c.bf16 %v8029, %v8025
        %v8661 = vpack.c.bf16 %v8100, %v8096
        %v8662 = vpack.c.bf16 %v8102, %v8098
        %v8663 = vpack.c.bf16 %v8173, %v8169
        %v8664 = vpack.c.bf16 %v8175, %v8171
        %v8665 = vpack.c.bf16 %v8246, %v8242
        %v8666 = vpack.c.bf16 %v8248, %v8244
        %v8667 = vpack.c.bf16 %v8319, %v8315
        %v8668 = vpack.c.bf16 %v8321, %v8317
        %v8669 = vpack.c.bf16 %v8392, %v8388
        %v8670 = vpack.c.bf16 %v8394, %v8390
        %v8671 = vpack.c.bf16 %v8465, %v8461
        %v8672 = vpack.c.bf16 %v8467, %v8463
        %v8673 = vpack.c.bf16 %v8538, %v8534
        %v8674 = vpack.c.bf16 %v8540, %v8536
        %v8675 = vpack.c.bf16 %v8611, %v8607
        %v8676 = vpack.c.bf16 %v8613, %v8609
        %v8677 = vpack.c.bf16 %v7526, %v7522
        %v8678 = vpack.c.bf16 %v7528, %v7524
        %v8679 = vpack.c.bf16 %v7599, %v7595
        %v8680 = vpack.c.bf16 %v7601, %v7597
        %v8681 = vpack.c.bf16 %v7672, %v7668
        %v8682 = vpack.c.bf16 %v7674, %v7670
        %v8683 = vpack.c.bf16 %v7745, %v7741
        %v8684 = vpack.c.bf16 %v7747, %v7743
        %v8685 = vpack.c.bf16 %v7818, %v7814
        %v8686 = vpack.c.bf16 %v7820, %v7816
        %v8687 = vpack.c.bf16 %v7891, %v7887
        %v8688 = vpack.c.bf16 %v7893, %v7889
        %v8689 = vpack.c.bf16 %v7964, %v7960
        %v8690 = vpack.c.bf16 %v7966, %v7962
        %v8691 = vpack.c.bf16 %v8037, %v8033
        %v8692 = vpack.c.bf16 %v8039, %v8035
        %v8693 = vpack.c.bf16 %v8110, %v8106
        %v8694 = vpack.c.bf16 %v8112, %v8108
        %v8695 = vpack.c.bf16 %v8183, %v8179
        %v8696 = vpack.c.bf16 %v8185, %v8181
        %v8697 = vpack.c.bf16 %v8256, %v8252
        %v8698 = vpack.c.bf16 %v8258, %v8254
        %v8699 = vpack.c.bf16 %v8329, %v8325
        %v8700 = vpack.c.bf16 %v8331, %v8327
        %v8701 = vpack.c.bf16 %v8402, %v8398
        %v8702 = vpack.c.bf16 %v8404, %v8400
        %v8703 = vpack.c.bf16 %v8475, %v8471
        %v8704 = vpack.c.bf16 %v8477, %v8473
        %v8705 = vpack.c.bf16 %v8548, %v8544
        %v8706 = vpack.c.bf16 %v8550, %v8546
        %v8707 = vpack.c.bf16 %v8621, %v8617
        %v8708 = vpack.c.bf16 %v8623, %v8619
        %v8709 = vpack.c.bf16 %v7536, %v7532
        %v8710 = vpack.c.bf16 %v7538, %v7534
        %v8711 = vpack.c.bf16 %v7609, %v7605
        %v8712 = vpack.c.bf16 %v7611, %v7607
        %v8713 = vpack.c.bf16 %v7682, %v7678
        %v8714 = vpack.c.bf16 %v7684, %v7680
        %v8715 = vpack.c.bf16 %v7755, %v7751
        %v8716 = vpack.c.bf16 %v7757, %v7753
        %v8717 = vpack.c.bf16 %v7828, %v7824
        %v8718 = vpack.c.bf16 %v7830, %v7826
        %v8719 = vpack.c.bf16 %v7901, %v7897
        %v8720 = vpack.c.bf16 %v7903, %v7899
        %v8721 = vpack.c.bf16 %v7974, %v7970
        %v8722 = vpack.c.bf16 %v7976, %v7972
        %v8723 = vpack.c.bf16 %v8047, %v8043
        %v8724 = vpack.c.bf16 %v8049, %v8045
        %v8725 = vpack.c.bf16 %v8120, %v8116
        %v8726 = vpack.c.bf16 %v8122, %v8118
        %v8727 = vpack.c.bf16 %v8193, %v8189
        %v8728 = vpack.c.bf16 %v8195, %v8191
        %v8729 = vpack.c.bf16 %v8266, %v8262
        %v8730 = vpack.c.bf16 %v8268, %v8264
        %v8731 = vpack.c.bf16 %v8339, %v8335
        %v8732 = vpack.c.bf16 %v8341, %v8337
        %v8733 = vpack.c.bf16 %v8412, %v8408
        %v8734 = vpack.c.bf16 %v8414, %v8410
        %v8735 = vpack.c.bf16 %v8485, %v8481
        %v8736 = vpack.c.bf16 %v8487, %v8483
        %v8737 = vpack.c.bf16 %v8558, %v8554
        %v8738 = vpack.c.bf16 %v8560, %v8556
        %v8739 = vpack.c.bf16 %v8631, %v8627
        %v8740 = vpack.c.bf16 %v8633, %v8629
        %v8741 = vpack.c.bf16 %v7546, %v7542
        %v8742 = vpack.c.bf16 %v7548, %v7544
        %v8743 = vpack.c.bf16 %v7619, %v7615
        %v8744 = vpack.c.bf16 %v7621, %v7617
        %v8745 = vpack.c.bf16 %v7692, %v7688
        %v8746 = vpack.c.bf16 %v7694, %v7690
        %v8747 = vpack.c.bf16 %v7765, %v7761
        %v8748 = vpack.c.bf16 %v7767, %v7763
        %v8749 = vpack.c.bf16 %v7838, %v7834
        %v8750 = vpack.c.bf16 %v7840, %v7836
        %v8751 = vpack.c.bf16 %v7911, %v7907
        %v8752 = vpack.c.bf16 %v7913, %v7909
        %v8753 = vpack.c.bf16 %v7984, %v7980
        %v8754 = vpack.c.bf16 %v7986, %v7982
        %v8755 = vpack.c.bf16 %v8057, %v8053
        %v8756 = vpack.c.bf16 %v8059, %v8055
        %v8757 = vpack.c.bf16 %v8130, %v8126
        %v8758 = vpack.c.bf16 %v8132, %v8128
        %v8759 = vpack.c.bf16 %v8203, %v8199
        %v8760 = vpack.c.bf16 %v8205, %v8201
        %v8761 = vpack.c.bf16 %v8276, %v8272
        %v8762 = vpack.c.bf16 %v8278, %v8274
        %v8763 = vpack.c.bf16 %v8349, %v8345
        %v8764 = vpack.c.bf16 %v8351, %v8347
        %v8765 = vpack.c.bf16 %v8422, %v8418
        %v8766 = vpack.c.bf16 %v8424, %v8420
        %v8767 = vpack.c.bf16 %v8495, %v8491
        %v8768 = vpack.c.bf16 %v8497, %v8493
        %v8769 = vpack.c.bf16 %v8568, %v8564
        %v8770 = vpack.c.bf16 %v8570, %v8566
        %v8771 = vpack.c.bf16 %v8641, %v8637
        %v8772 = vpack.c.bf16 %v8643, %v8639
        %v8773 = vmax.bf16 %v8645, 0
        %v8774 = vmax.bf16 %v8646, 0
        %v8775 = vmax.bf16 %v8647, 0
        %v8776 = vmax.bf16 %v8648, 0
        %v8777 = vmax.bf16 %v8649, 0
        %v8778 = vmax.bf16 %v8650, 0
        %v8779 = vmax.bf16 %v8651, 0
        %v8780 = vmax.bf16 %v8652, 0
        %v8781 = vmax.bf16 %v8653, 0
        %v8782 = vmax.bf16 %v8654, 0
        %v8783 = vmax.bf16 %v8655, 0
        %v8784 = vmax.bf16 %v8656, 0
        %v8785 = vmax.bf16 %v8657, 0
        %v8786 = vmax.bf16 %v8658, 0
        %v8787 = vmax.bf16 %v8659, 0
        %v8788 = vmax.bf16 %v8660, 0
        %v8789 = vmax.bf16 %v8661, 0
        %v8790 = vmax.bf16 %v8662, 0
        %v8791 = vmax.bf16 %v8663, 0
        %v8792 = vmax.bf16 %v8664, 0
        %v8793 = vmax.bf16 %v8665, 0
        %v8794 = vmax.bf16 %v8666, 0
        %v8795 = vmax.bf16 %v8667, 0
        %v8796 = vmax.bf16 %v8668, 0
        %v8797 = vmax.bf16 %v8669, 0
        %v8798 = vmax.bf16 %v8670, 0
        %v8799 = vmax.bf16 %v8671, 0
        %v8800 = vmax.bf16 %v8672, 0
        %v8801 = vmax.bf16 %v8673, 0
        %v8802 = vmax.bf16 %v8674, 0
        %v8803 = vmax.bf16 %v8675, 0
        %v8804 = vmax.bf16 %v8676, 0
        %v8805 = vmax.bf16 %v8677, 0
        %v8806 = vmax.bf16 %v8678, 0
        %v8807 = vmax.bf16 %v8679, 0
        %v8808 = vmax.bf16 %v8680, 0
        %v8809 = vmax.bf16 %v8681, 0
        %v8810 = vmax.bf16 %v8682, 0
        %v8811 = vmax.bf16 %v8683, 0
        %v8812 = vmax.bf16 %v8684, 0
        %v8813 = vmax.bf16 %v8685, 0
        %v8814 = vmax.bf16 %v8686, 0
        %v8815 = vmax.bf16 %v8687, 0
        %v8816 = vmax.bf16 %v8688, 0
        %v8817 = vmax.bf16 %v8689, 0
        %v8818 = vmax.bf16 %v8690, 0
        %v8819 = vmax.bf16 %v8691, 0
        %v8820 = vmax.bf16 %v8692, 0
        %v8821 = vmax.bf16 %v8693, 0
        %v8822 = vmax.bf16 %v8694, 0
        %v8823 = vmax.bf16 %v8695, 0
        %v8824 = vmax.bf16 %v8696, 0
        %v8825 = vmax.bf16 %v8697, 0
        %v8826 = vmax.bf16 %v8698, 0
        %v8827 = vmax.bf16 %v8699, 0
        %v8828 = vmax.bf16 %v8700, 0
        %v8829 = vmax.bf16 %v8701, 0
        %v8830 = vmax.bf16 %v8702, 0
        %v8831 = vmax.bf16 %v8703, 0
        %v8832 = vmax.bf16 %v8704, 0
        %v8833 = vmax.bf16 %v8705, 0
        %v8834 = vmax.bf16 %v8706, 0
        %v8835 = vmax.bf16 %v8707, 0
        %v8836 = vmax.bf16 %v8708, 0
        %v8837 = vmax.bf16 %v8709, 0
        %v8838 = vmax.bf16 %v8710, 0
        %v8839 = vmax.bf16 %v8711, 0
        %v8840 = vmax.bf16 %v8712, 0
        %v8841 = vmax.bf16 %v8713, 0
        %v8842 = vmax.bf16 %v8714, 0
        %v8843 = vmax.bf16 %v8715, 0
        %v8844 = vmax.bf16 %v8716, 0
        %v8845 = vmax.bf16 %v8717, 0
        %v8846 = vmax.bf16 %v8718, 0
        %v8847 = vmax.bf16 %v8719, 0
        %v8848 = vmax.bf16 %v8720, 0
        %v8849 = vmax.bf16 %v8721, 0
        %v8850 = vmax.bf16 %v8722, 0
        %v8851 = vmax.bf16 %v8723, 0
        %v8852 = vmax.bf16 %v8724, 0
        %v8853 = vmax.bf16 %v8725, 0
        %v8854 = vmax.bf16 %v8726, 0
        %v8855 = vmax.bf16 %v8727, 0
        %v8856 = vmax.bf16 %v8728, 0
        %v8857 = vmax.bf16 %v8729, 0
        %v8858 = vmax.bf16 %v8730, 0
        %v8859 = vmax.bf16 %v8731, 0
        %v8860 = vmax.bf16 %v8732, 0
        %v8861 = vmax.bf16 %v8733, 0
        %v8862 = vmax.bf16 %v8734, 0
        %v8863 = vmax.bf16 %v8735, 0
        %v8864 = vmax.bf16 %v8736, 0
        %v8865 = vmax.bf16 %v8737, 0
        %v8866 = vmax.bf16 %v8738, 0
        %v8867 = vmax.bf16 %v8739, 0
        %v8868 = vmax.bf16 %v8740, 0
        %v8869 = vmax.bf16 %v8741, 0
        %v8870 = vmax.bf16 %v8742, 0
        %v8871 = vmax.bf16 %v8743, 0
        %v8872 = vmax.bf16 %v8744, 0
        %v8873 = vmax.bf16 %v8745, 0
        %v8874 = vmax.bf16 %v8746, 0
        %v8875 = vmax.bf16 %v8747, 0
        %v8876 = vmax.bf16 %v8748, 0
        %v8877 = vmax.bf16 %v8749, 0
        %v8878 = vmax.bf16 %v8750, 0
        %v8879 = vmax.bf16 %v8751, 0
        %v8880 = vmax.bf16 %v8752, 0
        %v8881 = vmax.bf16 %v8753, 0
        %v8882 = vmax.bf16 %v8754, 0
        %v8883 = vmax.bf16 %v8755, 0
        %v8884 = vmax.bf16 %v8756, 0
        %v8885 = vmax.bf16 %v8757, 0
        %v8886 = vmax.bf16 %v8758, 0
        %v8887 = vmax.bf16 %v8759, 0
        %v8888 = vmax.bf16 %v8760, 0
        %v8889 = vmax.bf16 %v8761, 0
        %v8890 = vmax.bf16 %v8762, 0
        %v8891 = vmax.bf16 %v8763, 0
        %v8892 = vmax.bf16 %v8764, 0
        %v8893 = vmax.bf16 %v8765, 0
        %v8894 = vmax.bf16 %v8766, 0
        %v8895 = vmax.bf16 %v8767, 0
        %v8896 = vmax.bf16 %v8768, 0
        %v8897 = vmax.bf16 %v8769, 0
        %v8898 = vmax.bf16 %v8770, 0
        %v8899 = vmax.bf16 %v8771, 0
        %v8900 = vmax.bf16 %v8772, 0
        %v8901 = vld [vmem:[%s4] sm:$0x1]
        %vm8902 = vcmask 523264
        %v8904 = vsel %vm8902, %v8901, 0
        %8906 = vmatprep.subr.bf16.mxu0 %v8774
        %8907 = vmatpush1.bf16.msra.mxu0 %v8773
        %8908 = vmatprep.subr.bf16.mxu0 %v8806
        %8909 = vmatpush1.bf16.msra.mxu0 %v8805
        %8910 = vmatprep.subr.bf16.mxu0 %v8838
        %8911 = vmatpush1.bf16.msra.mxu0 %v8837
        %8912 = vmatprep.subr.bf16.mxu0 %v8870
        %8913 = vmatpush1.bf16.msra.mxu0 %v8869
        %8914 = vmatprep.subr.bf16.mxu0 0
        %8915 = vmatpush1.bf16.msra.mxu0 0
        %8916 = vmatprep.subr.bf16.mxu0 0
        %8917 = vmatpush1.bf16.msra.mxu0 0
        %8918 = vmatprep.subr.bf16.mxu0 0
        %8919 = vmatpush1.bf16.msra.mxu0 0
        %8920 = vmatprep.subr.bf16.mxu0 0
        %8921 = vmatpush1.bf16.msra.mxu0 0
        %8922 = vmatprep.subr.bf16.mxu0 0
        %8923 = vmatpush1.bf16.msra.mxu0 0
        %8924 = vmatprep.subr.bf16.mxu0 0
        %8925 = vmatpush1.bf16.msra.mxu0 0
        %8926 = vmatprep.subr.bf16.mxu0 0
        %8927 = vmatpush1.bf16.msra.mxu0 0
        %8928 = vmatprep.subr.bf16.mxu0 0
        %8929 = vmatpush1.bf16.msra.mxu0 0
        %8930 = vmatprep.subr.bf16.mxu0 0
        %8931 = vmatpush1.bf16.msra.mxu0 0
        %8932 = vmatprep.subr.bf16.mxu0 0
        %8933 = vmatpush1.bf16.msra.mxu0 0
        %8934 = vmatprep.subr.bf16.mxu0 0
        %8935 = vmatpush1.bf16.msra.mxu0 0
        %8936 = vmatprep.subr.bf16.mxu0 0
        %8937 = vmatpush1.bf16.msra.mxu0 0
        %8938 = vmatprep.mubr.bf16.mxu0 0
        %8939 = vmatmul.mubr.bf16.gmra.mrb[0].mxu0 %v8904
        %v8940 = vpop.f32.mrb[0].mxu0
        %v8941 = vadd.f32 0.0, %v8940
        %v8942 = vpop.f32.mrb[0].mxu0
        %v8943 = vadd.f32 0.0, %v8942
        %v8944 = vpop.f32.mrb[0].mxu0
        %v8945 = vpop.f32.mrb[0].mxu0
        %8946 = vdwg.mxu0
        %8947 = vmatprep.subr.bf16.mxu0 %v8776
        %8948 = vmatpush1.bf16.msra.mxu0 %v8775
        %8949 = vmatprep.subr.bf16.mxu0 %v8808
        %8950 = vmatpush1.bf16.msra.mxu0 %v8807
        %8951 = vmatprep.subr.bf16.mxu0 %v8840
        %8952 = vmatpush1.bf16.msra.mxu0 %v8839
        %8953 = vmatprep.subr.bf16.mxu0 %v8872
        %8954 = vmatpush1.bf16.msra.mxu0 %v8871
        %8955 = vmatprep.subr.bf16.mxu0 0
        %8956 = vmatpush1.bf16.msra.mxu0 0
        %8957 = vmatprep.subr.bf16.mxu0 0
        %8958 = vmatpush1.bf16.msra.mxu0 0
        %8959 = vmatprep.subr.bf16.mxu0 0
        %8960 = vmatpush1.bf16.msra.mxu0 0
        %8961 = vmatprep.subr.bf16.mxu0 0
        %8962 = vmatpush1.bf16.msra.mxu0 0
        %8963 = vmatprep.subr.bf16.mxu0 0
        %8964 = vmatpush1.bf16.msra.mxu0 0
        %8965 = vmatprep.subr.bf16.mxu0 0
        %8966 = vmatpush1.bf16.msra.mxu0 0
        %8967 = vmatprep.subr.bf16.mxu0 0
        %8968 = vmatpush1.bf16.msra.mxu0 0
        %8969 = vmatprep.subr.bf16.mxu0 0
        %8970 = vmatpush1.bf16.msra.mxu0 0
        %8971 = vmatprep.subr.bf16.mxu0 0
        %8972 = vmatpush1.bf16.msra.mxu0 0
        %8973 = vmatprep.subr.bf16.mxu0 0
        %8974 = vmatpush1.bf16.msra.mxu0 0
        %8975 = vmatprep.subr.bf16.mxu0 0
        %8976 = vmatpush1.bf16.msra.mxu0 0
        %8977 = vmatprep.subr.bf16.mxu0 0
        %8978 = vmatpush1.bf16.msra.mxu0 0
        %8979 = vmatprep.mubr.bf16.mxu0 0
        %8980 = vmatmul.mubr.bf16.gmra.mrb[0].mxu0 %v8904
        %v8981 = vpop.f32.mrb[0].mxu0
        %v8982 = vadd.f32 0.0, %v8981
        %v8983 = vpop.f32.mrb[0].mxu0
        %v8984 = vadd.f32 0.0, %v8983
        %v8985 = vpop.f32.mrb[0].mxu0
        %v8986 = vpop.f32.mrb[0].mxu0
        %8987 = vdwg.mxu0
        %8988 = vmatprep.subr.bf16.mxu0 %v8778
        %8989 = vmatpush1.bf16.msra.mxu0 %v8777
        %8990 = vmatprep.subr.bf16.mxu0 %v8810
        %8991 = vmatpush1.bf16.msra.mxu0 %v8809
        %8992 = vmatprep.subr.bf16.mxu0 %v8842
        %8993 = vmatpush1.bf16.msra.mxu0 %v8841
        %8994 = vmatprep.subr.bf16.mxu0 %v8874
        %8995 = vmatpush1.bf16.msra.mxu0 %v8873
        %8996 = vmatprep.subr.bf16.mxu0 0
        %8997 = vmatpush1.bf16.msra.mxu0 0
        %8998 = vmatprep.subr.bf16.mxu0 0
        %8999 = vmatpush1.bf16.msra.mxu0 0
        %9000 = vmatprep.subr.bf16.mxu0 0
        %9001 = vmatpush1.bf16.msra.mxu0 0
        %9002 = vmatprep.subr.bf16.mxu0 0
        %9003 = vmatpush1.bf16.msra.mxu0 0
        %9004 = vmatprep.subr.bf16.mxu0 0
        %9005 = vmatpush1.bf16.msra.mxu0 0
        %9006 = vmatprep.subr.bf16.mxu0 0
        %9007 = vmatpush1.bf16.msra.mxu0 0
        %9008 = vmatprep.subr.bf16.mxu0 0
        %9009 = vmatpush1.bf16.msra.mxu0 0
        %9010 = vmatprep.subr.bf16.mxu0 0
        %9011 = vmatpush1.bf16.msra.mxu0 0
        %9012 = vmatprep.subr.bf16.mxu0 0
        %9013 = vmatpush1.bf16.msra.mxu0 0
        %9014 = vmatprep.subr.bf16.mxu0 0
        %9015 = vmatpush1.bf16.msra.mxu0 0
        %9016 = vmatprep.subr.bf16.mxu0 0
        %9017 = vmatpush1.bf16.msra.mxu0 0
        %9018 = vmatprep.subr.bf16.mxu0 0
        %9019 = vmatpush1.bf16.msra.mxu0 0
        %9020 = vmatprep.mubr.bf16.mxu0 0
        %9021 = vmatmul.mubr.bf16.gmra.mrb[0].mxu0 %v8904
        %v9022 = vpop.f32.mrb[0].mxu0
        %v9023 = vadd.f32 0.0, %v9022
        %v9024 = vpop.f32.mrb[0].mxu0
        %v9025 = vadd.f32 0.0, %v9024
        %v9026 = vpop.f32.mrb[0].mxu0
        %v9027 = vpop.f32.mrb[0].mxu0
        %9028 = vdwg.mxu0
        %9029 = vmatprep.subr.bf16.mxu0 %v8780
        %9030 = vmatpush1.bf16.msra.mxu0 %v8779
        %9031 = vmatprep.subr.bf16.mxu0 %v8812
        %9032 = vmatpush1.bf16.msra.mxu0 %v8811
        %9033 = vmatprep.subr.bf16.mxu0 %v8844
        %9034 = vmatpush1.bf16.msra.mxu0 %v8843
        %9035 = vmatprep.subr.bf16.mxu0 %v8876
        %9036 = vmatpush1.bf16.msra.mxu0 %v8875
        %9037 = vmatprep.subr.bf16.mxu0 0
        %9038 = vmatpush1.bf16.msra.mxu0 0
        %9039 = vmatprep.subr.bf16.mxu0 0
        %9040 = vmatpush1.bf16.msra.mxu0 0
        %9041 = vmatprep.subr.bf16.mxu0 0
        %9042 = vmatpush1.bf16.msra.mxu0 0
        %9043 = vmatprep.subr.bf16.mxu0 0
        %9044 = vmatpush1.bf16.msra.mxu0 0
        %9045 = vmatprep.subr.bf16.mxu0 0
        %9046 = vmatpush1.bf16.msra.mxu0 0
        %9047 = vmatprep.subr.bf16.mxu0 0
        %9048 = vmatpush1.bf16.msra.mxu0 0
        %9049 = vmatprep.subr.bf16.mxu0 0
        %9050 = vmatpush1.bf16.msra.mxu0 0
        %9051 = vmatprep.subr.bf16.mxu0 0
        %9052 = vmatpush1.bf16.msra.mxu0 0
        %9053 = vmatprep.subr.bf16.mxu0 0
        %9054 = vmatpush1.bf16.msra.mxu0 0
        %9055 = vmatprep.subr.bf16.mxu0 0
        %9056 = vmatpush1.bf16.msra.mxu0 0
        %9057 = vmatprep.subr.bf16.mxu0 0
        %9058 = vmatpush1.bf16.msra.mxu0 0
        %9059 = vmatprep.subr.bf16.mxu0 0
        %9060 = vmatpush1.bf16.msra.mxu0 0
        %9061 = vmatprep.mubr.bf16.mxu0 0
        %9062 = vmatmul.mubr.bf16.gmra.mrb[0].mxu0 %v8904
        %v9063 = vpop.f32.mrb[0].mxu0
        %v9064 = vadd.f32 0.0, %v9063
        %v9065 = vpop.f32.mrb[0].mxu0
        %v9066 = vadd.f32 0.0, %v9065
        %v9067 = vpop.f32.mrb[0].mxu0
        %v9068 = vpop.f32.mrb[0].mxu0
        %9069 = vdwg.mxu0
        %9070 = vmatprep.subr.bf16.mxu0 %v8782
        %9071 = vmatpush1.bf16.msra.mxu0 %v8781
        %9072 = vmatprep.subr.bf16.mxu0 %v8814
        %9073 = vmatpush1.bf16.msra.mxu0 %v8813
        %9074 = vmatprep.subr.bf16.mxu0 %v8846
        %9075 = vmatpush1.bf16.msra.mxu0 %v8845
        %9076 = vmatprep.subr.bf16.mxu0 %v8878
        %9077 = vmatpush1.bf16.msra.mxu0 %v8877
        %9078 = vmatprep.subr.bf16.mxu0 0
        %9079 = vmatpush1.bf16.msra.mxu0 0
        %9080 = vmatprep.subr.bf16.mxu0 0
        %9081 = vmatpush1.bf16.msra.mxu0 0
        %9082 = vmatprep.subr.bf16.mxu0 0
        %9083 = vmatpush1.bf16.msra.mxu0 0
        %9084 = vmatprep.subr.bf16.mxu0 0
        %9085 = vmatpush1.bf16.msra.mxu0 0
        %9086 = vmatprep.subr.bf16.mxu0 0
        %9087 = vmatpush1.bf16.msra.mxu0 0
        %9088 = vmatprep.subr.bf16.mxu0 0
        %9089 = vmatpush1.bf16.msra.mxu0 0
        %9090 = vmatprep.subr.bf16.mxu0 0
        %9091 = vmatpush1.bf16.msra.mxu0 0
        %9092 = vmatprep.subr.bf16.mxu0 0
        %9093 = vmatpush1.bf16.msra.mxu0 0
        %9094 = vmatprep.subr.bf16.mxu0 0
        %9095 = vmatpush1.bf16.msra.mxu0 0
        %9096 = vmatprep.subr.bf16.mxu0 0
        %9097 = vmatpush1.bf16.msra.mxu0 0
        %9098 = vmatprep.subr.bf16.mxu0 0
        %9099 = vmatpush1.bf16.msra.mxu0 0
        %9100 = vmatprep.subr.bf16.mxu0 0
        %9101 = vmatpush1.bf16.msra.mxu0 0
        %9102 = vmatprep.mubr.bf16.mxu0 0
        %9103 = vmatmul.mubr.bf16.gmra.mrb[0].mxu0 %v8904
        %v9104 = vpop.f32.mrb[0].mxu0
        %v9105 = vadd.f32 0.0, %v9104
        %v9106 = vpop.f32.mrb[0].mxu0
        %v9107 = vadd.f32 0.0, %v9106
        %v9108 = vpop.f32.mrb[0].mxu0
        %v9109 = vpop.f32.mrb[0].mxu0
        %9110 = vdwg.mxu0
        %9111 = vmatprep.subr.bf16.mxu0 %v8784
        %9112 = vmatpush1.bf16.msra.mxu0 %v8783
        %9113 = vmatprep.subr.bf16.mxu0 %v8816
        %9114 = vmatpush1.bf16.msra.mxu0 %v8815
        %9115 = vmatprep.subr.bf16.mxu0 %v8848
        %9116 = vmatpush1.bf16.msra.mxu0 %v8847
        %9117 = vmatprep.subr.bf16.mxu0 %v8880
        %9118 = vmatpush1.bf16.msra.mxu0 %v8879
        %9119 = vmatprep.subr.bf16.mxu0 0
        %9120 = vmatpush1.bf16.msra.mxu0 0
        %9121 = vmatprep.subr.bf16.mxu0 0
        %9122 = vmatpush1.bf16.msra.mxu0 0
        %9123 = vmatprep.subr.bf16.mxu0 0
        %9124 = vmatpush1.bf16.msra.mxu0 0
        %9125 = vmatprep.subr.bf16.mxu0 0
        %9126 = vmatpush1.bf16.msra.mxu0 0
        %9127 = vmatprep.subr.bf16.mxu0 0
        %9128 = vmatpush1.bf16.msra.mxu0 0
        %9129 = vmatprep.subr.bf16.mxu0 0
        %9130 = vmatpush1.bf16.msra.mxu0 0
        %9131 = vmatprep.subr.bf16.mxu0 0
        %9132 = vmatpush1.bf16.msra.mxu0 0
        %9133 = vmatprep.subr.bf16.mxu0 0
        %9134 = vmatpush1.bf16.msra.mxu0 0
        %9135 = vmatprep.subr.bf16.mxu0 0
        %9136 = vmatpush1.bf16.msra.mxu0 0
        %9137 = vmatprep.subr.bf16.mxu0 0
        %9138 = vmatpush1.bf16.msra.mxu0 0
        %9139 = vmatprep.subr.bf16.mxu0 0
        %9140 = vmatpush1.bf16.msra.mxu0 0
        %9141 = vmatprep.subr.bf16.mxu0 0
        %9142 = vmatpush1.bf16.msra.mxu0 0
        %9143 = vmatprep.mubr.bf16.mxu0 0
        %9144 = vmatmul.mubr.bf16.gmra.mrb[0].mxu0 %v8904
        %v9145 = vpop.f32.mrb[0].mxu0
        %v9146 = vadd.f32 0.0, %v9145
        %v9147 = vpop.f32.mrb[0].mxu0
        %v9148 = vadd.f32 0.0, %v9147
        %v9149 = vpop.f32.mrb[0].mxu0
        %v9150 = vpop.f32.mrb[0].mxu0
        %9151 = vdwg.mxu0
        %9152 = vmatprep.subr.bf16.mxu0 %v8786
        %9153 = vmatpush1.bf16.msra.mxu0 %v8785
        %9154 = vmatprep.subr.bf16.mxu0 %v8818
        %9155 = vmatpush1.bf16.msra.mxu0 %v8817
        %9156 = vmatprep.subr.bf16.mxu0 %v8850
        %9157 = vmatpush1.bf16.msra.mxu0 %v8849
        %9158 = vmatprep.subr.bf16.mxu0 %v8882
        %9159 = vmatpush1.bf16.msra.mxu0 %v8881
        %9160 = vmatprep.subr.bf16.mxu0 0
        %9161 = vmatpush1.bf16.msra.mxu0 0
        %9162 = vmatprep.subr.bf16.mxu0 0
        %9163 = vmatpush1.bf16.msra.mxu0 0
        %9164 = vmatprep.subr.bf16.mxu0 0
        %9165 = vmatpush1.bf16.msra.mxu0 0
        %9166 = vmatprep.subr.bf16.mxu0 0
        %9167 = vmatpush1.bf16.msra.mxu0 0
        %9168 = vmatprep.subr.bf16.mxu0 0
        %9169 = vmatpush1.bf16.msra.mxu0 0
        %9170 = vmatprep.subr.bf16.mxu0 0
        %9171 = vmatpush1.bf16.msra.mxu0 0
        %9172 = vmatprep.subr.bf16.mxu0 0
        %9173 = vmatpush1.bf16.msra.mxu0 0
        %9174 = vmatprep.subr.bf16.mxu0 0
        %9175 = vmatpush1.bf16.msra.mxu0 0
        %9176 = vmatprep.subr.bf16.mxu0 0
        %9177 = vmatpush1.bf16.msra.mxu0 0
        %9178 = vmatprep.subr.bf16.mxu0 0
        %9179 = vmatpush1.bf16.msra.mxu0 0
        %9180 = vmatprep.subr.bf16.mxu0 0
        %9181 = vmatpush1.bf16.msra.mxu0 0
        %9182 = vmatprep.subr.bf16.mxu0 0
        %9183 = vmatpush1.bf16.msra.mxu0 0
        %9184 = vmatprep.mubr.bf16.mxu0 0
        %9185 = vmatmul.mubr.bf16.gmra.mrb[0].mxu0 %v8904
        %v9186 = vpop.f32.mrb[0].mxu0
        %v9187 = vadd.f32 0.0, %v9186
        %v9188 = vpop.f32.mrb[0].mxu0
        %v9189 = vadd.f32 0.0, %v9188
        %v9190 = vpop.f32.mrb[0].mxu0
        %v9191 = vpop.f32.mrb[0].mxu0
        %9192 = vdwg.mxu0
        %9193 = vmatprep.subr.bf16.mxu0 %v8788
        %9194 = vmatpush1.bf16.msra.mxu0 %v8787
        %9195 = vmatprep.subr.bf16.mxu0 %v8820
        %9196 = vmatpush1.bf16.msra.mxu0 %v8819
        %9197 = vmatprep.subr.bf16.mxu0 %v8852
        %9198 = vmatpush1.bf16.msra.mxu0 %v8851
        %9199 = vmatprep.subr.bf16.mxu0 %v8884
        %9200 = vmatpush1.bf16.msra.mxu0 %v8883
        %9201 = vmatprep.subr.bf16.mxu0 0
        %9202 = vmatpush1.bf16.msra.mxu0 0
        %9203 = vmatprep.subr.bf16.mxu0 0
        %9204 = vmatpush1.bf16.msra.mxu0 0
        %9205 = vmatprep.subr.bf16.mxu0 0
        %9206 = vmatpush1.bf16.msra.mxu0 0
        %9207 = vmatprep.subr.bf16.mxu0 0
        %9208 = vmatpush1.bf16.msra.mxu0 0
        %9209 = vmatprep.subr.bf16.mxu0 0
        %9210 = vmatpush1.bf16.msra.mxu0 0
        %9211 = vmatprep.subr.bf16.mxu0 0
        %9212 = vmatpush1.bf16.msra.mxu0 0
        %9213 = vmatprep.subr.bf16.mxu0 0
        %9214 = vmatpush1.bf16.msra.mxu0 0
        %9215 = vmatprep.subr.bf16.mxu0 0
        %9216 = vmatpush1.bf16.msra.mxu0 0
        %9217 = vmatprep.subr.bf16.mxu0 0
        %9218 = vmatpush1.bf16.msra.mxu0 0
        %9219 = vmatprep.subr.bf16.mxu0 0
        %9220 = vmatpush1.bf16.msra.mxu0 0
        %9221 = vmatprep.subr.bf16.mxu0 0
        %9222 = vmatpush1.bf16.msra.mxu0 0
        %9223 = vmatprep.subr.bf16.mxu0 0
        %9224 = vmatpush1.bf16.msra.mxu0 0
        %9225 = vmatprep.mubr.bf16.mxu0 0
        %9226 = vmatmul.mubr.bf16.gmra.mrb[0].mxu0 %v8904
        %v9227 = vpop.f32.mrb[0].mxu0
        %v9228 = vadd.f32 0.0, %v9227
        %v9229 = vpop.f32.mrb[0].mxu0
        %v9230 = vadd.f32 0.0, %v9229
        %v9231 = vpop.f32.mrb[0].mxu0
        %v9232 = vpop.f32.mrb[0].mxu0
        %9233 = vdwg.mxu0
        %9234 = vmatprep.subr.bf16.mxu0 %v8790
        %9235 = vmatpush1.bf16.msra.mxu0 %v8789
        %9236 = vmatprep.subr.bf16.mxu0 %v8822
        %9237 = vmatpush1.bf16.msra.mxu0 %v8821
        %9238 = vmatprep.subr.bf16.mxu0 %v8854
        %9239 = vmatpush1.bf16.msra.mxu0 %v8853
        %9240 = vmatprep.subr.bf16.mxu0 %v8886
        %9241 = vmatpush1.bf16.msra.mxu0 %v8885
        %9242 = vmatprep.subr.bf16.mxu0 0
        %9243 = vmatpush1.bf16.msra.mxu0 0
        %9244 = vmatprep.subr.bf16.mxu0 0
        %9245 = vmatpush1.bf16.msra.mxu0 0
        %9246 = vmatprep.subr.bf16.mxu0 0
        %9247 = vmatpush1.bf16.msra.mxu0 0
        %9248 = vmatprep.subr.bf16.mxu0 0
        %9249 = vmatpush1.bf16.msra.mxu0 0
        %9250 = vmatprep.subr.bf16.mxu0 0
        %9251 = vmatpush1.bf16.msra.mxu0 0
        %9252 = vmatprep.subr.bf16.mxu0 0
        %9253 = vmatpush1.bf16.msra.mxu0 0
        %9254 = vmatprep.subr.bf16.mxu0 0
        %9255 = vmatpush1.bf16.msra.mxu0 0
        %9256 = vmatprep.subr.bf16.mxu0 0
        %9257 = vmatpush1.bf16.msra.mxu0 0
        %9258 = vmatprep.subr.bf16.mxu0 0
        %9259 = vmatpush1.bf16.msra.mxu0 0
        %9260 = vmatprep.subr.bf16.mxu0 0
        %9261 = vmatpush1.bf16.msra.mxu0 0
        %9262 = vmatprep.subr.bf16.mxu0 0
        %9263 = vmatpush1.bf16.msra.mxu0 0
        %9264 = vmatprep.subr.bf16.mxu0 0
        %9265 = vmatpush1.bf16.msra.mxu0 0
        %9266 = vmatprep.mubr.bf16.mxu0 0
        %9267 = vmatmul.mubr.bf16.gmra.mrb[0].mxu0 %v8904
        %v9268 = vpop.f32.mrb[0].mxu0
        %v9269 = vadd.f32 0.0, %v9268
        %v9270 = vpop.f32.mrb[0].mxu0
        %v9271 = vadd.f32 0.0, %v9270
        %v9272 = vpop.f32.mrb[0].mxu0
        %v9273 = vpop.f32.mrb[0].mxu0
        %9274 = vdwg.mxu0
        %9275 = vmatprep.subr.bf16.mxu0 %v8792
        %9276 = vmatpush1.bf16.msra.mxu0 %v8791
        %9277 = vmatprep.subr.bf16.mxu0 %v8824
        %9278 = vmatpush1.bf16.msra.mxu0 %v8823
        %9279 = vmatprep.subr.bf16.mxu0 %v8856
        %9280 = vmatpush1.bf16.msra.mxu0 %v8855
        %9281 = vmatprep.subr.bf16.mxu0 %v8888
        %9282 = vmatpush1.bf16.msra.mxu0 %v8887
        %9283 = vmatprep.subr.bf16.mxu0 0
        %9284 = vmatpush1.bf16.msra.mxu0 0
        %9285 = vmatprep.subr.bf16.mxu0 0
        %9286 = vmatpush1.bf16.msra.mxu0 0
        %9287 = vmatprep.subr.bf16.mxu0 0
        %9288 = vmatpush1.bf16.msra.mxu0 0
        %9289 = vmatprep.subr.bf16.mxu0 0
        %9290 = vmatpush1.bf16.msra.mxu0 0
        %9291 = vmatprep.subr.bf16.mxu0 0
        %9292 = vmatpush1.bf16.msra.mxu0 0
        %9293 = vmatprep.subr.bf16.mxu0 0
        %9294 = vmatpush1.bf16.msra.mxu0 0
        %9295 = vmatprep.subr.bf16.mxu0 0
        %9296 = vmatpush1.bf16.msra.mxu0 0
        %9297 = vmatprep.subr.bf16.mxu0 0
        %9298 = vmatpush1.bf16.msra.mxu0 0
        %9299 = vmatprep.subr.bf16.mxu0 0
        %9300 = vmatpush1.bf16.msra.mxu0 0
        %9301 = vmatprep.subr.bf16.mxu0 0
        %9302 = vmatpush1.bf16.msra.mxu0 0
        %9303 = vmatprep.subr.bf16.mxu0 0
        %9304 = vmatpush1.bf16.msra.mxu0 0
        %9305 = vmatprep.subr.bf16.mxu0 0
        %9306 = vmatpush1.bf16.msra.mxu0 0
        %9307 = vmatprep.mubr.bf16.mxu0 0
        %9308 = vmatmul.mubr.bf16.gmra.mrb[0].mxu0 %v8904
        %v9309 = vpop.f32.mrb[0].mxu0
        %v9310 = vadd.f32 0.0, %v9309
        %v9311 = vpop.f32.mrb[0].mxu0
        %v9312 = vadd.f32 0.0, %v9311
        %v9313 = vpop.f32.mrb[0].mxu0
        %v9314 = vpop.f32.mrb[0].mxu0
        %9315 = vdwg.mxu0
        %9316 = vmatprep.subr.bf16.mxu0 %v8794
        %9317 = vmatpush1.bf16.msra.mxu0 %v8793
        %9318 = vmatprep.subr.bf16.mxu0 %v8826
        %9319 = vmatpush1.bf16.msra.mxu0 %v8825
        %9320 = vmatprep.subr.bf16.mxu0 %v8858
        %9321 = vmatpush1.bf16.msra.mxu0 %v8857
        %9322 = vmatprep.subr.bf16.mxu0 %v8890
        %9323 = vmatpush1.bf16.msra.mxu0 %v8889
        %9324 = vmatprep.subr.bf16.mxu0 0
        %9325 = vmatpush1.bf16.msra.mxu0 0
        %9326 = vmatprep.subr.bf16.mxu0 0
        %9327 = vmatpush1.bf16.msra.mxu0 0
        %9328 = vmatprep.subr.bf16.mxu0 0
        %9329 = vmatpush1.bf16.msra.mxu0 0
        %9330 = vmatprep.subr.bf16.mxu0 0
        %9331 = vmatpush1.bf16.msra.mxu0 0
        %9332 = vmatprep.subr.bf16.mxu0 0
        %9333 = vmatpush1.bf16.msra.mxu0 0
        %9334 = vmatprep.subr.bf16.mxu0 0
        %9335 = vmatpush1.bf16.msra.mxu0 0
        %9336 = vmatprep.subr.bf16.mxu0 0
        %9337 = vmatpush1.bf16.msra.mxu0 0
        %9338 = vmatprep.subr.bf16.mxu0 0
        %9339 = vmatpush1.bf16.msra.mxu0 0
        %9340 = vmatprep.subr.bf16.mxu0 0
        %9341 = vmatpush1.bf16.msra.mxu0 0
        %9342 = vmatprep.subr.bf16.mxu0 0
        %9343 = vmatpush1.bf16.msra.mxu0 0
        %9344 = vmatprep.subr.bf16.mxu0 0
        %9345 = vmatpush1.bf16.msra.mxu0 0
        %9346 = vmatprep.subr.bf16.mxu0 0
        %9347 = vmatpush1.bf16.msra.mxu0 0
        %9348 = vmatprep.mubr.bf16.mxu0 0
        %9349 = vmatmul.mubr.bf16.gmra.mrb[0].mxu0 %v8904
        %v9350 = vpop.f32.mrb[0].mxu0
        %v9351 = vadd.f32 0.0, %v9350
        %v9352 = vpop.f32.mrb[0].mxu0
        %v9353 = vadd.f32 0.0, %v9352
        %v9354 = vpop.f32.mrb[0].mxu0
        %v9355 = vpop.f32.mrb[0].mxu0
        %9356 = vdwg.mxu0
        %9357 = vmatprep.subr.bf16.mxu0 %v8796
        %9358 = vmatpush1.bf16.msra.mxu0 %v8795
        %9359 = vmatprep.subr.bf16.mxu0 %v8828
        %9360 = vmatpush1.bf16.msra.mxu0 %v8827
        %9361 = vmatprep.subr.bf16.mxu0 %v8860
        %9362 = vmatpush1.bf16.msra.mxu0 %v8859
        %9363 = vmatprep.subr.bf16.mxu0 %v8892
        %9364 = vmatpush1.bf16.msra.mxu0 %v8891
        %9365 = vmatprep.subr.bf16.mxu0 0
        %9366 = vmatpush1.bf16.msra.mxu0 0
        %9367 = vmatprep.subr.bf16.mxu0 0
        %9368 = vmatpush1.bf16.msra.mxu0 0
        %9369 = vmatprep.subr.bf16.mxu0 0
        %9370 = vmatpush1.bf16.msra.mxu0 0
        %9371 = vmatprep.subr.bf16.mxu0 0
        %9372 = vmatpush1.bf16.msra.mxu0 0
        %9373 = vmatprep.subr.bf16.mxu0 0
        %9374 = vmatpush1.bf16.msra.mxu0 0
        %9375 = vmatprep.subr.bf16.mxu0 0
        %9376 = vmatpush1.bf16.msra.mxu0 0
        %9377 = vmatprep.subr.bf16.mxu0 0
        %9378 = vmatpush1.bf16.msra.mxu0 0
        %9379 = vmatprep.subr.bf16.mxu0 0
        %9380 = vmatpush1.bf16.msra.mxu0 0
        %9381 = vmatprep.subr.bf16.mxu0 0
        %9382 = vmatpush1.bf16.msra.mxu0 0
        %9383 = vmatprep.subr.bf16.mxu0 0
        %9384 = vmatpush1.bf16.msra.mxu0 0
        %9385 = vmatprep.subr.bf16.mxu0 0
        %9386 = vmatpush1.bf16.msra.mxu0 0
        %9387 = vmatprep.subr.bf16.mxu0 0
        %9388 = vmatpush1.bf16.msra.mxu0 0
        %9389 = vmatprep.mubr.bf16.mxu0 0
        %9390 = vmatmul.mubr.bf16.gmra.mrb[0].mxu0 %v8904
        %v9391 = vpop.f32.mrb[0].mxu0
        %v9392 = vadd.f32 0.0, %v9391
        %v9393 = vpop.f32.mrb[0].mxu0
        %v9394 = vadd.f32 0.0, %v9393
        %v9395 = vpop.f32.mrb[0].mxu0
        %v9396 = vpop.f32.mrb[0].mxu0
        %9397 = vdwg.mxu0
        %9398 = vmatprep.subr.bf16.mxu0 %v8798
        %9399 = vmatpush1.bf16.msra.mxu0 %v8797
        %9400 = vmatprep.subr.bf16.mxu0 %v8830
        %9401 = vmatpush1.bf16.msra.mxu0 %v8829
        %9402 = vmatprep.subr.bf16.mxu0 %v8862
        %9403 = vmatpush1.bf16.msra.mxu0 %v8861
        %9404 = vmatprep.subr.bf16.mxu0 %v8894
        %9405 = vmatpush1.bf16.msra.mxu0 %v8893
        %9406 = vmatprep.subr.bf16.mxu0 0
        %9407 = vmatpush1.bf16.msra.mxu0 0
        %9408 = vmatprep.subr.bf16.mxu0 0
        %9409 = vmatpush1.bf16.msra.mxu0 0
        %9410 = vmatprep.subr.bf16.mxu0 0
        %9411 = vmatpush1.bf16.msra.mxu0 0
        %9412 = vmatprep.subr.bf16.mxu0 0
        %9413 = vmatpush1.bf16.msra.mxu0 0
        %9414 = vmatprep.subr.bf16.mxu0 0
        %9415 = vmatpush1.bf16.msra.mxu0 0
        %9416 = vmatprep.subr.bf16.mxu0 0
        %9417 = vmatpush1.bf16.msra.mxu0 0
        %9418 = vmatprep.subr.bf16.mxu0 0
        %9419 = vmatpush1.bf16.msra.mxu0 0
        %9420 = vmatprep.subr.bf16.mxu0 0
        %9421 = vmatpush1.bf16.msra.mxu0 0
        %9422 = vmatprep.subr.bf16.mxu0 0
        %9423 = vmatpush1.bf16.msra.mxu0 0
        %9424 = vmatprep.subr.bf16.mxu0 0
        %9425 = vmatpush1.bf16.msra.mxu0 0
        %9426 = vmatprep.subr.bf16.mxu0 0
        %9427 = vmatpush1.bf16.msra.mxu0 0
        %9428 = vmatprep.subr.bf16.mxu0 0
        %9429 = vmatpush1.bf16.msra.mxu0 0
        %9430 = vmatprep.mubr.bf16.mxu0 0
        %9431 = vmatmul.mubr.bf16.gmra.mrb[0].mxu0 %v8904
        %v9432 = vpop.f32.mrb[0].mxu0
        %v9433 = vadd.f32 0.0, %v9432
        %v9434 = vpop.f32.mrb[0].mxu0
        %v9435 = vadd.f32 0.0, %v9434
        %v9436 = vpop.f32.mrb[0].mxu0
        %v9437 = vpop.f32.mrb[0].mxu0
        %9438 = vdwg.mxu0
        %9439 = vmatprep.subr.bf16.mxu0 %v8800
        %9440 = vmatpush1.bf16.msra.mxu0 %v8799
        %9441 = vmatprep.subr.bf16.mxu0 %v8832
        %9442 = vmatpush1.bf16.msra.mxu0 %v8831
        %9443 = vmatprep.subr.bf16.mxu0 %v8864
        %9444 = vmatpush1.bf16.msra.mxu0 %v8863
        %9445 = vmatprep.subr.bf16.mxu0 %v8896
        %9446 = vmatpush1.bf16.msra.mxu0 %v8895
        %9447 = vmatprep.subr.bf16.mxu0 0
        %9448 = vmatpush1.bf16.msra.mxu0 0
        %9449 = vmatprep.subr.bf16.mxu0 0
        %9450 = vmatpush1.bf16.msra.mxu0 0
        %9451 = vmatprep.subr.bf16.mxu0 0
        %9452 = vmatpush1.bf16.msra.mxu0 0
        %9453 = vmatprep.subr.bf16.mxu0 0
        %9454 = vmatpush1.bf16.msra.mxu0 0
        %9455 = vmatprep.subr.bf16.mxu0 0
        %9456 = vmatpush1.bf16.msra.mxu0 0
        %9457 = vmatprep.subr.bf16.mxu0 0
        %9458 = vmatpush1.bf16.msra.mxu0 0
        %9459 = vmatprep.subr.bf16.mxu0 0
        %9460 = vmatpush1.bf16.msra.mxu0 0
        %9461 = vmatprep.subr.bf16.mxu0 0
        %9462 = vmatpush1.bf16.msra.mxu0 0
        %9463 = vmatprep.subr.bf16.mxu0 0
        %9464 = vmatpush1.bf16.msra.mxu0 0
        %9465 = vmatprep.subr.bf16.mxu0 0
        %9466 = vmatpush1.bf16.msra.mxu0 0
        %9467 = vmatprep.subr.bf16.mxu0 0
        %9468 = vmatpush1.bf16.msra.mxu0 0
        %9469 = vmatprep.subr.bf16.mxu0 0
        %9470 = vmatpush1.bf16.msra.mxu0 0
        %9471 = vmatprep.mubr.bf16.mxu0 0
        %9472 = vmatmul.mubr.bf16.gmra.mrb[0].mxu0 %v8904
        %v9473 = vpop.f32.mrb[0].mxu0
        %v9474 = vadd.f32 0.0, %v9473
        %v9475 = vpop.f32.mrb[0].mxu0
        %v9476 = vadd.f32 0.0, %v9475
        %v9477 = vpop.f32.mrb[0].mxu0
        %v9478 = vpop.f32.mrb[0].mxu0
        %9479 = vdwg.mxu0
        %9480 = vmatprep.subr.bf16.mxu0 %v8802
        %9481 = vmatpush1.bf16.msra.mxu0 %v8801
        %9482 = vmatprep.subr.bf16.mxu0 %v8834
        %9483 = vmatpush1.bf16.msra.mxu0 %v8833
        %9484 = vmatprep.subr.bf16.mxu0 %v8866
        %9485 = vmatpush1.bf16.msra.mxu0 %v8865
        %9486 = vmatprep.subr.bf16.mxu0 %v8898
        %9487 = vmatpush1.bf16.msra.mxu0 %v8897
        %9488 = vmatprep.subr.bf16.mxu0 0
        %9489 = vmatpush1.bf16.msra.mxu0 0
        %9490 = vmatprep.subr.bf16.mxu0 0
        %9491 = vmatpush1.bf16.msra.mxu0 0
        %9492 = vmatprep.subr.bf16.mxu0 0
        %9493 = vmatpush1.bf16.msra.mxu0 0
        %9494 = vmatprep.subr.bf16.mxu0 0
        %9495 = vmatpush1.bf16.msra.mxu0 0
        %9496 = vmatprep.subr.bf16.mxu0 0
        %9497 = vmatpush1.bf16.msra.mxu0 0
        %9498 = vmatprep.subr.bf16.mxu0 0
        %9499 = vmatpush1.bf16.msra.mxu0 0
        %9500 = vmatprep.subr.bf16.mxu0 0
        %9501 = vmatpush1.bf16.msra.mxu0 0
        %9502 = vmatprep.subr.bf16.mxu0 0
        %9503 = vmatpush1.bf16.msra.mxu0 0
        %9504 = vmatprep.subr.bf16.mxu0 0
        %9505 = vmatpush1.bf16.msra.mxu0 0
        %9506 = vmatprep.subr.bf16.mxu0 0
        %9507 = vmatpush1.bf16.msra.mxu0 0
        %9508 = vmatprep.subr.bf16.mxu0 0
        %9509 = vmatpush1.bf16.msra.mxu0 0
        %9510 = vmatprep.subr.bf16.mxu0 0
        %9511 = vmatpush1.bf16.msra.mxu0 0
        %9512 = vmatprep.mubr.bf16.mxu0 0
        %9513 = vmatmul.mubr.bf16.gmra.mrb[0].mxu0 %v8904
        %v9514 = vpop.f32.mrb[0].mxu0
        %v9515 = vadd.f32 0.0, %v9514
        %v9516 = vpop.f32.mrb[0].mxu0
        %v9517 = vadd.f32 0.0, %v9516
        %v9518 = vpop.f32.mrb[0].mxu0
        %v9519 = vpop.f32.mrb[0].mxu0
        %9520 = vdwg.mxu0
        %9521 = vmatprep.subr.bf16.mxu0 %v8804
        %9522 = vmatpush1.bf16.msra.mxu0 %v8803
        %9523 = vmatprep.subr.bf16.mxu0 %v8836
        %9524 = vmatpush1.bf16.msra.mxu0 %v8835
        %9525 = vmatprep.subr.bf16.mxu0 %v8868
        %9526 = vmatpush1.bf16.msra.mxu0 %v8867
        %9527 = vmatprep.subr.bf16.mxu0 %v8900
        %9528 = vmatpush1.bf16.msra.mxu0 %v8899
        %9529 = vmatprep.subr.bf16.mxu0 0
        %9530 = vmatpush1.bf16.msra.mxu0 0
        %9531 = vmatprep.subr.bf16.mxu0 0
        %9532 = vmatpush1.bf16.msra.mxu0 0
        %9533 = vmatprep.subr.bf16.mxu0 0
        %9534 = vmatpush1.bf16.msra.mxu0 0
        %9535 = vmatprep.subr.bf16.mxu0 0
        %9536 = vmatpush1.bf16.msra.mxu0 0
        %9537 = vmatprep.subr.bf16.mxu0 0
        %9538 = vmatpush1.bf16.msra.mxu0 0
        %9539 = vmatprep.subr.bf16.mxu0 0
        %9540 = vmatpush1.bf16.msra.mxu0 0
        %9541 = vmatprep.subr.bf16.mxu0 0
        %9542 = vmatpush1.bf16.msra.mxu0 0
        %9543 = vmatprep.subr.bf16.mxu0 0
        %9544 = vmatpush1.bf16.msra.mxu0 0
        %9545 = vmatprep.subr.bf16.mxu0 0
        %9546 = vmatpush1.bf16.msra.mxu0 0
        %9547 = vmatprep.subr.bf16.mxu0 0
        %9548 = vmatpush1.bf16.msra.mxu0 0
        %9549 = vmatprep.subr.bf16.mxu0 0
        %9550 = vmatpush1.bf16.msra.mxu0 0
        %9551 = vmatprep.subr.bf16.mxu0 0
        %9552 = vmatpush1.bf16.msra.mxu0 0
        %9553 = vmatprep.mubr.bf16.mxu0 0
        %9554 = vmatmul.mubr.bf16.gmra.mrb[0].mxu0 %v8904
        %v9555 = vpop.f32.mrb[0].mxu0
        %v9556 = vadd.f32 0.0, %v9555
        %v9557 = vpop.f32.mrb[0].mxu0
        %v9558 = vadd.f32 0.0, %v9557
        %v9559 = vpop.f32.mrb[0].mxu0
        %v9560 = vpop.f32.mrb[0].mxu0
        %9561 = vdwg.mxu0
        %v9562 = vxor.u32 %v8941, 2147483648
        %v9563 = vxor.u32 %v8943, 2147483648
        %v9564 = vxor.u32 %v8982, 2147483648
        %v9565 = vxor.u32 %v8984, 2147483648
        %v9566 = vxor.u32 %v9023, 2147483648
        %v9567 = vxor.u32 %v9025, 2147483648
        %v9568 = vxor.u32 %v9064, 2147483648
        %v9569 = vxor.u32 %v9066, 2147483648
        %v9570 = vxor.u32 %v9105, 2147483648
        %v9571 = vxor.u32 %v9107, 2147483648
        %v9572 = vxor.u32 %v9146, 2147483648
        %v9573 = vxor.u32 %v9148, 2147483648
        %v9574 = vxor.u32 %v9187, 2147483648
        %v9575 = vxor.u32 %v9189, 2147483648
        %v9576 = vxor.u32 %v9228, 2147483648
        %v9577 = vxor.u32 %v9230, 2147483648
        %v9578 = vxor.u32 %v9269, 2147483648
        %v9579 = vxor.u32 %v9271, 2147483648
        %v9580 = vxor.u32 %v9310, 2147483648
        %v9581 = vxor.u32 %v9312, 2147483648
        %v9582 = vxor.u32 %v9351, 2147483648
        %v9583 = vxor.u32 %v9353, 2147483648
        %v9584 = vxor.u32 %v9392, 2147483648
        %v9585 = vxor.u32 %v9394, 2147483648
        %v9586 = vxor.u32 %v9433, 2147483648
        %v9587 = vxor.u32 %v9435, 2147483648
        %v9588 = vxor.u32 %v9474, 2147483648
        %v9589 = vxor.u32 %v9476, 2147483648
        %v9590 = vxor.u32 %v9515, 2147483648
        %v9591 = vxor.u32 %v9517, 2147483648
        %v9592 = vxor.u32 %v9556, 2147483648
        %v9593 = vxor.u32 %v9558, 2147483648
        %v9594 = vmul.f32 %v9562, 1.442695
        %v9595 = vpow.pop %v9594
        %v9596 = vmul.f32 %v9563, 1.442695
        %v9597 = vpow.pop %v9596
        %v9598 = vmul.f32 %v9564, 1.442695
        %v9599 = vpow.pop %v9598
        %v9600 = vmul.f32 %v9565, 1.442695
        %v9601 = vpow.pop %v9600
        %v9602 = vmul.f32 %v9566, 1.442695
        %v9603 = vpow.pop %v9602
        %v9604 = vmul.f32 %v9567, 1.442695
        %v9605 = vpow.pop %v9604
        %v9606 = vmul.f32 %v9568, 1.442695
        %v9607 = vpow.pop %v9606
        %v9608 = vmul.f32 %v9569, 1.442695
        %v9609 = vpow.pop %v9608
        %v9610 = vmul.f32 %v9570, 1.442695
        %v9611 = vpow.pop %v9610
        %v9612 = vmul.f32 %v9571, 1.442695
        %v9613 = vpow.pop %v9612
        %v9614 = vmul.f32 %v9572, 1.442695
        %v9615 = vpow.pop %v9614
        %v9616 = vmul.f32 %v9573, 1.442695
        %v9617 = vpow.pop %v9616
        %v9618 = vmul.f32 %v9574, 1.442695
        %v9619 = vpow.pop %v9618
        %v9620 = vmul.f32 %v9575, 1.442695
        %v9621 = vpow.pop %v9620
        %v9622 = vmul.f32 %v9576, 1.442695
        %v9623 = vpow.pop %v9622
        %v9624 = vmul.f32 %v9577, 1.442695
        %v9625 = vpow.pop %v9624
        %v9626 = vmul.f32 %v9578, 1.442695
        %v9627 = vpow.pop %v9626
        %v9628 = vmul.f32 %v9579, 1.442695
        %v9629 = vpow.pop %v9628
        %v9630 = vmul.f32 %v9580, 1.442695
        %v9631 = vpow.pop %v9630
        %v9632 = vmul.f32 %v9581, 1.442695
        %v9633 = vpow.pop %v9632
        %v9634 = vmul.f32 %v9582, 1.442695
        %v9635 = vpow.pop %v9634
        %v9636 = vmul.f32 %v9583, 1.442695
        %v9637 = vpow.pop %v9636
        %v9638 = vmul.f32 %v9584, 1.442695
        %v9639 = vpow.pop %v9638
        %v9640 = vmul.f32 %v9585, 1.442695
        %v9641 = vpow.pop %v9640
        %v9642 = vmul.f32 %v9586, 1.442695
        %v9643 = vpow.pop %v9642
        %v9644 = vmul.f32 %v9587, 1.442695
        %v9645 = vpow.pop %v9644
        %v9646 = vmul.f32 %v9588, 1.442695
        %v9647 = vpow.pop %v9646
        %v9648 = vmul.f32 %v9589, 1.442695
        %v9649 = vpow.pop %v9648
        %v9650 = vmul.f32 %v9590, 1.442695
        %v9651 = vpow.pop %v9650
        %v9652 = vmul.f32 %v9591, 1.442695
        %v9653 = vpow.pop %v9652
        %v9654 = vmul.f32 %v9592, 1.442695
        %v9655 = vpow.pop %v9654
        %v9656 = vmul.f32 %v9593, 1.442695
        %v9657 = vpow.pop %v9656
        %v9658 = vadd.f32 %v9595, 1.0
        %v9659 = vadd.f32 %v9597, 1.0
        %v9660 = vadd.f32 %v9599, 1.0
        %v9661 = vadd.f32 %v9601, 1.0
        %v9662 = vadd.f32 %v9603, 1.0
        %v9663 = vadd.f32 %v9605, 1.0
        %v9664 = vadd.f32 %v9607, 1.0
        %v9665 = vadd.f32 %v9609, 1.0
        %v9666 = vadd.f32 %v9611, 1.0
        %v9667 = vadd.f32 %v9613, 1.0
        %v9668 = vadd.f32 %v9615, 1.0
        %v9669 = vadd.f32 %v9617, 1.0
        %v9670 = vadd.f32 %v9619, 1.0
        %v9671 = vadd.f32 %v9621, 1.0
        %v9672 = vadd.f32 %v9623, 1.0
        %v9673 = vadd.f32 %v9625, 1.0
        %v9674 = vadd.f32 %v9627, 1.0
        %v9675 = vadd.f32 %v9629, 1.0
        %v9676 = vadd.f32 %v9631, 1.0
        %v9677 = vadd.f32 %v9633, 1.0
        %v9678 = vadd.f32 %v9635, 1.0
        %v9679 = vadd.f32 %v9637, 1.0
        %v9680 = vadd.f32 %v9639, 1.0
        %v9681 = vadd.f32 %v9641, 1.0
        %v9682 = vadd.f32 %v9643, 1.0
        %v9683 = vadd.f32 %v9645, 1.0
        %v9684 = vadd.f32 %v9647, 1.0
        %v9685 = vadd.f32 %v9649, 1.0
        %v9686 = vadd.f32 %v9651, 1.0
        %v9687 = vadd.f32 %v9653, 1.0
        %v9688 = vadd.f32 %v9655, 1.0
        %v9689 = vadd.f32 %v9657, 1.0
        %v9690 = vrcp.pop %v9658
        %v9691 = vmul.f32 1.0, %v9690
        %v9692 = vrcp.pop %v9659
        %v9693 = vmul.f32 1.0, %v9692
        %v9694 = vrcp.pop %v9660
        %v9695 = vmul.f32 1.0, %v9694
        %v9696 = vrcp.pop %v9661
        %v9697 = vmul.f32 1.0, %v9696
        %v9698 = vrcp.pop %v9662
        %v9699 = vmul.f32 1.0, %v9698
        %v9700 = vrcp.pop %v9663
        %v9701 = vmul.f32 1.0, %v9700
        %v9702 = vrcp.pop %v9664
        %v9703 = vmul.f32 1.0, %v9702
        %v9704 = vrcp.pop %v9665
        %v9705 = vmul.f32 1.0, %v9704
        %v9706 = vrcp.pop %v9666
        %v9707 = vmul.f32 1.0, %v9706
        %v9708 = vrcp.pop %v9667
        %v9709 = vmul.f32 1.0, %v9708
        %v9710 = vrcp.pop %v9668
        %v9711 = vmul.f32 1.0, %v9710
        %v9712 = vrcp.pop %v9669
        %v9713 = vmul.f32 1.0, %v9712
        %v9714 = vrcp.pop %v9670
        %v9715 = vmul.f32 1.0, %v9714
        %v9716 = vrcp.pop %v9671
        %v9717 = vmul.f32 1.0, %v9716
        %v9718 = vrcp.pop %v9672
        %v9719 = vmul.f32 1.0, %v9718
        %v9720 = vrcp.pop %v9673
        %v9721 = vmul.f32 1.0, %v9720
        %v9722 = vrcp.pop %v9674
        %v9723 = vmul.f32 1.0, %v9722
        %v9724 = vrcp.pop %v9675
        %v9725 = vmul.f32 1.0, %v9724
        %v9726 = vrcp.pop %v9676
        %v9727 = vmul.f32 1.0, %v9726
        %v9728 = vrcp.pop %v9677
        %v9729 = vmul.f32 1.0, %v9728
        %v9730 = vrcp.pop %v9678
        %v9731 = vmul.f32 1.0, %v9730
        %v9732 = vrcp.pop %v9679
        %v9733 = vmul.f32 1.0, %v9732
        %v9734 = vrcp.pop %v9680
        %v9735 = vmul.f32 1.0, %v9734
        %v9736 = vrcp.pop %v9681
        %v9737 = vmul.f32 1.0, %v9736
        %v9738 = vrcp.pop %v9682
        %v9739 = vmul.f32 1.0, %v9738
        %v9740 = vrcp.pop %v9683
        %v9741 = vmul.f32 1.0, %v9740
        %v9742 = vrcp.pop %v9684
        %v9743 = vmul.f32 1.0, %v9742
        %v9744 = vrcp.pop %v9685
        %v9745 = vmul.f32 1.0, %v9744
        %v9746 = vrcp.pop %v9686
        %v9747 = vmul.f32 1.0, %v9746
        %v9748 = vrcp.pop %v9687
        %v9749 = vmul.f32 1.0, %v9748
        %v9750 = vrcp.pop %v9688
        %v9751 = vmul.f32 1.0, %v9750
        %v9752 = vrcp.pop %v9689
        %v9753 = vmul.f32 1.0, %v9752
        %v9754 = vmul.f32 %v9691, 0.5
        %v9755 = vmul.f32 %v9693, 0.5
        %v9756 = vmul.f32 %v9695, 0.5
        %v9757 = vmul.f32 %v9697, 0.5
        %v9758 = vmul.f32 %v9699, 0.5
        %v9759 = vmul.f32 %v9701, 0.5
        %v9760 = vmul.f32 %v9703, 0.5
        %v9761 = vmul.f32 %v9705, 0.5
        %v9762 = vmul.f32 %v9707, 0.5
        %v9763 = vmul.f32 %v9709, 0.5
        %v9764 = vmul.f32 %v9711, 0.5
        %v9765 = vmul.f32 %v9713, 0.5
        %v9766 = vmul.f32 %v9715, 0.5
        %v9767 = vmul.f32 %v9717, 0.5
        %v9768 = vmul.f32 %v9719, 0.5
        %v9769 = vmul.f32 %v9721, 0.5
        %v9770 = vmul.f32 %v9723, 0.5
        %v9771 = vmul.f32 %v9725, 0.5
        %v9772 = vmul.f32 %v9727, 0.5
        %v9773 = vmul.f32 %v9729, 0.5
        %v9774 = vmul.f32 %v9731, 0.5
        %v9775 = vmul.f32 %v9733, 0.5
        %v9776 = vmul.f32 %v9735, 0.5
        %v9777 = vmul.f32 %v9737, 0.5
        %v9778 = vmul.f32 %v9739, 0.5
        %v9779 = vmul.f32 %v9741, 0.5
        %v9780 = vmul.f32 %v9743, 0.5
        %v9781 = vmul.f32 %v9745, 0.5
        %v9782 = vmul.f32 %v9747, 0.5
        %v9783 = vmul.f32 %v9749, 0.5
        %v9784 = vmul.f32 %v9751, 0.5
        %v9785 = vmul.f32 %v9753, 0.5
        %v9786 = vmul.f32 %v9754, 1.442695
        %v9787 = vpow.pop %v9786
        %v9788 = vmul.f32 %v9755, 1.442695
        %v9789 = vpow.pop %v9788
        %v9790 = vmul.f32 %v9756, 1.442695
        %v9791 = vpow.pop %v9790
        %v9792 = vmul.f32 %v9757, 1.442695
        %v9793 = vpow.pop %v9792
        %v9794 = vmul.f32 %v9758, 1.442695
        %v9795 = vpow.pop %v9794
        %v9796 = vmul.f32 %v9759, 1.442695
        %v9797 = vpow.pop %v9796
        %v9798 = vmul.f32 %v9760, 1.442695
        %v9799 = vpow.pop %v9798
        %v9800 = vmul.f32 %v9761, 1.442695
        %v9801 = vpow.pop %v9800
        %v9802 = vmul.f32 %v9762, 1.442695
        %v9803 = vpow.pop %v9802
        %v9804 = vmul.f32 %v9763, 1.442695
        %v9805 = vpow.pop %v9804
        %v9806 = vmul.f32 %v9764, 1.442695
        %v9807 = vpow.pop %v9806
        %v9808 = vmul.f32 %v9765, 1.442695
        %v9809 = vpow.pop %v9808
        %v9810 = vmul.f32 %v9766, 1.442695
        %v9811 = vpow.pop %v9810
        %v9812 = vmul.f32 %v9767, 1.442695
        %v9813 = vpow.pop %v9812
        %v9814 = vmul.f32 %v9768, 1.442695
        %v9815 = vpow.pop %v9814
        %v9816 = vmul.f32 %v9769, 1.442695
        %v9817 = vpow.pop %v9816
        %v9818 = vmul.f32 %v9770, 1.442695
        %v9819 = vpow.pop %v9818
        %v9820 = vmul.f32 %v9771, 1.442695
        %v9821 = vpow.pop %v9820
        %v9822 = vmul.f32 %v9772, 1.442695
        %v9823 = vpow.pop %v9822
        %v9824 = vmul.f32 %v9773, 1.442695
        %v9825 = vpow.pop %v9824
        %v9826 = vmul.f32 %v9774, 1.442695
        %v9827 = vpow.pop %v9826
        %v9828 = vmul.f32 %v9775, 1.442695
        %v9829 = vpow.pop %v9828
        %v9830 = vmul.f32 %v9776, 1.442695
        %v9831 = vpow.pop %v9830
        %v9832 = vmul.f32 %v9777, 1.442695
        %v9833 = vpow.pop %v9832
        %v9834 = vmul.f32 %v9778, 1.442695
        %v9835 = vpow.pop %v9834
        %v9836 = vmul.f32 %v9779, 1.442695
        %v9837 = vpow.pop %v9836
        %v9838 = vmul.f32 %v9780, 1.442695
        %v9839 = vpow.pop %v9838
        %v9840 = vmul.f32 %v9781, 1.442695
        %v9841 = vpow.pop %v9840
        %v9842 = vmul.f32 %v9782, 1.442695
        %v9843 = vpow.pop %v9842
        %v9844 = vmul.f32 %v9783, 1.442695
        %v9845 = vpow.pop %v9844
        %v9846 = vmul.f32 %v9784, 1.442695
        %v9847 = vpow.pop %v9846
        %v9848 = vmul.f32 %v9785, 1.442695
        %v9849 = vpow.pop %v9848
        %v9850 = vadd.f32 %v9787, %v9795
        %v9851 = vadd.f32 %v9789, %v9797
        %v9852 = vadd.f32 %v9791, %v9799
        %v9853 = vadd.f32 %v9793, %v9801
        %v9854 = vadd.f32 %v9850, %v9803
        %v9855 = vadd.f32 %v9851, %v9805
        %v9856 = vadd.f32 %v9852, %v9807
        %v9857 = vadd.f32 %v9853, %v9809
        %v9858 = vadd.f32 %v9854, %v9811
        %v9859 = vadd.f32 %v9855, %v9813
        %v9860 = vadd.f32 %v9856, %v9815
        %v9861 = vadd.f32 %v9857, %v9817
        %v9862 = vadd.f32 %v9858, %v9819
        %v9863 = vadd.f32 %v9859, %v9821
        %v9864 = vadd.f32 %v9860, %v9823
        %v9865 = vadd.f32 %v9861, %v9825
        %v9866 = vadd.f32 %v9862, %v9827
        %v9867 = vadd.f32 %v9863, %v9829
        %v9868 = vadd.f32 %v9864, %v9831
        %v9869 = vadd.f32 %v9865, %v9833
        %v9870 = vadd.f32 %v9866, %v9835
        %v9871 = vadd.f32 %v9867, %v9837
        %v9872 = vadd.f32 %v9868, %v9839
        %v9873 = vadd.f32 %v9869, %v9841
        %v9874 = vadd.f32 %v9870, %v9843
        %v9875 = vadd.f32 %v9871, %v9845
        %v9876 = vadd.f32 %v9872, %v9847
        %v9877 = vadd.f32 %v9873, %v9849
        %v9878 = vmul.f32 %v9874, 0.125
        %v9879 = vmul.f32 %v9875, 0.125
        %v9880 = vmul.f32 %v9876, 0.125
        %v9881 = vmul.f32 %v9877, 0.125
        %v9882 = vlog2.pop %v9878
        %v9883 = vmul.f32 %v9882, 0.6931472
        %v9884 = vlog2.pop %v9879
        %v9885 = vmul.f32 %v9884, 0.6931472
        %v9886 = vlog2.pop %v9880
        %v9887 = vmul.f32 %v9886, 0.6931472
        %v9888 = vlog2.pop %v9881
        %v9889 = vmul.f32 %v9888, 0.6931472
        %v9890 = vmul.f32 %v9883, 2.0
        %v9891 = vmul.f32 %v9885, 2.0
        %v9892 = vmul.f32 %v9887, 2.0
        %v9893 = vmul.f32 %v9889, 2.0
        %v9898 = vcombine.low %v9890, %v9891
        %v9899 = vcombine.low %v9892, %v9893
        %v9901 = vunpack.c.l.s4 1966171168
        %v9902 = vunpack.c.0.s8 %v9901
        %v9903 = vlaneseq
        %v9904 = vshrl.u32 %v9903, 7
        %v9905 = vsub.s32 %v9902, %v9904
        %v9906 = vrot.slane %v9898, %v9905
        %v9908 = vunpack.c.l.s4 1966171168
        %v9909 = vunpack.c.0.s8 %v9908
        %v9910 = vlaneseq
        %v9911 = vshrl.u32 %v9910, 7
        %v9912 = vsub.s32 %v9909, %v9911
        %v9913 = vrot.slane %v9899, %v9912
        %v9914 = vcombine.low %v9906, %v9913
        %v9916 = vunpack.c.l.s4 1966171168
        %v9917 = vunpack.c.0.s8 %v9916
        %v9918 = vlaneseq
        %v9919 = vshrl.u32 %v9918, 7
        %v9920 = vsub.s32 %v9917, %v9919
        %v9921 = vrot.slane %v9914, %v9920
        %v9923 = vlaneseq
        %vm9924 = vcmp.ge.s32.totalorder %v9923, 0
        %vm9925 = vcmp.lt.s32.totalorder %v9923, 512
        %vm9926 = vmand %vm9924, %vm9925
        %9927 = vst.msk [vmem:[%s368] sm:$0xf] %vm9926, %v9921
        %s9928 = sand.u32 %s137, 1
        %s9929 = scalar_lea.sflag [#allocation4], %s9928
        %s9930 = sand.u32 %s137, 1
        %s9931 = smul.addr %s9930, 4
        %s9932 = scalar_lea.vmem [#allocation3], %s9931
        // Predicated region
        $region64: #{mi_net_forward.1} parent=58 // pred_check
          %p9933 = pneg %p147
        $region65: #{mi_net_forward.1} parent=58 // pred_check_branch
          %9935 = sbr.rel (%p9933) target = $region67
        $region66: #{mi_net_forward.1} parent=58 // pred_region
          %s9936 = smul.u32 4, %s19
          %s9938 = ssub.s32 64, 64
          %9939 = vsyncadd %s9929, %s9938
          %s9940 = smul.addr %s9936, 16
          %s9941 = scalar_lea.hbm %s5, %s9940
          %s9943 = sshll.u32 %s9932, 4
          %s9944 = int_to_ptr.vmem [resolvable:$true] %s9943
          %9946 = dma.vmem_to_hbm [thread:$0]  %s9944, 64, %s9941, %s9929
        $region67: #{mi_net_forward.1} parent=58 // pred_fallthru
          _
      $region59: #{mi_net_forward.1} parent=5 // pred_fallthru
        _
      %p9947 = scmp.le.s32.totalorder 2, %s14
      // Predicated region
      $region68: #{mi_net_forward.1} parent=5 // pred_check
        %p9948 = pneg %p9947
      $region69: #{mi_net_forward.1} parent=5 // pred_check_branch
        %9950 = sbr.rel (%p9948) target = $region71
      $region70: #{mi_net_forward.1} parent=5 // pred_region
        %s9951 = ssub.s32 %s14, 2
        // Predicated region
        $region72: #{mi_net_forward.1} parent=70 // pred_check
          %p9952 = pneg %p153
        $region73: #{mi_net_forward.1} parent=70 // pred_check_branch
          %9954 = sbr.rel (%p9952) target = $region75
        $region74: #{mi_net_forward.1} parent=70 // pred_region
          %s9955 = sand.u32 %s138, 1
          %s9956 = scalar_lea.sflag [#allocation4], %s9955
          %s9957 = sand.u32 %s138, 1
          %s9958 = smul.addr %s9957, 4
          %s9959 = scalar_lea.vmem [#allocation3], %s9958
          %9960 = dma.done %s9956, 64
        $region75: #{mi_net_forward.1} parent=70 // pred_fallthru
          _
      $region71: #{mi_net_forward.1} parent=5 // pred_fallthru
        _
    $region6: #{mi_net_forward.1} parent=1 // loop_footer
      %s18 = sadd.s32 1, %s14
    $region7: #{mi_net_forward.1} parent=1 // loop_footer_branch
      %13 = sbr.rel target = $region3
    $region8: #{mi_net_forward.1} parent=1 // loop_exit
      _
    %9961 = vsyncpa [#allocation4], 1
    %s9962 = scalar_lea.sflag [#allocation4], 1
    %9963 = vsyncpa %s9962, 1

</llo_original>
